<compile_context>
chip_gen: v5e
topology: v5e:2x2
jax: 0.10.0
libtpu: 0.0.40
codegen_flags: <defaults>
</compile_context>

<pallas_src>
import functools

import jax
import jax.numpy as jnp
from jax.experimental import pallas as pl
from jax.experimental.pallas import tpu as pltpu


def _valid_mask(rows, w_shift, wrap, h_lim, w_lim):
    """rows: (R, 1) int32 flat canvas row ids; square canvas of width 2**w_shift.

    Returns an f32 (R, 1) mask that is 1.0 inside the valid h<h_lim, w<w_lim
    region of every image and 0.0 elsewhere (uses shifts/ands only).
    """
    h = jnp.bitwise_and(jnp.right_shift(rows, w_shift), wrap)
    w = jnp.bitwise_and(rows, wrap)
    return jnp.where(jnp.logical_and(h < h_lim, w < w_lim), 1.0, 0.0)


def _cnn_kernel(x_ref, w1_ref, b1_ref, w2_ref, b2_ref, w3_ref, b3_ref,
                w4_ref, b4_ref, w5_ref, b5_ref, wd1_ref, bd1_ref,
                wd2_ref, bd2_ref, out_ref,
                a1, a2, a3, a4, a5, a6, a7, *, n_batch):
    f32 = jnp.float32
    bf16 = jnp.bfloat16
    N = n_batch
    M0 = N * 1024            # 32x32 canvas (per-image stride 1024)
    M1 = N * 256             # 16x16 canvas (after pool1)
    M2 = N * 64              # 8x8 canvas (after pool2)
    CH0 = 128                # rows/chunk, 32x32-canvas convs (acc = 16 vregs)
    CH1 = 128                # rows/chunk, 16x16-canvas convs
    CH2 = 64                 # rows/chunk, conv5 on the 8x8 canvas
    OFF32 = [di * 32 + dj for di in range(3) for dj in range(3)]  # 3x3 taps
    OFF16 = [di * 16 + dj for di in range(3) for dj in range(3)]
    OFF8 = [di * 8 + dj for di in range(2) for dj in range(2)]    # 2x2 taps
    EPS = 1e-5

    # ---- stage 0: zero the read-ahead pads of the canvases the convs read --
    a1[pl.ds(M0, 72), :] = jnp.zeros((72, 32), f32)
    a3[pl.ds(M1, 40), :] = jnp.zeros((40, 32), f32)
    a4[pl.ds(M1, 40), :] = jnp.zeros((40, 64), f32)
    a6[pl.ds(M2, 16), :] = jnp.zeros((16, 64), f32)

    # ---- conv1: Conv3d(1->32, 3x3x3) == 2-D conv over 3 depth channels; ReLU
    # (K=3 per tap: kept f32, MXU cost is negligible; input pads are zeroed by
    # the wrapper so out-of-valid rows stay finite.)
    def conv1_chunk(c, carry):
        base = pl.multiple_of(c * CH0, CH0)
        acc = jnp.zeros((CH0, 32), f32)
        for t, off in enumerate(OFF32):
            acc += jnp.dot(x_ref[pl.ds(base + off, CH0), :], w1_ref[t],
                           preferred_element_type=f32)
        a1[pl.ds(base, CH0), :] = jnp.maximum(acc + b1_ref[...], 0.0)
        return carry
    jax.lax.fori_loop(0, M0 // CH0, conv1_chunk, 0)

    # ---- conv2 (32->32, 3x3) raw; masked one-pass BN1 stats fused ----------
    def conv2_chunk(c, sums):
        s1c, s2c = sums
        base = pl.multiple_of(c * CH0, CH0)
        acc = jnp.zeros((CH0, 32), f32)
        for t, off in enumerate(OFF32):
            acc += jnp.dot(a1[pl.ds(base + off, CH0), :].astype(bf16),
                           w2_ref[t], preferred_element_type=f32)
        acc = acc + b2_ref[...]
        a2[pl.ds(base, CH0), :] = acc
        rows = base + jax.lax.broadcasted_iota(jnp.int32, (CH0, 1), 0)
        m = _valid_mask(rows, 5, 31, 28, 28)          # valid 28x28 of 32x32
        return (s1c + jnp.sum(acc * m, axis=0, keepdims=True),
                s2c + jnp.sum(acc * acc * m, axis=0, keepdims=True))

    s1, s2 = jax.lax.fori_loop(
        0, M0 // CH0, conv2_chunk,
        (jnp.zeros((1, 32), f32), jnp.zeros((1, 32), f32)))
    cnt1 = float(N * 28 * 28)
    mean1 = s1 / cnt1
    var1 = jnp.maximum(s2 / cnt1 - mean1 * mean1, 0.0)
    inv1 = jax.lax.rsqrt(var1 + EPS)

    # ---- max_pool1 (2x2/2) fused with BN1 normalize + ReLU (monotone) ------
    # Block b == (image n, pooled row h'): four stride-2 slices of the raw
    # conv2 canvas (rows 2h' / 2h'+1, even / odd w) -> 16 pooled values -> a3.
    # Statically unrolled so every strided-slice start is a constant; switch
    # to a fori_loop for very large N.
    for b in range(N * 16):
        base = b * 64
        v = jnp.maximum(
            jnp.maximum(a2[pl.ds(base, 16, 2), :],
                        a2[pl.ds(base + 1, 16, 2), :]),
            jnp.maximum(a2[pl.ds(base + 32, 16, 2), :],
                        a2[pl.ds(base + 33, 16, 2), :]))
        a3[pl.ds(b * 16, 16), :] = jnp.maximum((v - mean1) * inv1, 0.0)

    # ---- conv3 (32->64, 3x3) raw into a4; masked one-pass BN2 stats --------
    def conv3_chunk(c, sums):
        s1c, s2c = sums
        base = pl.multiple_of(c * CH1, CH1)
        acc = jnp.zeros((CH1, 64), f32)
        for t, off in enumerate(OFF16):
            acc += jnp.dot(a3[pl.ds(base + off, CH1), :].astype(bf16),
                           w3_ref[t], preferred_element_type=f32)
        acc = acc + b3_ref[...]
        a4[pl.ds(base, CH1), :] = acc
        rows = base + jax.lax.broadcasted_iota(jnp.int32, (CH1, 1), 0)
        m = _valid_mask(rows, 4, 15, 12, 12)          # valid 12x12 of 16x16
        return (s1c + jnp.sum(acc * m, axis=0, keepdims=True),
                s2c + jnp.sum(acc * acc * m, axis=0, keepdims=True))

    s1b, s2b = jax.lax.fori_loop(
        0, M1 // CH1, conv3_chunk,
        (jnp.zeros((1, 64), f32), jnp.zeros((1, 64), f32)))
    cnt2 = float(N * 12 * 12)
    mean2 = s1b / cnt2
    var2 = jnp.maximum(s2b / cnt2 - mean2 * mean2, 0.0)
    inv2 = jax.lax.rsqrt(var2 + EPS)

    # ---- BN2 normalize + ReLU in place on a4 (pad rows stay zero) ----------
    def bn2_chunk(c, carry):
        base = pl.multiple_of(c * CH1, CH1)
        a4[pl.ds(base, CH1), :] = jnp.maximum(
            (a4[pl.ds(base, CH1), :] - mean2) * inv2, 0.0)
        return carry
    jax.lax.fori_loop(0, M1 // CH1, bn2_chunk, 0)

    # ---- conv4 (64->64, 3x3) raw (ReLU deferred through pool2) -------------
    def conv4_chunk(c, carry):
        base = pl.multiple_of(c * CH1, CH1)
        acc = jnp.zeros((CH1, 64), f32)
        for t, off in enumerate(OFF16):
            acc += jnp.dot(a4[pl.ds(base + off, CH1), :].astype(bf16),
                           w4_ref[t], preferred_element_type=f32)
        a5[pl.ds(base, CH1), :] = acc + b4_ref[...]
        return carry
    jax.lax.fori_loop(0, M1 // CH1, conv4_chunk, 0)

    # ---- max_pool2 (2x2/2) fused with the deferred ReLU ---------------------
    for b in range(N * 8):
        base = b * 32
        v = jnp.maximum(
            jnp.maximum(a5[pl.ds(base, 8, 2), :],
                        a5[pl.ds(base + 1, 8, 2), :]),
            jnp.maximum(a5[pl.ds(base + 16, 8, 2), :],
                        a5[pl.ds(base + 17, 8, 2), :]))
        a6[pl.ds(b * 8, 8), :] = jnp.maximum(v, 0.0)

    # ---- conv5 (64->64, 2x2) + ReLU -----------------------------------------
    def conv5_chunk(c, carry):
        base = pl.multiple_of(c * CH2, CH2)
        acc = jnp.zeros((CH2, 64), f32)
        for t, off in enumerate(OFF8):
            acc += jnp.dot(a6[pl.ds(base + off, CH2), :].astype(bf16),
                           w5_ref[t], preferred_element_type=f32)
        a7[pl.ds(base, CH2), :] = jnp.maximum(acc + b5_ref[...], 0.0)
        return carry
    jax.lax.fori_loop(0, M2 // CH2, conv5_chunk, 0)

    # ---- dense1 (+ReLU) over the 16 valid 4x4 pixels, dense2 + sigmoid ------
    accd = jnp.zeros((N, 256), f32)
    for h in range(4):
        for w in range(4):
            px = a7[pl.ds(h * 8 + w, N, 64), :]       # (N, 64): pixel (h,w)
            accd += jnp.dot(px.astype(bf16), wd1_ref[h * 4 + w],
                            preferred_element_type=f32)
    accd = jnp.maximum(accd + bd1_ref[...], 0.0)       # (N, 256)
    logit = jnp.sum(accd * wd2_ref[...], axis=1, keepdims=True) + bd2_ref[...]
    out_ref[...] = 1.0 / (1.0 + jnp.exp(-logit))


def _conv_w(w):
    """(Cout, Cin, kh, kw) -> (kh*kw, Cin, Cout); w[di*kw + dj] is one tap."""
    co, ci, kh, kw = w.shape
    return jnp.transpose(w, (2, 3, 1, 0)).reshape(kh * kw, ci, co)


def init_params(key):
    def norm(k, shape, scale):
        return (scale * jax.random.normal(k, shape)).astype(jnp.float32)

    bf16 = jnp.bfloat16
    ks = jax.random.split(key, 14)
    # conv1: PyTorch Conv3d weight (32, 1, 3, 3, 3); the depth dim (3 slices)
    # folds into the input-channel dim -> (32, 3, 3, 3).
    w1 = norm(ks[0], (32, 1, 3, 3, 3), 0.1).reshape(32, 3, 3, 3)
    w2 = norm(ks[2], (32, 32, 3, 3), 0.05)
    w3 = norm(ks[4], (64, 32, 3, 3), 0.05)
    w4 = norm(ks[6], (64, 64, 3, 3), 0.05)
    w5 = norm(ks[8], (64, 64, 2, 2), 0.05)
    # dense1 in (in, out) order; PyTorch flattens NCHW (row = c*16 + h*4 + w).
    # Permute the rows ONCE here so the kernel consumes the NHWC-resident
    # activation directly: 16 blocks of (64, 256), one per (h, w).
    wd1 = norm(ks[10], (1024, 256), 0.03)
    wd1 = jnp.transpose(wd1.reshape(64, 4, 4, 256), (1, 2, 0, 3)).reshape(16, 64, 256)
    wd2 = norm(ks[12], (256, 1), 0.03)
    return {
        # conv1 stays f32 (K=3 taps, negligible); the rest are bf16 MXU
        # operands with f32 accumulation inside the kernel.
        "w1": _conv_w(w1), "b1": norm(ks[1], (32,), 0.1).reshape(1, 32),
        "w2": _conv_w(w2).astype(bf16), "b2": norm(ks[3], (32,), 0.05).reshape(1, 32),
        "w3": _conv_w(w3).astype(bf16), "b3": norm(ks[5], (64,), 0.05).reshape(1, 64),
        "w4": _conv_w(w4).astype(bf16), "b4": norm(ks[7], (64,), 0.05).reshape(1, 64),
        "w5": _conv_w(w5).astype(bf16), "b5": norm(ks[9], (64,), 0.05).reshape(1, 64),
        "wd1": wd1.astype(bf16), "bd1": norm(ks[11], (256,), 0.03).reshape(1, 256),
        "wd2": jnp.transpose(wd2, (1, 0)),            # (1, 256), f32
        "bd2": norm(ks[13], (1,), 0.03).reshape(1, 1),
    }


def cnn_forward(x_ndhw, params):
    """x: (N, 3, 32, 32) -- the '3' is the depth consumed by the Conv3d."""
    N, D, H, W = x_ndhw.shape
    assert (D, H, W) == (3, 32, 32), x_ndhw.shape
    M0, M1, M2 = N * 1024, N * 256, N * 64

    # One-time relayout to the lane-dense flat NHWC canvas (M0, 3), pre-padded
    # with the 72 read-ahead rows conv1's shifted tap loads need (this replaces
    # the old in-kernel s_in copy + pad zeroing).
    x2 = jnp.transpose(x_ndhw, (0, 2, 3, 1)).astype(jnp.float32).reshape(M0, D)
    x2 = jnp.pad(x2, ((0, 72), (0, 0)))

    vmem = pl.BlockSpec(memory_space=pltpu.MemorySpace.VMEM)
    return pl.pallas_call(
        functools.partial(_cnn_kernel, n_batch=N),
        out_shape=jax.ShapeDtypeStruct((N, 1), jnp.float32),
        in_specs=[vmem] * 15,
        out_specs=vmem,
        scratch_shapes=[
            pltpu.VMEM((M0 + 72, 32), jnp.float32),   # a1: conv1 + relu
            pltpu.VMEM((M0, 32), jnp.float32),        # a2: conv2 (raw)
            pltpu.VMEM((M1 + 40, 32), jnp.float32),   # a3: pool1 (bn1 + relu)
            pltpu.VMEM((M1 + 40, 64), jnp.float32),   # a4: conv3 raw -> bn2+relu
            pltpu.VMEM((M1, 64), jnp.float32),        # a5: conv4 (raw)
            pltpu.VMEM((M2 + 16, 64), jnp.float32),   # a6: pool2 (+relu)
            pltpu.VMEM((M2, 64), jnp.float32),        # a7: conv5 + relu
        ],
        # ~2.4 MiB of lane-padded scratch per image: 48 MiB keeps headroom on
        # v7x (64 MiB physical VMEM) and is well above v5e's 16 MiB default.
        compiler_params=pltpu.CompilerParams(
            vmem_limit_bytes=48 * 1024 * 1024),
    )(x2, params["w1"], params["b1"], params["w2"], params["b2"],
      params["w3"], params["b3"], params["w4"], params["b4"],
      params["w5"], params["b5"], params["wd1"], params["bd1"],
      params["wd2"], params["bd2"])


if __name__ == "__main__":
    key = jax.random.PRNGKey(0)
    k_x, k_p = jax.random.split(key)
    # Smallest shape consistent with the module: the final view(-1, 4*4*64)
    # forces a 32x32 spatial input with 3 depth slices.
    x = jax.random.normal(k_x, (2, 3, 32, 32), dtype=jnp.float32)
    params = init_params(k_p)

    out = jax.block_until_ready(jax.jit(cnn_forward)(x, params))
    assert out.shape == (2, 1), out.shape
    assert bool(jnp.all(jnp.isfinite(out)))
    assert bool(jnp.all((out >= 0.0) & (out <= 1.0)))
    print("KERNEL_OK")
</pallas_src>

<mosaic_0001>
module attributes {stable_mosaic.version = 11 : i64} {
  func.func @_cnn_kernel(%arg0: memref<2120x3xf32, #tpu.memory_space<vmem>>, %arg1: memref<9x3x32xf32, #tpu.memory_space<vmem>>, %arg2: memref<1x32xf32, #tpu.memory_space<vmem>>, %arg3: memref<9x32x32xbf16, #tpu.memory_space<vmem>>, %arg4: memref<1x32xf32, #tpu.memory_space<vmem>>, %arg5: memref<9x32x64xbf16, #tpu.memory_space<vmem>>, %arg6: memref<1x64xf32, #tpu.memory_space<vmem>>, %arg7: memref<9x64x64xbf16, #tpu.memory_space<vmem>>, %arg8: memref<1x64xf32, #tpu.memory_space<vmem>>, %arg9: memref<4x64x64xbf16, #tpu.memory_space<vmem>>, %arg10: memref<1x64xf32, #tpu.memory_space<vmem>>, %arg11: memref<16x64x256xbf16, #tpu.memory_space<vmem>>, %arg12: memref<1x256xf32, #tpu.memory_space<vmem>>, %arg13: memref<1x256xf32, #tpu.memory_space<vmem>>, %arg14: memref<1x1xf32, #tpu.memory_space<vmem>>, %arg15: memref<2x1xf32, #tpu.memory_space<vmem>>, %arg16: memref<2120x32xf32, #tpu.memory_space<vmem>>, %arg17: memref<2048x32xf32, #tpu.memory_space<vmem>>, %arg18: memref<552x32xf32, #tpu.memory_space<vmem>>, %arg19: memref<552x64xf32, #tpu.memory_space<vmem>>, %arg20: memref<512x64xf32, #tpu.memory_space<vmem>>, %arg21: memref<144x64xf32, #tpu.memory_space<vmem>>, %arg22: memref<128x64xf32, #tpu.memory_space<vmem>>) attributes {dimension_semantics = [], scalar_prefetch = 0 : i64, scratch_operands = 7 : i64, tpu.core_type = #tpu.core_type<tc>} {
    %cst = arith.constant 0.000000e+00 : f32
    %0 = vector.broadcast %cst : f32 to vector<72x32xf32>
    %c2048 = arith.constant 2048 : index
    %c0 = arith.constant 0 : index
    %1 = vector.load %arg16[%c2048, %c0] : memref<2120x32xf32, #tpu.memory_space<vmem>>, vector<72x32xf32>
    tpu.vector_store %arg16[%c2048, %c0], %0 {strides = array<i32>} : memref<2120x32xf32, #tpu.memory_space<vmem>>, vector<72x32xf32>,
    %cst_0 = arith.constant 0.000000e+00 : f32
    %2 = vector.broadcast %cst_0 : f32 to vector<40x32xf32>
    %c512 = arith.constant 512 : index
    %c0_1 = arith.constant 0 : index
    %3 = vector.load %arg18[%c512, %c0_1] : memref<552x32xf32, #tpu.memory_space<vmem>>, vector<40x32xf32>
    tpu.vector_store %arg18[%c512, %c0_1], %2 {strides = array<i32>} : memref<552x32xf32, #tpu.memory_space<vmem>>, vector<40x32xf32>,
    %cst_2 = arith.constant 0.000000e+00 : f32
    %4 = vector.broadcast %cst_2 : f32 to vector<40x64xf32>
    %c512_3 = arith.constant 512 : index
    %c0_4 = arith.constant 0 : index
    %5 = vector.load %arg19[%c512_3, %c0_4] : memref<552x64xf32, #tpu.memory_space<vmem>>, vector<40x64xf32>
    tpu.vector_store %arg19[%c512_3, %c0_4], %4 {strides = array<i32>} : memref<552x64xf32, #tpu.memory_space<vmem>>, vector<40x64xf32>,
    %cst_5 = arith.constant 0.000000e+00 : f32
    %6 = vector.broadcast %cst_5 : f32 to vector<16x64xf32>
    %c128 = arith.constant 128 : index
    %c0_6 = arith.constant 0 : index
    %7 = vector.load %arg21[%c128, %c0_6] : memref<144x64xf32, #tpu.memory_space<vmem>>, vector<16x64xf32>
    tpu.vector_store %arg21[%c128, %c0_6], %6 {strides = array<i32>} : memref<144x64xf32, #tpu.memory_space<vmem>>, vector<16x64xf32>,
    %c0_i32 = arith.constant 0 : i32
    %c16_i32 = arith.constant 16 : i32
    %8 = arith.addi %c0_i32, %c16_i32 : i32
    %c1_i32 = arith.constant 1 : i32
    scf.for %arg23 = %c0_i32 to %8 step %c1_i32  : i32 {
      %c128_i32 = arith.constant 128 : i32
      %768 = arith.muli %arg23, %c128_i32 : i32
      %769 = tpu.assume_multiple %768, 128 : i32
      %cst_493 = arith.constant 0.000000e+00 : f32
      %770 = vector.broadcast %cst_493 : f32 to vector<128x32xf32>
      %c0_i32_494 = arith.constant 0 : i32
      %771 = arith.addi %769, %c0_i32_494 : i32
      %772 = arith.index_cast %771 : i32 to index
      %c0_495 = arith.constant 0 : index
      %773 = vector.load %arg0[%772, %c0_495] : memref<2120x3xf32, #tpu.memory_space<vmem>>, vector<128x3xf32>
      %c0_496 = arith.constant 0 : index
      %c0_497 = arith.constant 0 : index
      %c0_498 = arith.constant 0 : index
      %774 = vector.load %arg1[%c0_496, %c0_497, %c0_498] : memref<9x3x32xf32, #tpu.memory_space<vmem>>, vector<1x3x32xf32>
      %775 = vector.shape_cast %774 : vector<1x3x32xf32> to vector<3x32xf32>
      %cst_499 = arith.constant dense<0.000000e+00> : vector<128x32xf32>
      %776 = tpu.matmul %773, %775, %cst_499 {dimension_numbers = #tpu.dot_dimension_numbers<[1], [0], [0], [1], [0, 0, 1, 1], [], []>} : vector<128x3xf32>, vector<3x32xf32>, vector<128x32xf32> -> vector<128x32xf32>
      %777 = arith.addf %770, %776 : vector<128x32xf32>
      %c1_i32_500 = arith.constant 1 : i32
      %778 = arith.addi %769, %c1_i32_500 : i32
      %779 = arith.index_cast %778 : i32 to index
      %c0_501 = arith.constant 0 : index
      %780 = vector.load %arg0[%779, %c0_501] : memref<2120x3xf32, #tpu.memory_space<vmem>>, vector<128x3xf32>
      %c1_502 = arith.constant 1 : index
      %c0_503 = arith.constant 0 : index
      %c0_504 = arith.constant 0 : index
      %781 = vector.load %arg1[%c1_502, %c0_503, %c0_504] : memref<9x3x32xf32, #tpu.memory_space<vmem>>, vector<1x3x32xf32>
      %782 = vector.shape_cast %781 : vector<1x3x32xf32> to vector<3x32xf32>
      %cst_505 = arith.constant dense<0.000000e+00> : vector<128x32xf32>
      %783 = tpu.matmul %780, %782, %cst_505 {dimension_numbers = #tpu.dot_dimension_numbers<[1], [0], [0], [1], [0, 0, 1, 1], [], []>} : vector<128x3xf32>, vector<3x32xf32>, vector<128x32xf32> -> vector<128x32xf32>
      %784 = arith.addf %777, %783 : vector<128x32xf32>
      %c2_i32_506 = arith.constant 2 : i32
      %785 = arith.addi %769, %c2_i32_506 : i32
      %786 = arith.index_cast %785 : i32 to index
      %c0_507 = arith.constant 0 : index
      %787 = vector.load %arg0[%786, %c0_507] : memref<2120x3xf32, #tpu.memory_space<vmem>>, vector<128x3xf32>
      %c2_508 = arith.constant 2 : index
      %c0_509 = arith.constant 0 : index
      %c0_510 = arith.constant 0 : index
      %788 = vector.load %arg1[%c2_508, %c0_509, %c0_510] : memref<9x3x32xf32, #tpu.memory_space<vmem>>, vector<1x3x32xf32>
      %789 = vector.shape_cast %788 : vector<1x3x32xf32> to vector<3x32xf32>
      %cst_511 = arith.constant dense<0.000000e+00> : vector<128x32xf32>
      %790 = tpu.matmul %787, %789, %cst_511 {dimension_numbers = #tpu.dot_dimension_numbers<[1], [0], [0], [1], [0, 0, 1, 1], [], []>} : vector<128x3xf32>, vector<3x32xf32>, vector<128x32xf32> -> vector<128x32xf32>
      %791 = arith.addf %784, %790 : vector<128x32xf32>
      %c32_i32 = arith.constant 32 : i32
      %792 = arith.addi %769, %c32_i32 : i32
      %793 = arith.index_cast %792 : i32 to index
      %c0_512 = arith.constant 0 : index
      %794 = vector.load %arg0[%793, %c0_512] : memref<2120x3xf32, #tpu.memory_space<vmem>>, vector<128x3xf32>
      %c3_513 = arith.constant 3 : index
      %c0_514 = arith.constant 0 : index
      %c0_515 = arith.constant 0 : index
      %795 = vector.load %arg1[%c3_513, %c0_514, %c0_515] : memref<9x3x32xf32, #tpu.memory_space<vmem>>, vector<1x3x32xf32>
      %796 = vector.shape_cast %795 : vector<1x3x32xf32> to vector<3x32xf32>
      %cst_516 = arith.constant dense<0.000000e+00> : vector<128x32xf32>
      %797 = tpu.matmul %794, %796, %cst_516 {dimension_numbers = #tpu.dot_dimension_numbers<[1], [0], [0], [1], [0, 0, 1, 1], [], []>} : vector<128x3xf32>, vector<3x32xf32>, vector<128x32xf32> -> vector<128x32xf32>
      %798 = arith.addf %791, %797 : vector<128x32xf32>
      %c33_i32 = arith.constant 33 : i32
      %799 = arith.addi %769, %c33_i32 : i32
      %800 = arith.index_cast %799 : i32 to index
      %c0_517 = arith.constant 0 : index
      %801 = vector.load %arg0[%800, %c0_517] : memref<2120x3xf32, #tpu.memory_space<vmem>>, vector<128x3xf32>
      %c4_518 = arith.constant 4 : index
      %c0_519 = arith.constant 0 : index
      %c0_520 = arith.constant 0 : index
      %802 = vector.load %arg1[%c4_518, %c0_519, %c0_520] : memref<9x3x32xf32, #tpu.memory_space<vmem>>, vector<1x3x32xf32>
      %803 = vector.shape_cast %802 : vector<1x3x32xf32> to vector<3x32xf32>
      %cst_521 = arith.constant dense<0.000000e+00> : vector<128x32xf32>
      %804 = tpu.matmul %801, %803, %cst_521 {dimension_numbers = #tpu.dot_dimension_numbers<[1], [0], [0], [1], [0, 0, 1, 1], [], []>} : vector<128x3xf32>, vector<3x32xf32>, vector<128x32xf32> -> vector<128x32xf32>
      %805 = arith.addf %798, %804 : vector<128x32xf32>
      %c34_i32 = arith.constant 34 : i32
      %806 = arith.addi %769, %c34_i32 : i32
      %807 = arith.index_cast %806 : i32 to index
      %c0_522 = arith.constant 0 : index
      %808 = vector.load %arg0[%807, %c0_522] : memref<2120x3xf32, #tpu.memory_space<vmem>>, vector<128x3xf32>
      %c5_523 = arith.constant 5 : index
      %c0_524 = arith.constant 0 : index
      %c0_525 = arith.constant 0 : index
      %809 = vector.load %arg1[%c5_523, %c0_524, %c0_525] : memref<9x3x32xf32, #tpu.memory_space<vmem>>, vector<1x3x32xf32>
      %810 = vector.shape_cast %809 : vector<1x3x32xf32> to vector<3x32xf32>
      %cst_526 = arith.constant dense<0.000000e+00> : vector<128x32xf32>
      %811 = tpu.matmul %808, %810, %cst_526 {dimension_numbers = #tpu.dot_dimension_numbers<[1], [0], [0], [1], [0, 0, 1, 1], [], []>} : vector<128x3xf32>, vector<3x32xf32>, vector<128x32xf32> -> vector<128x32xf32>
      %812 = arith.addf %805, %811 : vector<128x32xf32>
      %c64_i32 = arith.constant 64 : i32
      %813 = arith.addi %769, %c64_i32 : i32
      %814 = arith.index_cast %813 : i32 to index
      %c0_527 = arith.constant 0 : index
      %815 = vector.load %arg0[%814, %c0_527] : memref<2120x3xf32, #tpu.memory_space<vmem>>, vector<128x3xf32>
      %c6_528 = arith.constant 6 : index
      %c0_529 = arith.constant 0 : index
      %c0_530 = arith.constant 0 : index
      %816 = vector.load %arg1[%c6_528, %c0_529, %c0_530] : memref<9x3x32xf32, #tpu.memory_space<vmem>>, vector<1x3x32xf32>
      %817 = vector.shape_cast %816 : vector<1x3x32xf32> to vector<3x32xf32>
      %cst_531 = arith.constant dense<0.000000e+00> : vector<128x32xf32>
      %818 = tpu.matmul %815, %817, %cst_531 {dimension_numbers = #tpu.dot_dimension_numbers<[1], [0], [0], [1], [0, 0, 1, 1], [], []>} : vector<128x3xf32>, vector<3x32xf32>, vector<128x32xf32> -> vector<128x32xf32>
      %819 = arith.addf %812, %818 : vector<128x32xf32>
      %c65_i32 = arith.constant 65 : i32
      %820 = arith.addi %769, %c65_i32 : i32
      %821 = arith.index_cast %820 : i32 to index
      %c0_532 = arith.constant 0 : index
      %822 = vector.load %arg0[%821, %c0_532] : memref<2120x3xf32, #tpu.memory_space<vmem>>, vector<128x3xf32>
      %c7_533 = arith.constant 7 : index
      %c0_534 = arith.constant 0 : index
      %c0_535 = arith.constant 0 : index
      %823 = vector.load %arg1[%c7_533, %c0_534, %c0_535] : memref<9x3x32xf32, #tpu.memory_space<vmem>>, vector<1x3x32xf32>
      %824 = vector.shape_cast %823 : vector<1x3x32xf32> to vector<3x32xf32>
      %cst_536 = arith.constant dense<0.000000e+00> : vector<128x32xf32>
      %825 = tpu.matmul %822, %824, %cst_536 {dimension_numbers = #tpu.dot_dimension_numbers<[1], [0], [0], [1], [0, 0, 1, 1], [], []>} : vector<128x3xf32>, vector<3x32xf32>, vector<128x32xf32> -> vector<128x32xf32>
      %826 = arith.addf %819, %825 : vector<128x32xf32>
      %c66_i32 = arith.constant 66 : i32
      %827 = arith.addi %769, %c66_i32 : i32
      %828 = arith.index_cast %827 : i32 to index
      %c0_537 = arith.constant 0 : index
      %829 = vector.load %arg0[%828, %c0_537] : memref<2120x3xf32, #tpu.memory_space<vmem>>, vector<128x3xf32>
      %c8_538 = arith.constant 8 : index
      %c0_539 = arith.constant 0 : index
      %c0_540 = arith.constant 0 : index
      %830 = vector.load %arg1[%c8_538, %c0_539, %c0_540] : memref<9x3x32xf32, #tpu.memory_space<vmem>>, vector<1x3x32xf32>
      %831 = vector.shape_cast %830 : vector<1x3x32xf32> to vector<3x32xf32>
      %cst_541 = arith.constant dense<0.000000e+00> : vector<128x32xf32>
      %832 = tpu.matmul %829, %831, %cst_541 {dimension_numbers = #tpu.dot_dimension_numbers<[1], [0], [0], [1], [0, 0, 1, 1], [], []>} : vector<128x3xf32>, vector<3x32xf32>, vector<128x32xf32> -> vector<128x32xf32>
      %833 = arith.addf %826, %832 : vector<128x32xf32>
      %c0_542 = arith.constant 0 : index
      %c0_543 = arith.constant 0 : index
      %834 = vector.load %arg2[%c0_542, %c0_543] : memref<1x32xf32, #tpu.memory_space<vmem>>, vector<1x32xf32>
      %835 = vector.broadcast %834 : vector<1x32xf32> to vector<128x32xf32>
      %836 = arith.addf %833, %835 : vector<128x32xf32>
      %cst_544 = arith.constant 0.000000e+00 : f32
      %837 = vector.broadcast %cst_544 : f32 to vector<128x32xf32>
      %838 = arith.maximumf %836, %837 : vector<128x32xf32>
      %839 = arith.index_cast %769 : i32 to index
      %c0_545 = arith.constant 0 : index
      %840 = vector.load %arg16[%839, %c0_545] : memref<2120x32xf32, #tpu.memory_space<vmem>>, vector<128x32xf32>
      tpu.vector_store %arg16[%839, %c0_545], %838 {strides = array<i32>} : memref<2120x32xf32, #tpu.memory_space<vmem>>, vector<128x32xf32>,
    }
    %c16_i32_7 = arith.constant 16 : i32
    %cst_8 = arith.constant 0.000000e+00 : f32
    %9 = vector.broadcast %cst_8 : f32 to vector<1x32xf32>
    %cst_9 = arith.constant 0.000000e+00 : f32
    %10 = vector.broadcast %cst_9 : f32 to vector<1x32xf32>
    %c0_i32_10 = arith.constant 0 : i32
    %c16_i32_11 = arith.constant 16 : i32
    %11 = arith.addi %c0_i32_10, %c16_i32_11 : i32
    %c1_i32_12 = arith.constant 1 : i32
    %12:2 = scf.for %arg23 = %c0_i32_10 to %11 step %c1_i32_12 iter_args(%arg24 = %9, %arg25 = %10) -> (vector<1x32xf32>, vector<1x32xf32>)  : i32 {
      %c128_i32 = arith.constant 128 : i32
      %768 = arith.muli %arg23, %c128_i32 : i32
      %769 = tpu.assume_multiple %768, 128 : i32
      %cst_493 = arith.constant 0.000000e+00 : f32
      %770 = vector.broadcast %cst_493 : f32 to vector<128x32xf32>
      %c0_i32_494 = arith.constant 0 : i32
      %771 = arith.addi %769, %c0_i32_494 : i32
      %772 = arith.index_cast %771 : i32 to index
      %c0_495 = arith.constant 0 : index
      %773 = vector.load %arg16[%772, %c0_495] : memref<2120x32xf32, #tpu.memory_space<vmem>>, vector<128x32xf32>
      %774 = arith.truncf %773 : vector<128x32xf32> to vector<128x32xbf16>
      %c0_496 = arith.constant 0 : index
      %c0_497 = arith.constant 0 : index
      %c0_498 = arith.constant 0 : index
      %775 = vector.load %arg3[%c0_496, %c0_497, %c0_498] : memref<9x32x32xbf16, #tpu.memory_space<vmem>>, vector<1x32x32xbf16>
      %776 = vector.shape_cast %775 : vector<1x32x32xbf16> to vector<32x32xbf16>
      %cst_499 = arith.constant dense<0.000000e+00> : vector<128x32xf32>
      %777 = tpu.matmul %774, %776, %cst_499 {dimension_numbers = #tpu.dot_dimension_numbers<[1], [0], [0], [1], [0, 0, 1, 1], [], []>} : vector<128x32xbf16>, vector<32x32xbf16>, vector<128x32xf32> -> vector<128x32xf32>
      %778 = arith.addf %770, %777 : vector<128x32xf32>
      %c1_i32_500 = arith.constant 1 : i32
      %779 = arith.addi %769, %c1_i32_500 : i32
      %780 = arith.index_cast %779 : i32 to index
      %c0_501 = arith.constant 0 : index
      %781 = vector.load %arg16[%780, %c0_501] : memref<2120x32xf32, #tpu.memory_space<vmem>>, vector<128x32xf32>
      %782 = arith.truncf %781 : vector<128x32xf32> to vector<128x32xbf16>
      %c1_502 = arith.constant 1 : index
      %c0_503 = arith.constant 0 : index
      %c0_504 = arith.constant 0 : index
      %783 = vector.load %arg3[%c1_502, %c0_503, %c0_504] : memref<9x32x32xbf16, #tpu.memory_space<vmem>>, vector<1x32x32xbf16>
      %784 = vector.shape_cast %783 : vector<1x32x32xbf16> to vector<32x32xbf16>
      %cst_505 = arith.constant dense<0.000000e+00> : vector<128x32xf32>
      %785 = tpu.matmul %782, %784, %cst_505 {dimension_numbers = #tpu.dot_dimension_numbers<[1], [0], [0], [1], [0, 0, 1, 1], [], []>} : vector<128x32xbf16>, vector<32x32xbf16>, vector<128x32xf32> -> vector<128x32xf32>
      %786 = arith.addf %778, %785 : vector<128x32xf32>
      %c2_i32_506 = arith.constant 2 : i32
      %787 = arith.addi %769, %c2_i32_506 : i32
      %788 = arith.index_cast %787 : i32 to index
      %c0_507 = arith.constant 0 : index
      %789 = vector.load %arg16[%788, %c0_507] : memref<2120x32xf32, #tpu.memory_space<vmem>>, vector<128x32xf32>
      %790 = arith.truncf %789 : vector<128x32xf32> to vector<128x32xbf16>
      %c2_508 = arith.constant 2 : index
      %c0_509 = arith.constant 0 : index
      %c0_510 = arith.constant 0 : index
      %791 = vector.load %arg3[%c2_508, %c0_509, %c0_510] : memref<9x32x32xbf16, #tpu.memory_space<vmem>>, vector<1x32x32xbf16>
      %792 = vector.shape_cast %791 : vector<1x32x32xbf16> to vector<32x32xbf16>
      %cst_511 = arith.constant dense<0.000000e+00> : vector<128x32xf32>
      %793 = tpu.matmul %790, %792, %cst_511 {dimension_numbers = #tpu.dot_dimension_numbers<[1], [0], [0], [1], [0, 0, 1, 1], [], []>} : vector<128x32xbf16>, vector<32x32xbf16>, vector<128x32xf32> -> vector<128x32xf32>
      %794 = arith.addf %786, %793 : vector<128x32xf32>
      %c32_i32 = arith.constant 32 : i32
      %795 = arith.addi %769, %c32_i32 : i32
      %796 = arith.index_cast %795 : i32 to index
      %c0_512 = arith.constant 0 : index
      %797 = vector.load %arg16[%796, %c0_512] : memref<2120x32xf32, #tpu.memory_space<vmem>>, vector<128x32xf32>
      %798 = arith.truncf %797 : vector<128x32xf32> to vector<128x32xbf16>
      %c3_513 = arith.constant 3 : index
      %c0_514 = arith.constant 0 : index
      %c0_515 = arith.constant 0 : index
      %799 = vector.load %arg3[%c3_513, %c0_514, %c0_515] : memref<9x32x32xbf16, #tpu.memory_space<vmem>>, vector<1x32x32xbf16>
      %800 = vector.shape_cast %799 : vector<1x32x32xbf16> to vector<32x32xbf16>
      %cst_516 = arith.constant dense<0.000000e+00> : vector<128x32xf32>
      %801 = tpu.matmul %798, %800, %cst_516 {dimension_numbers = #tpu.dot_dimension_numbers<[1], [0], [0], [1], [0, 0, 1, 1], [], []>} : vector<128x32xbf16>, vector<32x32xbf16>, vector<128x32xf32> -> vector<128x32xf32>
      %802 = arith.addf %794, %801 : vector<128x32xf32>
      %c33_i32 = arith.constant 33 : i32
      %803 = arith.addi %769, %c33_i32 : i32
      %804 = arith.index_cast %803 : i32 to index
      %c0_517 = arith.constant 0 : index
      %805 = vector.load %arg16[%804, %c0_517] : memref<2120x32xf32, #tpu.memory_space<vmem>>, vector<128x32xf32>
      %806 = arith.truncf %805 : vector<128x32xf32> to vector<128x32xbf16>
      %c4_518 = arith.constant 4 : index
      %c0_519 = arith.constant 0 : index
      %c0_520 = arith.constant 0 : index
      %807 = vector.load %arg3[%c4_518, %c0_519, %c0_520] : memref<9x32x32xbf16, #tpu.memory_space<vmem>>, vector<1x32x32xbf16>
      %808 = vector.shape_cast %807 : vector<1x32x32xbf16> to vector<32x32xbf16>
      %cst_521 = arith.constant dense<0.000000e+00> : vector<128x32xf32>
      %809 = tpu.matmul %806, %808, %cst_521 {dimension_numbers = #tpu.dot_dimension_numbers<[1], [0], [0], [1], [0, 0, 1, 1], [], []>} : vector<128x32xbf16>, vector<32x32xbf16>, vector<128x32xf32> -> vector<128x32xf32>
      %810 = arith.addf %802, %809 : vector<128x32xf32>
      %c34_i32 = arith.constant 34 : i32
      %811 = arith.addi %769, %c34_i32 : i32
      %812 = arith.index_cast %811 : i32 to index
      %c0_522 = arith.constant 0 : index
      %813 = vector.load %arg16[%812, %c0_522] : memref<2120x32xf32, #tpu.memory_space<vmem>>, vector<128x32xf32>
      %814 = arith.truncf %813 : vector<128x32xf32> to vector<128x32xbf16>
      %c5_523 = arith.constant 5 : index
      %c0_524 = arith.constant 0 : index
      %c0_525 = arith.constant 0 : index
      %815 = vector.load %arg3[%c5_523, %c0_524, %c0_525] : memref<9x32x32xbf16, #tpu.memory_space<vmem>>, vector<1x32x32xbf16>
      %816 = vector.shape_cast %815 : vector<1x32x32xbf16> to vector<32x32xbf16>
      %cst_526 = arith.constant dense<0.000000e+00> : vector<128x32xf32>
      %817 = tpu.matmul %814, %816, %cst_526 {dimension_numbers = #tpu.dot_dimension_numbers<[1], [0], [0], [1], [0, 0, 1, 1], [], []>} : vector<128x32xbf16>, vector<32x32xbf16>, vector<128x32xf32> -> vector<128x32xf32>
      %818 = arith.addf %810, %817 : vector<128x32xf32>
      %c64_i32 = arith.constant 64 : i32
      %819 = arith.addi %769, %c64_i32 : i32
      %820 = arith.index_cast %819 : i32 to index
      %c0_527 = arith.constant 0 : index
      %821 = vector.load %arg16[%820, %c0_527] : memref<2120x32xf32, #tpu.memory_space<vmem>>, vector<128x32xf32>
      %822 = arith.truncf %821 : vector<128x32xf32> to vector<128x32xbf16>
      %c6_528 = arith.constant 6 : index
      %c0_529 = arith.constant 0 : index
      %c0_530 = arith.constant 0 : index
      %823 = vector.load %arg3[%c6_528, %c0_529, %c0_530] : memref<9x32x32xbf16, #tpu.memory_space<vmem>>, vector<1x32x32xbf16>
      %824 = vector.shape_cast %823 : vector<1x32x32xbf16> to vector<32x32xbf16>
      %cst_531 = arith.constant dense<0.000000e+00> : vector<128x32xf32>
      %825 = tpu.matmul %822, %824, %cst_531 {dimension_numbers = #tpu.dot_dimension_numbers<[1], [0], [0], [1], [0, 0, 1, 1], [], []>} : vector<128x32xbf16>, vector<32x32xbf16>, vector<128x32xf32> -> vector<128x32xf32>
      %826 = arith.addf %818, %825 : vector<128x32xf32>
      %c65_i32 = arith.constant 65 : i32
      %827 = arith.addi %769, %c65_i32 : i32
      %828 = arith.index_cast %827 : i32 to index
      %c0_532 = arith.constant 0 : index
      %829 = vector.load %arg16[%828, %c0_532] : memref<2120x32xf32, #tpu.memory_space<vmem>>, vector<128x32xf32>
      %830 = arith.truncf %829 : vector<128x32xf32> to vector<128x32xbf16>
      %c7_533 = arith.constant 7 : index
      %c0_534 = arith.constant 0 : index
      %c0_535 = arith.constant 0 : index
      %831 = vector.load %arg3[%c7_533, %c0_534, %c0_535] : memref<9x32x32xbf16, #tpu.memory_space<vmem>>, vector<1x32x32xbf16>
      %832 = vector.shape_cast %831 : vector<1x32x32xbf16> to vector<32x32xbf16>
      %cst_536 = arith.constant dense<0.000000e+00> : vector<128x32xf32>
      %833 = tpu.matmul %830, %832, %cst_536 {dimension_numbers = #tpu.dot_dimension_numbers<[1], [0], [0], [1], [0, 0, 1, 1], [], []>} : vector<128x32xbf16>, vector<32x32xbf16>, vector<128x32xf32> -> vector<128x32xf32>
      %834 = arith.addf %826, %833 : vector<128x32xf32>
      %c66_i32 = arith.constant 66 : i32
      %835 = arith.addi %769, %c66_i32 : i32
      %836 = arith.index_cast %835 : i32 to index
      %c0_537 = arith.constant 0 : index
      %837 = vector.load %arg16[%836, %c0_537] : memref<2120x32xf32, #tpu.memory_space<vmem>>, vector<128x32xf32>
      %838 = arith.truncf %837 : vector<128x32xf32> to vector<128x32xbf16>
      %c8_538 = arith.constant 8 : index
      %c0_539 = arith.constant 0 : index
      %c0_540 = arith.constant 0 : index
      %839 = vector.load %arg3[%c8_538, %c0_539, %c0_540] : memref<9x32x32xbf16, #tpu.memory_space<vmem>>, vector<1x32x32xbf16>
      %840 = vector.shape_cast %839 : vector<1x32x32xbf16> to vector<32x32xbf16>
      %cst_541 = arith.constant dense<0.000000e+00> : vector<128x32xf32>
      %841 = tpu.matmul %838, %840, %cst_541 {dimension_numbers = #tpu.dot_dimension_numbers<[1], [0], [0], [1], [0, 0, 1, 1], [], []>} : vector<128x32xbf16>, vector<32x32xbf16>, vector<128x32xf32> -> vector<128x32xf32>
      %842 = arith.addf %834, %841 : vector<128x32xf32>
      %c0_542 = arith.constant 0 : index
      %c0_543 = arith.constant 0 : index
      %843 = vector.load %arg4[%c0_542, %c0_543] : memref<1x32xf32, #tpu.memory_space<vmem>>, vector<1x32xf32>
      %844 = vector.broadcast %843 : vector<1x32xf32> to vector<128x32xf32>
      %845 = arith.addf %842, %844 : vector<128x32xf32>
      %846 = arith.index_cast %769 : i32 to index
      %c0_544 = arith.constant 0 : index
      %847 = vector.load %arg17[%846, %c0_544] : memref<2048x32xf32, #tpu.memory_space<vmem>>, vector<128x32xf32>
      tpu.vector_store %arg17[%846, %c0_544], %845 {strides = array<i32>} : memref<2048x32xf32, #tpu.memory_space<vmem>>, vector<128x32xf32>,
      %848 = tpu.iota {dimensions = array<i32: 0>} : vector<128x1xi32>
      %849 = vector.broadcast %769 : i32 to vector<128x1xi32>
      %850 = arith.addi %849, %848 : vector<128x1xi32>
      %c5_i32 = arith.constant 5 : i32
      %851 = vector.broadcast %c5_i32 : i32 to vector<128x1xi32>
      %852 = arith.shrsi %850, %851 : vector<128x1xi32>
      %c31_i32 = arith.constant 31 : i32
      %853 = vector.broadcast %c31_i32 : i32 to vector<128x1xi32>
      %854 = arith.andi %852, %853 : vector<128x1xi32>
      %c31_i32_545 = arith.constant 31 : i32
      %855 = vector.broadcast %c31_i32_545 : i32 to vector<128x1xi32>
      %856 = arith.andi %850, %855 : vector<128x1xi32>
      %c28_i32 = arith.constant 28 : i32
      %857 = vector.broadcast %c28_i32 : i32 to vector<128x1xi32>
      %858 = arith.cmpi slt, %854, %857 : vector<128x1xi32>
      %c28_i32_546 = arith.constant 28 : i32
      %859 = vector.broadcast %c28_i32_546 : i32 to vector<128x1xi32>
      %860 = arith.cmpi slt, %856, %859 : vector<128x1xi32>
      %861 = arith.andi %858, %860 : vector<128x1xi1>
      %cst_547 = arith.constant 1.000000e+00 : f32
      %cst_548 = arith.constant 0.000000e+00 : f32
      %862 = vector.broadcast %cst_547 : f32 to vector<128x1xf32>
      %863 = vector.broadcast %cst_548 : f32 to vector<128x1xf32>
      %864 = arith.select %861, %862, %863 : vector<128x1xi1>, vector<128x1xf32>
      %865 = vector.broadcast %864 : vector<128x1xf32> to vector<128x32xf32>
      %866 = arith.mulf %845, %865 : vector<128x32xf32>
      %cst_549 = arith.constant dense<0.000000e+00> : vector<32xf32>
      %867 = vector.multi_reduction <add>, %866, %cst_549 [0] : vector<128x32xf32> to vector<32xf32>
      %868 = vector.shape_cast %867 : vector<32xf32> to vector<1x32xf32>
      %869 = arith.addf %arg24, %868 : vector<1x32xf32>
      %870 = arith.mulf %845, %845 : vector<128x32xf32>
      %871 = vector.broadcast %864 : vector<128x1xf32> to vector<128x32xf32>
      %872 = arith.mulf %870, %871 : vector<128x32xf32>
      %cst_550 = arith.constant dense<0.000000e+00> : vector<32xf32>
      %873 = vector.multi_reduction <add>, %872, %cst_550 [0] : vector<128x32xf32> to vector<32xf32>
      %874 = vector.shape_cast %873 : vector<32xf32> to vector<1x32xf32>
      %875 = arith.addf %arg25, %874 : vector<1x32xf32>
      scf.yield %869, %875 : vector<1x32xf32>, vector<1x32xf32>
    }
    %c16_i32_13 = arith.constant 16 : i32
    %cst_14 = arith.constant 1.568000e+03 : f32
    %13 = vector.broadcast %cst_14 : f32 to vector<1x32xf32>
    %14 = arith.divf %12#0, %13 : vector<1x32xf32>
    %cst_15 = arith.constant 1.568000e+03 : f32
    %15 = vector.broadcast %cst_15 : f32 to vector<1x32xf32>
    %16 = arith.divf %12#1, %15 : vector<1x32xf32>
    %17 = arith.mulf %14, %14 : vector<1x32xf32>
    %18 = arith.subf %16, %17 : vector<1x32xf32>
    %cst_16 = arith.constant 0.000000e+00 : f32
    %19 = vector.broadcast %cst_16 : f32 to vector<1x32xf32>
    %20 = arith.maximumf %18, %19 : vector<1x32xf32>
    %cst_17 = arith.constant 9.99999974E-6 : f32
    %21 = vector.broadcast %cst_17 : f32 to vector<1x32xf32>
    %22 = arith.addf %20, %21 : vector<1x32xf32>
    %23 = math.rsqrt %22 : vector<1x32xf32>
    %c0_18 = arith.constant 0 : index
    %c0_19 = arith.constant 0 : index
    %24 = tpu.strided_load %arg17[%c0_18, %c0_19] {strides = array<i32: 2, 1>} : memref<2048x32xf32, #tpu.memory_space<vmem>>, vector<16x32xf32>
    %c1 = arith.constant 1 : index
    %c0_20 = arith.constant 0 : index
    %25 = tpu.strided_load %arg17[%c1, %c0_20] {strides = array<i32: 2, 1>} : memref<2048x32xf32, #tpu.memory_space<vmem>>, vector<16x32xf32>
    %26 = arith.maximumf %24, %25 : vector<16x32xf32>
    %c32 = arith.constant 32 : index
    %c0_21 = arith.constant 0 : index
    %27 = tpu.strided_load %arg17[%c32, %c0_21] {strides = array<i32: 2, 1>} : memref<2048x32xf32, #tpu.memory_space<vmem>>, vector<16x32xf32>
    %c33 = arith.constant 33 : index
    %c0_22 = arith.constant 0 : index
    %28 = tpu.strided_load %arg17[%c33, %c0_22] {strides = array<i32: 2, 1>} : memref<2048x32xf32, #tpu.memory_space<vmem>>, vector<16x32xf32>
    %29 = arith.maximumf %27, %28 : vector<16x32xf32>
    %30 = arith.maximumf %26, %29 : vector<16x32xf32>
    %31 = vector.broadcast %14 : vector<1x32xf32> to vector<16x32xf32>
    %32 = arith.subf %30, %31 : vector<16x32xf32>
    %33 = vector.broadcast %23 : vector<1x32xf32> to vector<16x32xf32>
    %34 = arith.mulf %32, %33 : vector<16x32xf32>
    %cst_23 = arith.constant 0.000000e+00 : f32
    %35 = vector.broadcast %cst_23 : f32 to vector<16x32xf32>
    %36 = arith.maximumf %34, %35 : vector<16x32xf32>
    %c0_24 = arith.constant 0 : index
    %c0_25 = arith.constant 0 : index
    %37 = vector.load %arg18[%c0_24, %c0_25] : memref<552x32xf32, #tpu.memory_space<vmem>>, vector<16x32xf32>
    tpu.vector_store %arg18[%c0_24, %c0_25], %36 {strides = array<i32>} : memref<552x32xf32, #tpu.memory_space<vmem>>, vector<16x32xf32>,
    %c64 = arith.constant 64 : index
    %c0_26 = arith.constant 0 : index
    %38 = tpu.strided_load %arg17[%c64, %c0_26] {strides = array<i32: 2, 1>} : memref<2048x32xf32, #tpu.memory_space<vmem>>, vector<16x32xf32>
    %c65 = arith.constant 65 : index
    %c0_27 = arith.constant 0 : index
    %39 = tpu.strided_load %arg17[%c65, %c0_27] {strides = array<i32: 2, 1>} : memref<2048x32xf32, #tpu.memory_space<vmem>>, vector<16x32xf32>
    %40 = arith.maximumf %38, %39 : vector<16x32xf32>
    %c96 = arith.constant 96 : index
    %c0_28 = arith.constant 0 : index
    %41 = tpu.strided_load %arg17[%c96, %c0_28] {strides = array<i32: 2, 1>} : memref<2048x32xf32, #tpu.memory_space<vmem>>, vector<16x32xf32>
    %c97 = arith.constant 97 : index
    %c0_29 = arith.constant 0 : index
    %42 = tpu.strided_load %arg17[%c97, %c0_29] {strides = array<i32: 2, 1>} : memref<2048x32xf32, #tpu.memory_space<vmem>>, vector<16x32xf32>
    %43 = arith.maximumf %41, %42 : vector<16x32xf32>
    %44 = arith.maximumf %40, %43 : vector<16x32xf32>
    %45 = vector.broadcast %14 : vector<1x32xf32> to vector<16x32xf32>
    %46 = arith.subf %44, %45 : vector<16x32xf32>
    %47 = vector.broadcast %23 : vector<1x32xf32> to vector<16x32xf32>
    %48 = arith.mulf %46, %47 : vector<16x32xf32>
    %cst_30 = arith.constant 0.000000e+00 : f32
    %49 = vector.broadcast %cst_30 : f32 to vector<16x32xf32>
    %50 = arith.maximumf %48, %49 : vector<16x32xf32>
    %c16 = arith.constant 16 : index
    %c0_31 = arith.constant 0 : index
    %51 = vector.load %arg18[%c16, %c0_31] : memref<552x32xf32, #tpu.memory_space<vmem>>, vector<16x32xf32>
    tpu.vector_store %arg18[%c16, %c0_31], %50 {strides = array<i32>} : memref<552x32xf32, #tpu.memory_space<vmem>>, vector<16x32xf32>,
    %c128_32 = arith.constant 128 : index
    %c0_33 = arith.constant 0 : index
    %52 = tpu.strided_load %arg17[%c128_32, %c0_33] {strides = array<i32: 2, 1>} : memref<2048x32xf32, #tpu.memory_space<vmem>>, vector<16x32xf32>
    %c129 = arith.constant 129 : index
    %c0_34 = arith.constant 0 : index
    %53 = tpu.strided_load %arg17[%c129, %c0_34] {strides = array<i32: 2, 1>} : memref<2048x32xf32, #tpu.memory_space<vmem>>, vector<16x32xf32>
    %54 = arith.maximumf %52, %53 : vector<16x32xf32>
    %c160 = arith.constant 160 : index
    %c0_35 = arith.constant 0 : index
    %55 = tpu.strided_load %arg17[%c160, %c0_35] {strides = array<i32: 2, 1>} : memref<2048x32xf32, #tpu.memory_space<vmem>>, vector<16x32xf32>
    %c161 = arith.constant 161 : index
    %c0_36 = arith.constant 0 : index
    %56 = tpu.strided_load %arg17[%c161, %c0_36] {strides = array<i32: 2, 1>} : memref<2048x32xf32, #tpu.memory_space<vmem>>, vector<16x32xf32>
    %57 = arith.maximumf %55, %56 : vector<16x32xf32>
    %58 = arith.maximumf %54, %57 : vector<16x32xf32>
    %59 = vector.broadcast %14 : vector<1x32xf32> to vector<16x32xf32>
    %60 = arith.subf %58, %59 : vector<16x32xf32>
    %61 = vector.broadcast %23 : vector<1x32xf32> to vector<16x32xf32>
    %62 = arith.mulf %60, %61 : vector<16x32xf32>
    %cst_37 = arith.constant 0.000000e+00 : f32
    %63 = vector.broadcast %cst_37 : f32 to vector<16x32xf32>
    %64 = arith.maximumf %62, %63 : vector<16x32xf32>
    %c32_38 = arith.constant 32 : index
    %c0_39 = arith.constant 0 : index
    %65 = vector.load %arg18[%c32_38, %c0_39] : memref<552x32xf32, #tpu.memory_space<vmem>>, vector<16x32xf32>
    tpu.vector_store %arg18[%c32_38, %c0_39], %64 {strides = array<i32>} : memref<552x32xf32, #tpu.memory_space<vmem>>, vector<16x32xf32>,
    %c192 = arith.constant 192 : index
    %c0_40 = arith.constant 0 : index
    %66 = tpu.strided_load %arg17[%c192, %c0_40] {strides = array<i32: 2, 1>} : memref<2048x32xf32, #tpu.memory_space<vmem>>, vector<16x32xf32>
    %c193 = arith.constant 193 : index
    %c0_41 = arith.constant 0 : index
    %67 = tpu.strided_load %arg17[%c193, %c0_41] {strides = array<i32: 2, 1>} : memref<2048x32xf32, #tpu.memory_space<vmem>>, vector<16x32xf32>
    %68 = arith.maximumf %66, %67 : vector<16x32xf32>
    %c224 = arith.constant 224 : index
    %c0_42 = arith.constant 0 : index
    %69 = tpu.strided_load %arg17[%c224, %c0_42] {strides = array<i32: 2, 1>} : memref<2048x32xf32, #tpu.memory_space<vmem>>, vector<16x32xf32>
    %c225 = arith.constant 225 : index
    %c0_43 = arith.constant 0 : index
    %70 = tpu.strided_load %arg17[%c225, %c0_43] {strides = array<i32: 2, 1>} : memref<2048x32xf32, #tpu.memory_space<vmem>>, vector<16x32xf32>
    %71 = arith.maximumf %69, %70 : vector<16x32xf32>
    %72 = arith.maximumf %68, %71 : vector<16x32xf32>
    %73 = vector.broadcast %14 : vector<1x32xf32> to vector<16x32xf32>
    %74 = arith.subf %72, %73 : vector<16x32xf32>
    %75 = vector.broadcast %23 : vector<1x32xf32> to vector<16x32xf32>
    %76 = arith.mulf %74, %75 : vector<16x32xf32>
    %cst_44 = arith.constant 0.000000e+00 : f32
    %77 = vector.broadcast %cst_44 : f32 to vector<16x32xf32>
    %78 = arith.maximumf %76, %77 : vector<16x32xf32>
    %c48 = arith.constant 48 : index
    %c0_45 = arith.constant 0 : index
    %79 = vector.load %arg18[%c48, %c0_45] : memref<552x32xf32, #tpu.memory_space<vmem>>, vector<16x32xf32>
    tpu.vector_store %arg18[%c48, %c0_45], %78 {strides = array<i32>} : memref<552x32xf32, #tpu.memory_space<vmem>>, vector<16x32xf32>,
    %c256 = arith.constant 256 : index
    %c0_46 = arith.constant 0 : index
    %80 = tpu.strided_load %arg17[%c256, %c0_46] {strides = array<i32: 2, 1>} : memref<2048x32xf32, #tpu.memory_space<vmem>>, vector<16x32xf32>
    %c257 = arith.constant 257 : index
    %c0_47 = arith.constant 0 : index
    %81 = tpu.strided_load %arg17[%c257, %c0_47] {strides = array<i32: 2, 1>} : memref<2048x32xf32, #tpu.memory_space<vmem>>, vector<16x32xf32>
    %82 = arith.maximumf %80, %81 : vector<16x32xf32>
    %c288 = arith.constant 288 : index
    %c0_48 = arith.constant 0 : index
    %83 = tpu.strided_load %arg17[%c288, %c0_48] {strides = array<i32: 2, 1>} : memref<2048x32xf32, #tpu.memory_space<vmem>>, vector<16x32xf32>
    %c289 = arith.constant 289 : index
    %c0_49 = arith.constant 0 : index
    %84 = tpu.strided_load %arg17[%c289, %c0_49] {strides = array<i32: 2, 1>} : memref<2048x32xf32, #tpu.memory_space<vmem>>, vector<16x32xf32>
    %85 = arith.maximumf %83, %84 : vector<16x32xf32>
    %86 = arith.maximumf %82, %85 : vector<16x32xf32>
    %87 = vector.broadcast %14 : vector<1x32xf32> to vector<16x32xf32>
    %88 = arith.subf %86, %87 : vector<16x32xf32>
    %89 = vector.broadcast %23 : vector<1x32xf32> to vector<16x32xf32>
    %90 = arith.mulf %88, %89 : vector<16x32xf32>
    %cst_50 = arith.constant 0.000000e+00 : f32
    %91 = vector.broadcast %cst_50 : f32 to vector<16x32xf32>
    %92 = arith.maximumf %90, %91 : vector<16x32xf32>
    %c64_51 = arith.constant 64 : index
    %c0_52 = arith.constant 0 : index
    %93 = vector.load %arg18[%c64_51, %c0_52] : memref<552x32xf32, #tpu.memory_space<vmem>>, vector<16x32xf32>
    tpu.vector_store %arg18[%c64_51, %c0_52], %92 {strides = array<i32>} : memref<552x32xf32, #tpu.memory_space<vmem>>, vector<16x32xf32>,
    %c320 = arith.constant 320 : index
    %c0_53 = arith.constant 0 : index
    %94 = tpu.strided_load %arg17[%c320, %c0_53] {strides = array<i32: 2, 1>} : memref<2048x32xf32, #tpu.memory_space<vmem>>, vector<16x32xf32>
    %c321 = arith.constant 321 : index
    %c0_54 = arith.constant 0 : index
    %95 = tpu.strided_load %arg17[%c321, %c0_54] {strides = array<i32: 2, 1>} : memref<2048x32xf32, #tpu.memory_space<vmem>>, vector<16x32xf32>
    %96 = arith.maximumf %94, %95 : vector<16x32xf32>
    %c352 = arith.constant 352 : index
    %c0_55 = arith.constant 0 : index
    %97 = tpu.strided_load %arg17[%c352, %c0_55] {strides = array<i32: 2, 1>} : memref<2048x32xf32, #tpu.memory_space<vmem>>, vector<16x32xf32>
    %c353 = arith.constant 353 : index
    %c0_56 = arith.constant 0 : index
    %98 = tpu.strided_load %arg17[%c353, %c0_56] {strides = array<i32: 2, 1>} : memref<2048x32xf32, #tpu.memory_space<vmem>>, vector<16x32xf32>
    %99 = arith.maximumf %97, %98 : vector<16x32xf32>
    %100 = arith.maximumf %96, %99 : vector<16x32xf32>
    %101 = vector.broadcast %14 : vector<1x32xf32> to vector<16x32xf32>
    %102 = arith.subf %100, %101 : vector<16x32xf32>
    %103 = vector.broadcast %23 : vector<1x32xf32> to vector<16x32xf32>
    %104 = arith.mulf %102, %103 : vector<16x32xf32>
    %cst_57 = arith.constant 0.000000e+00 : f32
    %105 = vector.broadcast %cst_57 : f32 to vector<16x32xf32>
    %106 = arith.maximumf %104, %105 : vector<16x32xf32>
    %c80 = arith.constant 80 : index
    %c0_58 = arith.constant 0 : index
    %107 = vector.load %arg18[%c80, %c0_58] : memref<552x32xf32, #tpu.memory_space<vmem>>, vector<16x32xf32>
    tpu.vector_store %arg18[%c80, %c0_58], %106 {strides = array<i32>} : memref<552x32xf32, #tpu.memory_space<vmem>>, vector<16x32xf32>,
    %c384 = arith.constant 384 : index
    %c0_59 = arith.constant 0 : index
    %108 = tpu.strided_load %arg17[%c384, %c0_59] {strides = array<i32: 2, 1>} : memref<2048x32xf32, #tpu.memory_space<vmem>>, vector<16x32xf32>
    %c385 = arith.constant 385 : index
    %c0_60 = arith.constant 0 : index
    %109 = tpu.strided_load %arg17[%c385, %c0_60] {strides = array<i32: 2, 1>} : memref<2048x32xf32, #tpu.memory_space<vmem>>, vector<16x32xf32>
    %110 = arith.maximumf %108, %109 : vector<16x32xf32>
    %c416 = arith.constant 416 : index
    %c0_61 = arith.constant 0 : index
    %111 = tpu.strided_load %arg17[%c416, %c0_61] {strides = array<i32: 2, 1>} : memref<2048x32xf32, #tpu.memory_space<vmem>>, vector<16x32xf32>
    %c417 = arith.constant 417 : index
    %c0_62 = arith.constant 0 : index
    %112 = tpu.strided_load %arg17[%c417, %c0_62] {strides = array<i32: 2, 1>} : memref<2048x32xf32, #tpu.memory_space<vmem>>, vector<16x32xf32>
    %113 = arith.maximumf %111, %112 : vector<16x32xf32>
    %114 = arith.maximumf %110, %113 : vector<16x32xf32>
    %115 = vector.broadcast %14 : vector<1x32xf32> to vector<16x32xf32>
    %116 = arith.subf %114, %115 : vector<16x32xf32>
    %117 = vector.broadcast %23 : vector<1x32xf32> to vector<16x32xf32>
    %118 = arith.mulf %116, %117 : vector<16x32xf32>
    %cst_63 = arith.constant 0.000000e+00 : f32
    %119 = vector.broadcast %cst_63 : f32 to vector<16x32xf32>
    %120 = arith.maximumf %118, %119 : vector<16x32xf32>
    %c96_64 = arith.constant 96 : index
    %c0_65 = arith.constant 0 : index
    %121 = vector.load %arg18[%c96_64, %c0_65] : memref<552x32xf32, #tpu.memory_space<vmem>>, vector<16x32xf32>
    tpu.vector_store %arg18[%c96_64, %c0_65], %120 {strides = array<i32>} : memref<552x32xf32, #tpu.memory_space<vmem>>, vector<16x32xf32>,
    %c448 = arith.constant 448 : index
    %c0_66 = arith.constant 0 : index
    %122 = tpu.strided_load %arg17[%c448, %c0_66] {strides = array<i32: 2, 1>} : memref<2048x32xf32, #tpu.memory_space<vmem>>, vector<16x32xf32>
    %c449 = arith.constant 449 : index
    %c0_67 = arith.constant 0 : index
    %123 = tpu.strided_load %arg17[%c449, %c0_67] {strides = array<i32: 2, 1>} : memref<2048x32xf32, #tpu.memory_space<vmem>>, vector<16x32xf32>
    %124 = arith.maximumf %122, %123 : vector<16x32xf32>
    %c480 = arith.constant 480 : index
    %c0_68 = arith.constant 0 : index
    %125 = tpu.strided_load %arg17[%c480, %c0_68] {strides = array<i32: 2, 1>} : memref<2048x32xf32, #tpu.memory_space<vmem>>, vector<16x32xf32>
    %c481 = arith.constant 481 : index
    %c0_69 = arith.constant 0 : index
    %126 = tpu.strided_load %arg17[%c481, %c0_69] {strides = array<i32: 2, 1>} : memref<2048x32xf32, #tpu.memory_space<vmem>>, vector<16x32xf32>
    %127 = arith.maximumf %125, %126 : vector<16x32xf32>
    %128 = arith.maximumf %124, %127 : vector<16x32xf32>
    %129 = vector.broadcast %14 : vector<1x32xf32> to vector<16x32xf32>
    %130 = arith.subf %128, %129 : vector<16x32xf32>
    %131 = vector.broadcast %23 : vector<1x32xf32> to vector<16x32xf32>
    %132 = arith.mulf %130, %131 : vector<16x32xf32>
    %cst_70 = arith.constant 0.000000e+00 : f32
    %133 = vector.broadcast %cst_70 : f32 to vector<16x32xf32>
    %134 = arith.maximumf %132, %133 : vector<16x32xf32>
    %c112 = arith.constant 112 : index
    %c0_71 = arith.constant 0 : index
    %135 = vector.load %arg18[%c112, %c0_71] : memref<552x32xf32, #tpu.memory_space<vmem>>, vector<16x32xf32>
    tpu.vector_store %arg18[%c112, %c0_71], %134 {strides = array<i32>} : memref<552x32xf32, #tpu.memory_space<vmem>>, vector<16x32xf32>,
    %c512_72 = arith.constant 512 : index
    %c0_73 = arith.constant 0 : index
    %136 = tpu.strided_load %arg17[%c512_72, %c0_73] {strides = array<i32: 2, 1>} : memref<2048x32xf32, #tpu.memory_space<vmem>>, vector<16x32xf32>
    %c513 = arith.constant 513 : index
    %c0_74 = arith.constant 0 : index
    %137 = tpu.strided_load %arg17[%c513, %c0_74] {strides = array<i32: 2, 1>} : memref<2048x32xf32, #tpu.memory_space<vmem>>, vector<16x32xf32>
    %138 = arith.maximumf %136, %137 : vector<16x32xf32>
    %c544 = arith.constant 544 : index
    %c0_75 = arith.constant 0 : index
    %139 = tpu.strided_load %arg17[%c544, %c0_75] {strides = array<i32: 2, 1>} : memref<2048x32xf32, #tpu.memory_space<vmem>>, vector<16x32xf32>
    %c545 = arith.constant 545 : index
    %c0_76 = arith.constant 0 : index
    %140 = tpu.strided_load %arg17[%c545, %c0_76] {strides = array<i32: 2, 1>} : memref<2048x32xf32, #tpu.memory_space<vmem>>, vector<16x32xf32>
    %141 = arith.maximumf %139, %140 : vector<16x32xf32>
    %142 = arith.maximumf %138, %141 : vector<16x32xf32>
    %143 = vector.broadcast %14 : vector<1x32xf32> to vector<16x32xf32>
    %144 = arith.subf %142, %143 : vector<16x32xf32>
    %145 = vector.broadcast %23 : vector<1x32xf32> to vector<16x32xf32>
    %146 = arith.mulf %144, %145 : vector<16x32xf32>
    %cst_77 = arith.constant 0.000000e+00 : f32
    %147 = vector.broadcast %cst_77 : f32 to vector<16x32xf32>
    %148 = arith.maximumf %146, %147 : vector<16x32xf32>
    %c128_78 = arith.constant 128 : index
    %c0_79 = arith.constant 0 : index
    %149 = vector.load %arg18[%c128_78, %c0_79] : memref<552x32xf32, #tpu.memory_space<vmem>>, vector<16x32xf32>
    tpu.vector_store %arg18[%c128_78, %c0_79], %148 {strides = array<i32>} : memref<552x32xf32, #tpu.memory_space<vmem>>, vector<16x32xf32>,
    %c576 = arith.constant 576 : index
    %c0_80 = arith.constant 0 : index
    %150 = tpu.strided_load %arg17[%c576, %c0_80] {strides = array<i32: 2, 1>} : memref<2048x32xf32, #tpu.memory_space<vmem>>, vector<16x32xf32>
    %c577 = arith.constant 577 : index
    %c0_81 = arith.constant 0 : index
    %151 = tpu.strided_load %arg17[%c577, %c0_81] {strides = array<i32: 2, 1>} : memref<2048x32xf32, #tpu.memory_space<vmem>>, vector<16x32xf32>
    %152 = arith.maximumf %150, %151 : vector<16x32xf32>
    %c608 = arith.constant 608 : index
    %c0_82 = arith.constant 0 : index
    %153 = tpu.strided_load %arg17[%c608, %c0_82] {strides = array<i32: 2, 1>} : memref<2048x32xf32, #tpu.memory_space<vmem>>, vector<16x32xf32>
    %c609 = arith.constant 609 : index
    %c0_83 = arith.constant 0 : index
    %154 = tpu.strided_load %arg17[%c609, %c0_83] {strides = array<i32: 2, 1>} : memref<2048x32xf32, #tpu.memory_space<vmem>>, vector<16x32xf32>
    %155 = arith.maximumf %153, %154 : vector<16x32xf32>
    %156 = arith.maximumf %152, %155 : vector<16x32xf32>
    %157 = vector.broadcast %14 : vector<1x32xf32> to vector<16x32xf32>
    %158 = arith.subf %156, %157 : vector<16x32xf32>
    %159 = vector.broadcast %23 : vector<1x32xf32> to vector<16x32xf32>
    %160 = arith.mulf %158, %159 : vector<16x32xf32>
    %cst_84 = arith.constant 0.000000e+00 : f32
    %161 = vector.broadcast %cst_84 : f32 to vector<16x32xf32>
    %162 = arith.maximumf %160, %161 : vector<16x32xf32>
    %c144 = arith.constant 144 : index
    %c0_85 = arith.constant 0 : index
    %163 = vector.load %arg18[%c144, %c0_85] : memref<552x32xf32, #tpu.memory_space<vmem>>, vector<16x32xf32>
    tpu.vector_store %arg18[%c144, %c0_85], %162 {strides = array<i32>} : memref<552x32xf32, #tpu.memory_space<vmem>>, vector<16x32xf32>,
    %c640 = arith.constant 640 : index
    %c0_86 = arith.constant 0 : index
    %164 = tpu.strided_load %arg17[%c640, %c0_86] {strides = array<i32: 2, 1>} : memref<2048x32xf32, #tpu.memory_space<vmem>>, vector<16x32xf32>
    %c641 = arith.constant 641 : index
    %c0_87 = arith.constant 0 : index
    %165 = tpu.strided_load %arg17[%c641, %c0_87] {strides = array<i32: 2, 1>} : memref<2048x32xf32, #tpu.memory_space<vmem>>, vector<16x32xf32>
    %166 = arith.maximumf %164, %165 : vector<16x32xf32>
    %c672 = arith.constant 672 : index
    %c0_88 = arith.constant 0 : index
    %167 = tpu.strided_load %arg17[%c672, %c0_88] {strides = array<i32: 2, 1>} : memref<2048x32xf32, #tpu.memory_space<vmem>>, vector<16x32xf32>
    %c673 = arith.constant 673 : index
    %c0_89 = arith.constant 0 : index
    %168 = tpu.strided_load %arg17[%c673, %c0_89] {strides = array<i32: 2, 1>} : memref<2048x32xf32, #tpu.memory_space<vmem>>, vector<16x32xf32>
    %169 = arith.maximumf %167, %168 : vector<16x32xf32>
    %170 = arith.maximumf %166, %169 : vector<16x32xf32>
    %171 = vector.broadcast %14 : vector<1x32xf32> to vector<16x32xf32>
    %172 = arith.subf %170, %171 : vector<16x32xf32>
    %173 = vector.broadcast %23 : vector<1x32xf32> to vector<16x32xf32>
    %174 = arith.mulf %172, %173 : vector<16x32xf32>
    %cst_90 = arith.constant 0.000000e+00 : f32
    %175 = vector.broadcast %cst_90 : f32 to vector<16x32xf32>
    %176 = arith.maximumf %174, %175 : vector<16x32xf32>
    %c160_91 = arith.constant 160 : index
    %c0_92 = arith.constant 0 : index
    %177 = vector.load %arg18[%c160_91, %c0_92] : memref<552x32xf32, #tpu.memory_space<vmem>>, vector<16x32xf32>
    tpu.vector_store %arg18[%c160_91, %c0_92], %176 {strides = array<i32>} : memref<552x32xf32, #tpu.memory_space<vmem>>, vector<16x32xf32>,
    %c704 = arith.constant 704 : index
    %c0_93 = arith.constant 0 : index
    %178 = tpu.strided_load %arg17[%c704, %c0_93] {strides = array<i32: 2, 1>} : memref<2048x32xf32, #tpu.memory_space<vmem>>, vector<16x32xf32>
    %c705 = arith.constant 705 : index
    %c0_94 = arith.constant 0 : index
    %179 = tpu.strided_load %arg17[%c705, %c0_94] {strides = array<i32: 2, 1>} : memref<2048x32xf32, #tpu.memory_space<vmem>>, vector<16x32xf32>
    %180 = arith.maximumf %178, %179 : vector<16x32xf32>
    %c736 = arith.constant 736 : index
    %c0_95 = arith.constant 0 : index
    %181 = tpu.strided_load %arg17[%c736, %c0_95] {strides = array<i32: 2, 1>} : memref<2048x32xf32, #tpu.memory_space<vmem>>, vector<16x32xf32>
    %c737 = arith.constant 737 : index
    %c0_96 = arith.constant 0 : index
    %182 = tpu.strided_load %arg17[%c737, %c0_96] {strides = array<i32: 2, 1>} : memref<2048x32xf32, #tpu.memory_space<vmem>>, vector<16x32xf32>
    %183 = arith.maximumf %181, %182 : vector<16x32xf32>
    %184 = arith.maximumf %180, %183 : vector<16x32xf32>
    %185 = vector.broadcast %14 : vector<1x32xf32> to vector<16x32xf32>
    %186 = arith.subf %184, %185 : vector<16x32xf32>
    %187 = vector.broadcast %23 : vector<1x32xf32> to vector<16x32xf32>
    %188 = arith.mulf %186, %187 : vector<16x32xf32>
    %cst_97 = arith.constant 0.000000e+00 : f32
    %189 = vector.broadcast %cst_97 : f32 to vector<16x32xf32>
    %190 = arith.maximumf %188, %189 : vector<16x32xf32>
    %c176 = arith.constant 176 : index
    %c0_98 = arith.constant 0 : index
    %191 = vector.load %arg18[%c176, %c0_98] : memref<552x32xf32, #tpu.memory_space<vmem>>, vector<16x32xf32>
    tpu.vector_store %arg18[%c176, %c0_98], %190 {strides = array<i32>} : memref<552x32xf32, #tpu.memory_space<vmem>>, vector<16x32xf32>,
    %c768 = arith.constant 768 : index
    %c0_99 = arith.constant 0 : index
    %192 = tpu.strided_load %arg17[%c768, %c0_99] {strides = array<i32: 2, 1>} : memref<2048x32xf32, #tpu.memory_space<vmem>>, vector<16x32xf32>
    %c769 = arith.constant 769 : index
    %c0_100 = arith.constant 0 : index
    %193 = tpu.strided_load %arg17[%c769, %c0_100] {strides = array<i32: 2, 1>} : memref<2048x32xf32, #tpu.memory_space<vmem>>, vector<16x32xf32>
    %194 = arith.maximumf %192, %193 : vector<16x32xf32>
    %c800 = arith.constant 800 : index
    %c0_101 = arith.constant 0 : index
    %195 = tpu.strided_load %arg17[%c800, %c0_101] {strides = array<i32: 2, 1>} : memref<2048x32xf32, #tpu.memory_space<vmem>>, vector<16x32xf32>
    %c801 = arith.constant 801 : index
    %c0_102 = arith.constant 0 : index
    %196 = tpu.strided_load %arg17[%c801, %c0_102] {strides = array<i32: 2, 1>} : memref<2048x32xf32, #tpu.memory_space<vmem>>, vector<16x32xf32>
    %197 = arith.maximumf %195, %196 : vector<16x32xf32>
    %198 = arith.maximumf %194, %197 : vector<16x32xf32>
    %199 = vector.broadcast %14 : vector<1x32xf32> to vector<16x32xf32>
    %200 = arith.subf %198, %199 : vector<16x32xf32>
    %201 = vector.broadcast %23 : vector<1x32xf32> to vector<16x32xf32>
    %202 = arith.mulf %200, %201 : vector<16x32xf32>
    %cst_103 = arith.constant 0.000000e+00 : f32
    %203 = vector.broadcast %cst_103 : f32 to vector<16x32xf32>
    %204 = arith.maximumf %202, %203 : vector<16x32xf32>
    %c192_104 = arith.constant 192 : index
    %c0_105 = arith.constant 0 : index
    %205 = vector.load %arg18[%c192_104, %c0_105] : memref<552x32xf32, #tpu.memory_space<vmem>>, vector<16x32xf32>
    tpu.vector_store %arg18[%c192_104, %c0_105], %204 {strides = array<i32>} : memref<552x32xf32, #tpu.memory_space<vmem>>, vector<16x32xf32>,
    %c832 = arith.constant 832 : index
    %c0_106 = arith.constant 0 : index
    %206 = tpu.strided_load %arg17[%c832, %c0_106] {strides = array<i32: 2, 1>} : memref<2048x32xf32, #tpu.memory_space<vmem>>, vector<16x32xf32>
    %c833 = arith.constant 833 : index
    %c0_107 = arith.constant 0 : index
    %207 = tpu.strided_load %arg17[%c833, %c0_107] {strides = array<i32: 2, 1>} : memref<2048x32xf32, #tpu.memory_space<vmem>>, vector<16x32xf32>
    %208 = arith.maximumf %206, %207 : vector<16x32xf32>
    %c864 = arith.constant 864 : index
    %c0_108 = arith.constant 0 : index
    %209 = tpu.strided_load %arg17[%c864, %c0_108] {strides = array<i32: 2, 1>} : memref<2048x32xf32, #tpu.memory_space<vmem>>, vector<16x32xf32>
    %c865 = arith.constant 865 : index
    %c0_109 = arith.constant 0 : index
    %210 = tpu.strided_load %arg17[%c865, %c0_109] {strides = array<i32: 2, 1>} : memref<2048x32xf32, #tpu.memory_space<vmem>>, vector<16x32xf32>
    %211 = arith.maximumf %209, %210 : vector<16x32xf32>
    %212 = arith.maximumf %208, %211 : vector<16x32xf32>
    %213 = vector.broadcast %14 : vector<1x32xf32> to vector<16x32xf32>
    %214 = arith.subf %212, %213 : vector<16x32xf32>
    %215 = vector.broadcast %23 : vector<1x32xf32> to vector<16x32xf32>
    %216 = arith.mulf %214, %215 : vector<16x32xf32>
    %cst_110 = arith.constant 0.000000e+00 : f32
    %217 = vector.broadcast %cst_110 : f32 to vector<16x32xf32>
    %218 = arith.maximumf %216, %217 : vector<16x32xf32>
    %c208 = arith.constant 208 : index
    %c0_111 = arith.constant 0 : index
    %219 = vector.load %arg18[%c208, %c0_111] : memref<552x32xf32, #tpu.memory_space<vmem>>, vector<16x32xf32>
    tpu.vector_store %arg18[%c208, %c0_111], %218 {strides = array<i32>} : memref<552x32xf32, #tpu.memory_space<vmem>>, vector<16x32xf32>,
    %c896 = arith.constant 896 : index
    %c0_112 = arith.constant 0 : index
    %220 = tpu.strided_load %arg17[%c896, %c0_112] {strides = array<i32: 2, 1>} : memref<2048x32xf32, #tpu.memory_space<vmem>>, vector<16x32xf32>
    %c897 = arith.constant 897 : index
    %c0_113 = arith.constant 0 : index
    %221 = tpu.strided_load %arg17[%c897, %c0_113] {strides = array<i32: 2, 1>} : memref<2048x32xf32, #tpu.memory_space<vmem>>, vector<16x32xf32>
    %222 = arith.maximumf %220, %221 : vector<16x32xf32>
    %c928 = arith.constant 928 : index
    %c0_114 = arith.constant 0 : index
    %223 = tpu.strided_load %arg17[%c928, %c0_114] {strides = array<i32: 2, 1>} : memref<2048x32xf32, #tpu.memory_space<vmem>>, vector<16x32xf32>
    %c929 = arith.constant 929 : index
    %c0_115 = arith.constant 0 : index
    %224 = tpu.strided_load %arg17[%c929, %c0_115] {strides = array<i32: 2, 1>} : memref<2048x32xf32, #tpu.memory_space<vmem>>, vector<16x32xf32>
    %225 = arith.maximumf %223, %224 : vector<16x32xf32>
    %226 = arith.maximumf %222, %225 : vector<16x32xf32>
    %227 = vector.broadcast %14 : vector<1x32xf32> to vector<16x32xf32>
    %228 = arith.subf %226, %227 : vector<16x32xf32>
    %229 = vector.broadcast %23 : vector<1x32xf32> to vector<16x32xf32>
    %230 = arith.mulf %228, %229 : vector<16x32xf32>
    %cst_116 = arith.constant 0.000000e+00 : f32
    %231 = vector.broadcast %cst_116 : f32 to vector<16x32xf32>
    %232 = arith.maximumf %230, %231 : vector<16x32xf32>
    %c224_117 = arith.constant 224 : index
    %c0_118 = arith.constant 0 : index
    %233 = vector.load %arg18[%c224_117, %c0_118] : memref<552x32xf32, #tpu.memory_space<vmem>>, vector<16x32xf32>
    tpu.vector_store %arg18[%c224_117, %c0_118], %232 {strides = array<i32>} : memref<552x32xf32, #tpu.memory_space<vmem>>, vector<16x32xf32>,
    %c960 = arith.constant 960 : index
    %c0_119 = arith.constant 0 : index
    %234 = tpu.strided_load %arg17[%c960, %c0_119] {strides = array<i32: 2, 1>} : memref<2048x32xf32, #tpu.memory_space<vmem>>, vector<16x32xf32>
    %c961 = arith.constant 961 : index
    %c0_120 = arith.constant 0 : index
    %235 = tpu.strided_load %arg17[%c961, %c0_120] {strides = array<i32: 2, 1>} : memref<2048x32xf32, #tpu.memory_space<vmem>>, vector<16x32xf32>
    %236 = arith.maximumf %234, %235 : vector<16x32xf32>
    %c992 = arith.constant 992 : index
    %c0_121 = arith.constant 0 : index
    %237 = tpu.strided_load %arg17[%c992, %c0_121] {strides = array<i32: 2, 1>} : memref<2048x32xf32, #tpu.memory_space<vmem>>, vector<16x32xf32>
    %c993 = arith.constant 993 : index
    %c0_122 = arith.constant 0 : index
    %238 = tpu.strided_load %arg17[%c993, %c0_122] {strides = array<i32: 2, 1>} : memref<2048x32xf32, #tpu.memory_space<vmem>>, vector<16x32xf32>
    %239 = arith.maximumf %237, %238 : vector<16x32xf32>
    %240 = arith.maximumf %236, %239 : vector<16x32xf32>
    %241 = vector.broadcast %14 : vector<1x32xf32> to vector<16x32xf32>
    %242 = arith.subf %240, %241 : vector<16x32xf32>
    %243 = vector.broadcast %23 : vector<1x32xf32> to vector<16x32xf32>
    %244 = arith.mulf %242, %243 : vector<16x32xf32>
    %cst_123 = arith.constant 0.000000e+00 : f32
    %245 = vector.broadcast %cst_123 : f32 to vector<16x32xf32>
    %246 = arith.maximumf %244, %245 : vector<16x32xf32>
    %c240 = arith.constant 240 : index
    %c0_124 = arith.constant 0 : index
    %247 = vector.load %arg18[%c240, %c0_124] : memref<552x32xf32, #tpu.memory_space<vmem>>, vector<16x32xf32>
    tpu.vector_store %arg18[%c240, %c0_124], %246 {strides = array<i32>} : memref<552x32xf32, #tpu.memory_space<vmem>>, vector<16x32xf32>,
    %c1024 = arith.constant 1024 : index
    %c0_125 = arith.constant 0 : index
    %248 = tpu.strided_load %arg17[%c1024, %c0_125] {strides = array<i32: 2, 1>} : memref<2048x32xf32, #tpu.memory_space<vmem>>, vector<16x32xf32>
    %c1025 = arith.constant 1025 : index
    %c0_126 = arith.constant 0 : index
    %249 = tpu.strided_load %arg17[%c1025, %c0_126] {strides = array<i32: 2, 1>} : memref<2048x32xf32, #tpu.memory_space<vmem>>, vector<16x32xf32>
    %250 = arith.maximumf %248, %249 : vector<16x32xf32>
    %c1056 = arith.constant 1056 : index
    %c0_127 = arith.constant 0 : index
    %251 = tpu.strided_load %arg17[%c1056, %c0_127] {strides = array<i32: 2, 1>} : memref<2048x32xf32, #tpu.memory_space<vmem>>, vector<16x32xf32>
    %c1057 = arith.constant 1057 : index
    %c0_128 = arith.constant 0 : index
    %252 = tpu.strided_load %arg17[%c1057, %c0_128] {strides = array<i32: 2, 1>} : memref<2048x32xf32, #tpu.memory_space<vmem>>, vector<16x32xf32>
    %253 = arith.maximumf %251, %252 : vector<16x32xf32>
    %254 = arith.maximumf %250, %253 : vector<16x32xf32>
    %255 = vector.broadcast %14 : vector<1x32xf32> to vector<16x32xf32>
    %256 = arith.subf %254, %255 : vector<16x32xf32>
    %257 = vector.broadcast %23 : vector<1x32xf32> to vector<16x32xf32>
    %258 = arith.mulf %256, %257 : vector<16x32xf32>
    %cst_129 = arith.constant 0.000000e+00 : f32
    %259 = vector.broadcast %cst_129 : f32 to vector<16x32xf32>
    %260 = arith.maximumf %258, %259 : vector<16x32xf32>
    %c256_130 = arith.constant 256 : index
    %c0_131 = arith.constant 0 : index
    %261 = vector.load %arg18[%c256_130, %c0_131] : memref<552x32xf32, #tpu.memory_space<vmem>>, vector<16x32xf32>
    tpu.vector_store %arg18[%c256_130, %c0_131], %260 {strides = array<i32>} : memref<552x32xf32, #tpu.memory_space<vmem>>, vector<16x32xf32>,
    %c1088 = arith.constant 1088 : index
    %c0_132 = arith.constant 0 : index
    %262 = tpu.strided_load %arg17[%c1088, %c0_132] {strides = array<i32: 2, 1>} : memref<2048x32xf32, #tpu.memory_space<vmem>>, vector<16x32xf32>
    %c1089 = arith.constant 1089 : index
    %c0_133 = arith.constant 0 : index
    %263 = tpu.strided_load %arg17[%c1089, %c0_133] {strides = array<i32: 2, 1>} : memref<2048x32xf32, #tpu.memory_space<vmem>>, vector<16x32xf32>
    %264 = arith.maximumf %262, %263 : vector<16x32xf32>
    %c1120 = arith.constant 1120 : index
    %c0_134 = arith.constant 0 : index
    %265 = tpu.strided_load %arg17[%c1120, %c0_134] {strides = array<i32: 2, 1>} : memref<2048x32xf32, #tpu.memory_space<vmem>>, vector<16x32xf32>
    %c1121 = arith.constant 1121 : index
    %c0_135 = arith.constant 0 : index
    %266 = tpu.strided_load %arg17[%c1121, %c0_135] {strides = array<i32: 2, 1>} : memref<2048x32xf32, #tpu.memory_space<vmem>>, vector<16x32xf32>
    %267 = arith.maximumf %265, %266 : vector<16x32xf32>
    %268 = arith.maximumf %264, %267 : vector<16x32xf32>
    %269 = vector.broadcast %14 : vector<1x32xf32> to vector<16x32xf32>
    %270 = arith.subf %268, %269 : vector<16x32xf32>
    %271 = vector.broadcast %23 : vector<1x32xf32> to vector<16x32xf32>
    %272 = arith.mulf %270, %271 : vector<16x32xf32>
    %cst_136 = arith.constant 0.000000e+00 : f32
    %273 = vector.broadcast %cst_136 : f32 to vector<16x32xf32>
    %274 = arith.maximumf %272, %273 : vector<16x32xf32>
    %c272 = arith.constant 272 : index
    %c0_137 = arith.constant 0 : index
    %275 = vector.load %arg18[%c272, %c0_137] : memref<552x32xf32, #tpu.memory_space<vmem>>, vector<16x32xf32>
    tpu.vector_store %arg18[%c272, %c0_137], %274 {strides = array<i32>} : memref<552x32xf32, #tpu.memory_space<vmem>>, vector<16x32xf32>,
    %c1152 = arith.constant 1152 : index
    %c0_138 = arith.constant 0 : index
    %276 = tpu.strided_load %arg17[%c1152, %c0_138] {strides = array<i32: 2, 1>} : memref<2048x32xf32, #tpu.memory_space<vmem>>, vector<16x32xf32>
    %c1153 = arith.constant 1153 : index
    %c0_139 = arith.constant 0 : index
    %277 = tpu.strided_load %arg17[%c1153, %c0_139] {strides = array<i32: 2, 1>} : memref<2048x32xf32, #tpu.memory_space<vmem>>, vector<16x32xf32>
    %278 = arith.maximumf %276, %277 : vector<16x32xf32>
    %c1184 = arith.constant 1184 : index
    %c0_140 = arith.constant 0 : index
    %279 = tpu.strided_load %arg17[%c1184, %c0_140] {strides = array<i32: 2, 1>} : memref<2048x32xf32, #tpu.memory_space<vmem>>, vector<16x32xf32>
    %c1185 = arith.constant 1185 : index
    %c0_141 = arith.constant 0 : index
    %280 = tpu.strided_load %arg17[%c1185, %c0_141] {strides = array<i32: 2, 1>} : memref<2048x32xf32, #tpu.memory_space<vmem>>, vector<16x32xf32>
    %281 = arith.maximumf %279, %280 : vector<16x32xf32>
    %282 = arith.maximumf %278, %281 : vector<16x32xf32>
    %283 = vector.broadcast %14 : vector<1x32xf32> to vector<16x32xf32>
    %284 = arith.subf %282, %283 : vector<16x32xf32>
    %285 = vector.broadcast %23 : vector<1x32xf32> to vector<16x32xf32>
    %286 = arith.mulf %284, %285 : vector<16x32xf32>
    %cst_142 = arith.constant 0.000000e+00 : f32
    %287 = vector.broadcast %cst_142 : f32 to vector<16x32xf32>
    %288 = arith.maximumf %286, %287 : vector<16x32xf32>
    %c288_143 = arith.constant 288 : index
    %c0_144 = arith.constant 0 : index
    %289 = vector.load %arg18[%c288_143, %c0_144] : memref<552x32xf32, #tpu.memory_space<vmem>>, vector<16x32xf32>
    tpu.vector_store %arg18[%c288_143, %c0_144], %288 {strides = array<i32>} : memref<552x32xf32, #tpu.memory_space<vmem>>, vector<16x32xf32>,
    %c1216 = arith.constant 1216 : index
    %c0_145 = arith.constant 0 : index
    %290 = tpu.strided_load %arg17[%c1216, %c0_145] {strides = array<i32: 2, 1>} : memref<2048x32xf32, #tpu.memory_space<vmem>>, vector<16x32xf32>
    %c1217 = arith.constant 1217 : index
    %c0_146 = arith.constant 0 : index
    %291 = tpu.strided_load %arg17[%c1217, %c0_146] {strides = array<i32: 2, 1>} : memref<2048x32xf32, #tpu.memory_space<vmem>>, vector<16x32xf32>
    %292 = arith.maximumf %290, %291 : vector<16x32xf32>
    %c1248 = arith.constant 1248 : index
    %c0_147 = arith.constant 0 : index
    %293 = tpu.strided_load %arg17[%c1248, %c0_147] {strides = array<i32: 2, 1>} : memref<2048x32xf32, #tpu.memory_space<vmem>>, vector<16x32xf32>
    %c1249 = arith.constant 1249 : index
    %c0_148 = arith.constant 0 : index
    %294 = tpu.strided_load %arg17[%c1249, %c0_148] {strides = array<i32: 2, 1>} : memref<2048x32xf32, #tpu.memory_space<vmem>>, vector<16x32xf32>
    %295 = arith.maximumf %293, %294 : vector<16x32xf32>
    %296 = arith.maximumf %292, %295 : vector<16x32xf32>
    %297 = vector.broadcast %14 : vector<1x32xf32> to vector<16x32xf32>
    %298 = arith.subf %296, %297 : vector<16x32xf32>
    %299 = vector.broadcast %23 : vector<1x32xf32> to vector<16x32xf32>
    %300 = arith.mulf %298, %299 : vector<16x32xf32>
    %cst_149 = arith.constant 0.000000e+00 : f32
    %301 = vector.broadcast %cst_149 : f32 to vector<16x32xf32>
    %302 = arith.maximumf %300, %301 : vector<16x32xf32>
    %c304 = arith.constant 304 : index
    %c0_150 = arith.constant 0 : index
    %303 = vector.load %arg18[%c304, %c0_150] : memref<552x32xf32, #tpu.memory_space<vmem>>, vector<16x32xf32>
    tpu.vector_store %arg18[%c304, %c0_150], %302 {strides = array<i32>} : memref<552x32xf32, #tpu.memory_space<vmem>>, vector<16x32xf32>,
    %c1280 = arith.constant 1280 : index
    %c0_151 = arith.constant 0 : index
    %304 = tpu.strided_load %arg17[%c1280, %c0_151] {strides = array<i32: 2, 1>} : memref<2048x32xf32, #tpu.memory_space<vmem>>, vector<16x32xf32>
    %c1281 = arith.constant 1281 : index
    %c0_152 = arith.constant 0 : index
    %305 = tpu.strided_load %arg17[%c1281, %c0_152] {strides = array<i32: 2, 1>} : memref<2048x32xf32, #tpu.memory_space<vmem>>, vector<16x32xf32>
    %306 = arith.maximumf %304, %305 : vector<16x32xf32>
    %c1312 = arith.constant 1312 : index
    %c0_153 = arith.constant 0 : index
    %307 = tpu.strided_load %arg17[%c1312, %c0_153] {strides = array<i32: 2, 1>} : memref<2048x32xf32, #tpu.memory_space<vmem>>, vector<16x32xf32>
    %c1313 = arith.constant 1313 : index
    %c0_154 = arith.constant 0 : index
    %308 = tpu.strided_load %arg17[%c1313, %c0_154] {strides = array<i32: 2, 1>} : memref<2048x32xf32, #tpu.memory_space<vmem>>, vector<16x32xf32>
    %309 = arith.maximumf %307, %308 : vector<16x32xf32>
    %310 = arith.maximumf %306, %309 : vector<16x32xf32>
    %311 = vector.broadcast %14 : vector<1x32xf32> to vector<16x32xf32>
    %312 = arith.subf %310, %311 : vector<16x32xf32>
    %313 = vector.broadcast %23 : vector<1x32xf32> to vector<16x32xf32>
    %314 = arith.mulf %312, %313 : vector<16x32xf32>
    %cst_155 = arith.constant 0.000000e+00 : f32
    %315 = vector.broadcast %cst_155 : f32 to vector<16x32xf32>
    %316 = arith.maximumf %314, %315 : vector<16x32xf32>
    %c320_156 = arith.constant 320 : index
    %c0_157 = arith.constant 0 : index
    %317 = vector.load %arg18[%c320_156, %c0_157] : memref<552x32xf32, #tpu.memory_space<vmem>>, vector<16x32xf32>
    tpu.vector_store %arg18[%c320_156, %c0_157], %316 {strides = array<i32>} : memref<552x32xf32, #tpu.memory_space<vmem>>, vector<16x32xf32>,
    %c1344 = arith.constant 1344 : index
    %c0_158 = arith.constant 0 : index
    %318 = tpu.strided_load %arg17[%c1344, %c0_158] {strides = array<i32: 2, 1>} : memref<2048x32xf32, #tpu.memory_space<vmem>>, vector<16x32xf32>
    %c1345 = arith.constant 1345 : index
    %c0_159 = arith.constant 0 : index
    %319 = tpu.strided_load %arg17[%c1345, %c0_159] {strides = array<i32: 2, 1>} : memref<2048x32xf32, #tpu.memory_space<vmem>>, vector<16x32xf32>
    %320 = arith.maximumf %318, %319 : vector<16x32xf32>
    %c1376 = arith.constant 1376 : index
    %c0_160 = arith.constant 0 : index
    %321 = tpu.strided_load %arg17[%c1376, %c0_160] {strides = array<i32: 2, 1>} : memref<2048x32xf32, #tpu.memory_space<vmem>>, vector<16x32xf32>
    %c1377 = arith.constant 1377 : index
    %c0_161 = arith.constant 0 : index
    %322 = tpu.strided_load %arg17[%c1377, %c0_161] {strides = array<i32: 2, 1>} : memref<2048x32xf32, #tpu.memory_space<vmem>>, vector<16x32xf32>
    %323 = arith.maximumf %321, %322 : vector<16x32xf32>
    %324 = arith.maximumf %320, %323 : vector<16x32xf32>
    %325 = vector.broadcast %14 : vector<1x32xf32> to vector<16x32xf32>
    %326 = arith.subf %324, %325 : vector<16x32xf32>
    %327 = vector.broadcast %23 : vector<1x32xf32> to vector<16x32xf32>
    %328 = arith.mulf %326, %327 : vector<16x32xf32>
    %cst_162 = arith.constant 0.000000e+00 : f32
    %329 = vector.broadcast %cst_162 : f32 to vector<16x32xf32>
    %330 = arith.maximumf %328, %329 : vector<16x32xf32>
    %c336 = arith.constant 336 : index
    %c0_163 = arith.constant 0 : index
    %331 = vector.load %arg18[%c336, %c0_163] : memref<552x32xf32, #tpu.memory_space<vmem>>, vector<16x32xf32>
    tpu.vector_store %arg18[%c336, %c0_163], %330 {strides = array<i32>} : memref<552x32xf32, #tpu.memory_space<vmem>>, vector<16x32xf32>,
    %c1408 = arith.constant 1408 : index
    %c0_164 = arith.constant 0 : index
    %332 = tpu.strided_load %arg17[%c1408, %c0_164] {strides = array<i32: 2, 1>} : memref<2048x32xf32, #tpu.memory_space<vmem>>, vector<16x32xf32>
    %c1409 = arith.constant 1409 : index
    %c0_165 = arith.constant 0 : index
    %333 = tpu.strided_load %arg17[%c1409, %c0_165] {strides = array<i32: 2, 1>} : memref<2048x32xf32, #tpu.memory_space<vmem>>, vector<16x32xf32>
    %334 = arith.maximumf %332, %333 : vector<16x32xf32>
    %c1440 = arith.constant 1440 : index
    %c0_166 = arith.constant 0 : index
    %335 = tpu.strided_load %arg17[%c1440, %c0_166] {strides = array<i32: 2, 1>} : memref<2048x32xf32, #tpu.memory_space<vmem>>, vector<16x32xf32>
    %c1441 = arith.constant 1441 : index
    %c0_167 = arith.constant 0 : index
    %336 = tpu.strided_load %arg17[%c1441, %c0_167] {strides = array<i32: 2, 1>} : memref<2048x32xf32, #tpu.memory_space<vmem>>, vector<16x32xf32>
    %337 = arith.maximumf %335, %336 : vector<16x32xf32>
    %338 = arith.maximumf %334, %337 : vector<16x32xf32>
    %339 = vector.broadcast %14 : vector<1x32xf32> to vector<16x32xf32>
    %340 = arith.subf %338, %339 : vector<16x32xf32>
    %341 = vector.broadcast %23 : vector<1x32xf32> to vector<16x32xf32>
    %342 = arith.mulf %340, %341 : vector<16x32xf32>
    %cst_168 = arith.constant 0.000000e+00 : f32
    %343 = vector.broadcast %cst_168 : f32 to vector<16x32xf32>
    %344 = arith.maximumf %342, %343 : vector<16x32xf32>
    %c352_169 = arith.constant 352 : index
    %c0_170 = arith.constant 0 : index
    %345 = vector.load %arg18[%c352_169, %c0_170] : memref<552x32xf32, #tpu.memory_space<vmem>>, vector<16x32xf32>
    tpu.vector_store %arg18[%c352_169, %c0_170], %344 {strides = array<i32>} : memref<552x32xf32, #tpu.memory_space<vmem>>, vector<16x32xf32>,
    %c1472 = arith.constant 1472 : index
    %c0_171 = arith.constant 0 : index
    %346 = tpu.strided_load %arg17[%c1472, %c0_171] {strides = array<i32: 2, 1>} : memref<2048x32xf32, #tpu.memory_space<vmem>>, vector<16x32xf32>
    %c1473 = arith.constant 1473 : index
    %c0_172 = arith.constant 0 : index
    %347 = tpu.strided_load %arg17[%c1473, %c0_172] {strides = array<i32: 2, 1>} : memref<2048x32xf32, #tpu.memory_space<vmem>>, vector<16x32xf32>
    %348 = arith.maximumf %346, %347 : vector<16x32xf32>
    %c1504 = arith.constant 1504 : index
    %c0_173 = arith.constant 0 : index
    %349 = tpu.strided_load %arg17[%c1504, %c0_173] {strides = array<i32: 2, 1>} : memref<2048x32xf32, #tpu.memory_space<vmem>>, vector<16x32xf32>
    %c1505 = arith.constant 1505 : index
    %c0_174 = arith.constant 0 : index
    %350 = tpu.strided_load %arg17[%c1505, %c0_174] {strides = array<i32: 2, 1>} : memref<2048x32xf32, #tpu.memory_space<vmem>>, vector<16x32xf32>
    %351 = arith.maximumf %349, %350 : vector<16x32xf32>
    %352 = arith.maximumf %348, %351 : vector<16x32xf32>
    %353 = vector.broadcast %14 : vector<1x32xf32> to vector<16x32xf32>
    %354 = arith.subf %352, %353 : vector<16x32xf32>
    %355 = vector.broadcast %23 : vector<1x32xf32> to vector<16x32xf32>
    %356 = arith.mulf %354, %355 : vector<16x32xf32>
    %cst_175 = arith.constant 0.000000e+00 : f32
    %357 = vector.broadcast %cst_175 : f32 to vector<16x32xf32>
    %358 = arith.maximumf %356, %357 : vector<16x32xf32>
    %c368 = arith.constant 368 : index
    %c0_176 = arith.constant 0 : index
    %359 = vector.load %arg18[%c368, %c0_176] : memref<552x32xf32, #tpu.memory_space<vmem>>, vector<16x32xf32>
    tpu.vector_store %arg18[%c368, %c0_176], %358 {strides = array<i32>} : memref<552x32xf32, #tpu.memory_space<vmem>>, vector<16x32xf32>,
    %c1536 = arith.constant 1536 : index
    %c0_177 = arith.constant 0 : index
    %360 = tpu.strided_load %arg17[%c1536, %c0_177] {strides = array<i32: 2, 1>} : memref<2048x32xf32, #tpu.memory_space<vmem>>, vector<16x32xf32>
    %c1537 = arith.constant 1537 : index
    %c0_178 = arith.constant 0 : index
    %361 = tpu.strided_load %arg17[%c1537, %c0_178] {strides = array<i32: 2, 1>} : memref<2048x32xf32, #tpu.memory_space<vmem>>, vector<16x32xf32>
    %362 = arith.maximumf %360, %361 : vector<16x32xf32>
    %c1568 = arith.constant 1568 : index
    %c0_179 = arith.constant 0 : index
    %363 = tpu.strided_load %arg17[%c1568, %c0_179] {strides = array<i32: 2, 1>} : memref<2048x32xf32, #tpu.memory_space<vmem>>, vector<16x32xf32>
    %c1569 = arith.constant 1569 : index
    %c0_180 = arith.constant 0 : index
    %364 = tpu.strided_load %arg17[%c1569, %c0_180] {strides = array<i32: 2, 1>} : memref<2048x32xf32, #tpu.memory_space<vmem>>, vector<16x32xf32>
    %365 = arith.maximumf %363, %364 : vector<16x32xf32>
    %366 = arith.maximumf %362, %365 : vector<16x32xf32>
    %367 = vector.broadcast %14 : vector<1x32xf32> to vector<16x32xf32>
    %368 = arith.subf %366, %367 : vector<16x32xf32>
    %369 = vector.broadcast %23 : vector<1x32xf32> to vector<16x32xf32>
    %370 = arith.mulf %368, %369 : vector<16x32xf32>
    %cst_181 = arith.constant 0.000000e+00 : f32
    %371 = vector.broadcast %cst_181 : f32 to vector<16x32xf32>
    %372 = arith.maximumf %370, %371 : vector<16x32xf32>
    %c384_182 = arith.constant 384 : index
    %c0_183 = arith.constant 0 : index
    %373 = vector.load %arg18[%c384_182, %c0_183] : memref<552x32xf32, #tpu.memory_space<vmem>>, vector<16x32xf32>
    tpu.vector_store %arg18[%c384_182, %c0_183], %372 {strides = array<i32>} : memref<552x32xf32, #tpu.memory_space<vmem>>, vector<16x32xf32>,
    %c1600 = arith.constant 1600 : index
    %c0_184 = arith.constant 0 : index
    %374 = tpu.strided_load %arg17[%c1600, %c0_184] {strides = array<i32: 2, 1>} : memref<2048x32xf32, #tpu.memory_space<vmem>>, vector<16x32xf32>
    %c1601 = arith.constant 1601 : index
    %c0_185 = arith.constant 0 : index
    %375 = tpu.strided_load %arg17[%c1601, %c0_185] {strides = array<i32: 2, 1>} : memref<2048x32xf32, #tpu.memory_space<vmem>>, vector<16x32xf32>
    %376 = arith.maximumf %374, %375 : vector<16x32xf32>
    %c1632 = arith.constant 1632 : index
    %c0_186 = arith.constant 0 : index
    %377 = tpu.strided_load %arg17[%c1632, %c0_186] {strides = array<i32: 2, 1>} : memref<2048x32xf32, #tpu.memory_space<vmem>>, vector<16x32xf32>
    %c1633 = arith.constant 1633 : index
    %c0_187 = arith.constant 0 : index
    %378 = tpu.strided_load %arg17[%c1633, %c0_187] {strides = array<i32: 2, 1>} : memref<2048x32xf32, #tpu.memory_space<vmem>>, vector<16x32xf32>
    %379 = arith.maximumf %377, %378 : vector<16x32xf32>
    %380 = arith.maximumf %376, %379 : vector<16x32xf32>
    %381 = vector.broadcast %14 : vector<1x32xf32> to vector<16x32xf32>
    %382 = arith.subf %380, %381 : vector<16x32xf32>
    %383 = vector.broadcast %23 : vector<1x32xf32> to vector<16x32xf32>
    %384 = arith.mulf %382, %383 : vector<16x32xf32>
    %cst_188 = arith.constant 0.000000e+00 : f32
    %385 = vector.broadcast %cst_188 : f32 to vector<16x32xf32>
    %386 = arith.maximumf %384, %385 : vector<16x32xf32>
    %c400 = arith.constant 400 : index
    %c0_189 = arith.constant 0 : index
    %387 = vector.load %arg18[%c400, %c0_189] : memref<552x32xf32, #tpu.memory_space<vmem>>, vector<16x32xf32>
    tpu.vector_store %arg18[%c400, %c0_189], %386 {strides = array<i32>} : memref<552x32xf32, #tpu.memory_space<vmem>>, vector<16x32xf32>,
    %c1664 = arith.constant 1664 : index
    %c0_190 = arith.constant 0 : index
    %388 = tpu.strided_load %arg17[%c1664, %c0_190] {strides = array<i32: 2, 1>} : memref<2048x32xf32, #tpu.memory_space<vmem>>, vector<16x32xf32>
    %c1665 = arith.constant 1665 : index
    %c0_191 = arith.constant 0 : index
    %389 = tpu.strided_load %arg17[%c1665, %c0_191] {strides = array<i32: 2, 1>} : memref<2048x32xf32, #tpu.memory_space<vmem>>, vector<16x32xf32>
    %390 = arith.maximumf %388, %389 : vector<16x32xf32>
    %c1696 = arith.constant 1696 : index
    %c0_192 = arith.constant 0 : index
    %391 = tpu.strided_load %arg17[%c1696, %c0_192] {strides = array<i32: 2, 1>} : memref<2048x32xf32, #tpu.memory_space<vmem>>, vector<16x32xf32>
    %c1697 = arith.constant 1697 : index
    %c0_193 = arith.constant 0 : index
    %392 = tpu.strided_load %arg17[%c1697, %c0_193] {strides = array<i32: 2, 1>} : memref<2048x32xf32, #tpu.memory_space<vmem>>, vector<16x32xf32>
    %393 = arith.maximumf %391, %392 : vector<16x32xf32>
    %394 = arith.maximumf %390, %393 : vector<16x32xf32>
    %395 = vector.broadcast %14 : vector<1x32xf32> to vector<16x32xf32>
    %396 = arith.subf %394, %395 : vector<16x32xf32>
    %397 = vector.broadcast %23 : vector<1x32xf32> to vector<16x32xf32>
    %398 = arith.mulf %396, %397 : vector<16x32xf32>
    %cst_194 = arith.constant 0.000000e+00 : f32
    %399 = vector.broadcast %cst_194 : f32 to vector<16x32xf32>
    %400 = arith.maximumf %398, %399 : vector<16x32xf32>
    %c416_195 = arith.constant 416 : index
    %c0_196 = arith.constant 0 : index
    %401 = vector.load %arg18[%c416_195, %c0_196] : memref<552x32xf32, #tpu.memory_space<vmem>>, vector<16x32xf32>
    tpu.vector_store %arg18[%c416_195, %c0_196], %400 {strides = array<i32>} : memref<552x32xf32, #tpu.memory_space<vmem>>, vector<16x32xf32>,
    %c1728 = arith.constant 1728 : index
    %c0_197 = arith.constant 0 : index
    %402 = tpu.strided_load %arg17[%c1728, %c0_197] {strides = array<i32: 2, 1>} : memref<2048x32xf32, #tpu.memory_space<vmem>>, vector<16x32xf32>
    %c1729 = arith.constant 1729 : index
    %c0_198 = arith.constant 0 : index
    %403 = tpu.strided_load %arg17[%c1729, %c0_198] {strides = array<i32: 2, 1>} : memref<2048x32xf32, #tpu.memory_space<vmem>>, vector<16x32xf32>
    %404 = arith.maximumf %402, %403 : vector<16x32xf32>
    %c1760 = arith.constant 1760 : index
    %c0_199 = arith.constant 0 : index
    %405 = tpu.strided_load %arg17[%c1760, %c0_199] {strides = array<i32: 2, 1>} : memref<2048x32xf32, #tpu.memory_space<vmem>>, vector<16x32xf32>
    %c1761 = arith.constant 1761 : index
    %c0_200 = arith.constant 0 : index
    %406 = tpu.strided_load %arg17[%c1761, %c0_200] {strides = array<i32: 2, 1>} : memref<2048x32xf32, #tpu.memory_space<vmem>>, vector<16x32xf32>
    %407 = arith.maximumf %405, %406 : vector<16x32xf32>
    %408 = arith.maximumf %404, %407 : vector<16x32xf32>
    %409 = vector.broadcast %14 : vector<1x32xf32> to vector<16x32xf32>
    %410 = arith.subf %408, %409 : vector<16x32xf32>
    %411 = vector.broadcast %23 : vector<1x32xf32> to vector<16x32xf32>
    %412 = arith.mulf %410, %411 : vector<16x32xf32>
    %cst_201 = arith.constant 0.000000e+00 : f32
    %413 = vector.broadcast %cst_201 : f32 to vector<16x32xf32>
    %414 = arith.maximumf %412, %413 : vector<16x32xf32>
    %c432 = arith.constant 432 : index
    %c0_202 = arith.constant 0 : index
    %415 = vector.load %arg18[%c432, %c0_202] : memref<552x32xf32, #tpu.memory_space<vmem>>, vector<16x32xf32>
    tpu.vector_store %arg18[%c432, %c0_202], %414 {strides = array<i32>} : memref<552x32xf32, #tpu.memory_space<vmem>>, vector<16x32xf32>,
    %c1792 = arith.constant 1792 : index
    %c0_203 = arith.constant 0 : index
    %416 = tpu.strided_load %arg17[%c1792, %c0_203] {strides = array<i32: 2, 1>} : memref<2048x32xf32, #tpu.memory_space<vmem>>, vector<16x32xf32>
    %c1793 = arith.constant 1793 : index
    %c0_204 = arith.constant 0 : index
    %417 = tpu.strided_load %arg17[%c1793, %c0_204] {strides = array<i32: 2, 1>} : memref<2048x32xf32, #tpu.memory_space<vmem>>, vector<16x32xf32>
    %418 = arith.maximumf %416, %417 : vector<16x32xf32>
    %c1824 = arith.constant 1824 : index
    %c0_205 = arith.constant 0 : index
    %419 = tpu.strided_load %arg17[%c1824, %c0_205] {strides = array<i32: 2, 1>} : memref<2048x32xf32, #tpu.memory_space<vmem>>, vector<16x32xf32>
    %c1825 = arith.constant 1825 : index
    %c0_206 = arith.constant 0 : index
    %420 = tpu.strided_load %arg17[%c1825, %c0_206] {strides = array<i32: 2, 1>} : memref<2048x32xf32, #tpu.memory_space<vmem>>, vector<16x32xf32>
    %421 = arith.maximumf %419, %420 : vector<16x32xf32>
    %422 = arith.maximumf %418, %421 : vector<16x32xf32>
    %423 = vector.broadcast %14 : vector<1x32xf32> to vector<16x32xf32>
    %424 = arith.subf %422, %423 : vector<16x32xf32>
    %425 = vector.broadcast %23 : vector<1x32xf32> to vector<16x32xf32>
    %426 = arith.mulf %424, %425 : vector<16x32xf32>
    %cst_207 = arith.constant 0.000000e+00 : f32
    %427 = vector.broadcast %cst_207 : f32 to vector<16x32xf32>
    %428 = arith.maximumf %426, %427 : vector<16x32xf32>
    %c448_208 = arith.constant 448 : index
    %c0_209 = arith.constant 0 : index
    %429 = vector.load %arg18[%c448_208, %c0_209] : memref<552x32xf32, #tpu.memory_space<vmem>>, vector<16x32xf32>
    tpu.vector_store %arg18[%c448_208, %c0_209], %428 {strides = array<i32>} : memref<552x32xf32, #tpu.memory_space<vmem>>, vector<16x32xf32>,
    %c1856 = arith.constant 1856 : index
    %c0_210 = arith.constant 0 : index
    %430 = tpu.strided_load %arg17[%c1856, %c0_210] {strides = array<i32: 2, 1>} : memref<2048x32xf32, #tpu.memory_space<vmem>>, vector<16x32xf32>
    %c1857 = arith.constant 1857 : index
    %c0_211 = arith.constant 0 : index
    %431 = tpu.strided_load %arg17[%c1857, %c0_211] {strides = array<i32: 2, 1>} : memref<2048x32xf32, #tpu.memory_space<vmem>>, vector<16x32xf32>
    %432 = arith.maximumf %430, %431 : vector<16x32xf32>
    %c1888 = arith.constant 1888 : index
    %c0_212 = arith.constant 0 : index
    %433 = tpu.strided_load %arg17[%c1888, %c0_212] {strides = array<i32: 2, 1>} : memref<2048x32xf32, #tpu.memory_space<vmem>>, vector<16x32xf32>
    %c1889 = arith.constant 1889 : index
    %c0_213 = arith.constant 0 : index
    %434 = tpu.strided_load %arg17[%c1889, %c0_213] {strides = array<i32: 2, 1>} : memref<2048x32xf32, #tpu.memory_space<vmem>>, vector<16x32xf32>
    %435 = arith.maximumf %433, %434 : vector<16x32xf32>
    %436 = arith.maximumf %432, %435 : vector<16x32xf32>
    %437 = vector.broadcast %14 : vector<1x32xf32> to vector<16x32xf32>
    %438 = arith.subf %436, %437 : vector<16x32xf32>
    %439 = vector.broadcast %23 : vector<1x32xf32> to vector<16x32xf32>
    %440 = arith.mulf %438, %439 : vector<16x32xf32>
    %cst_214 = arith.constant 0.000000e+00 : f32
    %441 = vector.broadcast %cst_214 : f32 to vector<16x32xf32>
    %442 = arith.maximumf %440, %441 : vector<16x32xf32>
    %c464 = arith.constant 464 : index
    %c0_215 = arith.constant 0 : index
    %443 = vector.load %arg18[%c464, %c0_215] : memref<552x32xf32, #tpu.memory_space<vmem>>, vector<16x32xf32>
    tpu.vector_store %arg18[%c464, %c0_215], %442 {strides = array<i32>} : memref<552x32xf32, #tpu.memory_space<vmem>>, vector<16x32xf32>,
    %c1920 = arith.constant 1920 : index
    %c0_216 = arith.constant 0 : index
    %444 = tpu.strided_load %arg17[%c1920, %c0_216] {strides = array<i32: 2, 1>} : memref<2048x32xf32, #tpu.memory_space<vmem>>, vector<16x32xf32>
    %c1921 = arith.constant 1921 : index
    %c0_217 = arith.constant 0 : index
    %445 = tpu.strided_load %arg17[%c1921, %c0_217] {strides = array<i32: 2, 1>} : memref<2048x32xf32, #tpu.memory_space<vmem>>, vector<16x32xf32>
    %446 = arith.maximumf %444, %445 : vector<16x32xf32>
    %c1952 = arith.constant 1952 : index
    %c0_218 = arith.constant 0 : index
    %447 = tpu.strided_load %arg17[%c1952, %c0_218] {strides = array<i32: 2, 1>} : memref<2048x32xf32, #tpu.memory_space<vmem>>, vector<16x32xf32>
    %c1953 = arith.constant 1953 : index
    %c0_219 = arith.constant 0 : index
    %448 = tpu.strided_load %arg17[%c1953, %c0_219] {strides = array<i32: 2, 1>} : memref<2048x32xf32, #tpu.memory_space<vmem>>, vector<16x32xf32>
    %449 = arith.maximumf %447, %448 : vector<16x32xf32>
    %450 = arith.maximumf %446, %449 : vector<16x32xf32>
    %451 = vector.broadcast %14 : vector<1x32xf32> to vector<16x32xf32>
    %452 = arith.subf %450, %451 : vector<16x32xf32>
    %453 = vector.broadcast %23 : vector<1x32xf32> to vector<16x32xf32>
    %454 = arith.mulf %452, %453 : vector<16x32xf32>
    %cst_220 = arith.constant 0.000000e+00 : f32
    %455 = vector.broadcast %cst_220 : f32 to vector<16x32xf32>
    %456 = arith.maximumf %454, %455 : vector<16x32xf32>
    %c480_221 = arith.constant 480 : index
    %c0_222 = arith.constant 0 : index
    %457 = vector.load %arg18[%c480_221, %c0_222] : memref<552x32xf32, #tpu.memory_space<vmem>>, vector<16x32xf32>
    tpu.vector_store %arg18[%c480_221, %c0_222], %456 {strides = array<i32>} : memref<552x32xf32, #tpu.memory_space<vmem>>, vector<16x32xf32>,
    %c1984 = arith.constant 1984 : index
    %c0_223 = arith.constant 0 : index
    %458 = tpu.strided_load %arg17[%c1984, %c0_223] {strides = array<i32: 2, 1>} : memref<2048x32xf32, #tpu.memory_space<vmem>>, vector<16x32xf32>
    %c1985 = arith.constant 1985 : index
    %c0_224 = arith.constant 0 : index
    %459 = tpu.strided_load %arg17[%c1985, %c0_224] {strides = array<i32: 2, 1>} : memref<2048x32xf32, #tpu.memory_space<vmem>>, vector<16x32xf32>
    %460 = arith.maximumf %458, %459 : vector<16x32xf32>
    %c2016 = arith.constant 2016 : index
    %c0_225 = arith.constant 0 : index
    %461 = tpu.strided_load %arg17[%c2016, %c0_225] {strides = array<i32: 2, 1>} : memref<2048x32xf32, #tpu.memory_space<vmem>>, vector<16x32xf32>
    %c2017 = arith.constant 2017 : index
    %c0_226 = arith.constant 0 : index
    %462 = tpu.strided_load %arg17[%c2017, %c0_226] {strides = array<i32: 2, 1>} : memref<2048x32xf32, #tpu.memory_space<vmem>>, vector<16x32xf32>
    %463 = arith.maximumf %461, %462 : vector<16x32xf32>
    %464 = arith.maximumf %460, %463 : vector<16x32xf32>
    %465 = vector.broadcast %14 : vector<1x32xf32> to vector<16x32xf32>
    %466 = arith.subf %464, %465 : vector<16x32xf32>
    %467 = vector.broadcast %23 : vector<1x32xf32> to vector<16x32xf32>
    %468 = arith.mulf %466, %467 : vector<16x32xf32>
    %cst_227 = arith.constant 0.000000e+00 : f32
    %469 = vector.broadcast %cst_227 : f32 to vector<16x32xf32>
    %470 = arith.maximumf %468, %469 : vector<16x32xf32>
    %c496 = arith.constant 496 : index
    %c0_228 = arith.constant 0 : index
    %471 = vector.load %arg18[%c496, %c0_228] : memref<552x32xf32, #tpu.memory_space<vmem>>, vector<16x32xf32>
    tpu.vector_store %arg18[%c496, %c0_228], %470 {strides = array<i32>} : memref<552x32xf32, #tpu.memory_space<vmem>>, vector<16x32xf32>,
    %cst_229 = arith.constant 0.000000e+00 : f32
    %472 = vector.broadcast %cst_229 : f32 to vector<1x64xf32>
    %cst_230 = arith.constant 0.000000e+00 : f32
    %473 = vector.broadcast %cst_230 : f32 to vector<1x64xf32>
    %c0_i32_231 = arith.constant 0 : i32
    %c4_i32 = arith.constant 4 : i32
    %474 = arith.addi %c0_i32_231, %c4_i32 : i32
    %c1_i32_232 = arith.constant 1 : i32
    %475:2 = scf.for %arg23 = %c0_i32_231 to %474 step %c1_i32_232 iter_args(%arg24 = %472, %arg25 = %473) -> (vector<1x64xf32>, vector<1x64xf32>)  : i32 {
      %c128_i32 = arith.constant 128 : i32
      %768 = arith.muli %arg23, %c128_i32 : i32
      %769 = tpu.assume_multiple %768, 128 : i32
      %cst_493 = arith.constant 0.000000e+00 : f32
      %770 = vector.broadcast %cst_493 : f32 to vector<128x64xf32>
      %c0_i32_494 = arith.constant 0 : i32
      %771 = arith.addi %769, %c0_i32_494 : i32
      %772 = arith.index_cast %771 : i32 to index
      %c0_495 = arith.constant 0 : index
      %773 = vector.load %arg18[%772, %c0_495] : memref<552x32xf32, #tpu.memory_space<vmem>>, vector<128x32xf32>
      %774 = arith.truncf %773 : vector<128x32xf32> to vector<128x32xbf16>
      %c0_496 = arith.constant 0 : index
      %c0_497 = arith.constant 0 : index
      %c0_498 = arith.constant 0 : index
      %775 = vector.load %arg5[%c0_496, %c0_497, %c0_498] : memref<9x32x64xbf16, #tpu.memory_space<vmem>>, vector<1x32x64xbf16>
      %776 = vector.shape_cast %775 : vector<1x32x64xbf16> to vector<32x64xbf16>
      %cst_499 = arith.constant dense<0.000000e+00> : vector<128x64xf32>
      %777 = tpu.matmul %774, %776, %cst_499 {dimension_numbers = #tpu.dot_dimension_numbers<[1], [0], [0], [1], [0, 0, 1, 1], [], []>} : vector<128x32xbf16>, vector<32x64xbf16>, vector<128x64xf32> -> vector<128x64xf32>
      %778 = arith.addf %770, %777 : vector<128x64xf32>
      %c1_i32_500 = arith.constant 1 : i32
      %779 = arith.addi %769, %c1_i32_500 : i32
      %780 = arith.index_cast %779 : i32 to index
      %c0_501 = arith.constant 0 : index
      %781 = vector.load %arg18[%780, %c0_501] : memref<552x32xf32, #tpu.memory_space<vmem>>, vector<128x32xf32>
      %782 = arith.truncf %781 : vector<128x32xf32> to vector<128x32xbf16>
      %c1_502 = arith.constant 1 : index
      %c0_503 = arith.constant 0 : index
      %c0_504 = arith.constant 0 : index
      %783 = vector.load %arg5[%c1_502, %c0_503, %c0_504] : memref<9x32x64xbf16, #tpu.memory_space<vmem>>, vector<1x32x64xbf16>
      %784 = vector.shape_cast %783 : vector<1x32x64xbf16> to vector<32x64xbf16>
      %cst_505 = arith.constant dense<0.000000e+00> : vector<128x64xf32>
      %785 = tpu.matmul %782, %784, %cst_505 {dimension_numbers = #tpu.dot_dimension_numbers<[1], [0], [0], [1], [0, 0, 1, 1], [], []>} : vector<128x32xbf16>, vector<32x64xbf16>, vector<128x64xf32> -> vector<128x64xf32>
      %786 = arith.addf %778, %785 : vector<128x64xf32>
      %c2_i32_506 = arith.constant 2 : i32
      %787 = arith.addi %769, %c2_i32_506 : i32
      %788 = arith.index_cast %787 : i32 to index
      %c0_507 = arith.constant 0 : index
      %789 = vector.load %arg18[%788, %c0_507] : memref<552x32xf32, #tpu.memory_space<vmem>>, vector<128x32xf32>
      %790 = arith.truncf %789 : vector<128x32xf32> to vector<128x32xbf16>
      %c2_508 = arith.constant 2 : index
      %c0_509 = arith.constant 0 : index
      %c0_510 = arith.constant 0 : index
      %791 = vector.load %arg5[%c2_508, %c0_509, %c0_510] : memref<9x32x64xbf16, #tpu.memory_space<vmem>>, vector<1x32x64xbf16>
      %792 = vector.shape_cast %791 : vector<1x32x64xbf16> to vector<32x64xbf16>
      %cst_511 = arith.constant dense<0.000000e+00> : vector<128x64xf32>
      %793 = tpu.matmul %790, %792, %cst_511 {dimension_numbers = #tpu.dot_dimension_numbers<[1], [0], [0], [1], [0, 0, 1, 1], [], []>} : vector<128x32xbf16>, vector<32x64xbf16>, vector<128x64xf32> -> vector<128x64xf32>
      %794 = arith.addf %786, %793 : vector<128x64xf32>
      %c16_i32_512 = arith.constant 16 : i32
      %795 = arith.addi %769, %c16_i32_512 : i32
      %796 = arith.index_cast %795 : i32 to index
      %c0_513 = arith.constant 0 : index
      %797 = vector.load %arg18[%796, %c0_513] : memref<552x32xf32, #tpu.memory_space<vmem>>, vector<128x32xf32>
      %798 = arith.truncf %797 : vector<128x32xf32> to vector<128x32xbf16>
      %c3_514 = arith.constant 3 : index
      %c0_515 = arith.constant 0 : index
      %c0_516 = arith.constant 0 : index
      %799 = vector.load %arg5[%c3_514, %c0_515, %c0_516] : memref<9x32x64xbf16, #tpu.memory_space<vmem>>, vector<1x32x64xbf16>
      %800 = vector.shape_cast %799 : vector<1x32x64xbf16> to vector<32x64xbf16>
      %cst_517 = arith.constant dense<0.000000e+00> : vector<128x64xf32>
      %801 = tpu.matmul %798, %800, %cst_517 {dimension_numbers = #tpu.dot_dimension_numbers<[1], [0], [0], [1], [0, 0, 1, 1], [], []>} : vector<128x32xbf16>, vector<32x64xbf16>, vector<128x64xf32> -> vector<128x64xf32>
      %802 = arith.addf %794, %801 : vector<128x64xf32>
      %c17_i32 = arith.constant 17 : i32
      %803 = arith.addi %769, %c17_i32 : i32
      %804 = arith.index_cast %803 : i32 to index
      %c0_518 = arith.constant 0 : index
      %805 = vector.load %arg18[%804, %c0_518] : memref<552x32xf32, #tpu.memory_space<vmem>>, vector<128x32xf32>
      %806 = arith.truncf %805 : vector<128x32xf32> to vector<128x32xbf16>
      %c4_519 = arith.constant 4 : index
      %c0_520 = arith.constant 0 : index
      %c0_521 = arith.constant 0 : index
      %807 = vector.load %arg5[%c4_519, %c0_520, %c0_521] : memref<9x32x64xbf16, #tpu.memory_space<vmem>>, vector<1x32x64xbf16>
      %808 = vector.shape_cast %807 : vector<1x32x64xbf16> to vector<32x64xbf16>
      %cst_522 = arith.constant dense<0.000000e+00> : vector<128x64xf32>
      %809 = tpu.matmul %806, %808, %cst_522 {dimension_numbers = #tpu.dot_dimension_numbers<[1], [0], [0], [1], [0, 0, 1, 1], [], []>} : vector<128x32xbf16>, vector<32x64xbf16>, vector<128x64xf32> -> vector<128x64xf32>
      %810 = arith.addf %802, %809 : vector<128x64xf32>
      %c18_i32 = arith.constant 18 : i32
      %811 = arith.addi %769, %c18_i32 : i32
      %812 = arith.index_cast %811 : i32 to index
      %c0_523 = arith.constant 0 : index
      %813 = vector.load %arg18[%812, %c0_523] : memref<552x32xf32, #tpu.memory_space<vmem>>, vector<128x32xf32>
      %814 = arith.truncf %813 : vector<128x32xf32> to vector<128x32xbf16>
      %c5_524 = arith.constant 5 : index
      %c0_525 = arith.constant 0 : index
      %c0_526 = arith.constant 0 : index
      %815 = vector.load %arg5[%c5_524, %c0_525, %c0_526] : memref<9x32x64xbf16, #tpu.memory_space<vmem>>, vector<1x32x64xbf16>
      %816 = vector.shape_cast %815 : vector<1x32x64xbf16> to vector<32x64xbf16>
      %cst_527 = arith.constant dense<0.000000e+00> : vector<128x64xf32>
      %817 = tpu.matmul %814, %816, %cst_527 {dimension_numbers = #tpu.dot_dimension_numbers<[1], [0], [0], [1], [0, 0, 1, 1], [], []>} : vector<128x32xbf16>, vector<32x64xbf16>, vector<128x64xf32> -> vector<128x64xf32>
      %818 = arith.addf %810, %817 : vector<128x64xf32>
      %c32_i32 = arith.constant 32 : i32
      %819 = arith.addi %769, %c32_i32 : i32
      %820 = arith.index_cast %819 : i32 to index
      %c0_528 = arith.constant 0 : index
      %821 = vector.load %arg18[%820, %c0_528] : memref<552x32xf32, #tpu.memory_space<vmem>>, vector<128x32xf32>
      %822 = arith.truncf %821 : vector<128x32xf32> to vector<128x32xbf16>
      %c6_529 = arith.constant 6 : index
      %c0_530 = arith.constant 0 : index
      %c0_531 = arith.constant 0 : index
      %823 = vector.load %arg5[%c6_529, %c0_530, %c0_531] : memref<9x32x64xbf16, #tpu.memory_space<vmem>>, vector<1x32x64xbf16>
      %824 = vector.shape_cast %823 : vector<1x32x64xbf16> to vector<32x64xbf16>
      %cst_532 = arith.constant dense<0.000000e+00> : vector<128x64xf32>
      %825 = tpu.matmul %822, %824, %cst_532 {dimension_numbers = #tpu.dot_dimension_numbers<[1], [0], [0], [1], [0, 0, 1, 1], [], []>} : vector<128x32xbf16>, vector<32x64xbf16>, vector<128x64xf32> -> vector<128x64xf32>
      %826 = arith.addf %818, %825 : vector<128x64xf32>
      %c33_i32 = arith.constant 33 : i32
      %827 = arith.addi %769, %c33_i32 : i32
      %828 = arith.index_cast %827 : i32 to index
      %c0_533 = arith.constant 0 : index
      %829 = vector.load %arg18[%828, %c0_533] : memref<552x32xf32, #tpu.memory_space<vmem>>, vector<128x32xf32>
      %830 = arith.truncf %829 : vector<128x32xf32> to vector<128x32xbf16>
      %c7_534 = arith.constant 7 : index
      %c0_535 = arith.constant 0 : index
      %c0_536 = arith.constant 0 : index
      %831 = vector.load %arg5[%c7_534, %c0_535, %c0_536] : memref<9x32x64xbf16, #tpu.memory_space<vmem>>, vector<1x32x64xbf16>
      %832 = vector.shape_cast %831 : vector<1x32x64xbf16> to vector<32x64xbf16>
      %cst_537 = arith.constant dense<0.000000e+00> : vector<128x64xf32>
      %833 = tpu.matmul %830, %832, %cst_537 {dimension_numbers = #tpu.dot_dimension_numbers<[1], [0], [0], [1], [0, 0, 1, 1], [], []>} : vector<128x32xbf16>, vector<32x64xbf16>, vector<128x64xf32> -> vector<128x64xf32>
      %834 = arith.addf %826, %833 : vector<128x64xf32>
      %c34_i32 = arith.constant 34 : i32
      %835 = arith.addi %769, %c34_i32 : i32
      %836 = arith.index_cast %835 : i32 to index
      %c0_538 = arith.constant 0 : index
      %837 = vector.load %arg18[%836, %c0_538] : memref<552x32xf32, #tpu.memory_space<vmem>>, vector<128x32xf32>
      %838 = arith.truncf %837 : vector<128x32xf32> to vector<128x32xbf16>
      %c8_539 = arith.constant 8 : index
      %c0_540 = arith.constant 0 : index
      %c0_541 = arith.constant 0 : index
      %839 = vector.load %arg5[%c8_539, %c0_540, %c0_541] : memref<9x32x64xbf16, #tpu.memory_space<vmem>>, vector<1x32x64xbf16>
      %840 = vector.shape_cast %839 : vector<1x32x64xbf16> to vector<32x64xbf16>
      %cst_542 = arith.constant dense<0.000000e+00> : vector<128x64xf32>
      %841 = tpu.matmul %838, %840, %cst_542 {dimension_numbers = #tpu.dot_dimension_numbers<[1], [0], [0], [1], [0, 0, 1, 1], [], []>} : vector<128x32xbf16>, vector<32x64xbf16>, vector<128x64xf32> -> vector<128x64xf32>
      %842 = arith.addf %834, %841 : vector<128x64xf32>
      %c0_543 = arith.constant 0 : index
      %c0_544 = arith.constant 0 : index
      %843 = vector.load %arg6[%c0_543, %c0_544] : memref<1x64xf32, #tpu.memory_space<vmem>>, vector<1x64xf32>
      %844 = vector.broadcast %843 : vector<1x64xf32> to vector<128x64xf32>
      %845 = arith.addf %842, %844 : vector<128x64xf32>
      %846 = arith.index_cast %769 : i32 to index
      %c0_545 = arith.constant 0 : index
      %847 = vector.load %arg19[%846, %c0_545] : memref<552x64xf32, #tpu.memory_space<vmem>>, vector<128x64xf32>
      tpu.vector_store %arg19[%846, %c0_545], %845 {strides = array<i32>} : memref<552x64xf32, #tpu.memory_space<vmem>>, vector<128x64xf32>,
      %848 = tpu.iota {dimensions = array<i32: 0>} : vector<128x1xi32>
      %849 = vector.broadcast %769 : i32 to vector<128x1xi32>
      %850 = arith.addi %849, %848 : vector<128x1xi32>
      %c4_i32_546 = arith.constant 4 : i32
      %851 = vector.broadcast %c4_i32_546 : i32 to vector<128x1xi32>
      %852 = arith.shrsi %850, %851 : vector<128x1xi32>
      %c15_i32 = arith.constant 15 : i32
      %853 = vector.broadcast %c15_i32 : i32 to vector<128x1xi32>
      %854 = arith.andi %852, %853 : vector<128x1xi32>
      %c15_i32_547 = arith.constant 15 : i32
      %855 = vector.broadcast %c15_i32_547 : i32 to vector<128x1xi32>
      %856 = arith.andi %850, %855 : vector<128x1xi32>
      %c12_i32 = arith.constant 12 : i32
      %857 = vector.broadcast %c12_i32 : i32 to vector<128x1xi32>
      %858 = arith.cmpi slt, %854, %857 : vector<128x1xi32>
      %c12_i32_548 = arith.constant 12 : i32
      %859 = vector.broadcast %c12_i32_548 : i32 to vector<128x1xi32>
      %860 = arith.cmpi slt, %856, %859 : vector<128x1xi32>
      %861 = arith.andi %858, %860 : vector<128x1xi1>
      %cst_549 = arith.constant 1.000000e+00 : f32
      %cst_550 = arith.constant 0.000000e+00 : f32
      %862 = vector.broadcast %cst_549 : f32 to vector<128x1xf32>
      %863 = vector.broadcast %cst_550 : f32 to vector<128x1xf32>
      %864 = arith.select %861, %862, %863 : vector<128x1xi1>, vector<128x1xf32>
      %865 = vector.broadcast %864 : vector<128x1xf32> to vector<128x64xf32>
      %866 = arith.mulf %845, %865 : vector<128x64xf32>
      %cst_551 = arith.constant dense<0.000000e+00> : vector<64xf32>
      %867 = vector.multi_reduction <add>, %866, %cst_551 [0] : vector<128x64xf32> to vector<64xf32>
      %868 = vector.shape_cast %867 : vector<64xf32> to vector<1x64xf32>
      %869 = arith.addf %arg24, %868 : vector<1x64xf32>
      %870 = arith.mulf %845, %845 : vector<128x64xf32>
      %871 = vector.broadcast %864 : vector<128x1xf32> to vector<128x64xf32>
      %872 = arith.mulf %870, %871 : vector<128x64xf32>
      %cst_552 = arith.constant dense<0.000000e+00> : vector<64xf32>
      %873 = vector.multi_reduction <add>, %872, %cst_552 [0] : vector<128x64xf32> to vector<64xf32>
      %874 = vector.shape_cast %873 : vector<64xf32> to vector<1x64xf32>
      %875 = arith.addf %arg25, %874 : vector<1x64xf32>
      scf.yield %869, %875 : vector<1x64xf32>, vector<1x64xf32>
    }
    %c4_i32_233 = arith.constant 4 : i32
    %cst_234 = arith.constant 2.880000e+02 : f32
    %476 = vector.broadcast %cst_234 : f32 to vector<1x64xf32>
    %477 = arith.divf %475#0, %476 : vector<1x64xf32>
    %cst_235 = arith.constant 2.880000e+02 : f32
    %478 = vector.broadcast %cst_235 : f32 to vector<1x64xf32>
    %479 = arith.divf %475#1, %478 : vector<1x64xf32>
    %480 = arith.mulf %477, %477 : vector<1x64xf32>
    %481 = arith.subf %479, %480 : vector<1x64xf32>
    %cst_236 = arith.constant 0.000000e+00 : f32
    %482 = vector.broadcast %cst_236 : f32 to vector<1x64xf32>
    %483 = arith.maximumf %481, %482 : vector<1x64xf32>
    %cst_237 = arith.constant 9.99999974E-6 : f32
    %484 = vector.broadcast %cst_237 : f32 to vector<1x64xf32>
    %485 = arith.addf %483, %484 : vector<1x64xf32>
    %486 = math.rsqrt %485 : vector<1x64xf32>
    %c0_i32_238 = arith.constant 0 : i32
    %c4_i32_239 = arith.constant 4 : i32
    %487 = arith.addi %c0_i32_238, %c4_i32_239 : i32
    %c1_i32_240 = arith.constant 1 : i32
    scf.for %arg23 = %c0_i32_238 to %487 step %c1_i32_240  : i32 {
      %c128_i32 = arith.constant 128 : i32
      %768 = arith.muli %arg23, %c128_i32 : i32
      %769 = tpu.assume_multiple %768, 128 : i32
      %770 = arith.index_cast %769 : i32 to index
      %c0_493 = arith.constant 0 : index
      %771 = vector.load %arg19[%770, %c0_493] : memref<552x64xf32, #tpu.memory_space<vmem>>, vector<128x64xf32>
      %772 = vector.broadcast %477 : vector<1x64xf32> to vector<128x64xf32>
      %773 = arith.subf %771, %772 : vector<128x64xf32>
      %774 = vector.broadcast %486 : vector<1x64xf32> to vector<128x64xf32>
      %775 = arith.mulf %773, %774 : vector<128x64xf32>
      %cst_494 = arith.constant 0.000000e+00 : f32
      %776 = vector.broadcast %cst_494 : f32 to vector<128x64xf32>
      %777 = arith.maximumf %775, %776 : vector<128x64xf32>
      %778 = arith.index_cast %769 : i32 to index
      %c0_495 = arith.constant 0 : index
      %779 = vector.load %arg19[%778, %c0_495] : memref<552x64xf32, #tpu.memory_space<vmem>>, vector<128x64xf32>
      tpu.vector_store %arg19[%778, %c0_495], %777 {strides = array<i32>} : memref<552x64xf32, #tpu.memory_space<vmem>>, vector<128x64xf32>,
    }
    %c4_i32_241 = arith.constant 4 : i32
    %c0_i32_242 = arith.constant 0 : i32
    %c4_i32_243 = arith.constant 4 : i32
    %488 = arith.addi %c0_i32_242, %c4_i32_243 : i32
    %c1_i32_244 = arith.constant 1 : i32
    scf.for %arg23 = %c0_i32_242 to %488 step %c1_i32_244  : i32 {
      %c128_i32 = arith.constant 128 : i32
      %768 = arith.muli %arg23, %c128_i32 : i32
      %769 = tpu.assume_multiple %768, 128 : i32
      %cst_493 = arith.constant 0.000000e+00 : f32
      %770 = vector.broadcast %cst_493 : f32 to vector<128x64xf32>
      %c0_i32_494 = arith.constant 0 : i32
      %771 = arith.addi %769, %c0_i32_494 : i32
      %772 = arith.index_cast %771 : i32 to index
      %c0_495 = arith.constant 0 : index
      %773 = vector.load %arg19[%772, %c0_495] : memref<552x64xf32, #tpu.memory_space<vmem>>, vector<128x64xf32>
      %774 = arith.truncf %773 : vector<128x64xf32> to vector<128x64xbf16>
      %c0_496 = arith.constant 0 : index
      %c0_497 = arith.constant 0 : index
      %c0_498 = arith.constant 0 : index
      %775 = vector.load %arg7[%c0_496, %c0_497, %c0_498] : memref<9x64x64xbf16, #tpu.memory_space<vmem>>, vector<1x64x64xbf16>
      %776 = vector.shape_cast %775 : vector<1x64x64xbf16> to vector<64x64xbf16>
      %cst_499 = arith.constant dense<0.000000e+00> : vector<128x64xf32>
      %777 = tpu.matmul %774, %776, %cst_499 {dimension_numbers = #tpu.dot_dimension_numbers<[1], [0], [0], [1], [0, 0, 1, 1], [], []>} : vector<128x64xbf16>, vector<64x64xbf16>, vector<128x64xf32> -> vector<128x64xf32>
      %778 = arith.addf %770, %777 : vector<128x64xf32>
      %c1_i32_500 = arith.constant 1 : i32
      %779 = arith.addi %769, %c1_i32_500 : i32
      %780 = arith.index_cast %779 : i32 to index
      %c0_501 = arith.constant 0 : index
      %781 = vector.load %arg19[%780, %c0_501] : memref<552x64xf32, #tpu.memory_space<vmem>>, vector<128x64xf32>
      %782 = arith.truncf %781 : vector<128x64xf32> to vector<128x64xbf16>
      %c1_502 = arith.constant 1 : index
      %c0_503 = arith.constant 0 : index
      %c0_504 = arith.constant 0 : index
      %783 = vector.load %arg7[%c1_502, %c0_503, %c0_504] : memref<9x64x64xbf16, #tpu.memory_space<vmem>>, vector<1x64x64xbf16>
      %784 = vector.shape_cast %783 : vector<1x64x64xbf16> to vector<64x64xbf16>
      %cst_505 = arith.constant dense<0.000000e+00> : vector<128x64xf32>
      %785 = tpu.matmul %782, %784, %cst_505 {dimension_numbers = #tpu.dot_dimension_numbers<[1], [0], [0], [1], [0, 0, 1, 1], [], []>} : vector<128x64xbf16>, vector<64x64xbf16>, vector<128x64xf32> -> vector<128x64xf32>
      %786 = arith.addf %778, %785 : vector<128x64xf32>
      %c2_i32_506 = arith.constant 2 : i32
      %787 = arith.addi %769, %c2_i32_506 : i32
      %788 = arith.index_cast %787 : i32 to index
      %c0_507 = arith.constant 0 : index
      %789 = vector.load %arg19[%788, %c0_507] : memref<552x64xf32, #tpu.memory_space<vmem>>, vector<128x64xf32>
      %790 = arith.truncf %789 : vector<128x64xf32> to vector<128x64xbf16>
      %c2_508 = arith.constant 2 : index
      %c0_509 = arith.constant 0 : index
      %c0_510 = arith.constant 0 : index
      %791 = vector.load %arg7[%c2_508, %c0_509, %c0_510] : memref<9x64x64xbf16, #tpu.memory_space<vmem>>, vector<1x64x64xbf16>
      %792 = vector.shape_cast %791 : vector<1x64x64xbf16> to vector<64x64xbf16>
      %cst_511 = arith.constant dense<0.000000e+00> : vector<128x64xf32>
      %793 = tpu.matmul %790, %792, %cst_511 {dimension_numbers = #tpu.dot_dimension_numbers<[1], [0], [0], [1], [0, 0, 1, 1], [], []>} : vector<128x64xbf16>, vector<64x64xbf16>, vector<128x64xf32> -> vector<128x64xf32>
      %794 = arith.addf %786, %793 : vector<128x64xf32>
      %c16_i32_512 = arith.constant 16 : i32
      %795 = arith.addi %769, %c16_i32_512 : i32
      %796 = arith.index_cast %795 : i32 to index
      %c0_513 = arith.constant 0 : index
      %797 = vector.load %arg19[%796, %c0_513] : memref<552x64xf32, #tpu.memory_space<vmem>>, vector<128x64xf32>
      %798 = arith.truncf %797 : vector<128x64xf32> to vector<128x64xbf16>
      %c3_514 = arith.constant 3 : index
      %c0_515 = arith.constant 0 : index
      %c0_516 = arith.constant 0 : index
      %799 = vector.load %arg7[%c3_514, %c0_515, %c0_516] : memref<9x64x64xbf16, #tpu.memory_space<vmem>>, vector<1x64x64xbf16>
      %800 = vector.shape_cast %799 : vector<1x64x64xbf16> to vector<64x64xbf16>
      %cst_517 = arith.constant dense<0.000000e+00> : vector<128x64xf32>
      %801 = tpu.matmul %798, %800, %cst_517 {dimension_numbers = #tpu.dot_dimension_numbers<[1], [0], [0], [1], [0, 0, 1, 1], [], []>} : vector<128x64xbf16>, vector<64x64xbf16>, vector<128x64xf32> -> vector<128x64xf32>
      %802 = arith.addf %794, %801 : vector<128x64xf32>
      %c17_i32 = arith.constant 17 : i32
      %803 = arith.addi %769, %c17_i32 : i32
      %804 = arith.index_cast %803 : i32 to index
      %c0_518 = arith.constant 0 : index
      %805 = vector.load %arg19[%804, %c0_518] : memref<552x64xf32, #tpu.memory_space<vmem>>, vector<128x64xf32>
      %806 = arith.truncf %805 : vector<128x64xf32> to vector<128x64xbf16>
      %c4_519 = arith.constant 4 : index
      %c0_520 = arith.constant 0 : index
      %c0_521 = arith.constant 0 : index
      %807 = vector.load %arg7[%c4_519, %c0_520, %c0_521] : memref<9x64x64xbf16, #tpu.memory_space<vmem>>, vector<1x64x64xbf16>
      %808 = vector.shape_cast %807 : vector<1x64x64xbf16> to vector<64x64xbf16>
      %cst_522 = arith.constant dense<0.000000e+00> : vector<128x64xf32>
      %809 = tpu.matmul %806, %808, %cst_522 {dimension_numbers = #tpu.dot_dimension_numbers<[1], [0], [0], [1], [0, 0, 1, 1], [], []>} : vector<128x64xbf16>, vector<64x64xbf16>, vector<128x64xf32> -> vector<128x64xf32>
      %810 = arith.addf %802, %809 : vector<128x64xf32>
      %c18_i32 = arith.constant 18 : i32
      %811 = arith.addi %769, %c18_i32 : i32
      %812 = arith.index_cast %811 : i32 to index
      %c0_523 = arith.constant 0 : index
      %813 = vector.load %arg19[%812, %c0_523] : memref<552x64xf32, #tpu.memory_space<vmem>>, vector<128x64xf32>
      %814 = arith.truncf %813 : vector<128x64xf32> to vector<128x64xbf16>
      %c5_524 = arith.constant 5 : index
      %c0_525 = arith.constant 0 : index
      %c0_526 = arith.constant 0 : index
      %815 = vector.load %arg7[%c5_524, %c0_525, %c0_526] : memref<9x64x64xbf16, #tpu.memory_space<vmem>>, vector<1x64x64xbf16>
      %816 = vector.shape_cast %815 : vector<1x64x64xbf16> to vector<64x64xbf16>
      %cst_527 = arith.constant dense<0.000000e+00> : vector<128x64xf32>
      %817 = tpu.matmul %814, %816, %cst_527 {dimension_numbers = #tpu.dot_dimension_numbers<[1], [0], [0], [1], [0, 0, 1, 1], [], []>} : vector<128x64xbf16>, vector<64x64xbf16>, vector<128x64xf32> -> vector<128x64xf32>
      %818 = arith.addf %810, %817 : vector<128x64xf32>
      %c32_i32 = arith.constant 32 : i32
      %819 = arith.addi %769, %c32_i32 : i32
      %820 = arith.index_cast %819 : i32 to index
      %c0_528 = arith.constant 0 : index
      %821 = vector.load %arg19[%820, %c0_528] : memref<552x64xf32, #tpu.memory_space<vmem>>, vector<128x64xf32>
      %822 = arith.truncf %821 : vector<128x64xf32> to vector<128x64xbf16>
      %c6_529 = arith.constant 6 : index
      %c0_530 = arith.constant 0 : index
      %c0_531 = arith.constant 0 : index
      %823 = vector.load %arg7[%c6_529, %c0_530, %c0_531] : memref<9x64x64xbf16, #tpu.memory_space<vmem>>, vector<1x64x64xbf16>
      %824 = vector.shape_cast %823 : vector<1x64x64xbf16> to vector<64x64xbf16>
      %cst_532 = arith.constant dense<0.000000e+00> : vector<128x64xf32>
      %825 = tpu.matmul %822, %824, %cst_532 {dimension_numbers = #tpu.dot_dimension_numbers<[1], [0], [0], [1], [0, 0, 1, 1], [], []>} : vector<128x64xbf16>, vector<64x64xbf16>, vector<128x64xf32> -> vector<128x64xf32>
      %826 = arith.addf %818, %825 : vector<128x64xf32>
      %c33_i32 = arith.constant 33 : i32
      %827 = arith.addi %769, %c33_i32 : i32
      %828 = arith.index_cast %827 : i32 to index
      %c0_533 = arith.constant 0 : index
      %829 = vector.load %arg19[%828, %c0_533] : memref<552x64xf32, #tpu.memory_space<vmem>>, vector<128x64xf32>
      %830 = arith.truncf %829 : vector<128x64xf32> to vector<128x64xbf16>
      %c7_534 = arith.constant 7 : index
      %c0_535 = arith.constant 0 : index
      %c0_536 = arith.constant 0 : index
      %831 = vector.load %arg7[%c7_534, %c0_535, %c0_536] : memref<9x64x64xbf16, #tpu.memory_space<vmem>>, vector<1x64x64xbf16>
      %832 = vector.shape_cast %831 : vector<1x64x64xbf16> to vector<64x64xbf16>
      %cst_537 = arith.constant dense<0.000000e+00> : vector<128x64xf32>
      %833 = tpu.matmul %830, %832, %cst_537 {dimension_numbers = #tpu.dot_dimension_numbers<[1], [0], [0], [1], [0, 0, 1, 1], [], []>} : vector<128x64xbf16>, vector<64x64xbf16>, vector<128x64xf32> -> vector<128x64xf32>
      %834 = arith.addf %826, %833 : vector<128x64xf32>
      %c34_i32 = arith.constant 34 : i32
      %835 = arith.addi %769, %c34_i32 : i32
      %836 = arith.index_cast %835 : i32 to index
      %c0_538 = arith.constant 0 : index
      %837 = vector.load %arg19[%836, %c0_538] : memref<552x64xf32, #tpu.memory_space<vmem>>, vector<128x64xf32>
      %838 = arith.truncf %837 : vector<128x64xf32> to vector<128x64xbf16>
      %c8_539 = arith.constant 8 : index
      %c0_540 = arith.constant 0 : index
      %c0_541 = arith.constant 0 : index
      %839 = vector.load %arg7[%c8_539, %c0_540, %c0_541] : memref<9x64x64xbf16, #tpu.memory_space<vmem>>, vector<1x64x64xbf16>
      %840 = vector.shape_cast %839 : vector<1x64x64xbf16> to vector<64x64xbf16>
      %cst_542 = arith.constant dense<0.000000e+00> : vector<128x64xf32>
      %841 = tpu.matmul %838, %840, %cst_542 {dimension_numbers = #tpu.dot_dimension_numbers<[1], [0], [0], [1], [0, 0, 1, 1], [], []>} : vector<128x64xbf16>, vector<64x64xbf16>, vector<128x64xf32> -> vector<128x64xf32>
      %842 = arith.addf %834, %841 : vector<128x64xf32>
      %c0_543 = arith.constant 0 : index
      %c0_544 = arith.constant 0 : index
      %843 = vector.load %arg8[%c0_543, %c0_544] : memref<1x64xf32, #tpu.memory_space<vmem>>, vector<1x64xf32>
      %844 = vector.broadcast %843 : vector<1x64xf32> to vector<128x64xf32>
      %845 = arith.addf %842, %844 : vector<128x64xf32>
      %846 = arith.index_cast %769 : i32 to index
      %c0_545 = arith.constant 0 : index
      %847 = vector.load %arg20[%846, %c0_545] : memref<512x64xf32, #tpu.memory_space<vmem>>, vector<128x64xf32>
      tpu.vector_store %arg20[%846, %c0_545], %845 {strides = array<i32>} : memref<512x64xf32, #tpu.memory_space<vmem>>, vector<128x64xf32>,
    }
    %c4_i32_245 = arith.constant 4 : i32
    %c0_246 = arith.constant 0 : index
    %c0_247 = arith.constant 0 : index
    %489 = tpu.strided_load %arg20[%c0_246, %c0_247] {strides = array<i32: 2, 1>} : memref<512x64xf32, #tpu.memory_space<vmem>>, vector<8x64xf32>
    %c1_248 = arith.constant 1 : index
    %c0_249 = arith.constant 0 : index
    %490 = tpu.strided_load %arg20[%c1_248, %c0_249] {strides = array<i32: 2, 1>} : memref<512x64xf32, #tpu.memory_space<vmem>>, vector<8x64xf32>
    %491 = arith.maximumf %489, %490 : vector<8x64xf32>
    %c16_250 = arith.constant 16 : index
    %c0_251 = arith.constant 0 : index
    %492 = tpu.strided_load %arg20[%c16_250, %c0_251] {strides = array<i32: 2, 1>} : memref<512x64xf32, #tpu.memory_space<vmem>>, vector<8x64xf32>
    %c17 = arith.constant 17 : index
    %c0_252 = arith.constant 0 : index
    %493 = tpu.strided_load %arg20[%c17, %c0_252] {strides = array<i32: 2, 1>} : memref<512x64xf32, #tpu.memory_space<vmem>>, vector<8x64xf32>
    %494 = arith.maximumf %492, %493 : vector<8x64xf32>
    %495 = arith.maximumf %491, %494 : vector<8x64xf32>
    %cst_253 = arith.constant 0.000000e+00 : f32
    %496 = vector.broadcast %cst_253 : f32 to vector<8x64xf32>
    %497 = arith.maximumf %495, %496 : vector<8x64xf32>
    %c0_254 = arith.constant 0 : index
    %c0_255 = arith.constant 0 : index
    %498 = vector.load %arg21[%c0_254, %c0_255] : memref<144x64xf32, #tpu.memory_space<vmem>>, vector<8x64xf32>
    tpu.vector_store %arg21[%c0_254, %c0_255], %497 {strides = array<i32>} : memref<144x64xf32, #tpu.memory_space<vmem>>, vector<8x64xf32>,
    %c32_256 = arith.constant 32 : index
    %c0_257 = arith.constant 0 : index
    %499 = tpu.strided_load %arg20[%c32_256, %c0_257] {strides = array<i32: 2, 1>} : memref<512x64xf32, #tpu.memory_space<vmem>>, vector<8x64xf32>
    %c33_258 = arith.constant 33 : index
    %c0_259 = arith.constant 0 : index
    %500 = tpu.strided_load %arg20[%c33_258, %c0_259] {strides = array<i32: 2, 1>} : memref<512x64xf32, #tpu.memory_space<vmem>>, vector<8x64xf32>
    %501 = arith.maximumf %499, %500 : vector<8x64xf32>
    %c48_260 = arith.constant 48 : index
    %c0_261 = arith.constant 0 : index
    %502 = tpu.strided_load %arg20[%c48_260, %c0_261] {strides = array<i32: 2, 1>} : memref<512x64xf32, #tpu.memory_space<vmem>>, vector<8x64xf32>
    %c49 = arith.constant 49 : index
    %c0_262 = arith.constant 0 : index
    %503 = tpu.strided_load %arg20[%c49, %c0_262] {strides = array<i32: 2, 1>} : memref<512x64xf32, #tpu.memory_space<vmem>>, vector<8x64xf32>
    %504 = arith.maximumf %502, %503 : vector<8x64xf32>
    %505 = arith.maximumf %501, %504 : vector<8x64xf32>
    %cst_263 = arith.constant 0.000000e+00 : f32
    %506 = vector.broadcast %cst_263 : f32 to vector<8x64xf32>
    %507 = arith.maximumf %505, %506 : vector<8x64xf32>
    %c8 = arith.constant 8 : index
    %c0_264 = arith.constant 0 : index
    %508 = vector.load %arg21[%c8, %c0_264] : memref<144x64xf32, #tpu.memory_space<vmem>>, vector<8x64xf32>
    tpu.vector_store %arg21[%c8, %c0_264], %507 {strides = array<i32>} : memref<144x64xf32, #tpu.memory_space<vmem>>, vector<8x64xf32>,
    %c64_265 = arith.constant 64 : index
    %c0_266 = arith.constant 0 : index
    %509 = tpu.strided_load %arg20[%c64_265, %c0_266] {strides = array<i32: 2, 1>} : memref<512x64xf32, #tpu.memory_space<vmem>>, vector<8x64xf32>
    %c65_267 = arith.constant 65 : index
    %c0_268 = arith.constant 0 : index
    %510 = tpu.strided_load %arg20[%c65_267, %c0_268] {strides = array<i32: 2, 1>} : memref<512x64xf32, #tpu.memory_space<vmem>>, vector<8x64xf32>
    %511 = arith.maximumf %509, %510 : vector<8x64xf32>
    %c80_269 = arith.constant 80 : index
    %c0_270 = arith.constant 0 : index
    %512 = tpu.strided_load %arg20[%c80_269, %c0_270] {strides = array<i32: 2, 1>} : memref<512x64xf32, #tpu.memory_space<vmem>>, vector<8x64xf32>
    %c81 = arith.constant 81 : index
    %c0_271 = arith.constant 0 : index
    %513 = tpu.strided_load %arg20[%c81, %c0_271] {strides = array<i32: 2, 1>} : memref<512x64xf32, #tpu.memory_space<vmem>>, vector<8x64xf32>
    %514 = arith.maximumf %512, %513 : vector<8x64xf32>
    %515 = arith.maximumf %511, %514 : vector<8x64xf32>
    %cst_272 = arith.constant 0.000000e+00 : f32
    %516 = vector.broadcast %cst_272 : f32 to vector<8x64xf32>
    %517 = arith.maximumf %515, %516 : vector<8x64xf32>
    %c16_273 = arith.constant 16 : index
    %c0_274 = arith.constant 0 : index
    %518 = vector.load %arg21[%c16_273, %c0_274] : memref<144x64xf32, #tpu.memory_space<vmem>>, vector<8x64xf32>
    tpu.vector_store %arg21[%c16_273, %c0_274], %517 {strides = array<i32>} : memref<144x64xf32, #tpu.memory_space<vmem>>, vector<8x64xf32>,
    %c96_275 = arith.constant 96 : index
    %c0_276 = arith.constant 0 : index
    %519 = tpu.strided_load %arg20[%c96_275, %c0_276] {strides = array<i32: 2, 1>} : memref<512x64xf32, #tpu.memory_space<vmem>>, vector<8x64xf32>
    %c97_277 = arith.constant 97 : index
    %c0_278 = arith.constant 0 : index
    %520 = tpu.strided_load %arg20[%c97_277, %c0_278] {strides = array<i32: 2, 1>} : memref<512x64xf32, #tpu.memory_space<vmem>>, vector<8x64xf32>
    %521 = arith.maximumf %519, %520 : vector<8x64xf32>
    %c112_279 = arith.constant 112 : index
    %c0_280 = arith.constant 0 : index
    %522 = tpu.strided_load %arg20[%c112_279, %c0_280] {strides = array<i32: 2, 1>} : memref<512x64xf32, #tpu.memory_space<vmem>>, vector<8x64xf32>
    %c113 = arith.constant 113 : index
    %c0_281 = arith.constant 0 : index
    %523 = tpu.strided_load %arg20[%c113, %c0_281] {strides = array<i32: 2, 1>} : memref<512x64xf32, #tpu.memory_space<vmem>>, vector<8x64xf32>
    %524 = arith.maximumf %522, %523 : vector<8x64xf32>
    %525 = arith.maximumf %521, %524 : vector<8x64xf32>
    %cst_282 = arith.constant 0.000000e+00 : f32
    %526 = vector.broadcast %cst_282 : f32 to vector<8x64xf32>
    %527 = arith.maximumf %525, %526 : vector<8x64xf32>
    %c24 = arith.constant 24 : index
    %c0_283 = arith.constant 0 : index
    %528 = vector.load %arg21[%c24, %c0_283] : memref<144x64xf32, #tpu.memory_space<vmem>>, vector<8x64xf32>
    tpu.vector_store %arg21[%c24, %c0_283], %527 {strides = array<i32>} : memref<144x64xf32, #tpu.memory_space<vmem>>, vector<8x64xf32>,
    %c128_284 = arith.constant 128 : index
    %c0_285 = arith.constant 0 : index
    %529 = tpu.strided_load %arg20[%c128_284, %c0_285] {strides = array<i32: 2, 1>} : memref<512x64xf32, #tpu.memory_space<vmem>>, vector<8x64xf32>
    %c129_286 = arith.constant 129 : index
    %c0_287 = arith.constant 0 : index
    %530 = tpu.strided_load %arg20[%c129_286, %c0_287] {strides = array<i32: 2, 1>} : memref<512x64xf32, #tpu.memory_space<vmem>>, vector<8x64xf32>
    %531 = arith.maximumf %529, %530 : vector<8x64xf32>
    %c144_288 = arith.constant 144 : index
    %c0_289 = arith.constant 0 : index
    %532 = tpu.strided_load %arg20[%c144_288, %c0_289] {strides = array<i32: 2, 1>} : memref<512x64xf32, #tpu.memory_space<vmem>>, vector<8x64xf32>
    %c145 = arith.constant 145 : index
    %c0_290 = arith.constant 0 : index
    %533 = tpu.strided_load %arg20[%c145, %c0_290] {strides = array<i32: 2, 1>} : memref<512x64xf32, #tpu.memory_space<vmem>>, vector<8x64xf32>
    %534 = arith.maximumf %532, %533 : vector<8x64xf32>
    %535 = arith.maximumf %531, %534 : vector<8x64xf32>
    %cst_291 = arith.constant 0.000000e+00 : f32
    %536 = vector.broadcast %cst_291 : f32 to vector<8x64xf32>
    %537 = arith.maximumf %535, %536 : vector<8x64xf32>
    %c32_292 = arith.constant 32 : index
    %c0_293 = arith.constant 0 : index
    %538 = vector.load %arg21[%c32_292, %c0_293] : memref<144x64xf32, #tpu.memory_space<vmem>>, vector<8x64xf32>
    tpu.vector_store %arg21[%c32_292, %c0_293], %537 {strides = array<i32>} : memref<144x64xf32, #tpu.memory_space<vmem>>, vector<8x64xf32>,
    %c160_294 = arith.constant 160 : index
    %c0_295 = arith.constant 0 : index
    %539 = tpu.strided_load %arg20[%c160_294, %c0_295] {strides = array<i32: 2, 1>} : memref<512x64xf32, #tpu.memory_space<vmem>>, vector<8x64xf32>
    %c161_296 = arith.constant 161 : index
    %c0_297 = arith.constant 0 : index
    %540 = tpu.strided_load %arg20[%c161_296, %c0_297] {strides = array<i32: 2, 1>} : memref<512x64xf32, #tpu.memory_space<vmem>>, vector<8x64xf32>
    %541 = arith.maximumf %539, %540 : vector<8x64xf32>
    %c176_298 = arith.constant 176 : index
    %c0_299 = arith.constant 0 : index
    %542 = tpu.strided_load %arg20[%c176_298, %c0_299] {strides = array<i32: 2, 1>} : memref<512x64xf32, #tpu.memory_space<vmem>>, vector<8x64xf32>
    %c177 = arith.constant 177 : index
    %c0_300 = arith.constant 0 : index
    %543 = tpu.strided_load %arg20[%c177, %c0_300] {strides = array<i32: 2, 1>} : memref<512x64xf32, #tpu.memory_space<vmem>>, vector<8x64xf32>
    %544 = arith.maximumf %542, %543 : vector<8x64xf32>
    %545 = arith.maximumf %541, %544 : vector<8x64xf32>
    %cst_301 = arith.constant 0.000000e+00 : f32
    %546 = vector.broadcast %cst_301 : f32 to vector<8x64xf32>
    %547 = arith.maximumf %545, %546 : vector<8x64xf32>
    %c40 = arith.constant 40 : index
    %c0_302 = arith.constant 0 : index
    %548 = vector.load %arg21[%c40, %c0_302] : memref<144x64xf32, #tpu.memory_space<vmem>>, vector<8x64xf32>
    tpu.vector_store %arg21[%c40, %c0_302], %547 {strides = array<i32>} : memref<144x64xf32, #tpu.memory_space<vmem>>, vector<8x64xf32>,
    %c192_303 = arith.constant 192 : index
    %c0_304 = arith.constant 0 : index
    %549 = tpu.strided_load %arg20[%c192_303, %c0_304] {strides = array<i32: 2, 1>} : memref<512x64xf32, #tpu.memory_space<vmem>>, vector<8x64xf32>
    %c193_305 = arith.constant 193 : index
    %c0_306 = arith.constant 0 : index
    %550 = tpu.strided_load %arg20[%c193_305, %c0_306] {strides = array<i32: 2, 1>} : memref<512x64xf32, #tpu.memory_space<vmem>>, vector<8x64xf32>
    %551 = arith.maximumf %549, %550 : vector<8x64xf32>
    %c208_307 = arith.constant 208 : index
    %c0_308 = arith.constant 0 : index
    %552 = tpu.strided_load %arg20[%c208_307, %c0_308] {strides = array<i32: 2, 1>} : memref<512x64xf32, #tpu.memory_space<vmem>>, vector<8x64xf32>
    %c209 = arith.constant 209 : index
    %c0_309 = arith.constant 0 : index
    %553 = tpu.strided_load %arg20[%c209, %c0_309] {strides = array<i32: 2, 1>} : memref<512x64xf32, #tpu.memory_space<vmem>>, vector<8x64xf32>
    %554 = arith.maximumf %552, %553 : vector<8x64xf32>
    %555 = arith.maximumf %551, %554 : vector<8x64xf32>
    %cst_310 = arith.constant 0.000000e+00 : f32
    %556 = vector.broadcast %cst_310 : f32 to vector<8x64xf32>
    %557 = arith.maximumf %555, %556 : vector<8x64xf32>
    %c48_311 = arith.constant 48 : index
    %c0_312 = arith.constant 0 : index
    %558 = vector.load %arg21[%c48_311, %c0_312] : memref<144x64xf32, #tpu.memory_space<vmem>>, vector<8x64xf32>
    tpu.vector_store %arg21[%c48_311, %c0_312], %557 {strides = array<i32>} : memref<144x64xf32, #tpu.memory_space<vmem>>, vector<8x64xf32>,
    %c224_313 = arith.constant 224 : index
    %c0_314 = arith.constant 0 : index
    %559 = tpu.strided_load %arg20[%c224_313, %c0_314] {strides = array<i32: 2, 1>} : memref<512x64xf32, #tpu.memory_space<vmem>>, vector<8x64xf32>
    %c225_315 = arith.constant 225 : index
    %c0_316 = arith.constant 0 : index
    %560 = tpu.strided_load %arg20[%c225_315, %c0_316] {strides = array<i32: 2, 1>} : memref<512x64xf32, #tpu.memory_space<vmem>>, vector<8x64xf32>
    %561 = arith.maximumf %559, %560 : vector<8x64xf32>
    %c240_317 = arith.constant 240 : index
    %c0_318 = arith.constant 0 : index
    %562 = tpu.strided_load %arg20[%c240_317, %c0_318] {strides = array<i32: 2, 1>} : memref<512x64xf32, #tpu.memory_space<vmem>>, vector<8x64xf32>
    %c241 = arith.constant 241 : index
    %c0_319 = arith.constant 0 : index
    %563 = tpu.strided_load %arg20[%c241, %c0_319] {strides = array<i32: 2, 1>} : memref<512x64xf32, #tpu.memory_space<vmem>>, vector<8x64xf32>
    %564 = arith.maximumf %562, %563 : vector<8x64xf32>
    %565 = arith.maximumf %561, %564 : vector<8x64xf32>
    %cst_320 = arith.constant 0.000000e+00 : f32
    %566 = vector.broadcast %cst_320 : f32 to vector<8x64xf32>
    %567 = arith.maximumf %565, %566 : vector<8x64xf32>
    %c56 = arith.constant 56 : index
    %c0_321 = arith.constant 0 : index
    %568 = vector.load %arg21[%c56, %c0_321] : memref<144x64xf32, #tpu.memory_space<vmem>>, vector<8x64xf32>
    tpu.vector_store %arg21[%c56, %c0_321], %567 {strides = array<i32>} : memref<144x64xf32, #tpu.memory_space<vmem>>, vector<8x64xf32>,
    %c256_322 = arith.constant 256 : index
    %c0_323 = arith.constant 0 : index
    %569 = tpu.strided_load %arg20[%c256_322, %c0_323] {strides = array<i32: 2, 1>} : memref<512x64xf32, #tpu.memory_space<vmem>>, vector<8x64xf32>
    %c257_324 = arith.constant 257 : index
    %c0_325 = arith.constant 0 : index
    %570 = tpu.strided_load %arg20[%c257_324, %c0_325] {strides = array<i32: 2, 1>} : memref<512x64xf32, #tpu.memory_space<vmem>>, vector<8x64xf32>
    %571 = arith.maximumf %569, %570 : vector<8x64xf32>
    %c272_326 = arith.constant 272 : index
    %c0_327 = arith.constant 0 : index
    %572 = tpu.strided_load %arg20[%c272_326, %c0_327] {strides = array<i32: 2, 1>} : memref<512x64xf32, #tpu.memory_space<vmem>>, vector<8x64xf32>
    %c273 = arith.constant 273 : index
    %c0_328 = arith.constant 0 : index
    %573 = tpu.strided_load %arg20[%c273, %c0_328] {strides = array<i32: 2, 1>} : memref<512x64xf32, #tpu.memory_space<vmem>>, vector<8x64xf32>
    %574 = arith.maximumf %572, %573 : vector<8x64xf32>
    %575 = arith.maximumf %571, %574 : vector<8x64xf32>
    %cst_329 = arith.constant 0.000000e+00 : f32
    %576 = vector.broadcast %cst_329 : f32 to vector<8x64xf32>
    %577 = arith.maximumf %575, %576 : vector<8x64xf32>
    %c64_330 = arith.constant 64 : index
    %c0_331 = arith.constant 0 : index
    %578 = vector.load %arg21[%c64_330, %c0_331] : memref<144x64xf32, #tpu.memory_space<vmem>>, vector<8x64xf32>
    tpu.vector_store %arg21[%c64_330, %c0_331], %577 {strides = array<i32>} : memref<144x64xf32, #tpu.memory_space<vmem>>, vector<8x64xf32>,
    %c288_332 = arith.constant 288 : index
    %c0_333 = arith.constant 0 : index
    %579 = tpu.strided_load %arg20[%c288_332, %c0_333] {strides = array<i32: 2, 1>} : memref<512x64xf32, #tpu.memory_space<vmem>>, vector<8x64xf32>
    %c289_334 = arith.constant 289 : index
    %c0_335 = arith.constant 0 : index
    %580 = tpu.strided_load %arg20[%c289_334, %c0_335] {strides = array<i32: 2, 1>} : memref<512x64xf32, #tpu.memory_space<vmem>>, vector<8x64xf32>
    %581 = arith.maximumf %579, %580 : vector<8x64xf32>
    %c304_336 = arith.constant 304 : index
    %c0_337 = arith.constant 0 : index
    %582 = tpu.strided_load %arg20[%c304_336, %c0_337] {strides = array<i32: 2, 1>} : memref<512x64xf32, #tpu.memory_space<vmem>>, vector<8x64xf32>
    %c305 = arith.constant 305 : index
    %c0_338 = arith.constant 0 : index
    %583 = tpu.strided_load %arg20[%c305, %c0_338] {strides = array<i32: 2, 1>} : memref<512x64xf32, #tpu.memory_space<vmem>>, vector<8x64xf32>
    %584 = arith.maximumf %582, %583 : vector<8x64xf32>
    %585 = arith.maximumf %581, %584 : vector<8x64xf32>
    %cst_339 = arith.constant 0.000000e+00 : f32
    %586 = vector.broadcast %cst_339 : f32 to vector<8x64xf32>
    %587 = arith.maximumf %585, %586 : vector<8x64xf32>
    %c72 = arith.constant 72 : index
    %c0_340 = arith.constant 0 : index
    %588 = vector.load %arg21[%c72, %c0_340] : memref<144x64xf32, #tpu.memory_space<vmem>>, vector<8x64xf32>
    tpu.vector_store %arg21[%c72, %c0_340], %587 {strides = array<i32>} : memref<144x64xf32, #tpu.memory_space<vmem>>, vector<8x64xf32>,
    %c320_341 = arith.constant 320 : index
    %c0_342 = arith.constant 0 : index
    %589 = tpu.strided_load %arg20[%c320_341, %c0_342] {strides = array<i32: 2, 1>} : memref<512x64xf32, #tpu.memory_space<vmem>>, vector<8x64xf32>
    %c321_343 = arith.constant 321 : index
    %c0_344 = arith.constant 0 : index
    %590 = tpu.strided_load %arg20[%c321_343, %c0_344] {strides = array<i32: 2, 1>} : memref<512x64xf32, #tpu.memory_space<vmem>>, vector<8x64xf32>
    %591 = arith.maximumf %589, %590 : vector<8x64xf32>
    %c336_345 = arith.constant 336 : index
    %c0_346 = arith.constant 0 : index
    %592 = tpu.strided_load %arg20[%c336_345, %c0_346] {strides = array<i32: 2, 1>} : memref<512x64xf32, #tpu.memory_space<vmem>>, vector<8x64xf32>
    %c337 = arith.constant 337 : index
    %c0_347 = arith.constant 0 : index
    %593 = tpu.strided_load %arg20[%c337, %c0_347] {strides = array<i32: 2, 1>} : memref<512x64xf32, #tpu.memory_space<vmem>>, vector<8x64xf32>
    %594 = arith.maximumf %592, %593 : vector<8x64xf32>
    %595 = arith.maximumf %591, %594 : vector<8x64xf32>
    %cst_348 = arith.constant 0.000000e+00 : f32
    %596 = vector.broadcast %cst_348 : f32 to vector<8x64xf32>
    %597 = arith.maximumf %595, %596 : vector<8x64xf32>
    %c80_349 = arith.constant 80 : index
    %c0_350 = arith.constant 0 : index
    %598 = vector.load %arg21[%c80_349, %c0_350] : memref<144x64xf32, #tpu.memory_space<vmem>>, vector<8x64xf32>
    tpu.vector_store %arg21[%c80_349, %c0_350], %597 {strides = array<i32>} : memref<144x64xf32, #tpu.memory_space<vmem>>, vector<8x64xf32>,
    %c352_351 = arith.constant 352 : index
    %c0_352 = arith.constant 0 : index
    %599 = tpu.strided_load %arg20[%c352_351, %c0_352] {strides = array<i32: 2, 1>} : memref<512x64xf32, #tpu.memory_space<vmem>>, vector<8x64xf32>
    %c353_353 = arith.constant 353 : index
    %c0_354 = arith.constant 0 : index
    %600 = tpu.strided_load %arg20[%c353_353, %c0_354] {strides = array<i32: 2, 1>} : memref<512x64xf32, #tpu.memory_space<vmem>>, vector<8x64xf32>
    %601 = arith.maximumf %599, %600 : vector<8x64xf32>
    %c368_355 = arith.constant 368 : index
    %c0_356 = arith.constant 0 : index
    %602 = tpu.strided_load %arg20[%c368_355, %c0_356] {strides = array<i32: 2, 1>} : memref<512x64xf32, #tpu.memory_space<vmem>>, vector<8x64xf32>
    %c369 = arith.constant 369 : index
    %c0_357 = arith.constant 0 : index
    %603 = tpu.strided_load %arg20[%c369, %c0_357] {strides = array<i32: 2, 1>} : memref<512x64xf32, #tpu.memory_space<vmem>>, vector<8x64xf32>
    %604 = arith.maximumf %602, %603 : vector<8x64xf32>
    %605 = arith.maximumf %601, %604 : vector<8x64xf32>
    %cst_358 = arith.constant 0.000000e+00 : f32
    %606 = vector.broadcast %cst_358 : f32 to vector<8x64xf32>
    %607 = arith.maximumf %605, %606 : vector<8x64xf32>
    %c88 = arith.constant 88 : index
    %c0_359 = arith.constant 0 : index
    %608 = vector.load %arg21[%c88, %c0_359] : memref<144x64xf32, #tpu.memory_space<vmem>>, vector<8x64xf32>
    tpu.vector_store %arg21[%c88, %c0_359], %607 {strides = array<i32>} : memref<144x64xf32, #tpu.memory_space<vmem>>, vector<8x64xf32>,
    %c384_360 = arith.constant 384 : index
    %c0_361 = arith.constant 0 : index
    %609 = tpu.strided_load %arg20[%c384_360, %c0_361] {strides = array<i32: 2, 1>} : memref<512x64xf32, #tpu.memory_space<vmem>>, vector<8x64xf32>
    %c385_362 = arith.constant 385 : index
    %c0_363 = arith.constant 0 : index
    %610 = tpu.strided_load %arg20[%c385_362, %c0_363] {strides = array<i32: 2, 1>} : memref<512x64xf32, #tpu.memory_space<vmem>>, vector<8x64xf32>
    %611 = arith.maximumf %609, %610 : vector<8x64xf32>
    %c400_364 = arith.constant 400 : index
    %c0_365 = arith.constant 0 : index
    %612 = tpu.strided_load %arg20[%c400_364, %c0_365] {strides = array<i32: 2, 1>} : memref<512x64xf32, #tpu.memory_space<vmem>>, vector<8x64xf32>
    %c401 = arith.constant 401 : index
    %c0_366 = arith.constant 0 : index
    %613 = tpu.strided_load %arg20[%c401, %c0_366] {strides = array<i32: 2, 1>} : memref<512x64xf32, #tpu.memory_space<vmem>>, vector<8x64xf32>
    %614 = arith.maximumf %612, %613 : vector<8x64xf32>
    %615 = arith.maximumf %611, %614 : vector<8x64xf32>
    %cst_367 = arith.constant 0.000000e+00 : f32
    %616 = vector.broadcast %cst_367 : f32 to vector<8x64xf32>
    %617 = arith.maximumf %615, %616 : vector<8x64xf32>
    %c96_368 = arith.constant 96 : index
    %c0_369 = arith.constant 0 : index
    %618 = vector.load %arg21[%c96_368, %c0_369] : memref<144x64xf32, #tpu.memory_space<vmem>>, vector<8x64xf32>
    tpu.vector_store %arg21[%c96_368, %c0_369], %617 {strides = array<i32>} : memref<144x64xf32, #tpu.memory_space<vmem>>, vector<8x64xf32>,
    %c416_370 = arith.constant 416 : index
    %c0_371 = arith.constant 0 : index
    %619 = tpu.strided_load %arg20[%c416_370, %c0_371] {strides = array<i32: 2, 1>} : memref<512x64xf32, #tpu.memory_space<vmem>>, vector<8x64xf32>
    %c417_372 = arith.constant 417 : index
    %c0_373 = arith.constant 0 : index
    %620 = tpu.strided_load %arg20[%c417_372, %c0_373] {strides = array<i32: 2, 1>} : memref<512x64xf32, #tpu.memory_space<vmem>>, vector<8x64xf32>
    %621 = arith.maximumf %619, %620 : vector<8x64xf32>
    %c432_374 = arith.constant 432 : index
    %c0_375 = arith.constant 0 : index
    %622 = tpu.strided_load %arg20[%c432_374, %c0_375] {strides = array<i32: 2, 1>} : memref<512x64xf32, #tpu.memory_space<vmem>>, vector<8x64xf32>
    %c433 = arith.constant 433 : index
    %c0_376 = arith.constant 0 : index
    %623 = tpu.strided_load %arg20[%c433, %c0_376] {strides = array<i32: 2, 1>} : memref<512x64xf32, #tpu.memory_space<vmem>>, vector<8x64xf32>
    %624 = arith.maximumf %622, %623 : vector<8x64xf32>
    %625 = arith.maximumf %621, %624 : vector<8x64xf32>
    %cst_377 = arith.constant 0.000000e+00 : f32
    %626 = vector.broadcast %cst_377 : f32 to vector<8x64xf32>
    %627 = arith.maximumf %625, %626 : vector<8x64xf32>
    %c104 = arith.constant 104 : index
    %c0_378 = arith.constant 0 : index
    %628 = vector.load %arg21[%c104, %c0_378] : memref<144x64xf32, #tpu.memory_space<vmem>>, vector<8x64xf32>
    tpu.vector_store %arg21[%c104, %c0_378], %627 {strides = array<i32>} : memref<144x64xf32, #tpu.memory_space<vmem>>, vector<8x64xf32>,
    %c448_379 = arith.constant 448 : index
    %c0_380 = arith.constant 0 : index
    %629 = tpu.strided_load %arg20[%c448_379, %c0_380] {strides = array<i32: 2, 1>} : memref<512x64xf32, #tpu.memory_space<vmem>>, vector<8x64xf32>
    %c449_381 = arith.constant 449 : index
    %c0_382 = arith.constant 0 : index
    %630 = tpu.strided_load %arg20[%c449_381, %c0_382] {strides = array<i32: 2, 1>} : memref<512x64xf32, #tpu.memory_space<vmem>>, vector<8x64xf32>
    %631 = arith.maximumf %629, %630 : vector<8x64xf32>
    %c464_383 = arith.constant 464 : index
    %c0_384 = arith.constant 0 : index
    %632 = tpu.strided_load %arg20[%c464_383, %c0_384] {strides = array<i32: 2, 1>} : memref<512x64xf32, #tpu.memory_space<vmem>>, vector<8x64xf32>
    %c465 = arith.constant 465 : index
    %c0_385 = arith.constant 0 : index
    %633 = tpu.strided_load %arg20[%c465, %c0_385] {strides = array<i32: 2, 1>} : memref<512x64xf32, #tpu.memory_space<vmem>>, vector<8x64xf32>
    %634 = arith.maximumf %632, %633 : vector<8x64xf32>
    %635 = arith.maximumf %631, %634 : vector<8x64xf32>
    %cst_386 = arith.constant 0.000000e+00 : f32
    %636 = vector.broadcast %cst_386 : f32 to vector<8x64xf32>
    %637 = arith.maximumf %635, %636 : vector<8x64xf32>
    %c112_387 = arith.constant 112 : index
    %c0_388 = arith.constant 0 : index
    %638 = vector.load %arg21[%c112_387, %c0_388] : memref<144x64xf32, #tpu.memory_space<vmem>>, vector<8x64xf32>
    tpu.vector_store %arg21[%c112_387, %c0_388], %637 {strides = array<i32>} : memref<144x64xf32, #tpu.memory_space<vmem>>, vector<8x64xf32>,
    %c480_389 = arith.constant 480 : index
    %c0_390 = arith.constant 0 : index
    %639 = tpu.strided_load %arg20[%c480_389, %c0_390] {strides = array<i32: 2, 1>} : memref<512x64xf32, #tpu.memory_space<vmem>>, vector<8x64xf32>
    %c481_391 = arith.constant 481 : index
    %c0_392 = arith.constant 0 : index
    %640 = tpu.strided_load %arg20[%c481_391, %c0_392] {strides = array<i32: 2, 1>} : memref<512x64xf32, #tpu.memory_space<vmem>>, vector<8x64xf32>
    %641 = arith.maximumf %639, %640 : vector<8x64xf32>
    %c496_393 = arith.constant 496 : index
    %c0_394 = arith.constant 0 : index
    %642 = tpu.strided_load %arg20[%c496_393, %c0_394] {strides = array<i32: 2, 1>} : memref<512x64xf32, #tpu.memory_space<vmem>>, vector<8x64xf32>
    %c497 = arith.constant 497 : index
    %c0_395 = arith.constant 0 : index
    %643 = tpu.strided_load %arg20[%c497, %c0_395] {strides = array<i32: 2, 1>} : memref<512x64xf32, #tpu.memory_space<vmem>>, vector<8x64xf32>
    %644 = arith.maximumf %642, %643 : vector<8x64xf32>
    %645 = arith.maximumf %641, %644 : vector<8x64xf32>
    %cst_396 = arith.constant 0.000000e+00 : f32
    %646 = vector.broadcast %cst_396 : f32 to vector<8x64xf32>
    %647 = arith.maximumf %645, %646 : vector<8x64xf32>
    %c120 = arith.constant 120 : index
    %c0_397 = arith.constant 0 : index
    %648 = vector.load %arg21[%c120, %c0_397] : memref<144x64xf32, #tpu.memory_space<vmem>>, vector<8x64xf32>
    tpu.vector_store %arg21[%c120, %c0_397], %647 {strides = array<i32>} : memref<144x64xf32, #tpu.memory_space<vmem>>, vector<8x64xf32>,
    %c0_i32_398 = arith.constant 0 : i32
    %c2_i32 = arith.constant 2 : i32
    %649 = arith.addi %c0_i32_398, %c2_i32 : i32
    %c1_i32_399 = arith.constant 1 : i32
    scf.for %arg23 = %c0_i32_398 to %649 step %c1_i32_399  : i32 {
      %c64_i32 = arith.constant 64 : i32
      %768 = arith.muli %arg23, %c64_i32 : i32
      %769 = tpu.assume_multiple %768, 64 : i32
      %cst_493 = arith.constant 0.000000e+00 : f32
      %770 = vector.broadcast %cst_493 : f32 to vector<64x64xf32>
      %c0_i32_494 = arith.constant 0 : i32
      %771 = arith.addi %769, %c0_i32_494 : i32
      %772 = arith.index_cast %771 : i32 to index
      %c0_495 = arith.constant 0 : index
      %773 = vector.load %arg21[%772, %c0_495] : memref<144x64xf32, #tpu.memory_space<vmem>>, vector<64x64xf32>
      %774 = arith.truncf %773 : vector<64x64xf32> to vector<64x64xbf16>
      %c0_496 = arith.constant 0 : index
      %c0_497 = arith.constant 0 : index
      %c0_498 = arith.constant 0 : index
      %775 = vector.load %arg9[%c0_496, %c0_497, %c0_498] : memref<4x64x64xbf16, #tpu.memory_space<vmem>>, vector<1x64x64xbf16>
      %776 = vector.shape_cast %775 : vector<1x64x64xbf16> to vector<64x64xbf16>
      %cst_499 = arith.constant dense<0.000000e+00> : vector<64x64xf32>
      %777 = tpu.matmul %774, %776, %cst_499 {dimension_numbers = #tpu.dot_dimension_numbers<[1], [0], [0], [1], [0, 0, 1, 1], [], []>} : vector<64x64xbf16>, vector<64x64xbf16>, vector<64x64xf32> -> vector<64x64xf32>
      %778 = arith.addf %770, %777 : vector<64x64xf32>
      %c1_i32_500 = arith.constant 1 : i32
      %779 = arith.addi %769, %c1_i32_500 : i32
      %780 = arith.index_cast %779 : i32 to index
      %c0_501 = arith.constant 0 : index
      %781 = vector.load %arg21[%780, %c0_501] : memref<144x64xf32, #tpu.memory_space<vmem>>, vector<64x64xf32>
      %782 = arith.truncf %781 : vector<64x64xf32> to vector<64x64xbf16>
      %c1_502 = arith.constant 1 : index
      %c0_503 = arith.constant 0 : index
      %c0_504 = arith.constant 0 : index
      %783 = vector.load %arg9[%c1_502, %c0_503, %c0_504] : memref<4x64x64xbf16, #tpu.memory_space<vmem>>, vector<1x64x64xbf16>
      %784 = vector.shape_cast %783 : vector<1x64x64xbf16> to vector<64x64xbf16>
      %cst_505 = arith.constant dense<0.000000e+00> : vector<64x64xf32>
      %785 = tpu.matmul %782, %784, %cst_505 {dimension_numbers = #tpu.dot_dimension_numbers<[1], [0], [0], [1], [0, 0, 1, 1], [], []>} : vector<64x64xbf16>, vector<64x64xbf16>, vector<64x64xf32> -> vector<64x64xf32>
      %786 = arith.addf %778, %785 : vector<64x64xf32>
      %c8_i32 = arith.constant 8 : i32
      %787 = arith.addi %769, %c8_i32 : i32
      %788 = arith.index_cast %787 : i32 to index
      %c0_506 = arith.constant 0 : index
      %789 = vector.load %arg21[%788, %c0_506] : memref<144x64xf32, #tpu.memory_space<vmem>>, vector<64x64xf32>
      %790 = arith.truncf %789 : vector<64x64xf32> to vector<64x64xbf16>
      %c2_507 = arith.constant 2 : index
      %c0_508 = arith.constant 0 : index
      %c0_509 = arith.constant 0 : index
      %791 = vector.load %arg9[%c2_507, %c0_508, %c0_509] : memref<4x64x64xbf16, #tpu.memory_space<vmem>>, vector<1x64x64xbf16>
      %792 = vector.shape_cast %791 : vector<1x64x64xbf16> to vector<64x64xbf16>
      %cst_510 = arith.constant dense<0.000000e+00> : vector<64x64xf32>
      %793 = tpu.matmul %790, %792, %cst_510 {dimension_numbers = #tpu.dot_dimension_numbers<[1], [0], [0], [1], [0, 0, 1, 1], [], []>} : vector<64x64xbf16>, vector<64x64xbf16>, vector<64x64xf32> -> vector<64x64xf32>
      %794 = arith.addf %786, %793 : vector<64x64xf32>
      %c9_i32 = arith.constant 9 : i32
      %795 = arith.addi %769, %c9_i32 : i32
      %796 = arith.index_cast %795 : i32 to index
      %c0_511 = arith.constant 0 : index
      %797 = vector.load %arg21[%796, %c0_511] : memref<144x64xf32, #tpu.memory_space<vmem>>, vector<64x64xf32>
      %798 = arith.truncf %797 : vector<64x64xf32> to vector<64x64xbf16>
      %c3_512 = arith.constant 3 : index
      %c0_513 = arith.constant 0 : index
      %c0_514 = arith.constant 0 : index
      %799 = vector.load %arg9[%c3_512, %c0_513, %c0_514] : memref<4x64x64xbf16, #tpu.memory_space<vmem>>, vector<1x64x64xbf16>
      %800 = vector.shape_cast %799 : vector<1x64x64xbf16> to vector<64x64xbf16>
      %cst_515 = arith.constant dense<0.000000e+00> : vector<64x64xf32>
      %801 = tpu.matmul %798, %800, %cst_515 {dimension_numbers = #tpu.dot_dimension_numbers<[1], [0], [0], [1], [0, 0, 1, 1], [], []>} : vector<64x64xbf16>, vector<64x64xbf16>, vector<64x64xf32> -> vector<64x64xf32>
      %802 = arith.addf %794, %801 : vector<64x64xf32>
      %c0_516 = arith.constant 0 : index
      %c0_517 = arith.constant 0 : index
      %803 = vector.load %arg10[%c0_516, %c0_517] : memref<1x64xf32, #tpu.memory_space<vmem>>, vector<1x64xf32>
      %804 = vector.broadcast %803 : vector<1x64xf32> to vector<64x64xf32>
      %805 = arith.addf %802, %804 : vector<64x64xf32>
      %cst_518 = arith.constant 0.000000e+00 : f32
      %806 = vector.broadcast %cst_518 : f32 to vector<64x64xf32>
      %807 = arith.maximumf %805, %806 : vector<64x64xf32>
      %808 = arith.index_cast %769 : i32 to index
      %c0_519 = arith.constant 0 : index
      %809 = vector.load %arg22[%808, %c0_519] : memref<128x64xf32, #tpu.memory_space<vmem>>, vector<64x64xf32>
      tpu.vector_store %arg22[%808, %c0_519], %807 {strides = array<i32>} : memref<128x64xf32, #tpu.memory_space<vmem>>, vector<64x64xf32>,
    }
    %c2_i32_400 = arith.constant 2 : i32
    %cst_401 = arith.constant 0.000000e+00 : f32
    %650 = vector.broadcast %cst_401 : f32 to vector<2x256xf32>
    %c0_402 = arith.constant 0 : index
    %c0_403 = arith.constant 0 : index
    %651 = tpu.strided_load %arg22[%c0_402, %c0_403] {strides = array<i32: 64, 1>} : memref<128x64xf32, #tpu.memory_space<vmem>>, vector<2x64xf32>
    %652 = arith.truncf %651 : vector<2x64xf32> to vector<2x64xbf16>
    %c0_404 = arith.constant 0 : index
    %c0_405 = arith.constant 0 : index
    %c0_406 = arith.constant 0 : index
    %653 = vector.load %arg11[%c0_404, %c0_405, %c0_406] : memref<16x64x256xbf16, #tpu.memory_space<vmem>>, vector<1x64x256xbf16>
    %654 = vector.shape_cast %653 : vector<1x64x256xbf16> to vector<64x256xbf16>
    %cst_407 = arith.constant dense<0.000000e+00> : vector<2x256xf32>
    %655 = tpu.matmul %652, %654, %cst_407 {dimension_numbers = #tpu.dot_dimension_numbers<[1], [0], [0], [1], [0, 0, 1, 1], [], []>} : vector<2x64xbf16>, vector<64x256xbf16>, vector<2x256xf32> -> vector<2x256xf32>
    %656 = arith.addf %650, %655 : vector<2x256xf32>
    %c1_408 = arith.constant 1 : index
    %c0_409 = arith.constant 0 : index
    %657 = tpu.strided_load %arg22[%c1_408, %c0_409] {strides = array<i32: 64, 1>} : memref<128x64xf32, #tpu.memory_space<vmem>>, vector<2x64xf32>
    %658 = arith.truncf %657 : vector<2x64xf32> to vector<2x64xbf16>
    %c1_410 = arith.constant 1 : index
    %c0_411 = arith.constant 0 : index
    %c0_412 = arith.constant 0 : index
    %659 = vector.load %arg11[%c1_410, %c0_411, %c0_412] : memref<16x64x256xbf16, #tpu.memory_space<vmem>>, vector<1x64x256xbf16>
    %660 = vector.shape_cast %659 : vector<1x64x256xbf16> to vector<64x256xbf16>
    %cst_413 = arith.constant dense<0.000000e+00> : vector<2x256xf32>
    %661 = tpu.matmul %658, %660, %cst_413 {dimension_numbers = #tpu.dot_dimension_numbers<[1], [0], [0], [1], [0, 0, 1, 1], [], []>} : vector<2x64xbf16>, vector<64x256xbf16>, vector<2x256xf32> -> vector<2x256xf32>
    %662 = arith.addf %656, %661 : vector<2x256xf32>
    %c2 = arith.constant 2 : index
    %c0_414 = arith.constant 0 : index
    %663 = tpu.strided_load %arg22[%c2, %c0_414] {strides = array<i32: 64, 1>} : memref<128x64xf32, #tpu.memory_space<vmem>>, vector<2x64xf32>
    %664 = arith.truncf %663 : vector<2x64xf32> to vector<2x64xbf16>
    %c2_415 = arith.constant 2 : index
    %c0_416 = arith.constant 0 : index
    %c0_417 = arith.constant 0 : index
    %665 = vector.load %arg11[%c2_415, %c0_416, %c0_417] : memref<16x64x256xbf16, #tpu.memory_space<vmem>>, vector<1x64x256xbf16>
    %666 = vector.shape_cast %665 : vector<1x64x256xbf16> to vector<64x256xbf16>
    %cst_418 = arith.constant dense<0.000000e+00> : vector<2x256xf32>
    %667 = tpu.matmul %664, %666, %cst_418 {dimension_numbers = #tpu.dot_dimension_numbers<[1], [0], [0], [1], [0, 0, 1, 1], [], []>} : vector<2x64xbf16>, vector<64x256xbf16>, vector<2x256xf32> -> vector<2x256xf32>
    %668 = arith.addf %662, %667 : vector<2x256xf32>
    %c3 = arith.constant 3 : index
    %c0_419 = arith.constant 0 : index
    %669 = tpu.strided_load %arg22[%c3, %c0_419] {strides = array<i32: 64, 1>} : memref<128x64xf32, #tpu.memory_space<vmem>>, vector<2x64xf32>
    %670 = arith.truncf %669 : vector<2x64xf32> to vector<2x64xbf16>
    %c3_420 = arith.constant 3 : index
    %c0_421 = arith.constant 0 : index
    %c0_422 = arith.constant 0 : index
    %671 = vector.load %arg11[%c3_420, %c0_421, %c0_422] : memref<16x64x256xbf16, #tpu.memory_space<vmem>>, vector<1x64x256xbf16>
    %672 = vector.shape_cast %671 : vector<1x64x256xbf16> to vector<64x256xbf16>
    %cst_423 = arith.constant dense<0.000000e+00> : vector<2x256xf32>
    %673 = tpu.matmul %670, %672, %cst_423 {dimension_numbers = #tpu.dot_dimension_numbers<[1], [0], [0], [1], [0, 0, 1, 1], [], []>} : vector<2x64xbf16>, vector<64x256xbf16>, vector<2x256xf32> -> vector<2x256xf32>
    %674 = arith.addf %668, %673 : vector<2x256xf32>
    %c8_424 = arith.constant 8 : index
    %c0_425 = arith.constant 0 : index
    %675 = tpu.strided_load %arg22[%c8_424, %c0_425] {strides = array<i32: 64, 1>} : memref<128x64xf32, #tpu.memory_space<vmem>>, vector<2x64xf32>
    %676 = arith.truncf %675 : vector<2x64xf32> to vector<2x64xbf16>
    %c4 = arith.constant 4 : index
    %c0_426 = arith.constant 0 : index
    %c0_427 = arith.constant 0 : index
    %677 = vector.load %arg11[%c4, %c0_426, %c0_427] : memref<16x64x256xbf16, #tpu.memory_space<vmem>>, vector<1x64x256xbf16>
    %678 = vector.shape_cast %677 : vector<1x64x256xbf16> to vector<64x256xbf16>
    %cst_428 = arith.constant dense<0.000000e+00> : vector<2x256xf32>
    %679 = tpu.matmul %676, %678, %cst_428 {dimension_numbers = #tpu.dot_dimension_numbers<[1], [0], [0], [1], [0, 0, 1, 1], [], []>} : vector<2x64xbf16>, vector<64x256xbf16>, vector<2x256xf32> -> vector<2x256xf32>
    %680 = arith.addf %674, %679 : vector<2x256xf32>
    %c9 = arith.constant 9 : index
    %c0_429 = arith.constant 0 : index
    %681 = tpu.strided_load %arg22[%c9, %c0_429] {strides = array<i32: 64, 1>} : memref<128x64xf32, #tpu.memory_space<vmem>>, vector<2x64xf32>
    %682 = arith.truncf %681 : vector<2x64xf32> to vector<2x64xbf16>
    %c5 = arith.constant 5 : index
    %c0_430 = arith.constant 0 : index
    %c0_431 = arith.constant 0 : index
    %683 = vector.load %arg11[%c5, %c0_430, %c0_431] : memref<16x64x256xbf16, #tpu.memory_space<vmem>>, vector<1x64x256xbf16>
    %684 = vector.shape_cast %683 : vector<1x64x256xbf16> to vector<64x256xbf16>
    %cst_432 = arith.constant dense<0.000000e+00> : vector<2x256xf32>
    %685 = tpu.matmul %682, %684, %cst_432 {dimension_numbers = #tpu.dot_dimension_numbers<[1], [0], [0], [1], [0, 0, 1, 1], [], []>} : vector<2x64xbf16>, vector<64x256xbf16>, vector<2x256xf32> -> vector<2x256xf32>
    %686 = arith.addf %680, %685 : vector<2x256xf32>
    %c10 = arith.constant 10 : index
    %c0_433 = arith.constant 0 : index
    %687 = tpu.strided_load %arg22[%c10, %c0_433] {strides = array<i32: 64, 1>} : memref<128x64xf32, #tpu.memory_space<vmem>>, vector<2x64xf32>
    %688 = arith.truncf %687 : vector<2x64xf32> to vector<2x64xbf16>
    %c6 = arith.constant 6 : index
    %c0_434 = arith.constant 0 : index
    %c0_435 = arith.constant 0 : index
    %689 = vector.load %arg11[%c6, %c0_434, %c0_435] : memref<16x64x256xbf16, #tpu.memory_space<vmem>>, vector<1x64x256xbf16>
    %690 = vector.shape_cast %689 : vector<1x64x256xbf16> to vector<64x256xbf16>
    %cst_436 = arith.constant dense<0.000000e+00> : vector<2x256xf32>
    %691 = tpu.matmul %688, %690, %cst_436 {dimension_numbers = #tpu.dot_dimension_numbers<[1], [0], [0], [1], [0, 0, 1, 1], [], []>} : vector<2x64xbf16>, vector<64x256xbf16>, vector<2x256xf32> -> vector<2x256xf32>
    %692 = arith.addf %686, %691 : vector<2x256xf32>
    %c11 = arith.constant 11 : index
    %c0_437 = arith.constant 0 : index
    %693 = tpu.strided_load %arg22[%c11, %c0_437] {strides = array<i32: 64, 1>} : memref<128x64xf32, #tpu.memory_space<vmem>>, vector<2x64xf32>
    %694 = arith.truncf %693 : vector<2x64xf32> to vector<2x64xbf16>
    %c7 = arith.constant 7 : index
    %c0_438 = arith.constant 0 : index
    %c0_439 = arith.constant 0 : index
    %695 = vector.load %arg11[%c7, %c0_438, %c0_439] : memref<16x64x256xbf16, #tpu.memory_space<vmem>>, vector<1x64x256xbf16>
    %696 = vector.shape_cast %695 : vector<1x64x256xbf16> to vector<64x256xbf16>
    %cst_440 = arith.constant dense<0.000000e+00> : vector<2x256xf32>
    %697 = tpu.matmul %694, %696, %cst_440 {dimension_numbers = #tpu.dot_dimension_numbers<[1], [0], [0], [1], [0, 0, 1, 1], [], []>} : vector<2x64xbf16>, vector<64x256xbf16>, vector<2x256xf32> -> vector<2x256xf32>
    %698 = arith.addf %692, %697 : vector<2x256xf32>
    %c16_441 = arith.constant 16 : index
    %c0_442 = arith.constant 0 : index
    %699 = tpu.strided_load %arg22[%c16_441, %c0_442] {strides = array<i32: 64, 1>} : memref<128x64xf32, #tpu.memory_space<vmem>>, vector<2x64xf32>
    %700 = arith.truncf %699 : vector<2x64xf32> to vector<2x64xbf16>
    %c8_443 = arith.constant 8 : index
    %c0_444 = arith.constant 0 : index
    %c0_445 = arith.constant 0 : index
    %701 = vector.load %arg11[%c8_443, %c0_444, %c0_445] : memref<16x64x256xbf16, #tpu.memory_space<vmem>>, vector<1x64x256xbf16>
    %702 = vector.shape_cast %701 : vector<1x64x256xbf16> to vector<64x256xbf16>
    %cst_446 = arith.constant dense<0.000000e+00> : vector<2x256xf32>
    %703 = tpu.matmul %700, %702, %cst_446 {dimension_numbers = #tpu.dot_dimension_numbers<[1], [0], [0], [1], [0, 0, 1, 1], [], []>} : vector<2x64xbf16>, vector<64x256xbf16>, vector<2x256xf32> -> vector<2x256xf32>
    %704 = arith.addf %698, %703 : vector<2x256xf32>
    %c17_447 = arith.constant 17 : index
    %c0_448 = arith.constant 0 : index
    %705 = tpu.strided_load %arg22[%c17_447, %c0_448] {strides = array<i32: 64, 1>} : memref<128x64xf32, #tpu.memory_space<vmem>>, vector<2x64xf32>
    %706 = arith.truncf %705 : vector<2x64xf32> to vector<2x64xbf16>
    %c9_449 = arith.constant 9 : index
    %c0_450 = arith.constant 0 : index
    %c0_451 = arith.constant 0 : index
    %707 = vector.load %arg11[%c9_449, %c0_450, %c0_451] : memref<16x64x256xbf16, #tpu.memory_space<vmem>>, vector<1x64x256xbf16>
    %708 = vector.shape_cast %707 : vector<1x64x256xbf16> to vector<64x256xbf16>
    %cst_452 = arith.constant dense<0.000000e+00> : vector<2x256xf32>
    %709 = tpu.matmul %706, %708, %cst_452 {dimension_numbers = #tpu.dot_dimension_numbers<[1], [0], [0], [1], [0, 0, 1, 1], [], []>} : vector<2x64xbf16>, vector<64x256xbf16>, vector<2x256xf32> -> vector<2x256xf32>
    %710 = arith.addf %704, %709 : vector<2x256xf32>
    %c18 = arith.constant 18 : index
    %c0_453 = arith.constant 0 : index
    %711 = tpu.strided_load %arg22[%c18, %c0_453] {strides = array<i32: 64, 1>} : memref<128x64xf32, #tpu.memory_space<vmem>>, vector<2x64xf32>
    %712 = arith.truncf %711 : vector<2x64xf32> to vector<2x64xbf16>
    %c10_454 = arith.constant 10 : index
    %c0_455 = arith.constant 0 : index
    %c0_456 = arith.constant 0 : index
    %713 = vector.load %arg11[%c10_454, %c0_455, %c0_456] : memref<16x64x256xbf16, #tpu.memory_space<vmem>>, vector<1x64x256xbf16>
    %714 = vector.shape_cast %713 : vector<1x64x256xbf16> to vector<64x256xbf16>
    %cst_457 = arith.constant dense<0.000000e+00> : vector<2x256xf32>
    %715 = tpu.matmul %712, %714, %cst_457 {dimension_numbers = #tpu.dot_dimension_numbers<[1], [0], [0], [1], [0, 0, 1, 1], [], []>} : vector<2x64xbf16>, vector<64x256xbf16>, vector<2x256xf32> -> vector<2x256xf32>
    %716 = arith.addf %710, %715 : vector<2x256xf32>
    %c19 = arith.constant 19 : index
    %c0_458 = arith.constant 0 : index
    %717 = tpu.strided_load %arg22[%c19, %c0_458] {strides = array<i32: 64, 1>} : memref<128x64xf32, #tpu.memory_space<vmem>>, vector<2x64xf32>
    %718 = arith.truncf %717 : vector<2x64xf32> to vector<2x64xbf16>
    %c11_459 = arith.constant 11 : index
    %c0_460 = arith.constant 0 : index
    %c0_461 = arith.constant 0 : index
    %719 = vector.load %arg11[%c11_459, %c0_460, %c0_461] : memref<16x64x256xbf16, #tpu.memory_space<vmem>>, vector<1x64x256xbf16>
    %720 = vector.shape_cast %719 : vector<1x64x256xbf16> to vector<64x256xbf16>
    %cst_462 = arith.constant dense<0.000000e+00> : vector<2x256xf32>
    %721 = tpu.matmul %718, %720, %cst_462 {dimension_numbers = #tpu.dot_dimension_numbers<[1], [0], [0], [1], [0, 0, 1, 1], [], []>} : vector<2x64xbf16>, vector<64x256xbf16>, vector<2x256xf32> -> vector<2x256xf32>
    %722 = arith.addf %716, %721 : vector<2x256xf32>
    %c24_463 = arith.constant 24 : index
    %c0_464 = arith.constant 0 : index
    %723 = tpu.strided_load %arg22[%c24_463, %c0_464] {strides = array<i32: 64, 1>} : memref<128x64xf32, #tpu.memory_space<vmem>>, vector<2x64xf32>
    %724 = arith.truncf %723 : vector<2x64xf32> to vector<2x64xbf16>
    %c12 = arith.constant 12 : index
    %c0_465 = arith.constant 0 : index
    %c0_466 = arith.constant 0 : index
    %725 = vector.load %arg11[%c12, %c0_465, %c0_466] : memref<16x64x256xbf16, #tpu.memory_space<vmem>>, vector<1x64x256xbf16>
    %726 = vector.shape_cast %725 : vector<1x64x256xbf16> to vector<64x256xbf16>
    %cst_467 = arith.constant dense<0.000000e+00> : vector<2x256xf32>
    %727 = tpu.matmul %724, %726, %cst_467 {dimension_numbers = #tpu.dot_dimension_numbers<[1], [0], [0], [1], [0, 0, 1, 1], [], []>} : vector<2x64xbf16>, vector<64x256xbf16>, vector<2x256xf32> -> vector<2x256xf32>
    %728 = arith.addf %722, %727 : vector<2x256xf32>
    %c25 = arith.constant 25 : index
    %c0_468 = arith.constant 0 : index
    %729 = tpu.strided_load %arg22[%c25, %c0_468] {strides = array<i32: 64, 1>} : memref<128x64xf32, #tpu.memory_space<vmem>>, vector<2x64xf32>
    %730 = arith.truncf %729 : vector<2x64xf32> to vector<2x64xbf16>
    %c13 = arith.constant 13 : index
    %c0_469 = arith.constant 0 : index
    %c0_470 = arith.constant 0 : index
    %731 = vector.load %arg11[%c13, %c0_469, %c0_470] : memref<16x64x256xbf16, #tpu.memory_space<vmem>>, vector<1x64x256xbf16>
    %732 = vector.shape_cast %731 : vector<1x64x256xbf16> to vector<64x256xbf16>
    %cst_471 = arith.constant dense<0.000000e+00> : vector<2x256xf32>
    %733 = tpu.matmul %730, %732, %cst_471 {dimension_numbers = #tpu.dot_dimension_numbers<[1], [0], [0], [1], [0, 0, 1, 1], [], []>} : vector<2x64xbf16>, vector<64x256xbf16>, vector<2x256xf32> -> vector<2x256xf32>
    %734 = arith.addf %728, %733 : vector<2x256xf32>
    %c26 = arith.constant 26 : index
    %c0_472 = arith.constant 0 : index
    %735 = tpu.strided_load %arg22[%c26, %c0_472] {strides = array<i32: 64, 1>} : memref<128x64xf32, #tpu.memory_space<vmem>>, vector<2x64xf32>
    %736 = arith.truncf %735 : vector<2x64xf32> to vector<2x64xbf16>
    %c14 = arith.constant 14 : index
    %c0_473 = arith.constant 0 : index
    %c0_474 = arith.constant 0 : index
    %737 = vector.load %arg11[%c14, %c0_473, %c0_474] : memref<16x64x256xbf16, #tpu.memory_space<vmem>>, vector<1x64x256xbf16>
    %738 = vector.shape_cast %737 : vector<1x64x256xbf16> to vector<64x256xbf16>
    %cst_475 = arith.constant dense<0.000000e+00> : vector<2x256xf32>
    %739 = tpu.matmul %736, %738, %cst_475 {dimension_numbers = #tpu.dot_dimension_numbers<[1], [0], [0], [1], [0, 0, 1, 1], [], []>} : vector<2x64xbf16>, vector<64x256xbf16>, vector<2x256xf32> -> vector<2x256xf32>
    %740 = arith.addf %734, %739 : vector<2x256xf32>
    %c27 = arith.constant 27 : index
    %c0_476 = arith.constant 0 : index
    %741 = tpu.strided_load %arg22[%c27, %c0_476] {strides = array<i32: 64, 1>} : memref<128x64xf32, #tpu.memory_space<vmem>>, vector<2x64xf32>
    %742 = arith.truncf %741 : vector<2x64xf32> to vector<2x64xbf16>
    %c15 = arith.constant 15 : index
    %c0_477 = arith.constant 0 : index
    %c0_478 = arith.constant 0 : index
    %743 = vector.load %arg11[%c15, %c0_477, %c0_478] : memref<16x64x256xbf16, #tpu.memory_space<vmem>>, vector<1x64x256xbf16>
    %744 = vector.shape_cast %743 : vector<1x64x256xbf16> to vector<64x256xbf16>
    %cst_479 = arith.constant dense<0.000000e+00> : vector<2x256xf32>
    %745 = tpu.matmul %742, %744, %cst_479 {dimension_numbers = #tpu.dot_dimension_numbers<[1], [0], [0], [1], [0, 0, 1, 1], [], []>} : vector<2x64xbf16>, vector<64x256xbf16>, vector<2x256xf32> -> vector<2x256xf32>
    %746 = arith.addf %740, %745 : vector<2x256xf32>
    %c0_480 = arith.constant 0 : index
    %c0_481 = arith.constant 0 : index
    %747 = vector.load %arg12[%c0_480, %c0_481] : memref<1x256xf32, #tpu.memory_space<vmem>>, vector<1x256xf32>
    %748 = vector.broadcast %747 : vector<1x256xf32> to vector<2x256xf32>
    %749 = arith.addf %746, %748 : vector<2x256xf32>
    %cst_482 = arith.constant 0.000000e+00 : f32
    %750 = vector.broadcast %cst_482 : f32 to vector<2x256xf32>
    %751 = arith.maximumf %749, %750 : vector<2x256xf32>
    %c0_483 = arith.constant 0 : index
    %c0_484 = arith.constant 0 : index
    %752 = vector.load %arg13[%c0_483, %c0_484] : memref<1x256xf32, #tpu.memory_space<vmem>>, vector<1x256xf32>
    %753 = vector.broadcast %752 : vector<1x256xf32> to vector<2x256xf32>
    %754 = arith.mulf %751, %753 : vector<2x256xf32>
    %cst_485 = arith.constant dense<0.000000e+00> : vector<2xf32>
    %755 = vector.multi_reduction <add>, %754, %cst_485 [1] : vector<2x256xf32> to vector<2xf32>
    %756 = vector.shape_cast %755 : vector<2xf32> to vector<2x1xf32>
    %c0_486 = arith.constant 0 : index
    %c0_487 = arith.constant 0 : index
    %757 = vector.load %arg14[%c0_486, %c0_487] : memref<1x1xf32, #tpu.memory_space<vmem>>, vector<1x1xf32>
    %758 = vector.broadcast %757 : vector<1x1xf32> to vector<2x1xf32>
    %759 = arith.addf %756, %758 : vector<2x1xf32>
    %cst_488 = arith.constant 0.000000e+00 : f32
    %760 = vector.broadcast %cst_488 : f32 to vector<2x1xf32>
    %761 = arith.subf %760, %759 : vector<2x1xf32>
    %762 = math.exp %761 : vector<2x1xf32>
    %cst_489 = arith.constant 1.000000e+00 : f32
    %763 = vector.broadcast %cst_489 : f32 to vector<2x1xf32>
    %764 = arith.addf %763, %762 : vector<2x1xf32>
    %cst_490 = arith.constant 1.000000e+00 : f32
    %765 = vector.broadcast %cst_490 : f32 to vector<2x1xf32>
    %766 = arith.divf %765, %764 : vector<2x1xf32>
    %c0_491 = arith.constant 0 : index
    %c0_492 = arith.constant 0 : index
    %767 = vector.load %arg15[%c0_491, %c0_492] : memref<2x1xf32, #tpu.memory_space<vmem>>, vector<2x1xf32>
    tpu.vector_store %arg15[%c0_491, %c0_492], %766 {strides = array<i32>} : memref<2x1xf32, #tpu.memory_space<vmem>>, vector<2x1xf32>,
    return
  }
}

</mosaic_0001>

<llo_original>
// kernel: cnn_forward.1
$region0: #{cnn_forward.1}
  #allocation0 [shape = 'u32[]', space=smem, size = 0x4, offset = 0x4, fixed_abs, tag = 'smem constant byte address 0x4 - core index']
  #allocation1 [shape = 'u32[72,128]{1,0:T(1,128)}', space=vmem, size = 0x9000, scoped, tag = 'internal scratch']
  #allocation2 [shape = 'f32[2120,32]{1,0:T(8,128)}', space=vmem, size = 0x109000, scoped, tag = 'scratch operand']
  #allocation3 [shape = 'f32[2048,32]{1,0:T(8,128)}', space=vmem, size = 0x100000, scoped, tag = 'scratch operand']
  #allocation4 [shape = 'f32[552,32]{1,0:T(8,128)}', space=vmem, size = 0x45000, scoped, tag = 'scratch operand']
  #allocation5 [shape = 'f32[552,64]{1,0:T(8,128)}', space=vmem, size = 0x45000, scoped, tag = 'scratch operand']
  #allocation6 [shape = 'f32[512,64]{1,0:T(8,128)}', space=vmem, size = 0x40000, scoped, tag = 'scratch operand']
  #allocation7 [shape = 'f32[144,64]{1,0:T(8,128)}', space=vmem, size = 0x12000, scoped, tag = 'scratch operand']
  #allocation8 [shape = 'f32[128,64]{1,0:T(8,128)}', space=vmem, size = 0x10000, scoped, tag = 'scratch operand']
  #allocation9 [shape = 'f32[1,1]{1,0:T(1,128)S(1)}', space=vmem, size = 0x200, scoped, tag = 'scoped memory for cnn_forward.1']
  %s0 = inlined_call_operand.vmem [shape: f32[2120,3], index: 0, kind: input, shape index: {}]
  %s1 = inlined_call_operand.vmem [shape: f32[9,3,32], index: 1, kind: input, shape index: {}]
  %s2 = inlined_call_operand.vmem [shape: f32[1,32], index: 2, kind: input, shape index: {}]
  %s3 = inlined_call_operand.vmem [shape: bf16[9,32,32], index: 3, kind: input, shape index: {}]
  %s4 = inlined_call_operand.vmem [shape: f32[1,32], index: 4, kind: input, shape index: {}]
  %s5 = inlined_call_operand.vmem [shape: bf16[9,32,64], index: 5, kind: input, shape index: {}]
  %s6 = inlined_call_operand.vmem [shape: f32[1,64], index: 6, kind: input, shape index: {}]
  %s7 = inlined_call_operand.vmem [shape: bf16[9,64,64], index: 7, kind: input, shape index: {}]
  %s8 = inlined_call_operand.vmem [shape: f32[1,64], index: 8, kind: input, shape index: {}]
  %s9 = inlined_call_operand.vmem [shape: bf16[4,64,64], index: 9, kind: input, shape index: {}]
  %s10 = inlined_call_operand.vmem [shape: f32[1,64], index: 10, kind: input, shape index: {}]
  %s11 = inlined_call_operand.vmem [shape: bf16[16,64,256], index: 11, kind: input, shape index: {}]
  %s12 = inlined_call_operand.vmem [shape: f32[1,256], index: 12, kind: input, shape index: {}]
  %s13 = inlined_call_operand.vmem [shape: f32[1,256], index: 13, kind: input, shape index: {}]
  %s14 = inlined_call_operand.<no memory space> [shape: f32[1,1], index: 14, kind: input, shape index: {}]
  %s15 = inlined_call_operand.vmem [shape: f32[2,1], index: 15, kind: output, shape index: {}]
  %s16 = sld [smem:[#allocation0]]
  $region112: #{cnn_forward.1} parent=0
    _
  %s18 = ssub.s32 1, %s16
  %s19 = scalar_select 0, %s18, %s16
  %v20 = vstv %s14
  %21 = vst [vmem:[#allocation9] sm:$0x1] %v20
  // Predicated region
  $region2: #{cnn_forward.1} parent=0 // pred_check
    _
  $region3: #{cnn_forward.1} parent=0 // pred_check_branch
    %23 = sbr.rel (0) target = $region5
  $region4: #{cnn_forward.1} parent=0 // pred_region
    _
  $region5: #{cnn_forward.1} parent=0 // pred_fallthru
    _
  // Predicated region
  $region6: #{cnn_forward.1} parent=0 // pred_check
    _
  $region7: #{cnn_forward.1} parent=0 // pred_check_branch
    %25 = sbr.rel (0) target = $region9
  $region8: #{cnn_forward.1} parent=0 // pred_region
    _
  $region9: #{cnn_forward.1} parent=0 // pred_fallthru
    _
  // Predicated region
  $region10: #{cnn_forward.1} parent=0 // pred_check
    _
  $region11: #{cnn_forward.1} parent=0 // pred_check_branch
    %27 = sbr.rel (0) target = $region13
  $region12: #{cnn_forward.1} parent=0 // pred_region
    _
  $region13: #{cnn_forward.1} parent=0 // pred_fallthru
    _
  // Predicated region
  $region14: #{cnn_forward.1} parent=0 // pred_check
    _
  $region15: #{cnn_forward.1} parent=0 // pred_check_branch
    %29 = sbr.rel (0) target = $region17
  $region16: #{cnn_forward.1} parent=0 // pred_region
    _
  $region17: #{cnn_forward.1} parent=0 // pred_fallthru
    _
  // Predicated region
  $region18: #{cnn_forward.1} parent=0 // pred_check
    _
  $region19: #{cnn_forward.1} parent=0 // pred_check_branch
    %31 = sbr.rel (0) target = $region21
  $region20: #{cnn_forward.1} parent=0 // pred_region
    _
  $region21: #{cnn_forward.1} parent=0 // pred_fallthru
    _
  // Predicated region
  $region22: #{cnn_forward.1} parent=0 // pred_check
    _
  $region23: #{cnn_forward.1} parent=0 // pred_check_branch
    %33 = sbr.rel (0) target = $region25
  $region24: #{cnn_forward.1} parent=0 // pred_region
    _
  $region25: #{cnn_forward.1} parent=0 // pred_fallthru
    _
  // Predicated region
  $region26: #{cnn_forward.1} parent=0 // pred_check
    _
  $region27: #{cnn_forward.1} parent=0 // pred_check_branch
    %35 = sbr.rel (0) target = $region29
  $region28: #{cnn_forward.1} parent=0 // pred_region
    _
  $region29: #{cnn_forward.1} parent=0 // pred_fallthru
    _
  // Predicated region
  $region30: #{cnn_forward.1} parent=0 // pred_check
    _
  $region31: #{cnn_forward.1} parent=0 // pred_check_branch
    %37 = sbr.rel (0) target = $region33
  $region32: #{cnn_forward.1} parent=0 // pred_region
    _
  $region33: #{cnn_forward.1} parent=0 // pred_fallthru
    _
  // Predicated region
  $region34: #{cnn_forward.1} parent=0 // pred_check
    _
  $region35: #{cnn_forward.1} parent=0 // pred_check_branch
    %39 = sbr.rel (0) target = $region37
  $region36: #{cnn_forward.1} parent=0 // pred_region
    _
  $region37: #{cnn_forward.1} parent=0 // pred_fallthru
    _
  // Predicated region
  $region38: #{cnn_forward.1} parent=0 // pred_check
    _
  $region39: #{cnn_forward.1} parent=0 // pred_check_branch
    %41 = sbr.rel (0) target = $region41
  $region40: #{cnn_forward.1} parent=0 // pred_region
    _
  $region41: #{cnn_forward.1} parent=0 // pred_fallthru
    _
  // Predicated region
  $region42: #{cnn_forward.1} parent=0 // pred_check
    _
  $region43: #{cnn_forward.1} parent=0 // pred_check_branch
    %43 = sbr.rel (0) target = $region45
  $region44: #{cnn_forward.1} parent=0 // pred_region
    _
  $region45: #{cnn_forward.1} parent=0 // pred_fallthru
    _
  // Predicated region
  $region46: #{cnn_forward.1} parent=0 // pred_check
    _
  $region47: #{cnn_forward.1} parent=0 // pred_check_branch
    %45 = sbr.rel (0) target = $region49
  $region48: #{cnn_forward.1} parent=0 // pred_region
    _
  $region49: #{cnn_forward.1} parent=0 // pred_fallthru
    _
  // Predicated region
  $region50: #{cnn_forward.1} parent=0 // pred_check
    _
  $region51: #{cnn_forward.1} parent=0 // pred_check_branch
    %47 = sbr.rel (0) target = $region53
  $region52: #{cnn_forward.1} parent=0 // pred_region
    _
  $region53: #{cnn_forward.1} parent=0 // pred_fallthru
    _
  // Predicated region
  $region54: #{cnn_forward.1} parent=0 // pred_check
    _
  $region55: #{cnn_forward.1} parent=0 // pred_check_branch
    %49 = sbr.rel (0) target = $region57
  $region56: #{cnn_forward.1} parent=0 // pred_region
    _
  $region57: #{cnn_forward.1} parent=0 // pred_fallthru
    _
  // Predicated region
  $region58: #{cnn_forward.1} parent=0 // pred_check
    _
  $region59: #{cnn_forward.1} parent=0 // pred_check_branch
    %51 = sbr.rel (0) target = $region61
  $region60: #{cnn_forward.1} parent=0 // pred_region
    _
  $region61: #{cnn_forward.1} parent=0 // pred_fallthru
    _
  %vm53 = vcmask 261120
  %54 = vst.msk [vmem:[#allocation2 + $0x800] sm:$0xff] %vm53, 0.0
  %55 = vst.msk [vmem:[#allocation2 + $0x808] sm:$0xff] %vm53, 0.0
  %56 = vst.msk [vmem:[#allocation2 + $0x810] sm:$0xff] %vm53, 0.0
  %57 = vst.msk [vmem:[#allocation2 + $0x818] sm:$0xff] %vm53, 0.0
  %58 = vst.msk [vmem:[#allocation2 + $0x820] sm:$0xff] %vm53, 0.0
  %59 = vst.msk [vmem:[#allocation2 + $0x828] sm:$0xff] %vm53, 0.0
  %60 = vst.msk [vmem:[#allocation2 + $0x830] sm:$0xff] %vm53, 0.0
  %61 = vst.msk [vmem:[#allocation2 + $0x838] sm:$0xff] %vm53, 0.0
  %62 = vst.msk [vmem:[#allocation2 + $0x840] sm:$0xff] %vm53, 0.0
  %63 = vst.msk [vmem:[#allocation4 + $0x200] sm:$0xff] %vm53, 0.0
  %64 = vst.msk [vmem:[#allocation4 + $0x208] sm:$0xff] %vm53, 0.0
  %65 = vst.msk [vmem:[#allocation4 + $0x210] sm:$0xff] %vm53, 0.0
  %66 = vst.msk [vmem:[#allocation4 + $0x218] sm:$0xff] %vm53, 0.0
  %67 = vst.msk [vmem:[#allocation4 + $0x220] sm:$0xff] %vm53, 0.0
  %vm68 = vcmask 523264
  %69 = vst.msk [vmem:[#allocation5 + $0x200] sm:$0xff] %vm68, 0.0
  %70 = vst.msk [vmem:[#allocation5 + $0x208] sm:$0xff] %vm68, 0.0
  %71 = vst.msk [vmem:[#allocation5 + $0x210] sm:$0xff] %vm68, 0.0
  %72 = vst.msk [vmem:[#allocation5 + $0x218] sm:$0xff] %vm68, 0.0
  %73 = vst.msk [vmem:[#allocation5 + $0x220] sm:$0xff] %vm68, 0.0
  %74 = vst.msk [vmem:[#allocation7 + $0x80] sm:$0xff] %vm68, 0.0
  %75 = vst.msk [vmem:[#allocation7 + $0x88] sm:$0xff] %vm68, 0.0
  loop: start=0, step=1, limit=16
  $region62: #{cnn_forward.1} parent=0 // loop_pre_header
    _
  $region63: #{cnn_forward.1} parent=0 // loop_header
    %s77 = sphi 0, %s81
    %p78 = scmp.ge.s32.totalorder %s77, 16
  $region64: #{cnn_forward.1} parent=0 // loop_header_branch
    %80 = sbr.rel (%p78) target = $region68
  $region65: #{cnn_forward.1} parent=0 // loop_body
    %s82 = smul.u32 %s77, 128
    %s83 = scalar_lea.vmem %s0, %s82
    %v84 = vld [vmem:[%s83] sm:$0xff]
    %v85 = vld [vmem:[%s83 + $0x8] sm:$0xff]
    %v86 = vld [vmem:[%s83 + $0x10] sm:$0xff]
    %v87 = vld [vmem:[%s83 + $0x18] sm:$0xff]
    %v88 = vld [vmem:[%s83 + $0x20] sm:$0xff]
    %v89 = vld [vmem:[%s83 + $0x28] sm:$0xff]
    %v90 = vld [vmem:[%s83 + $0x30] sm:$0xff]
    %v91 = vld [vmem:[%s83 + $0x38] sm:$0xff]
    %v92 = vld [vmem:[%s83 + $0x40] sm:$0xff]
    %v93 = vld [vmem:[%s83 + $0x48] sm:$0xff]
    %v94 = vld [vmem:[%s83 + $0x50] sm:$0xff]
    %v95 = vld [vmem:[%s83 + $0x58] sm:$0xff]
    %v96 = vld [vmem:[%s83 + $0x60] sm:$0xff]
    %v97 = vld [vmem:[%s83 + $0x68] sm:$0xff]
    %v98 = vld [vmem:[%s83 + $0x70] sm:$0xff]
    %v99 = vld [vmem:[%s83 + $0x78] sm:$0xff]
    %v100 = vld [vmem:[%s1] sm:$0x7]
    %s101 = sadd.s32 %s82, 1
    %s102 = scalar_lea.vmem %s0, %s101
    %v103 = vld [vmem:[%s102] sm:$0xff]
    %v104 = vld [vmem:[%s102 + $0x8] sm:$0xff]
    %v105 = vld [vmem:[%s102 + $0x10] sm:$0xff]
    %v106 = vld [vmem:[%s102 + $0x18] sm:$0xff]
    %v107 = vld [vmem:[%s102 + $0x20] sm:$0xff]
    %v108 = vld [vmem:[%s102 + $0x28] sm:$0xff]
    %v109 = vld [vmem:[%s102 + $0x30] sm:$0xff]
    %v110 = vld [vmem:[%s102 + $0x38] sm:$0xff]
    %v111 = vld [vmem:[%s102 + $0x40] sm:$0xff]
    %v112 = vld [vmem:[%s102 + $0x48] sm:$0xff]
    %v113 = vld [vmem:[%s102 + $0x50] sm:$0xff]
    %v114 = vld [vmem:[%s102 + $0x58] sm:$0xff]
    %v115 = vld [vmem:[%s102 + $0x60] sm:$0xff]
    %v116 = vld [vmem:[%s102 + $0x68] sm:$0xff]
    %v117 = vld [vmem:[%s102 + $0x70] sm:$0xff]
    %v118 = vld [vmem:[%s102 + $0x78] sm:$0xff]
    %s119 = scalar_lea.vmem %s1, 4
    %v120 = vld [vmem:[%s119] sm:$0x7]
    %vm121 = vcmask 23552
    %v123 = vsel %vm121, %v103, 0
    %v126 = vsel %vm121, %v104, 0
    %v129 = vsel %vm121, %v105, 0
    %v132 = vsel %vm121, %v106, 0
    %v135 = vsel %vm121, %v107, 0
    %v138 = vsel %vm121, %v108, 0
    %v141 = vsel %vm121, %v109, 0
    %v144 = vsel %vm121, %v110, 0
    %v147 = vsel %vm121, %v111, 0
    %v150 = vsel %vm121, %v112, 0
    %v153 = vsel %vm121, %v113, 0
    %v156 = vsel %vm121, %v114, 0
    %v159 = vsel %vm121, %v115, 0
    %v162 = vsel %vm121, %v116, 0
    %v165 = vsel %vm121, %v117, 0
    %v168 = vsel %vm121, %v118, 0
    %vm170 = vcmask 1042432
    %v172 = vsel %vm170, %v120, 0
    %174 = vmatpush.msra.mxu0 0.0
    %175 = vmatpush.msra.mxu0 0.0
    %176 = vmatpush.msra.mxu0 0.0
    %177 = vmatpush.msra.mxu0 0.0
    %178 = vmatpush.msra.mxu0 0.0
    %179 = vmatpush.msra.mxu0 0.0
    %180 = vmatpush.msra.mxu0 0.0
    %181 = vmatpush.msra.mxu0 0.0
    %182 = vmatpush.msra.mxu0 0.0
    %183 = vmatpush.msra.mxu0 0.0
    %184 = vmatpush.msra.mxu0 0.0
    %185 = vmatpush.msra.mxu0 0.0
    %186 = vmatpush.msra.mxu0 0.0
    %187 = vmatpush.msra.mxu0 0.0
    %188 = vmatpush.msra.mxu0 0.0
    %189 = vmatpush.msra.mxu0 %v172
    %190 = vmatmul.f32.gmra.mxu0 %v123
    %v191 = vpop.f32.mrf.mxu0
    %v192 = vadd.f32 0.0, %v191
    %193 = vmatmul.f32.gmra.mxu0 %v126
    %v194 = vpop.f32.mrf.mxu0
    %v195 = vadd.f32 0.0, %v194
    %196 = vmatmul.f32.gmra.mxu0 %v129
    %v197 = vpop.f32.mrf.mxu0
    %v198 = vadd.f32 0.0, %v197
    %199 = vmatmul.f32.gmra.mxu0 %v132
    %v200 = vpop.f32.mrf.mxu0
    %v201 = vadd.f32 0.0, %v200
    %202 = vmatmul.f32.gmra.mxu0 %v135
    %v203 = vpop.f32.mrf.mxu0
    %v204 = vadd.f32 0.0, %v203
    %205 = vmatmul.f32.gmra.mxu0 %v138
    %v206 = vpop.f32.mrf.mxu0
    %v207 = vadd.f32 0.0, %v206
    %208 = vmatmul.f32.gmra.mxu0 %v141
    %v209 = vpop.f32.mrf.mxu0
    %v210 = vadd.f32 0.0, %v209
    %211 = vmatmul.f32.gmra.mxu0 %v144
    %v212 = vpop.f32.mrf.mxu0
    %v213 = vadd.f32 0.0, %v212
    %214 = vmatmul.f32.gmra.mxu0 %v147
    %v215 = vpop.f32.mrf.mxu0
    %v216 = vadd.f32 0.0, %v215
    %217 = vmatmul.f32.gmra.mxu0 %v150
    %v218 = vpop.f32.mrf.mxu0
    %v219 = vadd.f32 0.0, %v218
    %220 = vmatmul.f32.gmra.mxu0 %v153
    %v221 = vpop.f32.mrf.mxu0
    %v222 = vadd.f32 0.0, %v221
    %223 = vmatmul.f32.gmra.mxu0 %v156
    %v224 = vpop.f32.mrf.mxu0
    %v225 = vadd.f32 0.0, %v224
    %226 = vmatmul.f32.gmra.mxu0 %v159
    %v227 = vpop.f32.mrf.mxu0
    %v228 = vadd.f32 0.0, %v227
    %229 = vmatmul.f32.gmra.mxu0 %v162
    %v230 = vpop.f32.mrf.mxu0
    %v231 = vadd.f32 0.0, %v230
    %232 = vmatmul.f32.gmra.mxu0 %v165
    %v233 = vpop.f32.mrf.mxu0
    %v234 = vadd.f32 0.0, %v233
    %235 = vmatmul.f32.gmra.mxu0 %v168
    %v236 = vpop.f32.mrf.mxu0
    %v237 = vadd.f32 0.0, %v236
    %238 = vdwg.mxu0
    %v240 = vsel %vm121, %v84, 0
    %v243 = vsel %vm121, %v85, 0
    %v246 = vsel %vm121, %v86, 0
    %v249 = vsel %vm121, %v87, 0
    %v252 = vsel %vm121, %v88, 0
    %v255 = vsel %vm121, %v89, 0
    %v258 = vsel %vm121, %v90, 0
    %v261 = vsel %vm121, %v91, 0
    %v264 = vsel %vm121, %v92, 0
    %v267 = vsel %vm121, %v93, 0
    %v270 = vsel %vm121, %v94, 0
    %v273 = vsel %vm121, %v95, 0
    %v276 = vsel %vm121, %v96, 0
    %v279 = vsel %vm121, %v97, 0
    %v282 = vsel %vm121, %v98, 0
    %v285 = vsel %vm121, %v99, 0
    %v288 = vsel %vm170, %v100, 0
    %290 = vmatpush.msra.mxu0 0.0
    %291 = vmatpush.msra.mxu0 0.0
    %292 = vmatpush.msra.mxu0 0.0
    %293 = vmatpush.msra.mxu0 0.0
    %294 = vmatpush.msra.mxu0 0.0
    %295 = vmatpush.msra.mxu0 0.0
    %296 = vmatpush.msra.mxu0 0.0
    %297 = vmatpush.msra.mxu0 0.0
    %298 = vmatpush.msra.mxu0 0.0
    %299 = vmatpush.msra.mxu0 0.0
    %300 = vmatpush.msra.mxu0 0.0
    %301 = vmatpush.msra.mxu0 0.0
    %302 = vmatpush.msra.mxu0 0.0
    %303 = vmatpush.msra.mxu0 0.0
    %304 = vmatpush.msra.mxu0 0.0
    %305 = vmatpush.msra.mxu0 %v288
    %306 = vmatmul.f32.gmra.mxu0 %v240
    %v307 = vpop.f32.mrf.mxu0
    %v308 = vadd.f32 %v192, %v307
    %309 = vmatmul.f32.gmra.mxu0 %v243
    %v310 = vpop.f32.mrf.mxu0
    %v311 = vadd.f32 %v195, %v310
    %312 = vmatmul.f32.gmra.mxu0 %v246
    %v313 = vpop.f32.mrf.mxu0
    %v314 = vadd.f32 %v198, %v313
    %315 = vmatmul.f32.gmra.mxu0 %v249
    %v316 = vpop.f32.mrf.mxu0
    %v317 = vadd.f32 %v201, %v316
    %318 = vmatmul.f32.gmra.mxu0 %v252
    %v319 = vpop.f32.mrf.mxu0
    %v320 = vadd.f32 %v204, %v319
    %321 = vmatmul.f32.gmra.mxu0 %v255
    %v322 = vpop.f32.mrf.mxu0
    %v323 = vadd.f32 %v207, %v322
    %324 = vmatmul.f32.gmra.mxu0 %v258
    %v325 = vpop.f32.mrf.mxu0
    %v326 = vadd.f32 %v210, %v325
    %327 = vmatmul.f32.gmra.mxu0 %v261
    %v328 = vpop.f32.mrf.mxu0
    %v329 = vadd.f32 %v213, %v328
    %330 = vmatmul.f32.gmra.mxu0 %v264
    %v331 = vpop.f32.mrf.mxu0
    %v332 = vadd.f32 %v216, %v331
    %333 = vmatmul.f32.gmra.mxu0 %v267
    %v334 = vpop.f32.mrf.mxu0
    %v335 = vadd.f32 %v219, %v334
    %336 = vmatmul.f32.gmra.mxu0 %v270
    %v337 = vpop.f32.mrf.mxu0
    %v338 = vadd.f32 %v222, %v337
    %339 = vmatmul.f32.gmra.mxu0 %v273
    %v340 = vpop.f32.mrf.mxu0
    %v341 = vadd.f32 %v225, %v340
    %342 = vmatmul.f32.gmra.mxu0 %v276
    %v343 = vpop.f32.mrf.mxu0
    %v344 = vadd.f32 %v228, %v343
    %345 = vmatmul.f32.gmra.mxu0 %v279
    %v346 = vpop.f32.mrf.mxu0
    %v347 = vadd.f32 %v231, %v346
    %348 = vmatmul.f32.gmra.mxu0 %v282
    %v349 = vpop.f32.mrf.mxu0
    %v350 = vadd.f32 %v234, %v349
    %351 = vmatmul.f32.gmra.mxu0 %v285
    %v352 = vpop.f32.mrf.mxu0
    %v353 = vadd.f32 %v237, %v352
    %354 = vdwg.mxu0
    %s355 = sadd.s32 %s82, 2
    %s356 = scalar_lea.vmem %s0, %s355
    %v357 = vld [vmem:[%s356] sm:$0xff]
    %v358 = vld [vmem:[%s356 + $0x8] sm:$0xff]
    %v359 = vld [vmem:[%s356 + $0x10] sm:$0xff]
    %v360 = vld [vmem:[%s356 + $0x18] sm:$0xff]
    %v361 = vld [vmem:[%s356 + $0x20] sm:$0xff]
    %v362 = vld [vmem:[%s356 + $0x28] sm:$0xff]
    %v363 = vld [vmem:[%s356 + $0x30] sm:$0xff]
    %v364 = vld [vmem:[%s356 + $0x38] sm:$0xff]
    %v365 = vld [vmem:[%s356 + $0x40] sm:$0xff]
    %v366 = vld [vmem:[%s356 + $0x48] sm:$0xff]
    %v367 = vld [vmem:[%s356 + $0x50] sm:$0xff]
    %v368 = vld [vmem:[%s356 + $0x58] sm:$0xff]
    %v369 = vld [vmem:[%s356 + $0x60] sm:$0xff]
    %v370 = vld [vmem:[%s356 + $0x68] sm:$0xff]
    %v371 = vld [vmem:[%s356 + $0x70] sm:$0xff]
    %v372 = vld [vmem:[%s356 + $0x78] sm:$0xff]
    %s373 = scalar_lea.vmem %s1, 8
    %v374 = vld [vmem:[%s373] sm:$0x7]
    %v376 = vsel %vm121, %v357, 0
    %v379 = vsel %vm121, %v358, 0
    %v382 = vsel %vm121, %v359, 0
    %v385 = vsel %vm121, %v360, 0
    %v388 = vsel %vm121, %v361, 0
    %v391 = vsel %vm121, %v362, 0
    %v394 = vsel %vm121, %v363, 0
    %v397 = vsel %vm121, %v364, 0
    %v400 = vsel %vm121, %v365, 0
    %v403 = vsel %vm121, %v366, 0
    %v406 = vsel %vm121, %v367, 0
    %v409 = vsel %vm121, %v368, 0
    %v412 = vsel %vm121, %v369, 0
    %v415 = vsel %vm121, %v370, 0
    %v418 = vsel %vm121, %v371, 0
    %v421 = vsel %vm121, %v372, 0
    %v424 = vsel %vm170, %v374, 0
    %426 = vmatpush.msra.mxu0 0.0
    %427 = vmatpush.msra.mxu0 0.0
    %428 = vmatpush.msra.mxu0 0.0
    %429 = vmatpush.msra.mxu0 0.0
    %430 = vmatpush.msra.mxu0 0.0
    %431 = vmatpush.msra.mxu0 0.0
    %432 = vmatpush.msra.mxu0 0.0
    %433 = vmatpush.msra.mxu0 0.0
    %434 = vmatpush.msra.mxu0 0.0
    %435 = vmatpush.msra.mxu0 0.0
    %436 = vmatpush.msra.mxu0 0.0
    %437 = vmatpush.msra.mxu0 0.0
    %438 = vmatpush.msra.mxu0 0.0
    %439 = vmatpush.msra.mxu0 0.0
    %440 = vmatpush.msra.mxu0 0.0
    %441 = vmatpush.msra.mxu0 %v424
    %442 = vmatmul.f32.gmra.mxu0 %v376
    %v443 = vpop.f32.mrf.mxu0
    %v444 = vadd.f32 0.0, %v443
    %445 = vmatmul.f32.gmra.mxu0 %v379
    %v446 = vpop.f32.mrf.mxu0
    %v447 = vadd.f32 0.0, %v446
    %448 = vmatmul.f32.gmra.mxu0 %v382
    %v449 = vpop.f32.mrf.mxu0
    %v450 = vadd.f32 0.0, %v449
    %451 = vmatmul.f32.gmra.mxu0 %v385
    %v452 = vpop.f32.mrf.mxu0
    %v453 = vadd.f32 0.0, %v452
    %454 = vmatmul.f32.gmra.mxu0 %v388
    %v455 = vpop.f32.mrf.mxu0
    %v456 = vadd.f32 0.0, %v455
    %457 = vmatmul.f32.gmra.mxu0 %v391
    %v458 = vpop.f32.mrf.mxu0
    %v459 = vadd.f32 0.0, %v458
    %460 = vmatmul.f32.gmra.mxu0 %v394
    %v461 = vpop.f32.mrf.mxu0
    %v462 = vadd.f32 0.0, %v461
    %463 = vmatmul.f32.gmra.mxu0 %v397
    %v464 = vpop.f32.mrf.mxu0
    %v465 = vadd.f32 0.0, %v464
    %466 = vmatmul.f32.gmra.mxu0 %v400
    %v467 = vpop.f32.mrf.mxu0
    %v468 = vadd.f32 0.0, %v467
    %469 = vmatmul.f32.gmra.mxu0 %v403
    %v470 = vpop.f32.mrf.mxu0
    %v471 = vadd.f32 0.0, %v470
    %472 = vmatmul.f32.gmra.mxu0 %v406
    %v473 = vpop.f32.mrf.mxu0
    %v474 = vadd.f32 0.0, %v473
    %475 = vmatmul.f32.gmra.mxu0 %v409
    %v476 = vpop.f32.mrf.mxu0
    %v477 = vadd.f32 0.0, %v476
    %478 = vmatmul.f32.gmra.mxu0 %v412
    %v479 = vpop.f32.mrf.mxu0
    %v480 = vadd.f32 0.0, %v479
    %481 = vmatmul.f32.gmra.mxu0 %v415
    %v482 = vpop.f32.mrf.mxu0
    %v483 = vadd.f32 0.0, %v482
    %484 = vmatmul.f32.gmra.mxu0 %v418
    %v485 = vpop.f32.mrf.mxu0
    %v486 = vadd.f32 0.0, %v485
    %487 = vmatmul.f32.gmra.mxu0 %v421
    %v488 = vpop.f32.mrf.mxu0
    %v489 = vadd.f32 0.0, %v488
    %490 = vdwg.mxu0
    %v491 = vadd.f32 %v308, %v444
    %v492 = vadd.f32 %v311, %v447
    %v493 = vadd.f32 %v314, %v450
    %v494 = vadd.f32 %v317, %v453
    %v495 = vadd.f32 %v320, %v456
    %v496 = vadd.f32 %v323, %v459
    %v497 = vadd.f32 %v326, %v462
    %v498 = vadd.f32 %v329, %v465
    %v499 = vadd.f32 %v332, %v468
    %v500 = vadd.f32 %v335, %v471
    %v501 = vadd.f32 %v338, %v474
    %v502 = vadd.f32 %v341, %v477
    %v503 = vadd.f32 %v344, %v480
    %v504 = vadd.f32 %v347, %v483
    %v505 = vadd.f32 %v350, %v486
    %v506 = vadd.f32 %v353, %v489
    %s507 = sadd.s32 %s82, 32
    %s508 = scalar_lea.vmem %s0, %s507
    %v509 = vld [vmem:[%s508] sm:$0xff]
    %v510 = vld [vmem:[%s508 + $0x8] sm:$0xff]
    %v511 = vld [vmem:[%s508 + $0x10] sm:$0xff]
    %v512 = vld [vmem:[%s508 + $0x18] sm:$0xff]
    %v513 = vld [vmem:[%s508 + $0x20] sm:$0xff]
    %v514 = vld [vmem:[%s508 + $0x28] sm:$0xff]
    %v515 = vld [vmem:[%s508 + $0x30] sm:$0xff]
    %v516 = vld [vmem:[%s508 + $0x38] sm:$0xff]
    %v517 = vld [vmem:[%s508 + $0x40] sm:$0xff]
    %v518 = vld [vmem:[%s508 + $0x48] sm:$0xff]
    %v519 = vld [vmem:[%s508 + $0x50] sm:$0xff]
    %v520 = vld [vmem:[%s508 + $0x58] sm:$0xff]
    %v521 = vld [vmem:[%s508 + $0x60] sm:$0xff]
    %v522 = vld [vmem:[%s508 + $0x68] sm:$0xff]
    %v523 = vld [vmem:[%s508 + $0x70] sm:$0xff]
    %v524 = vld [vmem:[%s508 + $0x78] sm:$0xff]
    %s525 = scalar_lea.vmem %s1, 12
    %v526 = vld [vmem:[%s525] sm:$0x7]
    %v528 = vsel %vm121, %v509, 0
    %v531 = vsel %vm121, %v510, 0
    %v534 = vsel %vm121, %v511, 0
    %v537 = vsel %vm121, %v512, 0
    %v540 = vsel %vm121, %v513, 0
    %v543 = vsel %vm121, %v514, 0
    %v546 = vsel %vm121, %v515, 0
    %v549 = vsel %vm121, %v516, 0
    %v552 = vsel %vm121, %v517, 0
    %v555 = vsel %vm121, %v518, 0
    %v558 = vsel %vm121, %v519, 0
    %v561 = vsel %vm121, %v520, 0
    %v564 = vsel %vm121, %v521, 0
    %v567 = vsel %vm121, %v522, 0
    %v570 = vsel %vm121, %v523, 0
    %v573 = vsel %vm121, %v524, 0
    %v576 = vsel %vm170, %v526, 0
    %578 = vmatpush.msra.mxu0 0.0
    %579 = vmatpush.msra.mxu0 0.0
    %580 = vmatpush.msra.mxu0 0.0
    %581 = vmatpush.msra.mxu0 0.0
    %582 = vmatpush.msra.mxu0 0.0
    %583 = vmatpush.msra.mxu0 0.0
    %584 = vmatpush.msra.mxu0 0.0
    %585 = vmatpush.msra.mxu0 0.0
    %586 = vmatpush.msra.mxu0 0.0
    %587 = vmatpush.msra.mxu0 0.0
    %588 = vmatpush.msra.mxu0 0.0
    %589 = vmatpush.msra.mxu0 0.0
    %590 = vmatpush.msra.mxu0 0.0
    %591 = vmatpush.msra.mxu0 0.0
    %592 = vmatpush.msra.mxu0 0.0
    %593 = vmatpush.msra.mxu0 %v576
    %594 = vmatmul.f32.gmra.mxu0 %v528
    %v595 = vpop.f32.mrf.mxu0
    %v596 = vadd.f32 0.0, %v595
    %597 = vmatmul.f32.gmra.mxu0 %v531
    %v598 = vpop.f32.mrf.mxu0
    %v599 = vadd.f32 0.0, %v598
    %600 = vmatmul.f32.gmra.mxu0 %v534
    %v601 = vpop.f32.mrf.mxu0
    %v602 = vadd.f32 0.0, %v601
    %603 = vmatmul.f32.gmra.mxu0 %v537
    %v604 = vpop.f32.mrf.mxu0
    %v605 = vadd.f32 0.0, %v604
    %606 = vmatmul.f32.gmra.mxu0 %v540
    %v607 = vpop.f32.mrf.mxu0
    %v608 = vadd.f32 0.0, %v607
    %609 = vmatmul.f32.gmra.mxu0 %v543
    %v610 = vpop.f32.mrf.mxu0
    %v611 = vadd.f32 0.0, %v610
    %612 = vmatmul.f32.gmra.mxu0 %v546
    %v613 = vpop.f32.mrf.mxu0
    %v614 = vadd.f32 0.0, %v613
    %615 = vmatmul.f32.gmra.mxu0 %v549
    %v616 = vpop.f32.mrf.mxu0
    %v617 = vadd.f32 0.0, %v616
    %618 = vmatmul.f32.gmra.mxu0 %v552
    %v619 = vpop.f32.mrf.mxu0
    %v620 = vadd.f32 0.0, %v619
    %621 = vmatmul.f32.gmra.mxu0 %v555
    %v622 = vpop.f32.mrf.mxu0
    %v623 = vadd.f32 0.0, %v622
    %624 = vmatmul.f32.gmra.mxu0 %v558
    %v625 = vpop.f32.mrf.mxu0
    %v626 = vadd.f32 0.0, %v625
    %627 = vmatmul.f32.gmra.mxu0 %v561
    %v628 = vpop.f32.mrf.mxu0
    %v629 = vadd.f32 0.0, %v628
    %630 = vmatmul.f32.gmra.mxu0 %v564
    %v631 = vpop.f32.mrf.mxu0
    %v632 = vadd.f32 0.0, %v631
    %633 = vmatmul.f32.gmra.mxu0 %v567
    %v634 = vpop.f32.mrf.mxu0
    %v635 = vadd.f32 0.0, %v634
    %636 = vmatmul.f32.gmra.mxu0 %v570
    %v637 = vpop.f32.mrf.mxu0
    %v638 = vadd.f32 0.0, %v637
    %639 = vmatmul.f32.gmra.mxu0 %v573
    %v640 = vpop.f32.mrf.mxu0
    %v641 = vadd.f32 0.0, %v640
    %642 = vdwg.mxu0
    %v643 = vadd.f32 %v491, %v596
    %v644 = vadd.f32 %v492, %v599
    %v645 = vadd.f32 %v493, %v602
    %v646 = vadd.f32 %v494, %v605
    %v647 = vadd.f32 %v495, %v608
    %v648 = vadd.f32 %v496, %v611
    %v649 = vadd.f32 %v497, %v614
    %v650 = vadd.f32 %v498, %v617
    %v651 = vadd.f32 %v499, %v620
    %v652 = vadd.f32 %v500, %v623
    %v653 = vadd.f32 %v501, %v626
    %v654 = vadd.f32 %v502, %v629
    %v655 = vadd.f32 %v503, %v632
    %v656 = vadd.f32 %v504, %v635
    %v657 = vadd.f32 %v505, %v638
    %v658 = vadd.f32 %v506, %v641
    %s659 = sadd.s32 %s82, 33
    %s660 = scalar_lea.vmem %s0, %s659
    %v661 = vld [vmem:[%s660] sm:$0xff]
    %v662 = vld [vmem:[%s660 + $0x8] sm:$0xff]
    %v663 = vld [vmem:[%s660 + $0x10] sm:$0xff]
    %v664 = vld [vmem:[%s660 + $0x18] sm:$0xff]
    %v665 = vld [vmem:[%s660 + $0x20] sm:$0xff]
    %v666 = vld [vmem:[%s660 + $0x28] sm:$0xff]
    %v667 = vld [vmem:[%s660 + $0x30] sm:$0xff]
    %v668 = vld [vmem:[%s660 + $0x38] sm:$0xff]
    %v669 = vld [vmem:[%s660 + $0x40] sm:$0xff]
    %v670 = vld [vmem:[%s660 + $0x48] sm:$0xff]
    %v671 = vld [vmem:[%s660 + $0x50] sm:$0xff]
    %v672 = vld [vmem:[%s660 + $0x58] sm:$0xff]
    %v673 = vld [vmem:[%s660 + $0x60] sm:$0xff]
    %v674 = vld [vmem:[%s660 + $0x68] sm:$0xff]
    %v675 = vld [vmem:[%s660 + $0x70] sm:$0xff]
    %v676 = vld [vmem:[%s660 + $0x78] sm:$0xff]
    %s677 = scalar_lea.vmem %s1, 16
    %v678 = vld [vmem:[%s677] sm:$0x7]
    %v680 = vsel %vm121, %v661, 0
    %v683 = vsel %vm121, %v662, 0
    %v686 = vsel %vm121, %v663, 0
    %v689 = vsel %vm121, %v664, 0
    %v692 = vsel %vm121, %v665, 0
    %v695 = vsel %vm121, %v666, 0
    %v698 = vsel %vm121, %v667, 0
    %v701 = vsel %vm121, %v668, 0
    %v704 = vsel %vm121, %v669, 0
    %v707 = vsel %vm121, %v670, 0
    %v710 = vsel %vm121, %v671, 0
    %v713 = vsel %vm121, %v672, 0
    %v716 = vsel %vm121, %v673, 0
    %v719 = vsel %vm121, %v674, 0
    %v722 = vsel %vm121, %v675, 0
    %v725 = vsel %vm121, %v676, 0
    %v728 = vsel %vm170, %v678, 0
    %730 = vmatpush.msra.mxu0 0.0
    %731 = vmatpush.msra.mxu0 0.0
    %732 = vmatpush.msra.mxu0 0.0
    %733 = vmatpush.msra.mxu0 0.0
    %734 = vmatpush.msra.mxu0 0.0
    %735 = vmatpush.msra.mxu0 0.0
    %736 = vmatpush.msra.mxu0 0.0
    %737 = vmatpush.msra.mxu0 0.0
    %738 = vmatpush.msra.mxu0 0.0
    %739 = vmatpush.msra.mxu0 0.0
    %740 = vmatpush.msra.mxu0 0.0
    %741 = vmatpush.msra.mxu0 0.0
    %742 = vmatpush.msra.mxu0 0.0
    %743 = vmatpush.msra.mxu0 0.0
    %744 = vmatpush.msra.mxu0 0.0
    %745 = vmatpush.msra.mxu0 %v728
    %746 = vmatmul.f32.gmra.mxu0 %v680
    %v747 = vpop.f32.mrf.mxu0
    %v748 = vadd.f32 0.0, %v747
    %749 = vmatmul.f32.gmra.mxu0 %v683
    %v750 = vpop.f32.mrf.mxu0
    %v751 = vadd.f32 0.0, %v750
    %752 = vmatmul.f32.gmra.mxu0 %v686
    %v753 = vpop.f32.mrf.mxu0
    %v754 = vadd.f32 0.0, %v753
    %755 = vmatmul.f32.gmra.mxu0 %v689
    %v756 = vpop.f32.mrf.mxu0
    %v757 = vadd.f32 0.0, %v756
    %758 = vmatmul.f32.gmra.mxu0 %v692
    %v759 = vpop.f32.mrf.mxu0
    %v760 = vadd.f32 0.0, %v759
    %761 = vmatmul.f32.gmra.mxu0 %v695
    %v762 = vpop.f32.mrf.mxu0
    %v763 = vadd.f32 0.0, %v762
    %764 = vmatmul.f32.gmra.mxu0 %v698
    %v765 = vpop.f32.mrf.mxu0
    %v766 = vadd.f32 0.0, %v765
    %767 = vmatmul.f32.gmra.mxu0 %v701
    %v768 = vpop.f32.mrf.mxu0
    %v769 = vadd.f32 0.0, %v768
    %770 = vmatmul.f32.gmra.mxu0 %v704
    %v771 = vpop.f32.mrf.mxu0
    %v772 = vadd.f32 0.0, %v771
    %773 = vmatmul.f32.gmra.mxu0 %v707
    %v774 = vpop.f32.mrf.mxu0
    %v775 = vadd.f32 0.0, %v774
    %776 = vmatmul.f32.gmra.mxu0 %v710
    %v777 = vpop.f32.mrf.mxu0
    %v778 = vadd.f32 0.0, %v777
    %779 = vmatmul.f32.gmra.mxu0 %v713
    %v780 = vpop.f32.mrf.mxu0
    %v781 = vadd.f32 0.0, %v780
    %782 = vmatmul.f32.gmra.mxu0 %v716
    %v783 = vpop.f32.mrf.mxu0
    %v784 = vadd.f32 0.0, %v783
    %785 = vmatmul.f32.gmra.mxu0 %v719
    %v786 = vpop.f32.mrf.mxu0
    %v787 = vadd.f32 0.0, %v786
    %788 = vmatmul.f32.gmra.mxu0 %v722
    %v789 = vpop.f32.mrf.mxu0
    %v790 = vadd.f32 0.0, %v789
    %791 = vmatmul.f32.gmra.mxu0 %v725
    %v792 = vpop.f32.mrf.mxu0
    %v793 = vadd.f32 0.0, %v792
    %794 = vdwg.mxu0
    %v795 = vadd.f32 %v643, %v748
    %v796 = vadd.f32 %v644, %v751
    %v797 = vadd.f32 %v645, %v754
    %v798 = vadd.f32 %v646, %v757
    %v799 = vadd.f32 %v647, %v760
    %v800 = vadd.f32 %v648, %v763
    %v801 = vadd.f32 %v649, %v766
    %v802 = vadd.f32 %v650, %v769
    %v803 = vadd.f32 %v651, %v772
    %v804 = vadd.f32 %v652, %v775
    %v805 = vadd.f32 %v653, %v778
    %v806 = vadd.f32 %v654, %v781
    %v807 = vadd.f32 %v655, %v784
    %v808 = vadd.f32 %v656, %v787
    %v809 = vadd.f32 %v657, %v790
    %v810 = vadd.f32 %v658, %v793
    %s811 = sadd.s32 %s82, 34
    %s812 = scalar_lea.vmem %s0, %s811
    %v813 = vld [vmem:[%s812] sm:$0xff]
    %v814 = vld [vmem:[%s812 + $0x8] sm:$0xff]
    %v815 = vld [vmem:[%s812 + $0x10] sm:$0xff]
    %v816 = vld [vmem:[%s812 + $0x18] sm:$0xff]
    %v817 = vld [vmem:[%s812 + $0x20] sm:$0xff]
    %v818 = vld [vmem:[%s812 + $0x28] sm:$0xff]
    %v819 = vld [vmem:[%s812 + $0x30] sm:$0xff]
    %v820 = vld [vmem:[%s812 + $0x38] sm:$0xff]
    %v821 = vld [vmem:[%s812 + $0x40] sm:$0xff]
    %v822 = vld [vmem:[%s812 + $0x48] sm:$0xff]
    %v823 = vld [vmem:[%s812 + $0x50] sm:$0xff]
    %v824 = vld [vmem:[%s812 + $0x58] sm:$0xff]
    %v825 = vld [vmem:[%s812 + $0x60] sm:$0xff]
    %v826 = vld [vmem:[%s812 + $0x68] sm:$0xff]
    %v827 = vld [vmem:[%s812 + $0x70] sm:$0xff]
    %v828 = vld [vmem:[%s812 + $0x78] sm:$0xff]
    %s829 = scalar_lea.vmem %s1, 20
    %v830 = vld [vmem:[%s829] sm:$0x7]
    %v832 = vsel %vm121, %v813, 0
    %v835 = vsel %vm121, %v814, 0
    %v838 = vsel %vm121, %v815, 0
    %v841 = vsel %vm121, %v816, 0
    %v844 = vsel %vm121, %v817, 0
    %v847 = vsel %vm121, %v818, 0
    %v850 = vsel %vm121, %v819, 0
    %v853 = vsel %vm121, %v820, 0
    %v856 = vsel %vm121, %v821, 0
    %v859 = vsel %vm121, %v822, 0
    %v862 = vsel %vm121, %v823, 0
    %v865 = vsel %vm121, %v824, 0
    %v868 = vsel %vm121, %v825, 0
    %v871 = vsel %vm121, %v826, 0
    %v874 = vsel %vm121, %v827, 0
    %v877 = vsel %vm121, %v828, 0
    %v880 = vsel %vm170, %v830, 0
    %882 = vmatpush.msra.mxu0 0.0
    %883 = vmatpush.msra.mxu0 0.0
    %884 = vmatpush.msra.mxu0 0.0
    %885 = vmatpush.msra.mxu0 0.0
    %886 = vmatpush.msra.mxu0 0.0
    %887 = vmatpush.msra.mxu0 0.0
    %888 = vmatpush.msra.mxu0 0.0
    %889 = vmatpush.msra.mxu0 0.0
    %890 = vmatpush.msra.mxu0 0.0
    %891 = vmatpush.msra.mxu0 0.0
    %892 = vmatpush.msra.mxu0 0.0
    %893 = vmatpush.msra.mxu0 0.0
    %894 = vmatpush.msra.mxu0 0.0
    %895 = vmatpush.msra.mxu0 0.0
    %896 = vmatpush.msra.mxu0 0.0
    %897 = vmatpush.msra.mxu0 %v880
    %898 = vmatmul.f32.gmra.mxu0 %v832
    %v899 = vpop.f32.mrf.mxu0
    %v900 = vadd.f32 0.0, %v899
    %901 = vmatmul.f32.gmra.mxu0 %v835
    %v902 = vpop.f32.mrf.mxu0
    %v903 = vadd.f32 0.0, %v902
    %904 = vmatmul.f32.gmra.mxu0 %v838
    %v905 = vpop.f32.mrf.mxu0
    %v906 = vadd.f32 0.0, %v905
    %907 = vmatmul.f32.gmra.mxu0 %v841
    %v908 = vpop.f32.mrf.mxu0
    %v909 = vadd.f32 0.0, %v908
    %910 = vmatmul.f32.gmra.mxu0 %v844
    %v911 = vpop.f32.mrf.mxu0
    %v912 = vadd.f32 0.0, %v911
    %913 = vmatmul.f32.gmra.mxu0 %v847
    %v914 = vpop.f32.mrf.mxu0
    %v915 = vadd.f32 0.0, %v914
    %916 = vmatmul.f32.gmra.mxu0 %v850
    %v917 = vpop.f32.mrf.mxu0
    %v918 = vadd.f32 0.0, %v917
    %919 = vmatmul.f32.gmra.mxu0 %v853
    %v920 = vpop.f32.mrf.mxu0
    %v921 = vadd.f32 0.0, %v920
    %922 = vmatmul.f32.gmra.mxu0 %v856
    %v923 = vpop.f32.mrf.mxu0
    %v924 = vadd.f32 0.0, %v923
    %925 = vmatmul.f32.gmra.mxu0 %v859
    %v926 = vpop.f32.mrf.mxu0
    %v927 = vadd.f32 0.0, %v926
    %928 = vmatmul.f32.gmra.mxu0 %v862
    %v929 = vpop.f32.mrf.mxu0
    %v930 = vadd.f32 0.0, %v929
    %931 = vmatmul.f32.gmra.mxu0 %v865
    %v932 = vpop.f32.mrf.mxu0
    %v933 = vadd.f32 0.0, %v932
    %934 = vmatmul.f32.gmra.mxu0 %v868
    %v935 = vpop.f32.mrf.mxu0
    %v936 = vadd.f32 0.0, %v935
    %937 = vmatmul.f32.gmra.mxu0 %v871
    %v938 = vpop.f32.mrf.mxu0
    %v939 = vadd.f32 0.0, %v938
    %940 = vmatmul.f32.gmra.mxu0 %v874
    %v941 = vpop.f32.mrf.mxu0
    %v942 = vadd.f32 0.0, %v941
    %943 = vmatmul.f32.gmra.mxu0 %v877
    %v944 = vpop.f32.mrf.mxu0
    %v945 = vadd.f32 0.0, %v944
    %946 = vdwg.mxu0
    %v947 = vadd.f32 %v795, %v900
    %v948 = vadd.f32 %v796, %v903
    %v949 = vadd.f32 %v797, %v906
    %v950 = vadd.f32 %v798, %v909
    %v951 = vadd.f32 %v799, %v912
    %v952 = vadd.f32 %v800, %v915
    %v953 = vadd.f32 %v801, %v918
    %v954 = vadd.f32 %v802, %v921
    %v955 = vadd.f32 %v803, %v924
    %v956 = vadd.f32 %v804, %v927
    %v957 = vadd.f32 %v805, %v930
    %v958 = vadd.f32 %v806, %v933
    %v959 = vadd.f32 %v807, %v936
    %v960 = vadd.f32 %v808, %v939
    %v961 = vadd.f32 %v809, %v942
    %v962 = vadd.f32 %v810, %v945
    %s963 = sadd.s32 %s82, 64
    %s964 = scalar_lea.vmem %s0, %s963
    %v965 = vld [vmem:[%s964] sm:$0xff]
    %v966 = vld [vmem:[%s964 + $0x8] sm:$0xff]
    %v967 = vld [vmem:[%s964 + $0x10] sm:$0xff]
    %v968 = vld [vmem:[%s964 + $0x18] sm:$0xff]
    %v969 = vld [vmem:[%s964 + $0x20] sm:$0xff]
    %v970 = vld [vmem:[%s964 + $0x28] sm:$0xff]
    %v971 = vld [vmem:[%s964 + $0x30] sm:$0xff]
    %v972 = vld [vmem:[%s964 + $0x38] sm:$0xff]
    %v973 = vld [vmem:[%s964 + $0x40] sm:$0xff]
    %v974 = vld [vmem:[%s964 + $0x48] sm:$0xff]
    %v975 = vld [vmem:[%s964 + $0x50] sm:$0xff]
    %v976 = vld [vmem:[%s964 + $0x58] sm:$0xff]
    %v977 = vld [vmem:[%s964 + $0x60] sm:$0xff]
    %v978 = vld [vmem:[%s964 + $0x68] sm:$0xff]
    %v979 = vld [vmem:[%s964 + $0x70] sm:$0xff]
    %v980 = vld [vmem:[%s964 + $0x78] sm:$0xff]
    %s981 = scalar_lea.vmem %s1, 24
    %v982 = vld [vmem:[%s981] sm:$0x7]
    %v984 = vsel %vm121, %v965, 0
    %v987 = vsel %vm121, %v966, 0
    %v990 = vsel %vm121, %v967, 0
    %v993 = vsel %vm121, %v968, 0
    %v996 = vsel %vm121, %v969, 0
    %v999 = vsel %vm121, %v970, 0
    %v1002 = vsel %vm121, %v971, 0
    %v1005 = vsel %vm121, %v972, 0
    %v1008 = vsel %vm121, %v973, 0
    %v1011 = vsel %vm121, %v974, 0
    %v1014 = vsel %vm121, %v975, 0
    %v1017 = vsel %vm121, %v976, 0
    %v1020 = vsel %vm121, %v977, 0
    %v1023 = vsel %vm121, %v978, 0
    %v1026 = vsel %vm121, %v979, 0
    %v1029 = vsel %vm121, %v980, 0
    %v1032 = vsel %vm170, %v982, 0
    %1034 = vmatpush.msra.mxu0 0.0
    %1035 = vmatpush.msra.mxu0 0.0
    %1036 = vmatpush.msra.mxu0 0.0
    %1037 = vmatpush.msra.mxu0 0.0
    %1038 = vmatpush.msra.mxu0 0.0
    %1039 = vmatpush.msra.mxu0 0.0
    %1040 = vmatpush.msra.mxu0 0.0
    %1041 = vmatpush.msra.mxu0 0.0
    %1042 = vmatpush.msra.mxu0 0.0
    %1043 = vmatpush.msra.mxu0 0.0
    %1044 = vmatpush.msra.mxu0 0.0
    %1045 = vmatpush.msra.mxu0 0.0
    %1046 = vmatpush.msra.mxu0 0.0
    %1047 = vmatpush.msra.mxu0 0.0
    %1048 = vmatpush.msra.mxu0 0.0
    %1049 = vmatpush.msra.mxu0 %v1032
    %1050 = vmatmul.f32.gmra.mxu0 %v984
    %v1051 = vpop.f32.mrf.mxu0
    %v1052 = vadd.f32 0.0, %v1051
    %1053 = vmatmul.f32.gmra.mxu0 %v987
    %v1054 = vpop.f32.mrf.mxu0
    %v1055 = vadd.f32 0.0, %v1054
    %1056 = vmatmul.f32.gmra.mxu0 %v990
    %v1057 = vpop.f32.mrf.mxu0
    %v1058 = vadd.f32 0.0, %v1057
    %1059 = vmatmul.f32.gmra.mxu0 %v993
    %v1060 = vpop.f32.mrf.mxu0
    %v1061 = vadd.f32 0.0, %v1060
    %1062 = vmatmul.f32.gmra.mxu0 %v996
    %v1063 = vpop.f32.mrf.mxu0
    %v1064 = vadd.f32 0.0, %v1063
    %1065 = vmatmul.f32.gmra.mxu0 %v999
    %v1066 = vpop.f32.mrf.mxu0
    %v1067 = vadd.f32 0.0, %v1066
    %1068 = vmatmul.f32.gmra.mxu0 %v1002
    %v1069 = vpop.f32.mrf.mxu0
    %v1070 = vadd.f32 0.0, %v1069
    %1071 = vmatmul.f32.gmra.mxu0 %v1005
    %v1072 = vpop.f32.mrf.mxu0
    %v1073 = vadd.f32 0.0, %v1072
    %1074 = vmatmul.f32.gmra.mxu0 %v1008
    %v1075 = vpop.f32.mrf.mxu0
    %v1076 = vadd.f32 0.0, %v1075
    %1077 = vmatmul.f32.gmra.mxu0 %v1011
    %v1078 = vpop.f32.mrf.mxu0
    %v1079 = vadd.f32 0.0, %v1078
    %1080 = vmatmul.f32.gmra.mxu0 %v1014
    %v1081 = vpop.f32.mrf.mxu0
    %v1082 = vadd.f32 0.0, %v1081
    %1083 = vmatmul.f32.gmra.mxu0 %v1017
    %v1084 = vpop.f32.mrf.mxu0
    %v1085 = vadd.f32 0.0, %v1084
    %1086 = vmatmul.f32.gmra.mxu0 %v1020
    %v1087 = vpop.f32.mrf.mxu0
    %v1088 = vadd.f32 0.0, %v1087
    %1089 = vmatmul.f32.gmra.mxu0 %v1023
    %v1090 = vpop.f32.mrf.mxu0
    %v1091 = vadd.f32 0.0, %v1090
    %1092 = vmatmul.f32.gmra.mxu0 %v1026
    %v1093 = vpop.f32.mrf.mxu0
    %v1094 = vadd.f32 0.0, %v1093
    %1095 = vmatmul.f32.gmra.mxu0 %v1029
    %v1096 = vpop.f32.mrf.mxu0
    %v1097 = vadd.f32 0.0, %v1096
    %1098 = vdwg.mxu0
    %v1099 = vadd.f32 %v947, %v1052
    %v1100 = vadd.f32 %v948, %v1055
    %v1101 = vadd.f32 %v949, %v1058
    %v1102 = vadd.f32 %v950, %v1061
    %v1103 = vadd.f32 %v951, %v1064
    %v1104 = vadd.f32 %v952, %v1067
    %v1105 = vadd.f32 %v953, %v1070
    %v1106 = vadd.f32 %v954, %v1073
    %v1107 = vadd.f32 %v955, %v1076
    %v1108 = vadd.f32 %v956, %v1079
    %v1109 = vadd.f32 %v957, %v1082
    %v1110 = vadd.f32 %v958, %v1085
    %v1111 = vadd.f32 %v959, %v1088
    %v1112 = vadd.f32 %v960, %v1091
    %v1113 = vadd.f32 %v961, %v1094
    %v1114 = vadd.f32 %v962, %v1097
    %s1115 = sadd.s32 %s82, 65
    %s1116 = scalar_lea.vmem %s0, %s1115
    %v1117 = vld [vmem:[%s1116] sm:$0xff]
    %v1118 = vld [vmem:[%s1116 + $0x8] sm:$0xff]
    %v1119 = vld [vmem:[%s1116 + $0x10] sm:$0xff]
    %v1120 = vld [vmem:[%s1116 + $0x18] sm:$0xff]
    %v1121 = vld [vmem:[%s1116 + $0x20] sm:$0xff]
    %v1122 = vld [vmem:[%s1116 + $0x28] sm:$0xff]
    %v1123 = vld [vmem:[%s1116 + $0x30] sm:$0xff]
    %v1124 = vld [vmem:[%s1116 + $0x38] sm:$0xff]
    %v1125 = vld [vmem:[%s1116 + $0x40] sm:$0xff]
    %v1126 = vld [vmem:[%s1116 + $0x48] sm:$0xff]
    %v1127 = vld [vmem:[%s1116 + $0x50] sm:$0xff]
    %v1128 = vld [vmem:[%s1116 + $0x58] sm:$0xff]
    %v1129 = vld [vmem:[%s1116 + $0x60] sm:$0xff]
    %v1130 = vld [vmem:[%s1116 + $0x68] sm:$0xff]
    %v1131 = vld [vmem:[%s1116 + $0x70] sm:$0xff]
    %v1132 = vld [vmem:[%s1116 + $0x78] sm:$0xff]
    %s1133 = scalar_lea.vmem %s1, 28
    %v1134 = vld [vmem:[%s1133] sm:$0x7]
    %v1136 = vsel %vm121, %v1117, 0
    %v1139 = vsel %vm121, %v1118, 0
    %v1142 = vsel %vm121, %v1119, 0
    %v1145 = vsel %vm121, %v1120, 0
    %v1148 = vsel %vm121, %v1121, 0
    %v1151 = vsel %vm121, %v1122, 0
    %v1154 = vsel %vm121, %v1123, 0
    %v1157 = vsel %vm121, %v1124, 0
    %v1160 = vsel %vm121, %v1125, 0
    %v1163 = vsel %vm121, %v1126, 0
    %v1166 = vsel %vm121, %v1127, 0
    %v1169 = vsel %vm121, %v1128, 0
    %v1172 = vsel %vm121, %v1129, 0
    %v1175 = vsel %vm121, %v1130, 0
    %v1178 = vsel %vm121, %v1131, 0
    %v1181 = vsel %vm121, %v1132, 0
    %v1184 = vsel %vm170, %v1134, 0
    %1186 = vmatpush.msra.mxu0 0.0
    %1187 = vmatpush.msra.mxu0 0.0
    %1188 = vmatpush.msra.mxu0 0.0
    %1189 = vmatpush.msra.mxu0 0.0
    %1190 = vmatpush.msra.mxu0 0.0
    %1191 = vmatpush.msra.mxu0 0.0
    %1192 = vmatpush.msra.mxu0 0.0
    %1193 = vmatpush.msra.mxu0 0.0
    %1194 = vmatpush.msra.mxu0 0.0
    %1195 = vmatpush.msra.mxu0 0.0
    %1196 = vmatpush.msra.mxu0 0.0
    %1197 = vmatpush.msra.mxu0 0.0
    %1198 = vmatpush.msra.mxu0 0.0
    %1199 = vmatpush.msra.mxu0 0.0
    %1200 = vmatpush.msra.mxu0 0.0
    %1201 = vmatpush.msra.mxu0 %v1184
    %1202 = vmatmul.f32.gmra.mxu0 %v1136
    %v1203 = vpop.f32.mrf.mxu0
    %v1204 = vadd.f32 0.0, %v1203
    %1205 = vmatmul.f32.gmra.mxu0 %v1139
    %v1206 = vpop.f32.mrf.mxu0
    %v1207 = vadd.f32 0.0, %v1206
    %1208 = vmatmul.f32.gmra.mxu0 %v1142
    %v1209 = vpop.f32.mrf.mxu0
    %v1210 = vadd.f32 0.0, %v1209
    %1211 = vmatmul.f32.gmra.mxu0 %v1145
    %v1212 = vpop.f32.mrf.mxu0
    %v1213 = vadd.f32 0.0, %v1212
    %1214 = vmatmul.f32.gmra.mxu0 %v1148
    %v1215 = vpop.f32.mrf.mxu0
    %v1216 = vadd.f32 0.0, %v1215
    %1217 = vmatmul.f32.gmra.mxu0 %v1151
    %v1218 = vpop.f32.mrf.mxu0
    %v1219 = vadd.f32 0.0, %v1218
    %1220 = vmatmul.f32.gmra.mxu0 %v1154
    %v1221 = vpop.f32.mrf.mxu0
    %v1222 = vadd.f32 0.0, %v1221
    %1223 = vmatmul.f32.gmra.mxu0 %v1157
    %v1224 = vpop.f32.mrf.mxu0
    %v1225 = vadd.f32 0.0, %v1224
    %1226 = vmatmul.f32.gmra.mxu0 %v1160
    %v1227 = vpop.f32.mrf.mxu0
    %v1228 = vadd.f32 0.0, %v1227
    %1229 = vmatmul.f32.gmra.mxu0 %v1163
    %v1230 = vpop.f32.mrf.mxu0
    %v1231 = vadd.f32 0.0, %v1230
    %1232 = vmatmul.f32.gmra.mxu0 %v1166
    %v1233 = vpop.f32.mrf.mxu0
    %v1234 = vadd.f32 0.0, %v1233
    %1235 = vmatmul.f32.gmra.mxu0 %v1169
    %v1236 = vpop.f32.mrf.mxu0
    %v1237 = vadd.f32 0.0, %v1236
    %1238 = vmatmul.f32.gmra.mxu0 %v1172
    %v1239 = vpop.f32.mrf.mxu0
    %v1240 = vadd.f32 0.0, %v1239
    %1241 = vmatmul.f32.gmra.mxu0 %v1175
    %v1242 = vpop.f32.mrf.mxu0
    %v1243 = vadd.f32 0.0, %v1242
    %1244 = vmatmul.f32.gmra.mxu0 %v1178
    %v1245 = vpop.f32.mrf.mxu0
    %v1246 = vadd.f32 0.0, %v1245
    %1247 = vmatmul.f32.gmra.mxu0 %v1181
    %v1248 = vpop.f32.mrf.mxu0
    %v1249 = vadd.f32 0.0, %v1248
    %1250 = vdwg.mxu0
    %v1251 = vadd.f32 %v1099, %v1204
    %v1252 = vadd.f32 %v1100, %v1207
    %v1253 = vadd.f32 %v1101, %v1210
    %v1254 = vadd.f32 %v1102, %v1213
    %v1255 = vadd.f32 %v1103, %v1216
    %v1256 = vadd.f32 %v1104, %v1219
    %v1257 = vadd.f32 %v1105, %v1222
    %v1258 = vadd.f32 %v1106, %v1225
    %v1259 = vadd.f32 %v1107, %v1228
    %v1260 = vadd.f32 %v1108, %v1231
    %v1261 = vadd.f32 %v1109, %v1234
    %v1262 = vadd.f32 %v1110, %v1237
    %v1263 = vadd.f32 %v1111, %v1240
    %v1264 = vadd.f32 %v1112, %v1243
    %v1265 = vadd.f32 %v1113, %v1246
    %v1266 = vadd.f32 %v1114, %v1249
    %s1267 = sadd.s32 %s82, 66
    %s1268 = scalar_lea.vmem %s0, %s1267
    %v1269 = vld [vmem:[%s1268] sm:$0xff]
    %v1270 = vld [vmem:[%s1268 + $0x8] sm:$0xff]
    %v1271 = vld [vmem:[%s1268 + $0x10] sm:$0xff]
    %v1272 = vld [vmem:[%s1268 + $0x18] sm:$0xff]
    %v1273 = vld [vmem:[%s1268 + $0x20] sm:$0xff]
    %v1274 = vld [vmem:[%s1268 + $0x28] sm:$0xff]
    %v1275 = vld [vmem:[%s1268 + $0x30] sm:$0xff]
    %v1276 = vld [vmem:[%s1268 + $0x38] sm:$0xff]
    %v1277 = vld [vmem:[%s1268 + $0x40] sm:$0xff]
    %v1278 = vld [vmem:[%s1268 + $0x48] sm:$0xff]
    %v1279 = vld [vmem:[%s1268 + $0x50] sm:$0xff]
    %v1280 = vld [vmem:[%s1268 + $0x58] sm:$0xff]
    %v1281 = vld [vmem:[%s1268 + $0x60] sm:$0xff]
    %v1282 = vld [vmem:[%s1268 + $0x68] sm:$0xff]
    %v1283 = vld [vmem:[%s1268 + $0x70] sm:$0xff]
    %v1284 = vld [vmem:[%s1268 + $0x78] sm:$0xff]
    %s1285 = scalar_lea.vmem %s1, 32
    %v1286 = vld [vmem:[%s1285] sm:$0x7]
    %v1288 = vsel %vm121, %v1269, 0
    %v1291 = vsel %vm121, %v1270, 0
    %v1294 = vsel %vm121, %v1271, 0
    %v1297 = vsel %vm121, %v1272, 0
    %v1300 = vsel %vm121, %v1273, 0
    %v1303 = vsel %vm121, %v1274, 0
    %v1306 = vsel %vm121, %v1275, 0
    %v1309 = vsel %vm121, %v1276, 0
    %v1312 = vsel %vm121, %v1277, 0
    %v1315 = vsel %vm121, %v1278, 0
    %v1318 = vsel %vm121, %v1279, 0
    %v1321 = vsel %vm121, %v1280, 0
    %v1324 = vsel %vm121, %v1281, 0
    %v1327 = vsel %vm121, %v1282, 0
    %v1330 = vsel %vm121, %v1283, 0
    %v1333 = vsel %vm121, %v1284, 0
    %v1336 = vsel %vm170, %v1286, 0
    %1338 = vmatpush.msra.mxu0 0.0
    %1339 = vmatpush.msra.mxu0 0.0
    %1340 = vmatpush.msra.mxu0 0.0
    %1341 = vmatpush.msra.mxu0 0.0
    %1342 = vmatpush.msra.mxu0 0.0
    %1343 = vmatpush.msra.mxu0 0.0
    %1344 = vmatpush.msra.mxu0 0.0
    %1345 = vmatpush.msra.mxu0 0.0
    %1346 = vmatpush.msra.mxu0 0.0
    %1347 = vmatpush.msra.mxu0 0.0
    %1348 = vmatpush.msra.mxu0 0.0
    %1349 = vmatpush.msra.mxu0 0.0
    %1350 = vmatpush.msra.mxu0 0.0
    %1351 = vmatpush.msra.mxu0 0.0
    %1352 = vmatpush.msra.mxu0 0.0
    %1353 = vmatpush.msra.mxu0 %v1336
    %1354 = vmatmul.f32.gmra.mxu0 %v1288
    %v1355 = vpop.f32.mrf.mxu0
    %v1356 = vadd.f32 0.0, %v1355
    %1357 = vmatmul.f32.gmra.mxu0 %v1291
    %v1358 = vpop.f32.mrf.mxu0
    %v1359 = vadd.f32 0.0, %v1358
    %1360 = vmatmul.f32.gmra.mxu0 %v1294
    %v1361 = vpop.f32.mrf.mxu0
    %v1362 = vadd.f32 0.0, %v1361
    %1363 = vmatmul.f32.gmra.mxu0 %v1297
    %v1364 = vpop.f32.mrf.mxu0
    %v1365 = vadd.f32 0.0, %v1364
    %1366 = vmatmul.f32.gmra.mxu0 %v1300
    %v1367 = vpop.f32.mrf.mxu0
    %v1368 = vadd.f32 0.0, %v1367
    %1369 = vmatmul.f32.gmra.mxu0 %v1303
    %v1370 = vpop.f32.mrf.mxu0
    %v1371 = vadd.f32 0.0, %v1370
    %1372 = vmatmul.f32.gmra.mxu0 %v1306
    %v1373 = vpop.f32.mrf.mxu0
    %v1374 = vadd.f32 0.0, %v1373
    %1375 = vmatmul.f32.gmra.mxu0 %v1309
    %v1376 = vpop.f32.mrf.mxu0
    %v1377 = vadd.f32 0.0, %v1376
    %1378 = vmatmul.f32.gmra.mxu0 %v1312
    %v1379 = vpop.f32.mrf.mxu0
    %v1380 = vadd.f32 0.0, %v1379
    %1381 = vmatmul.f32.gmra.mxu0 %v1315
    %v1382 = vpop.f32.mrf.mxu0
    %v1383 = vadd.f32 0.0, %v1382
    %1384 = vmatmul.f32.gmra.mxu0 %v1318
    %v1385 = vpop.f32.mrf.mxu0
    %v1386 = vadd.f32 0.0, %v1385
    %1387 = vmatmul.f32.gmra.mxu0 %v1321
    %v1388 = vpop.f32.mrf.mxu0
    %v1389 = vadd.f32 0.0, %v1388
    %1390 = vmatmul.f32.gmra.mxu0 %v1324
    %v1391 = vpop.f32.mrf.mxu0
    %v1392 = vadd.f32 0.0, %v1391
    %1393 = vmatmul.f32.gmra.mxu0 %v1327
    %v1394 = vpop.f32.mrf.mxu0
    %v1395 = vadd.f32 0.0, %v1394
    %1396 = vmatmul.f32.gmra.mxu0 %v1330
    %v1397 = vpop.f32.mrf.mxu0
    %v1398 = vadd.f32 0.0, %v1397
    %1399 = vmatmul.f32.gmra.mxu0 %v1333
    %v1400 = vpop.f32.mrf.mxu0
    %v1401 = vadd.f32 0.0, %v1400
    %1402 = vdwg.mxu0
    %v1403 = vadd.f32 %v1251, %v1356
    %v1404 = vadd.f32 %v1252, %v1359
    %v1405 = vadd.f32 %v1253, %v1362
    %v1406 = vadd.f32 %v1254, %v1365
    %v1407 = vadd.f32 %v1255, %v1368
    %v1408 = vadd.f32 %v1256, %v1371
    %v1409 = vadd.f32 %v1257, %v1374
    %v1410 = vadd.f32 %v1258, %v1377
    %v1411 = vadd.f32 %v1259, %v1380
    %v1412 = vadd.f32 %v1260, %v1383
    %v1413 = vadd.f32 %v1261, %v1386
    %v1414 = vadd.f32 %v1262, %v1389
    %v1415 = vadd.f32 %v1263, %v1392
    %v1416 = vadd.f32 %v1264, %v1395
    %v1417 = vadd.f32 %v1265, %v1398
    %v1418 = vadd.f32 %v1266, %v1401
    %v1419 = vld [vmem:[%s2] sm:$0x1]
    %v1421 = vperm.slane %v1419, 0
    %v1423 = vadd.f32 %v1403, %v1421
    %v1424 = vadd.f32 %v1404, %v1421
    %v1425 = vadd.f32 %v1405, %v1421
    %v1426 = vadd.f32 %v1406, %v1421
    %v1427 = vadd.f32 %v1407, %v1421
    %v1428 = vadd.f32 %v1408, %v1421
    %v1429 = vadd.f32 %v1409, %v1421
    %v1430 = vadd.f32 %v1410, %v1421
    %v1431 = vadd.f32 %v1411, %v1421
    %v1432 = vadd.f32 %v1412, %v1421
    %v1433 = vadd.f32 %v1413, %v1421
    %v1434 = vadd.f32 %v1414, %v1421
    %v1435 = vadd.f32 %v1415, %v1421
    %v1436 = vadd.f32 %v1416, %v1421
    %v1437 = vadd.f32 %v1417, %v1421
    %v1438 = vadd.f32 %v1418, %v1421
    %v1439 = vmax.f32 %v1423, 0.0
    %v1440 = vmax.f32 %v1424, 0.0
    %v1441 = vmax.f32 %v1425, 0.0
    %v1442 = vmax.f32 %v1426, 0.0
    %v1443 = vmax.f32 %v1427, 0.0
    %v1444 = vmax.f32 %v1428, 0.0
    %v1445 = vmax.f32 %v1429, 0.0
    %v1446 = vmax.f32 %v1430, 0.0
    %v1447 = vmax.f32 %v1431, 0.0
    %v1448 = vmax.f32 %v1432, 0.0
    %v1449 = vmax.f32 %v1433, 0.0
    %v1450 = vmax.f32 %v1434, 0.0
    %v1451 = vmax.f32 %v1435, 0.0
    %v1452 = vmax.f32 %v1436, 0.0
    %v1453 = vmax.f32 %v1437, 0.0
    %v1454 = vmax.f32 %v1438, 0.0
    %s1455 = scalar_lea.vmem [#allocation2], %s82
    %1456 = vst.msk [vmem:[%s1455] sm:$0xff] %vm53, %v1439
    %1457 = vst.msk [vmem:[%s1455 + $0x8] sm:$0xff] %vm53, %v1440
    %1458 = vst.msk [vmem:[%s1455 + $0x10] sm:$0xff] %vm53, %v1441
    %1459 = vst.msk [vmem:[%s1455 + $0x18] sm:$0xff] %vm53, %v1442
    %1460 = vst.msk [vmem:[%s1455 + $0x20] sm:$0xff] %vm53, %v1443
    %1461 = vst.msk [vmem:[%s1455 + $0x28] sm:$0xff] %vm53, %v1444
    %1462 = vst.msk [vmem:[%s1455 + $0x30] sm:$0xff] %vm53, %v1445
    %1463 = vst.msk [vmem:[%s1455 + $0x38] sm:$0xff] %vm53, %v1446
    %1464 = vst.msk [vmem:[%s1455 + $0x40] sm:$0xff] %vm53, %v1447
    %1465 = vst.msk [vmem:[%s1455 + $0x48] sm:$0xff] %vm53, %v1448
    %1466 = vst.msk [vmem:[%s1455 + $0x50] sm:$0xff] %vm53, %v1449
    %1467 = vst.msk [vmem:[%s1455 + $0x58] sm:$0xff] %vm53, %v1450
    %1468 = vst.msk [vmem:[%s1455 + $0x60] sm:$0xff] %vm53, %v1451
    %1469 = vst.msk [vmem:[%s1455 + $0x68] sm:$0xff] %vm53, %v1452
    %1470 = vst.msk [vmem:[%s1455 + $0x70] sm:$0xff] %vm53, %v1453
    %1471 = vst.msk [vmem:[%s1455 + $0x78] sm:$0xff] %vm53, %v1454
  $region66: #{cnn_forward.1} parent=0 // loop_footer
    %s81 = sadd.s32 1, %s77
  $region67: #{cnn_forward.1} parent=0 // loop_footer_branch
    %76 = sbr.rel target = $region63
  $region68: #{cnn_forward.1} parent=0 // loop_exit
    _
  loop: start=0, step=1, limit=16
  $region69: #{cnn_forward.1} parent=0 // loop_pre_header
    _
  $region70: #{cnn_forward.1} parent=0 // loop_header
    %s1473 = sphi 0, %s1477
    %p1474 = scmp.ge.s32.totalorder %s1473, 16
    %v1478 = vphi 0.0, %v2871
    %v1479 = vphi 0.0, %v2941
  $region71: #{cnn_forward.1} parent=0 // loop_header_branch
    %1476 = sbr.rel (%p1474) target = $region75
  $region72: #{cnn_forward.1} parent=0 // loop_body
    %s1480 = smul.u32 %s1473, 128
    %s1481 = scalar_lea.vmem [#allocation2], %s1480
    %v1482 = vld [vmem:[%s1481] sm:$0xff]
    %v1483 = vld [vmem:[%s1481 + $0x8] sm:$0xff]
    %v1484 = vld [vmem:[%s1481 + $0x10] sm:$0xff]
    %v1485 = vld [vmem:[%s1481 + $0x18] sm:$0xff]
    %v1486 = vld [vmem:[%s1481 + $0x20] sm:$0xff]
    %v1487 = vld [vmem:[%s1481 + $0x28] sm:$0xff]
    %v1488 = vld [vmem:[%s1481 + $0x30] sm:$0xff]
    %v1489 = vld [vmem:[%s1481 + $0x38] sm:$0xff]
    %v1490 = vld [vmem:[%s1481 + $0x40] sm:$0xff]
    %v1491 = vld [vmem:[%s1481 + $0x48] sm:$0xff]
    %v1492 = vld [vmem:[%s1481 + $0x50] sm:$0xff]
    %v1493 = vld [vmem:[%s1481 + $0x58] sm:$0xff]
    %v1494 = vld [vmem:[%s1481 + $0x60] sm:$0xff]
    %v1495 = vld [vmem:[%s1481 + $0x68] sm:$0xff]
    %v1496 = vld [vmem:[%s1481 + $0x70] sm:$0xff]
    %v1497 = vld [vmem:[%s1481 + $0x78] sm:$0xff]
    %v1498 = vpack.c.bf16 %v1483, %v1482
    %v1499 = vpack.c.bf16 %v1485, %v1484
    %v1500 = vpack.c.bf16 %v1487, %v1486
    %v1501 = vpack.c.bf16 %v1489, %v1488
    %v1502 = vpack.c.bf16 %v1491, %v1490
    %v1503 = vpack.c.bf16 %v1493, %v1492
    %v1504 = vpack.c.bf16 %v1495, %v1494
    %v1505 = vpack.c.bf16 %v1497, %v1496
    %v1506 = vld [vmem:[%s3] sm:$0xf]
    %v1507 = vld [vmem:[%s3 + $0x4] sm:$0xf]
    %v1508 = vld [vmem:[%s3 + $0x8] sm:$0xf]
    %v1509 = vld [vmem:[%s3 + $0xc] sm:$0xf]
    %s1510 = sadd.s32 %s1480, 1
    %s1511 = scalar_lea.vmem [#allocation2], %s1510
    %v1512 = vld [vmem:[%s1511] sm:$0xff]
    %v1513 = vld [vmem:[%s1511 + $0x8] sm:$0xff]
    %v1514 = vld [vmem:[%s1511 + $0x10] sm:$0xff]
    %v1515 = vld [vmem:[%s1511 + $0x18] sm:$0xff]
    %v1516 = vld [vmem:[%s1511 + $0x20] sm:$0xff]
    %v1517 = vld [vmem:[%s1511 + $0x28] sm:$0xff]
    %v1518 = vld [vmem:[%s1511 + $0x30] sm:$0xff]
    %v1519 = vld [vmem:[%s1511 + $0x38] sm:$0xff]
    %v1520 = vld [vmem:[%s1511 + $0x40] sm:$0xff]
    %v1521 = vld [vmem:[%s1511 + $0x48] sm:$0xff]
    %v1522 = vld [vmem:[%s1511 + $0x50] sm:$0xff]
    %v1523 = vld [vmem:[%s1511 + $0x58] sm:$0xff]
    %v1524 = vld [vmem:[%s1511 + $0x60] sm:$0xff]
    %v1525 = vld [vmem:[%s1511 + $0x68] sm:$0xff]
    %v1526 = vld [vmem:[%s1511 + $0x70] sm:$0xff]
    %v1527 = vld [vmem:[%s1511 + $0x78] sm:$0xff]
    %v1528 = vpack.c.bf16 %v1513, %v1512
    %v1529 = vpack.c.bf16 %v1515, %v1514
    %v1530 = vpack.c.bf16 %v1517, %v1516
    %v1531 = vpack.c.bf16 %v1519, %v1518
    %v1532 = vpack.c.bf16 %v1521, %v1520
    %v1533 = vpack.c.bf16 %v1523, %v1522
    %v1534 = vpack.c.bf16 %v1525, %v1524
    %v1535 = vpack.c.bf16 %v1527, %v1526
    %s1536 = scalar_lea.vmem %s3, 16
    %v1537 = vld [vmem:[%s1536] sm:$0xf]
    %v1538 = vld [vmem:[%s1536 + $0x4] sm:$0xf]
    %v1539 = vld [vmem:[%s1536 + $0x8] sm:$0xf]
    %v1540 = vld [vmem:[%s1536 + $0xc] sm:$0xf]
    %v1545 = vunpack.c.l.b16 %v1537
    %v1546 = vunpack.c.l.b16 %v1538
    %v1547 = vunpack.c.l.b16 %v1539
    %v1548 = vunpack.c.l.b16 %v1540
    %v1549 = vpack.c.b16 %v1546, %v1545
    %v1550 = vpack.c.b16 %v1548, %v1547
    %v1554 = vsel %vm53, %v1528, 0
    %v1557 = vsel %vm53, %v1529, 0
    %v1560 = vsel %vm53, %v1530, 0
    %v1563 = vsel %vm53, %v1531, 0
    %v1566 = vsel %vm53, %v1532, 0
    %v1569 = vsel %vm53, %v1533, 0
    %v1572 = vsel %vm53, %v1534, 0
    %v1575 = vsel %vm53, %v1535, 0
    %1577 = vmatpush.bf16.msra.mxu0 0
    %1578 = vmatpush.bf16.msra.mxu0 0
    %1579 = vmatpush.bf16.msra.mxu0 0
    %1580 = vmatpush.bf16.msra.mxu0 0
    %1581 = vmatpush.bf16.msra.mxu0 0
    %1582 = vmatpush.bf16.msra.mxu0 0
    %1583 = vmatpush.bf16.msra.mxu0 %v1550
    %1584 = vmatpush.bf16.msra.mxu0 %v1549
    %1585 = vmatmul.bf16.gmra.mxu0 %v1554
    %v1586 = vpop.f32.mrf.mxu0
    %v1587 = vadd.f32 0.0, %v1586
    %v1588 = vpop.f32.mrf.mxu0
    %v1589 = vadd.f32 0.0, %v1588
    %1590 = vmatmul.bf16.gmra.mxu0 %v1557
    %v1591 = vpop.f32.mrf.mxu0
    %v1592 = vadd.f32 0.0, %v1591
    %v1593 = vpop.f32.mrf.mxu0
    %v1594 = vadd.f32 0.0, %v1593
    %1595 = vmatmul.bf16.gmra.mxu0 %v1560
    %v1596 = vpop.f32.mrf.mxu0
    %v1597 = vadd.f32 0.0, %v1596
    %v1598 = vpop.f32.mrf.mxu0
    %v1599 = vadd.f32 0.0, %v1598
    %1600 = vmatmul.bf16.gmra.mxu0 %v1563
    %v1601 = vpop.f32.mrf.mxu0
    %v1602 = vadd.f32 0.0, %v1601
    %v1603 = vpop.f32.mrf.mxu0
    %v1604 = vadd.f32 0.0, %v1603
    %1605 = vmatmul.bf16.gmra.mxu0 %v1566
    %v1606 = vpop.f32.mrf.mxu0
    %v1607 = vadd.f32 0.0, %v1606
    %v1608 = vpop.f32.mrf.mxu0
    %v1609 = vadd.f32 0.0, %v1608
    %1610 = vmatmul.bf16.gmra.mxu0 %v1569
    %v1611 = vpop.f32.mrf.mxu0
    %v1612 = vadd.f32 0.0, %v1611
    %v1613 = vpop.f32.mrf.mxu0
    %v1614 = vadd.f32 0.0, %v1613
    %1615 = vmatmul.bf16.gmra.mxu0 %v1572
    %v1616 = vpop.f32.mrf.mxu0
    %v1617 = vadd.f32 0.0, %v1616
    %v1618 = vpop.f32.mrf.mxu0
    %v1619 = vadd.f32 0.0, %v1618
    %1620 = vmatmul.bf16.gmra.mxu0 %v1575
    %v1621 = vpop.f32.mrf.mxu0
    %v1622 = vadd.f32 0.0, %v1621
    %v1623 = vpop.f32.mrf.mxu0
    %v1624 = vadd.f32 0.0, %v1623
    %1625 = vdwg.mxu0
    %v1630 = vunpack.c.l.b16 %v1506
    %v1631 = vunpack.c.l.b16 %v1507
    %v1632 = vunpack.c.l.b16 %v1508
    %v1633 = vunpack.c.l.b16 %v1509
    %v1634 = vpack.c.b16 %v1631, %v1630
    %v1635 = vpack.c.b16 %v1633, %v1632
    %v1639 = vsel %vm53, %v1498, 0
    %v1642 = vsel %vm53, %v1499, 0
    %v1645 = vsel %vm53, %v1500, 0
    %v1648 = vsel %vm53, %v1501, 0
    %v1651 = vsel %vm53, %v1502, 0
    %v1654 = vsel %vm53, %v1503, 0
    %v1657 = vsel %vm53, %v1504, 0
    %v1660 = vsel %vm53, %v1505, 0
    %1662 = vmatpush.bf16.msra.mxu0 0
    %1663 = vmatpush.bf16.msra.mxu0 0
    %1664 = vmatpush.bf16.msra.mxu0 0
    %1665 = vmatpush.bf16.msra.mxu0 0
    %1666 = vmatpush.bf16.msra.mxu0 0
    %1667 = vmatpush.bf16.msra.mxu0 0
    %1668 = vmatpush.bf16.msra.mxu0 %v1635
    %1669 = vmatpush.bf16.msra.mxu0 %v1634
    %1670 = vmatmul.bf16.gmra.mxu0 %v1639
    %v1671 = vpop.f32.mrf.mxu0
    %v1672 = vadd.f32 %v1587, %v1671
    %v1673 = vpop.f32.mrf.mxu0
    %v1674 = vadd.f32 %v1589, %v1673
    %1675 = vmatmul.bf16.gmra.mxu0 %v1642
    %v1676 = vpop.f32.mrf.mxu0
    %v1677 = vadd.f32 %v1592, %v1676
    %v1678 = vpop.f32.mrf.mxu0
    %v1679 = vadd.f32 %v1594, %v1678
    %1680 = vmatmul.bf16.gmra.mxu0 %v1645
    %v1681 = vpop.f32.mrf.mxu0
    %v1682 = vadd.f32 %v1597, %v1681
    %v1683 = vpop.f32.mrf.mxu0
    %v1684 = vadd.f32 %v1599, %v1683
    %1685 = vmatmul.bf16.gmra.mxu0 %v1648
    %v1686 = vpop.f32.mrf.mxu0
    %v1687 = vadd.f32 %v1602, %v1686
    %v1688 = vpop.f32.mrf.mxu0
    %v1689 = vadd.f32 %v1604, %v1688
    %1690 = vmatmul.bf16.gmra.mxu0 %v1651
    %v1691 = vpop.f32.mrf.mxu0
    %v1692 = vadd.f32 %v1607, %v1691
    %v1693 = vpop.f32.mrf.mxu0
    %v1694 = vadd.f32 %v1609, %v1693
    %1695 = vmatmul.bf16.gmra.mxu0 %v1654
    %v1696 = vpop.f32.mrf.mxu0
    %v1697 = vadd.f32 %v1612, %v1696
    %v1698 = vpop.f32.mrf.mxu0
    %v1699 = vadd.f32 %v1614, %v1698
    %1700 = vmatmul.bf16.gmra.mxu0 %v1657
    %v1701 = vpop.f32.mrf.mxu0
    %v1702 = vadd.f32 %v1617, %v1701
    %v1703 = vpop.f32.mrf.mxu0
    %v1704 = vadd.f32 %v1619, %v1703
    %1705 = vmatmul.bf16.gmra.mxu0 %v1660
    %v1706 = vpop.f32.mrf.mxu0
    %v1707 = vadd.f32 %v1622, %v1706
    %v1708 = vpop.f32.mrf.mxu0
    %v1709 = vadd.f32 %v1624, %v1708
    %1710 = vdwg.mxu0
    %s1711 = sadd.s32 %s1480, 2
    %s1712 = scalar_lea.vmem [#allocation2], %s1711
    %v1713 = vld [vmem:[%s1712] sm:$0xff]
    %v1714 = vld [vmem:[%s1712 + $0x8] sm:$0xff]
    %v1715 = vld [vmem:[%s1712 + $0x10] sm:$0xff]
    %v1716 = vld [vmem:[%s1712 + $0x18] sm:$0xff]
    %v1717 = vld [vmem:[%s1712 + $0x20] sm:$0xff]
    %v1718 = vld [vmem:[%s1712 + $0x28] sm:$0xff]
    %v1719 = vld [vmem:[%s1712 + $0x30] sm:$0xff]
    %v1720 = vld [vmem:[%s1712 + $0x38] sm:$0xff]
    %v1721 = vld [vmem:[%s1712 + $0x40] sm:$0xff]
    %v1722 = vld [vmem:[%s1712 + $0x48] sm:$0xff]
    %v1723 = vld [vmem:[%s1712 + $0x50] sm:$0xff]
    %v1724 = vld [vmem:[%s1712 + $0x58] sm:$0xff]
    %v1725 = vld [vmem:[%s1712 + $0x60] sm:$0xff]
    %v1726 = vld [vmem:[%s1712 + $0x68] sm:$0xff]
    %v1727 = vld [vmem:[%s1712 + $0x70] sm:$0xff]
    %v1728 = vld [vmem:[%s1712 + $0x78] sm:$0xff]
    %v1729 = vpack.c.bf16 %v1714, %v1713
    %v1730 = vpack.c.bf16 %v1716, %v1715
    %v1731 = vpack.c.bf16 %v1718, %v1717
    %v1732 = vpack.c.bf16 %v1720, %v1719
    %v1733 = vpack.c.bf16 %v1722, %v1721
    %v1734 = vpack.c.bf16 %v1724, %v1723
    %v1735 = vpack.c.bf16 %v1726, %v1725
    %v1736 = vpack.c.bf16 %v1728, %v1727
    %s1737 = scalar_lea.vmem %s3, 32
    %v1738 = vld [vmem:[%s1737] sm:$0xf]
    %v1739 = vld [vmem:[%s1737 + $0x4] sm:$0xf]
    %v1740 = vld [vmem:[%s1737 + $0x8] sm:$0xf]
    %v1741 = vld [vmem:[%s1737 + $0xc] sm:$0xf]
    %v1746 = vunpack.c.l.b16 %v1738
    %v1747 = vunpack.c.l.b16 %v1739
    %v1748 = vunpack.c.l.b16 %v1740
    %v1749 = vunpack.c.l.b16 %v1741
    %v1750 = vpack.c.b16 %v1747, %v1746
    %v1751 = vpack.c.b16 %v1749, %v1748
    %v1755 = vsel %vm53, %v1729, 0
    %v1758 = vsel %vm53, %v1730, 0
    %v1761 = vsel %vm53, %v1731, 0
    %v1764 = vsel %vm53, %v1732, 0
    %v1767 = vsel %vm53, %v1733, 0
    %v1770 = vsel %vm53, %v1734, 0
    %v1773 = vsel %vm53, %v1735, 0
    %v1776 = vsel %vm53, %v1736, 0
    %1778 = vmatpush.bf16.msra.mxu0 0
    %1779 = vmatpush.bf16.msra.mxu0 0
    %1780 = vmatpush.bf16.msra.mxu0 0
    %1781 = vmatpush.bf16.msra.mxu0 0
    %1782 = vmatpush.bf16.msra.mxu0 0
    %1783 = vmatpush.bf16.msra.mxu0 0
    %1784 = vmatpush.bf16.msra.mxu0 %v1751
    %1785 = vmatpush.bf16.msra.mxu0 %v1750
    %1786 = vmatmul.bf16.gmra.mxu0 %v1755
    %v1787 = vpop.f32.mrf.mxu0
    %v1788 = vadd.f32 0.0, %v1787
    %v1789 = vpop.f32.mrf.mxu0
    %v1790 = vadd.f32 0.0, %v1789
    %1791 = vmatmul.bf16.gmra.mxu0 %v1758
    %v1792 = vpop.f32.mrf.mxu0
    %v1793 = vadd.f32 0.0, %v1792
    %v1794 = vpop.f32.mrf.mxu0
    %v1795 = vadd.f32 0.0, %v1794
    %1796 = vmatmul.bf16.gmra.mxu0 %v1761
    %v1797 = vpop.f32.mrf.mxu0
    %v1798 = vadd.f32 0.0, %v1797
    %v1799 = vpop.f32.mrf.mxu0
    %v1800 = vadd.f32 0.0, %v1799
    %1801 = vmatmul.bf16.gmra.mxu0 %v1764
    %v1802 = vpop.f32.mrf.mxu0
    %v1803 = vadd.f32 0.0, %v1802
    %v1804 = vpop.f32.mrf.mxu0
    %v1805 = vadd.f32 0.0, %v1804
    %1806 = vmatmul.bf16.gmra.mxu0 %v1767
    %v1807 = vpop.f32.mrf.mxu0
    %v1808 = vadd.f32 0.0, %v1807
    %v1809 = vpop.f32.mrf.mxu0
    %v1810 = vadd.f32 0.0, %v1809
    %1811 = vmatmul.bf16.gmra.mxu0 %v1770
    %v1812 = vpop.f32.mrf.mxu0
    %v1813 = vadd.f32 0.0, %v1812
    %v1814 = vpop.f32.mrf.mxu0
    %v1815 = vadd.f32 0.0, %v1814
    %1816 = vmatmul.bf16.gmra.mxu0 %v1773
    %v1817 = vpop.f32.mrf.mxu0
    %v1818 = vadd.f32 0.0, %v1817
    %v1819 = vpop.f32.mrf.mxu0
    %v1820 = vadd.f32 0.0, %v1819
    %1821 = vmatmul.bf16.gmra.mxu0 %v1776
    %v1822 = vpop.f32.mrf.mxu0
    %v1823 = vadd.f32 0.0, %v1822
    %v1824 = vpop.f32.mrf.mxu0
    %v1825 = vadd.f32 0.0, %v1824
    %1826 = vdwg.mxu0
    %v1827 = vadd.f32 %v1672, %v1788
    %v1828 = vadd.f32 %v1674, %v1790
    %v1829 = vadd.f32 %v1677, %v1793
    %v1830 = vadd.f32 %v1679, %v1795
    %v1831 = vadd.f32 %v1682, %v1798
    %v1832 = vadd.f32 %v1684, %v1800
    %v1833 = vadd.f32 %v1687, %v1803
    %v1834 = vadd.f32 %v1689, %v1805
    %v1835 = vadd.f32 %v1692, %v1808
    %v1836 = vadd.f32 %v1694, %v1810
    %v1837 = vadd.f32 %v1697, %v1813
    %v1838 = vadd.f32 %v1699, %v1815
    %v1839 = vadd.f32 %v1702, %v1818
    %v1840 = vadd.f32 %v1704, %v1820
    %v1841 = vadd.f32 %v1707, %v1823
    %v1842 = vadd.f32 %v1709, %v1825
    %s1843 = sadd.s32 %s1480, 32
    %s1844 = scalar_lea.vmem [#allocation2], %s1843
    %v1845 = vld [vmem:[%s1844] sm:$0xff]
    %v1846 = vld [vmem:[%s1844 + $0x8] sm:$0xff]
    %v1847 = vld [vmem:[%s1844 + $0x10] sm:$0xff]
    %v1848 = vld [vmem:[%s1844 + $0x18] sm:$0xff]
    %v1849 = vld [vmem:[%s1844 + $0x20] sm:$0xff]
    %v1850 = vld [vmem:[%s1844 + $0x28] sm:$0xff]
    %v1851 = vld [vmem:[%s1844 + $0x30] sm:$0xff]
    %v1852 = vld [vmem:[%s1844 + $0x38] sm:$0xff]
    %v1853 = vld [vmem:[%s1844 + $0x40] sm:$0xff]
    %v1854 = vld [vmem:[%s1844 + $0x48] sm:$0xff]
    %v1855 = vld [vmem:[%s1844 + $0x50] sm:$0xff]
    %v1856 = vld [vmem:[%s1844 + $0x58] sm:$0xff]
    %v1857 = vld [vmem:[%s1844 + $0x60] sm:$0xff]
    %v1858 = vld [vmem:[%s1844 + $0x68] sm:$0xff]
    %v1859 = vld [vmem:[%s1844 + $0x70] sm:$0xff]
    %v1860 = vld [vmem:[%s1844 + $0x78] sm:$0xff]
    %v1861 = vpack.c.bf16 %v1846, %v1845
    %v1862 = vpack.c.bf16 %v1848, %v1847
    %v1863 = vpack.c.bf16 %v1850, %v1849
    %v1864 = vpack.c.bf16 %v1852, %v1851
    %v1865 = vpack.c.bf16 %v1854, %v1853
    %v1866 = vpack.c.bf16 %v1856, %v1855
    %v1867 = vpack.c.bf16 %v1858, %v1857
    %v1868 = vpack.c.bf16 %v1860, %v1859
    %s1869 = scalar_lea.vmem %s3, 48
    %v1870 = vld [vmem:[%s1869] sm:$0xf]
    %v1871 = vld [vmem:[%s1869 + $0x4] sm:$0xf]
    %v1872 = vld [vmem:[%s1869 + $0x8] sm:$0xf]
    %v1873 = vld [vmem:[%s1869 + $0xc] sm:$0xf]
    %v1878 = vunpack.c.l.b16 %v1870
    %v1879 = vunpack.c.l.b16 %v1871
    %v1880 = vunpack.c.l.b16 %v1872
    %v1881 = vunpack.c.l.b16 %v1873
    %v1882 = vpack.c.b16 %v1879, %v1878
    %v1883 = vpack.c.b16 %v1881, %v1880
    %v1887 = vsel %vm53, %v1861, 0
    %v1890 = vsel %vm53, %v1862, 0
    %v1893 = vsel %vm53, %v1863, 0
    %v1896 = vsel %vm53, %v1864, 0
    %v1899 = vsel %vm53, %v1865, 0
    %v1902 = vsel %vm53, %v1866, 0
    %v1905 = vsel %vm53, %v1867, 0
    %v1908 = vsel %vm53, %v1868, 0
    %1910 = vmatpush.bf16.msra.mxu0 0
    %1911 = vmatpush.bf16.msra.mxu0 0
    %1912 = vmatpush.bf16.msra.mxu0 0
    %1913 = vmatpush.bf16.msra.mxu0 0
    %1914 = vmatpush.bf16.msra.mxu0 0
    %1915 = vmatpush.bf16.msra.mxu0 0
    %1916 = vmatpush.bf16.msra.mxu0 %v1883
    %1917 = vmatpush.bf16.msra.mxu0 %v1882
    %1918 = vmatmul.bf16.gmra.mxu0 %v1887
    %v1919 = vpop.f32.mrf.mxu0
    %v1920 = vadd.f32 0.0, %v1919
    %v1921 = vpop.f32.mrf.mxu0
    %v1922 = vadd.f32 0.0, %v1921
    %1923 = vmatmul.bf16.gmra.mxu0 %v1890
    %v1924 = vpop.f32.mrf.mxu0
    %v1925 = vadd.f32 0.0, %v1924
    %v1926 = vpop.f32.mrf.mxu0
    %v1927 = vadd.f32 0.0, %v1926
    %1928 = vmatmul.bf16.gmra.mxu0 %v1893
    %v1929 = vpop.f32.mrf.mxu0
    %v1930 = vadd.f32 0.0, %v1929
    %v1931 = vpop.f32.mrf.mxu0
    %v1932 = vadd.f32 0.0, %v1931
    %1933 = vmatmul.bf16.gmra.mxu0 %v1896
    %v1934 = vpop.f32.mrf.mxu0
    %v1935 = vadd.f32 0.0, %v1934
    %v1936 = vpop.f32.mrf.mxu0
    %v1937 = vadd.f32 0.0, %v1936
    %1938 = vmatmul.bf16.gmra.mxu0 %v1899
    %v1939 = vpop.f32.mrf.mxu0
    %v1940 = vadd.f32 0.0, %v1939
    %v1941 = vpop.f32.mrf.mxu0
    %v1942 = vadd.f32 0.0, %v1941
    %1943 = vmatmul.bf16.gmra.mxu0 %v1902
    %v1944 = vpop.f32.mrf.mxu0
    %v1945 = vadd.f32 0.0, %v1944
    %v1946 = vpop.f32.mrf.mxu0
    %v1947 = vadd.f32 0.0, %v1946
    %1948 = vmatmul.bf16.gmra.mxu0 %v1905
    %v1949 = vpop.f32.mrf.mxu0
    %v1950 = vadd.f32 0.0, %v1949
    %v1951 = vpop.f32.mrf.mxu0
    %v1952 = vadd.f32 0.0, %v1951
    %1953 = vmatmul.bf16.gmra.mxu0 %v1908
    %v1954 = vpop.f32.mrf.mxu0
    %v1955 = vadd.f32 0.0, %v1954
    %v1956 = vpop.f32.mrf.mxu0
    %v1957 = vadd.f32 0.0, %v1956
    %1958 = vdwg.mxu0
    %v1959 = vadd.f32 %v1827, %v1920
    %v1960 = vadd.f32 %v1828, %v1922
    %v1961 = vadd.f32 %v1829, %v1925
    %v1962 = vadd.f32 %v1830, %v1927
    %v1963 = vadd.f32 %v1831, %v1930
    %v1964 = vadd.f32 %v1832, %v1932
    %v1965 = vadd.f32 %v1833, %v1935
    %v1966 = vadd.f32 %v1834, %v1937
    %v1967 = vadd.f32 %v1835, %v1940
    %v1968 = vadd.f32 %v1836, %v1942
    %v1969 = vadd.f32 %v1837, %v1945
    %v1970 = vadd.f32 %v1838, %v1947
    %v1971 = vadd.f32 %v1839, %v1950
    %v1972 = vadd.f32 %v1840, %v1952
    %v1973 = vadd.f32 %v1841, %v1955
    %v1974 = vadd.f32 %v1842, %v1957
    %s1975 = sadd.s32 %s1480, 33
    %s1976 = scalar_lea.vmem [#allocation2], %s1975
    %v1977 = vld [vmem:[%s1976] sm:$0xff]
    %v1978 = vld [vmem:[%s1976 + $0x8] sm:$0xff]
    %v1979 = vld [vmem:[%s1976 + $0x10] sm:$0xff]
    %v1980 = vld [vmem:[%s1976 + $0x18] sm:$0xff]
    %v1981 = vld [vmem:[%s1976 + $0x20] sm:$0xff]
    %v1982 = vld [vmem:[%s1976 + $0x28] sm:$0xff]
    %v1983 = vld [vmem:[%s1976 + $0x30] sm:$0xff]
    %v1984 = vld [vmem:[%s1976 + $0x38] sm:$0xff]
    %v1985 = vld [vmem:[%s1976 + $0x40] sm:$0xff]
    %v1986 = vld [vmem:[%s1976 + $0x48] sm:$0xff]
    %v1987 = vld [vmem:[%s1976 + $0x50] sm:$0xff]
    %v1988 = vld [vmem:[%s1976 + $0x58] sm:$0xff]
    %v1989 = vld [vmem:[%s1976 + $0x60] sm:$0xff]
    %v1990 = vld [vmem:[%s1976 + $0x68] sm:$0xff]
    %v1991 = vld [vmem:[%s1976 + $0x70] sm:$0xff]
    %v1992 = vld [vmem:[%s1976 + $0x78] sm:$0xff]
    %v1993 = vpack.c.bf16 %v1978, %v1977
    %v1994 = vpack.c.bf16 %v1980, %v1979
    %v1995 = vpack.c.bf16 %v1982, %v1981
    %v1996 = vpack.c.bf16 %v1984, %v1983
    %v1997 = vpack.c.bf16 %v1986, %v1985
    %v1998 = vpack.c.bf16 %v1988, %v1987
    %v1999 = vpack.c.bf16 %v1990, %v1989
    %v2000 = vpack.c.bf16 %v1992, %v1991
    %s2001 = scalar_lea.vmem %s3, 64
    %v2002 = vld [vmem:[%s2001] sm:$0xf]
    %v2003 = vld [vmem:[%s2001 + $0x4] sm:$0xf]
    %v2004 = vld [vmem:[%s2001 + $0x8] sm:$0xf]
    %v2005 = vld [vmem:[%s2001 + $0xc] sm:$0xf]
    %v2010 = vunpack.c.l.b16 %v2002
    %v2011 = vunpack.c.l.b16 %v2003
    %v2012 = vunpack.c.l.b16 %v2004
    %v2013 = vunpack.c.l.b16 %v2005
    %v2014 = vpack.c.b16 %v2011, %v2010
    %v2015 = vpack.c.b16 %v2013, %v2012
    %v2019 = vsel %vm53, %v1993, 0
    %v2022 = vsel %vm53, %v1994, 0
    %v2025 = vsel %vm53, %v1995, 0
    %v2028 = vsel %vm53, %v1996, 0
    %v2031 = vsel %vm53, %v1997, 0
    %v2034 = vsel %vm53, %v1998, 0
    %v2037 = vsel %vm53, %v1999, 0
    %v2040 = vsel %vm53, %v2000, 0
    %2042 = vmatpush.bf16.msra.mxu0 0
    %2043 = vmatpush.bf16.msra.mxu0 0
    %2044 = vmatpush.bf16.msra.mxu0 0
    %2045 = vmatpush.bf16.msra.mxu0 0
    %2046 = vmatpush.bf16.msra.mxu0 0
    %2047 = vmatpush.bf16.msra.mxu0 0
    %2048 = vmatpush.bf16.msra.mxu0 %v2015
    %2049 = vmatpush.bf16.msra.mxu0 %v2014
    %2050 = vmatmul.bf16.gmra.mxu0 %v2019
    %v2051 = vpop.f32.mrf.mxu0
    %v2052 = vadd.f32 0.0, %v2051
    %v2053 = vpop.f32.mrf.mxu0
    %v2054 = vadd.f32 0.0, %v2053
    %2055 = vmatmul.bf16.gmra.mxu0 %v2022
    %v2056 = vpop.f32.mrf.mxu0
    %v2057 = vadd.f32 0.0, %v2056
    %v2058 = vpop.f32.mrf.mxu0
    %v2059 = vadd.f32 0.0, %v2058
    %2060 = vmatmul.bf16.gmra.mxu0 %v2025
    %v2061 = vpop.f32.mrf.mxu0
    %v2062 = vadd.f32 0.0, %v2061
    %v2063 = vpop.f32.mrf.mxu0
    %v2064 = vadd.f32 0.0, %v2063
    %2065 = vmatmul.bf16.gmra.mxu0 %v2028
    %v2066 = vpop.f32.mrf.mxu0
    %v2067 = vadd.f32 0.0, %v2066
    %v2068 = vpop.f32.mrf.mxu0
    %v2069 = vadd.f32 0.0, %v2068
    %2070 = vmatmul.bf16.gmra.mxu0 %v2031
    %v2071 = vpop.f32.mrf.mxu0
    %v2072 = vadd.f32 0.0, %v2071
    %v2073 = vpop.f32.mrf.mxu0
    %v2074 = vadd.f32 0.0, %v2073
    %2075 = vmatmul.bf16.gmra.mxu0 %v2034
    %v2076 = vpop.f32.mrf.mxu0
    %v2077 = vadd.f32 0.0, %v2076
    %v2078 = vpop.f32.mrf.mxu0
    %v2079 = vadd.f32 0.0, %v2078
    %2080 = vmatmul.bf16.gmra.mxu0 %v2037
    %v2081 = vpop.f32.mrf.mxu0
    %v2082 = vadd.f32 0.0, %v2081
    %v2083 = vpop.f32.mrf.mxu0
    %v2084 = vadd.f32 0.0, %v2083
    %2085 = vmatmul.bf16.gmra.mxu0 %v2040
    %v2086 = vpop.f32.mrf.mxu0
    %v2087 = vadd.f32 0.0, %v2086
    %v2088 = vpop.f32.mrf.mxu0
    %v2089 = vadd.f32 0.0, %v2088
    %2090 = vdwg.mxu0
    %v2091 = vadd.f32 %v1959, %v2052
    %v2092 = vadd.f32 %v1960, %v2054
    %v2093 = vadd.f32 %v1961, %v2057
    %v2094 = vadd.f32 %v1962, %v2059
    %v2095 = vadd.f32 %v1963, %v2062
    %v2096 = vadd.f32 %v1964, %v2064
    %v2097 = vadd.f32 %v1965, %v2067
    %v2098 = vadd.f32 %v1966, %v2069
    %v2099 = vadd.f32 %v1967, %v2072
    %v2100 = vadd.f32 %v1968, %v2074
    %v2101 = vadd.f32 %v1969, %v2077
    %v2102 = vadd.f32 %v1970, %v2079
    %v2103 = vadd.f32 %v1971, %v2082
    %v2104 = vadd.f32 %v1972, %v2084
    %v2105 = vadd.f32 %v1973, %v2087
    %v2106 = vadd.f32 %v1974, %v2089
    %s2107 = sadd.s32 %s1480, 34
    %s2108 = scalar_lea.vmem [#allocation2], %s2107
    %v2109 = vld [vmem:[%s2108] sm:$0xff]
    %v2110 = vld [vmem:[%s2108 + $0x8] sm:$0xff]
    %v2111 = vld [vmem:[%s2108 + $0x10] sm:$0xff]
    %v2112 = vld [vmem:[%s2108 + $0x18] sm:$0xff]
    %v2113 = vld [vmem:[%s2108 + $0x20] sm:$0xff]
    %v2114 = vld [vmem:[%s2108 + $0x28] sm:$0xff]
    %v2115 = vld [vmem:[%s2108 + $0x30] sm:$0xff]
    %v2116 = vld [vmem:[%s2108 + $0x38] sm:$0xff]
    %v2117 = vld [vmem:[%s2108 + $0x40] sm:$0xff]
    %v2118 = vld [vmem:[%s2108 + $0x48] sm:$0xff]
    %v2119 = vld [vmem:[%s2108 + $0x50] sm:$0xff]
    %v2120 = vld [vmem:[%s2108 + $0x58] sm:$0xff]
    %v2121 = vld [vmem:[%s2108 + $0x60] sm:$0xff]
    %v2122 = vld [vmem:[%s2108 + $0x68] sm:$0xff]
    %v2123 = vld [vmem:[%s2108 + $0x70] sm:$0xff]
    %v2124 = vld [vmem:[%s2108 + $0x78] sm:$0xff]
    %v2125 = vpack.c.bf16 %v2110, %v2109
    %v2126 = vpack.c.bf16 %v2112, %v2111
    %v2127 = vpack.c.bf16 %v2114, %v2113
    %v2128 = vpack.c.bf16 %v2116, %v2115
    %v2129 = vpack.c.bf16 %v2118, %v2117
    %v2130 = vpack.c.bf16 %v2120, %v2119
    %v2131 = vpack.c.bf16 %v2122, %v2121
    %v2132 = vpack.c.bf16 %v2124, %v2123
    %s2133 = scalar_lea.vmem %s3, 80
    %v2134 = vld [vmem:[%s2133] sm:$0xf]
    %v2135 = vld [vmem:[%s2133 + $0x4] sm:$0xf]
    %v2136 = vld [vmem:[%s2133 + $0x8] sm:$0xf]
    %v2137 = vld [vmem:[%s2133 + $0xc] sm:$0xf]
    %v2142 = vunpack.c.l.b16 %v2134
    %v2143 = vunpack.c.l.b16 %v2135
    %v2144 = vunpack.c.l.b16 %v2136
    %v2145 = vunpack.c.l.b16 %v2137
    %v2146 = vpack.c.b16 %v2143, %v2142
    %v2147 = vpack.c.b16 %v2145, %v2144
    %v2151 = vsel %vm53, %v2125, 0
    %v2154 = vsel %vm53, %v2126, 0
    %v2157 = vsel %vm53, %v2127, 0
    %v2160 = vsel %vm53, %v2128, 0
    %v2163 = vsel %vm53, %v2129, 0
    %v2166 = vsel %vm53, %v2130, 0
    %v2169 = vsel %vm53, %v2131, 0
    %v2172 = vsel %vm53, %v2132, 0
    %2174 = vmatpush.bf16.msra.mxu0 0
    %2175 = vmatpush.bf16.msra.mxu0 0
    %2176 = vmatpush.bf16.msra.mxu0 0
    %2177 = vmatpush.bf16.msra.mxu0 0
    %2178 = vmatpush.bf16.msra.mxu0 0
    %2179 = vmatpush.bf16.msra.mxu0 0
    %2180 = vmatpush.bf16.msra.mxu0 %v2147
    %2181 = vmatpush.bf16.msra.mxu0 %v2146
    %2182 = vmatmul.bf16.gmra.mxu0 %v2151
    %v2183 = vpop.f32.mrf.mxu0
    %v2184 = vadd.f32 0.0, %v2183
    %v2185 = vpop.f32.mrf.mxu0
    %v2186 = vadd.f32 0.0, %v2185
    %2187 = vmatmul.bf16.gmra.mxu0 %v2154
    %v2188 = vpop.f32.mrf.mxu0
    %v2189 = vadd.f32 0.0, %v2188
    %v2190 = vpop.f32.mrf.mxu0
    %v2191 = vadd.f32 0.0, %v2190
    %2192 = vmatmul.bf16.gmra.mxu0 %v2157
    %v2193 = vpop.f32.mrf.mxu0
    %v2194 = vadd.f32 0.0, %v2193
    %v2195 = vpop.f32.mrf.mxu0
    %v2196 = vadd.f32 0.0, %v2195
    %2197 = vmatmul.bf16.gmra.mxu0 %v2160
    %v2198 = vpop.f32.mrf.mxu0
    %v2199 = vadd.f32 0.0, %v2198
    %v2200 = vpop.f32.mrf.mxu0
    %v2201 = vadd.f32 0.0, %v2200
    %2202 = vmatmul.bf16.gmra.mxu0 %v2163
    %v2203 = vpop.f32.mrf.mxu0
    %v2204 = vadd.f32 0.0, %v2203
    %v2205 = vpop.f32.mrf.mxu0
    %v2206 = vadd.f32 0.0, %v2205
    %2207 = vmatmul.bf16.gmra.mxu0 %v2166
    %v2208 = vpop.f32.mrf.mxu0
    %v2209 = vadd.f32 0.0, %v2208
    %v2210 = vpop.f32.mrf.mxu0
    %v2211 = vadd.f32 0.0, %v2210
    %2212 = vmatmul.bf16.gmra.mxu0 %v2169
    %v2213 = vpop.f32.mrf.mxu0
    %v2214 = vadd.f32 0.0, %v2213
    %v2215 = vpop.f32.mrf.mxu0
    %v2216 = vadd.f32 0.0, %v2215
    %2217 = vmatmul.bf16.gmra.mxu0 %v2172
    %v2218 = vpop.f32.mrf.mxu0
    %v2219 = vadd.f32 0.0, %v2218
    %v2220 = vpop.f32.mrf.mxu0
    %v2221 = vadd.f32 0.0, %v2220
    %2222 = vdwg.mxu0
    %v2223 = vadd.f32 %v2091, %v2184
    %v2224 = vadd.f32 %v2092, %v2186
    %v2225 = vadd.f32 %v2093, %v2189
    %v2226 = vadd.f32 %v2094, %v2191
    %v2227 = vadd.f32 %v2095, %v2194
    %v2228 = vadd.f32 %v2096, %v2196
    %v2229 = vadd.f32 %v2097, %v2199
    %v2230 = vadd.f32 %v2098, %v2201
    %v2231 = vadd.f32 %v2099, %v2204
    %v2232 = vadd.f32 %v2100, %v2206
    %v2233 = vadd.f32 %v2101, %v2209
    %v2234 = vadd.f32 %v2102, %v2211
    %v2235 = vadd.f32 %v2103, %v2214
    %v2236 = vadd.f32 %v2104, %v2216
    %v2237 = vadd.f32 %v2105, %v2219
    %v2238 = vadd.f32 %v2106, %v2221
    %s2239 = sadd.s32 %s1480, 64
    %s2240 = scalar_lea.vmem [#allocation2], %s2239
    %v2241 = vld [vmem:[%s2240] sm:$0xff]
    %v2242 = vld [vmem:[%s2240 + $0x8] sm:$0xff]
    %v2243 = vld [vmem:[%s2240 + $0x10] sm:$0xff]
    %v2244 = vld [vmem:[%s2240 + $0x18] sm:$0xff]
    %v2245 = vld [vmem:[%s2240 + $0x20] sm:$0xff]
    %v2246 = vld [vmem:[%s2240 + $0x28] sm:$0xff]
    %v2247 = vld [vmem:[%s2240 + $0x30] sm:$0xff]
    %v2248 = vld [vmem:[%s2240 + $0x38] sm:$0xff]
    %v2249 = vld [vmem:[%s2240 + $0x40] sm:$0xff]
    %v2250 = vld [vmem:[%s2240 + $0x48] sm:$0xff]
    %v2251 = vld [vmem:[%s2240 + $0x50] sm:$0xff]
    %v2252 = vld [vmem:[%s2240 + $0x58] sm:$0xff]
    %v2253 = vld [vmem:[%s2240 + $0x60] sm:$0xff]
    %v2254 = vld [vmem:[%s2240 + $0x68] sm:$0xff]
    %v2255 = vld [vmem:[%s2240 + $0x70] sm:$0xff]
    %v2256 = vld [vmem:[%s2240 + $0x78] sm:$0xff]
    %v2257 = vpack.c.bf16 %v2242, %v2241
    %v2258 = vpack.c.bf16 %v2244, %v2243
    %v2259 = vpack.c.bf16 %v2246, %v2245
    %v2260 = vpack.c.bf16 %v2248, %v2247
    %v2261 = vpack.c.bf16 %v2250, %v2249
    %v2262 = vpack.c.bf16 %v2252, %v2251
    %v2263 = vpack.c.bf16 %v2254, %v2253
    %v2264 = vpack.c.bf16 %v2256, %v2255
    %s2265 = scalar_lea.vmem %s3, 96
    %v2266 = vld [vmem:[%s2265] sm:$0xf]
    %v2267 = vld [vmem:[%s2265 + $0x4] sm:$0xf]
    %v2268 = vld [vmem:[%s2265 + $0x8] sm:$0xf]
    %v2269 = vld [vmem:[%s2265 + $0xc] sm:$0xf]
    %v2274 = vunpack.c.l.b16 %v2266
    %v2275 = vunpack.c.l.b16 %v2267
    %v2276 = vunpack.c.l.b16 %v2268
    %v2277 = vunpack.c.l.b16 %v2269
    %v2278 = vpack.c.b16 %v2275, %v2274
    %v2279 = vpack.c.b16 %v2277, %v2276
    %v2283 = vsel %vm53, %v2257, 0
    %v2286 = vsel %vm53, %v2258, 0
    %v2289 = vsel %vm53, %v2259, 0
    %v2292 = vsel %vm53, %v2260, 0
    %v2295 = vsel %vm53, %v2261, 0
    %v2298 = vsel %vm53, %v2262, 0
    %v2301 = vsel %vm53, %v2263, 0
    %v2304 = vsel %vm53, %v2264, 0
    %2306 = vmatpush.bf16.msra.mxu0 0
    %2307 = vmatpush.bf16.msra.mxu0 0
    %2308 = vmatpush.bf16.msra.mxu0 0
    %2309 = vmatpush.bf16.msra.mxu0 0
    %2310 = vmatpush.bf16.msra.mxu0 0
    %2311 = vmatpush.bf16.msra.mxu0 0
    %2312 = vmatpush.bf16.msra.mxu0 %v2279
    %2313 = vmatpush.bf16.msra.mxu0 %v2278
    %2314 = vmatmul.bf16.gmra.mxu0 %v2283
    %v2315 = vpop.f32.mrf.mxu0
    %v2316 = vadd.f32 0.0, %v2315
    %v2317 = vpop.f32.mrf.mxu0
    %v2318 = vadd.f32 0.0, %v2317
    %2319 = vmatmul.bf16.gmra.mxu0 %v2286
    %v2320 = vpop.f32.mrf.mxu0
    %v2321 = vadd.f32 0.0, %v2320
    %v2322 = vpop.f32.mrf.mxu0
    %v2323 = vadd.f32 0.0, %v2322
    %2324 = vmatmul.bf16.gmra.mxu0 %v2289
    %v2325 = vpop.f32.mrf.mxu0
    %v2326 = vadd.f32 0.0, %v2325
    %v2327 = vpop.f32.mrf.mxu0
    %v2328 = vadd.f32 0.0, %v2327
    %2329 = vmatmul.bf16.gmra.mxu0 %v2292
    %v2330 = vpop.f32.mrf.mxu0
    %v2331 = vadd.f32 0.0, %v2330
    %v2332 = vpop.f32.mrf.mxu0
    %v2333 = vadd.f32 0.0, %v2332
    %2334 = vmatmul.bf16.gmra.mxu0 %v2295
    %v2335 = vpop.f32.mrf.mxu0
    %v2336 = vadd.f32 0.0, %v2335
    %v2337 = vpop.f32.mrf.mxu0
    %v2338 = vadd.f32 0.0, %v2337
    %2339 = vmatmul.bf16.gmra.mxu0 %v2298
    %v2340 = vpop.f32.mrf.mxu0
    %v2341 = vadd.f32 0.0, %v2340
    %v2342 = vpop.f32.mrf.mxu0
    %v2343 = vadd.f32 0.0, %v2342
    %2344 = vmatmul.bf16.gmra.mxu0 %v2301
    %v2345 = vpop.f32.mrf.mxu0
    %v2346 = vadd.f32 0.0, %v2345
    %v2347 = vpop.f32.mrf.mxu0
    %v2348 = vadd.f32 0.0, %v2347
    %2349 = vmatmul.bf16.gmra.mxu0 %v2304
    %v2350 = vpop.f32.mrf.mxu0
    %v2351 = vadd.f32 0.0, %v2350
    %v2352 = vpop.f32.mrf.mxu0
    %v2353 = vadd.f32 0.0, %v2352
    %2354 = vdwg.mxu0
    %v2355 = vadd.f32 %v2223, %v2316
    %v2356 = vadd.f32 %v2224, %v2318
    %v2357 = vadd.f32 %v2225, %v2321
    %v2358 = vadd.f32 %v2226, %v2323
    %v2359 = vadd.f32 %v2227, %v2326
    %v2360 = vadd.f32 %v2228, %v2328
    %v2361 = vadd.f32 %v2229, %v2331
    %v2362 = vadd.f32 %v2230, %v2333
    %v2363 = vadd.f32 %v2231, %v2336
    %v2364 = vadd.f32 %v2232, %v2338
    %v2365 = vadd.f32 %v2233, %v2341
    %v2366 = vadd.f32 %v2234, %v2343
    %v2367 = vadd.f32 %v2235, %v2346
    %v2368 = vadd.f32 %v2236, %v2348
    %v2369 = vadd.f32 %v2237, %v2351
    %v2370 = vadd.f32 %v2238, %v2353
    %s2371 = sadd.s32 %s1480, 65
    %s2372 = scalar_lea.vmem [#allocation2], %s2371
    %v2373 = vld [vmem:[%s2372] sm:$0xff]
    %v2374 = vld [vmem:[%s2372 + $0x8] sm:$0xff]
    %v2375 = vld [vmem:[%s2372 + $0x10] sm:$0xff]
    %v2376 = vld [vmem:[%s2372 + $0x18] sm:$0xff]
    %v2377 = vld [vmem:[%s2372 + $0x20] sm:$0xff]
    %v2378 = vld [vmem:[%s2372 + $0x28] sm:$0xff]
    %v2379 = vld [vmem:[%s2372 + $0x30] sm:$0xff]
    %v2380 = vld [vmem:[%s2372 + $0x38] sm:$0xff]
    %v2381 = vld [vmem:[%s2372 + $0x40] sm:$0xff]
    %v2382 = vld [vmem:[%s2372 + $0x48] sm:$0xff]
    %v2383 = vld [vmem:[%s2372 + $0x50] sm:$0xff]
    %v2384 = vld [vmem:[%s2372 + $0x58] sm:$0xff]
    %v2385 = vld [vmem:[%s2372 + $0x60] sm:$0xff]
    %v2386 = vld [vmem:[%s2372 + $0x68] sm:$0xff]
    %v2387 = vld [vmem:[%s2372 + $0x70] sm:$0xff]
    %v2388 = vld [vmem:[%s2372 + $0x78] sm:$0xff]
    %v2389 = vpack.c.bf16 %v2374, %v2373
    %v2390 = vpack.c.bf16 %v2376, %v2375
    %v2391 = vpack.c.bf16 %v2378, %v2377
    %v2392 = vpack.c.bf16 %v2380, %v2379
    %v2393 = vpack.c.bf16 %v2382, %v2381
    %v2394 = vpack.c.bf16 %v2384, %v2383
    %v2395 = vpack.c.bf16 %v2386, %v2385
    %v2396 = vpack.c.bf16 %v2388, %v2387
    %s2397 = scalar_lea.vmem %s3, 112
    %v2398 = vld [vmem:[%s2397] sm:$0xf]
    %v2399 = vld [vmem:[%s2397 + $0x4] sm:$0xf]
    %v2400 = vld [vmem:[%s2397 + $0x8] sm:$0xf]
    %v2401 = vld [vmem:[%s2397 + $0xc] sm:$0xf]
    %v2406 = vunpack.c.l.b16 %v2398
    %v2407 = vunpack.c.l.b16 %v2399
    %v2408 = vunpack.c.l.b16 %v2400
    %v2409 = vunpack.c.l.b16 %v2401
    %v2410 = vpack.c.b16 %v2407, %v2406
    %v2411 = vpack.c.b16 %v2409, %v2408
    %v2415 = vsel %vm53, %v2389, 0
    %v2418 = vsel %vm53, %v2390, 0
    %v2421 = vsel %vm53, %v2391, 0
    %v2424 = vsel %vm53, %v2392, 0
    %v2427 = vsel %vm53, %v2393, 0
    %v2430 = vsel %vm53, %v2394, 0
    %v2433 = vsel %vm53, %v2395, 0
    %v2436 = vsel %vm53, %v2396, 0
    %2438 = vmatpush.bf16.msra.mxu0 0
    %2439 = vmatpush.bf16.msra.mxu0 0
    %2440 = vmatpush.bf16.msra.mxu0 0
    %2441 = vmatpush.bf16.msra.mxu0 0
    %2442 = vmatpush.bf16.msra.mxu0 0
    %2443 = vmatpush.bf16.msra.mxu0 0
    %2444 = vmatpush.bf16.msra.mxu0 %v2411
    %2445 = vmatpush.bf16.msra.mxu0 %v2410
    %2446 = vmatmul.bf16.gmra.mxu0 %v2415
    %v2447 = vpop.f32.mrf.mxu0
    %v2448 = vadd.f32 0.0, %v2447
    %v2449 = vpop.f32.mrf.mxu0
    %v2450 = vadd.f32 0.0, %v2449
    %2451 = vmatmul.bf16.gmra.mxu0 %v2418
    %v2452 = vpop.f32.mrf.mxu0
    %v2453 = vadd.f32 0.0, %v2452
    %v2454 = vpop.f32.mrf.mxu0
    %v2455 = vadd.f32 0.0, %v2454
    %2456 = vmatmul.bf16.gmra.mxu0 %v2421
    %v2457 = vpop.f32.mrf.mxu0
    %v2458 = vadd.f32 0.0, %v2457
    %v2459 = vpop.f32.mrf.mxu0
    %v2460 = vadd.f32 0.0, %v2459
    %2461 = vmatmul.bf16.gmra.mxu0 %v2424
    %v2462 = vpop.f32.mrf.mxu0
    %v2463 = vadd.f32 0.0, %v2462
    %v2464 = vpop.f32.mrf.mxu0
    %v2465 = vadd.f32 0.0, %v2464
    %2466 = vmatmul.bf16.gmra.mxu0 %v2427
    %v2467 = vpop.f32.mrf.mxu0
    %v2468 = vadd.f32 0.0, %v2467
    %v2469 = vpop.f32.mrf.mxu0
    %v2470 = vadd.f32 0.0, %v2469
    %2471 = vmatmul.bf16.gmra.mxu0 %v2430
    %v2472 = vpop.f32.mrf.mxu0
    %v2473 = vadd.f32 0.0, %v2472
    %v2474 = vpop.f32.mrf.mxu0
    %v2475 = vadd.f32 0.0, %v2474
    %2476 = vmatmul.bf16.gmra.mxu0 %v2433
    %v2477 = vpop.f32.mrf.mxu0
    %v2478 = vadd.f32 0.0, %v2477
    %v2479 = vpop.f32.mrf.mxu0
    %v2480 = vadd.f32 0.0, %v2479
    %2481 = vmatmul.bf16.gmra.mxu0 %v2436
    %v2482 = vpop.f32.mrf.mxu0
    %v2483 = vadd.f32 0.0, %v2482
    %v2484 = vpop.f32.mrf.mxu0
    %v2485 = vadd.f32 0.0, %v2484
    %2486 = vdwg.mxu0
    %v2487 = vadd.f32 %v2355, %v2448
    %v2488 = vadd.f32 %v2356, %v2450
    %v2489 = vadd.f32 %v2357, %v2453
    %v2490 = vadd.f32 %v2358, %v2455
    %v2491 = vadd.f32 %v2359, %v2458
    %v2492 = vadd.f32 %v2360, %v2460
    %v2493 = vadd.f32 %v2361, %v2463
    %v2494 = vadd.f32 %v2362, %v2465
    %v2495 = vadd.f32 %v2363, %v2468
    %v2496 = vadd.f32 %v2364, %v2470
    %v2497 = vadd.f32 %v2365, %v2473
    %v2498 = vadd.f32 %v2366, %v2475
    %v2499 = vadd.f32 %v2367, %v2478
    %v2500 = vadd.f32 %v2368, %v2480
    %v2501 = vadd.f32 %v2369, %v2483
    %v2502 = vadd.f32 %v2370, %v2485
    %s2503 = sadd.s32 %s1480, 66
    %s2504 = scalar_lea.vmem [#allocation2], %s2503
    %v2505 = vld [vmem:[%s2504] sm:$0xff]
    %v2506 = vld [vmem:[%s2504 + $0x8] sm:$0xff]
    %v2507 = vld [vmem:[%s2504 + $0x10] sm:$0xff]
    %v2508 = vld [vmem:[%s2504 + $0x18] sm:$0xff]
    %v2509 = vld [vmem:[%s2504 + $0x20] sm:$0xff]
    %v2510 = vld [vmem:[%s2504 + $0x28] sm:$0xff]
    %v2511 = vld [vmem:[%s2504 + $0x30] sm:$0xff]
    %v2512 = vld [vmem:[%s2504 + $0x38] sm:$0xff]
    %v2513 = vld [vmem:[%s2504 + $0x40] sm:$0xff]
    %v2514 = vld [vmem:[%s2504 + $0x48] sm:$0xff]
    %v2515 = vld [vmem:[%s2504 + $0x50] sm:$0xff]
    %v2516 = vld [vmem:[%s2504 + $0x58] sm:$0xff]
    %v2517 = vld [vmem:[%s2504 + $0x60] sm:$0xff]
    %v2518 = vld [vmem:[%s2504 + $0x68] sm:$0xff]
    %v2519 = vld [vmem:[%s2504 + $0x70] sm:$0xff]
    %v2520 = vld [vmem:[%s2504 + $0x78] sm:$0xff]
    %v2521 = vpack.c.bf16 %v2506, %v2505
    %v2522 = vpack.c.bf16 %v2508, %v2507
    %v2523 = vpack.c.bf16 %v2510, %v2509
    %v2524 = vpack.c.bf16 %v2512, %v2511
    %v2525 = vpack.c.bf16 %v2514, %v2513
    %v2526 = vpack.c.bf16 %v2516, %v2515
    %v2527 = vpack.c.bf16 %v2518, %v2517
    %v2528 = vpack.c.bf16 %v2520, %v2519
    %s2529 = scalar_lea.vmem %s3, 128
    %v2530 = vld [vmem:[%s2529] sm:$0xf]
    %v2531 = vld [vmem:[%s2529 + $0x4] sm:$0xf]
    %v2532 = vld [vmem:[%s2529 + $0x8] sm:$0xf]
    %v2533 = vld [vmem:[%s2529 + $0xc] sm:$0xf]
    %v2538 = vunpack.c.l.b16 %v2530
    %v2539 = vunpack.c.l.b16 %v2531
    %v2540 = vunpack.c.l.b16 %v2532
    %v2541 = vunpack.c.l.b16 %v2533
    %v2542 = vpack.c.b16 %v2539, %v2538
    %v2543 = vpack.c.b16 %v2541, %v2540
    %v2547 = vsel %vm53, %v2521, 0
    %v2550 = vsel %vm53, %v2522, 0
    %v2553 = vsel %vm53, %v2523, 0
    %v2556 = vsel %vm53, %v2524, 0
    %v2559 = vsel %vm53, %v2525, 0
    %v2562 = vsel %vm53, %v2526, 0
    %v2565 = vsel %vm53, %v2527, 0
    %v2568 = vsel %vm53, %v2528, 0
    %2570 = vmatpush.bf16.msra.mxu0 0
    %2571 = vmatpush.bf16.msra.mxu0 0
    %2572 = vmatpush.bf16.msra.mxu0 0
    %2573 = vmatpush.bf16.msra.mxu0 0
    %2574 = vmatpush.bf16.msra.mxu0 0
    %2575 = vmatpush.bf16.msra.mxu0 0
    %2576 = vmatpush.bf16.msra.mxu0 %v2543
    %2577 = vmatpush.bf16.msra.mxu0 %v2542
    %2578 = vmatmul.bf16.gmra.mxu0 %v2547
    %v2579 = vpop.f32.mrf.mxu0
    %v2580 = vadd.f32 0.0, %v2579
    %v2581 = vpop.f32.mrf.mxu0
    %v2582 = vadd.f32 0.0, %v2581
    %2583 = vmatmul.bf16.gmra.mxu0 %v2550
    %v2584 = vpop.f32.mrf.mxu0
    %v2585 = vadd.f32 0.0, %v2584
    %v2586 = vpop.f32.mrf.mxu0
    %v2587 = vadd.f32 0.0, %v2586
    %2588 = vmatmul.bf16.gmra.mxu0 %v2553
    %v2589 = vpop.f32.mrf.mxu0
    %v2590 = vadd.f32 0.0, %v2589
    %v2591 = vpop.f32.mrf.mxu0
    %v2592 = vadd.f32 0.0, %v2591
    %2593 = vmatmul.bf16.gmra.mxu0 %v2556
    %v2594 = vpop.f32.mrf.mxu0
    %v2595 = vadd.f32 0.0, %v2594
    %v2596 = vpop.f32.mrf.mxu0
    %v2597 = vadd.f32 0.0, %v2596
    %2598 = vmatmul.bf16.gmra.mxu0 %v2559
    %v2599 = vpop.f32.mrf.mxu0
    %v2600 = vadd.f32 0.0, %v2599
    %v2601 = vpop.f32.mrf.mxu0
    %v2602 = vadd.f32 0.0, %v2601
    %2603 = vmatmul.bf16.gmra.mxu0 %v2562
    %v2604 = vpop.f32.mrf.mxu0
    %v2605 = vadd.f32 0.0, %v2604
    %v2606 = vpop.f32.mrf.mxu0
    %v2607 = vadd.f32 0.0, %v2606
    %2608 = vmatmul.bf16.gmra.mxu0 %v2565
    %v2609 = vpop.f32.mrf.mxu0
    %v2610 = vadd.f32 0.0, %v2609
    %v2611 = vpop.f32.mrf.mxu0
    %v2612 = vadd.f32 0.0, %v2611
    %2613 = vmatmul.bf16.gmra.mxu0 %v2568
    %v2614 = vpop.f32.mrf.mxu0
    %v2615 = vadd.f32 0.0, %v2614
    %v2616 = vpop.f32.mrf.mxu0
    %v2617 = vadd.f32 0.0, %v2616
    %2618 = vdwg.mxu0
    %v2619 = vadd.f32 %v2487, %v2580
    %v2620 = vadd.f32 %v2488, %v2582
    %v2621 = vadd.f32 %v2489, %v2585
    %v2622 = vadd.f32 %v2490, %v2587
    %v2623 = vadd.f32 %v2491, %v2590
    %v2624 = vadd.f32 %v2492, %v2592
    %v2625 = vadd.f32 %v2493, %v2595
    %v2626 = vadd.f32 %v2494, %v2597
    %v2627 = vadd.f32 %v2495, %v2600
    %v2628 = vadd.f32 %v2496, %v2602
    %v2629 = vadd.f32 %v2497, %v2605
    %v2630 = vadd.f32 %v2498, %v2607
    %v2631 = vadd.f32 %v2499, %v2610
    %v2632 = vadd.f32 %v2500, %v2612
    %v2633 = vadd.f32 %v2501, %v2615
    %v2634 = vadd.f32 %v2502, %v2617
    %v2635 = vld [vmem:[%s4] sm:$0x1]
    %v2637 = vperm.slane %v2635, 0
    %v2639 = vadd.f32 %v2619, %v2637
    %v2640 = vadd.f32 %v2620, %v2637
    %v2641 = vadd.f32 %v2621, %v2637
    %v2642 = vadd.f32 %v2622, %v2637
    %v2643 = vadd.f32 %v2623, %v2637
    %v2644 = vadd.f32 %v2624, %v2637
    %v2645 = vadd.f32 %v2625, %v2637
    %v2646 = vadd.f32 %v2626, %v2637
    %v2647 = vadd.f32 %v2627, %v2637
    %v2648 = vadd.f32 %v2628, %v2637
    %v2649 = vadd.f32 %v2629, %v2637
    %v2650 = vadd.f32 %v2630, %v2637
    %v2651 = vadd.f32 %v2631, %v2637
    %v2652 = vadd.f32 %v2632, %v2637
    %v2653 = vadd.f32 %v2633, %v2637
    %v2654 = vadd.f32 %v2634, %v2637
    %s2655 = scalar_lea.vmem [#allocation3], %s1480
    %2656 = vst.msk [vmem:[%s2655] sm:$0xff] %vm53, %v2639
    %2657 = vst.msk [vmem:[%s2655 + $0x8] sm:$0xff] %vm53, %v2640
    %2658 = vst.msk [vmem:[%s2655 + $0x10] sm:$0xff] %vm53, %v2641
    %2659 = vst.msk [vmem:[%s2655 + $0x18] sm:$0xff] %vm53, %v2642
    %2660 = vst.msk [vmem:[%s2655 + $0x20] sm:$0xff] %vm53, %v2643
    %2661 = vst.msk [vmem:[%s2655 + $0x28] sm:$0xff] %vm53, %v2644
    %2662 = vst.msk [vmem:[%s2655 + $0x30] sm:$0xff] %vm53, %v2645
    %2663 = vst.msk [vmem:[%s2655 + $0x38] sm:$0xff] %vm53, %v2646
    %2664 = vst.msk [vmem:[%s2655 + $0x40] sm:$0xff] %vm53, %v2647
    %2665 = vst.msk [vmem:[%s2655 + $0x48] sm:$0xff] %vm53, %v2648
    %2666 = vst.msk [vmem:[%s2655 + $0x50] sm:$0xff] %vm53, %v2649
    %2667 = vst.msk [vmem:[%s2655 + $0x58] sm:$0xff] %vm53, %v2650
    %2668 = vst.msk [vmem:[%s2655 + $0x60] sm:$0xff] %vm53, %v2651
    %2669 = vst.msk [vmem:[%s2655 + $0x68] sm:$0xff] %vm53, %v2652
    %2670 = vst.msk [vmem:[%s2655 + $0x70] sm:$0xff] %vm53, %v2653
    %2671 = vst.msk [vmem:[%s2655 + $0x78] sm:$0xff] %vm53, %v2654
    %v2672 = vlaneseq
    %v2673 = vshrl.u32 %v2672, 7
    %v2674 = vadd.s32 %v2673, 8
    %v2675 = vadd.s32 %v2673, 16
    %v2676 = vadd.s32 %v2673, 24
    %v2677 = vadd.s32 %v2673, 32
    %v2678 = vadd.s32 %v2673, 40
    %v2679 = vadd.s32 %v2673, 48
    %v2680 = vadd.s32 %v2673, 56
    %v2681 = vadd.s32 %v2673, 64
    %v2682 = vadd.s32 %v2673, 72
    %v2683 = vadd.s32 %v2673, 80
    %v2684 = vadd.s32 %v2673, 88
    %v2685 = vadd.s32 %v2673, 96
    %v2686 = vadd.s32 %v2673, 104
    %v2687 = vadd.s32 %v2673, 112
    %v2688 = vadd.s32 %v2673, 120
    %v2689 = vstv %s1480
    %v2690 = vadd.s32 %v2689, %v2673
    %v2691 = vadd.s32 %v2689, %v2674
    %v2692 = vadd.s32 %v2689, %v2675
    %v2693 = vadd.s32 %v2689, %v2676
    %v2694 = vadd.s32 %v2689, %v2677
    %v2695 = vadd.s32 %v2689, %v2678
    %v2696 = vadd.s32 %v2689, %v2679
    %v2697 = vadd.s32 %v2689, %v2680
    %v2698 = vadd.s32 %v2689, %v2681
    %v2699 = vadd.s32 %v2689, %v2682
    %v2700 = vadd.s32 %v2689, %v2683
    %v2701 = vadd.s32 %v2689, %v2684
    %v2702 = vadd.s32 %v2689, %v2685
    %v2703 = vadd.s32 %v2689, %v2686
    %v2704 = vadd.s32 %v2689, %v2687
    %v2705 = vadd.s32 %v2689, %v2688
    %v2706 = vshra.s32 %v2690, 5
    %v2707 = vshra.s32 %v2691, 5
    %v2708 = vshra.s32 %v2692, 5
    %v2709 = vshra.s32 %v2693, 5
    %v2710 = vshra.s32 %v2694, 5
    %v2711 = vshra.s32 %v2695, 5
    %v2712 = vshra.s32 %v2696, 5
    %v2713 = vshra.s32 %v2697, 5
    %v2714 = vshra.s32 %v2698, 5
    %v2715 = vshra.s32 %v2699, 5
    %v2716 = vshra.s32 %v2700, 5
    %v2717 = vshra.s32 %v2701, 5
    %v2718 = vshra.s32 %v2702, 5
    %v2719 = vshra.s32 %v2703, 5
    %v2720 = vshra.s32 %v2704, 5
    %v2721 = vshra.s32 %v2705, 5
    %v2722 = vand.u32 %v2706, 31
    %v2723 = vand.u32 %v2707, 31
    %v2724 = vand.u32 %v2708, 31
    %v2725 = vand.u32 %v2709, 31
    %v2726 = vand.u32 %v2710, 31
    %v2727 = vand.u32 %v2711, 31
    %v2728 = vand.u32 %v2712, 31
    %v2729 = vand.u32 %v2713, 31
    %v2730 = vand.u32 %v2714, 31
    %v2731 = vand.u32 %v2715, 31
    %v2732 = vand.u32 %v2716, 31
    %v2733 = vand.u32 %v2717, 31
    %v2734 = vand.u32 %v2718, 31
    %v2735 = vand.u32 %v2719, 31
    %v2736 = vand.u32 %v2720, 31
    %v2737 = vand.u32 %v2721, 31
    %v2738 = vand.u32 %v2690, 31
    %v2739 = vand.u32 %v2691, 31
    %v2740 = vand.u32 %v2692, 31
    %v2741 = vand.u32 %v2693, 31
    %v2742 = vand.u32 %v2694, 31
    %v2743 = vand.u32 %v2695, 31
    %v2744 = vand.u32 %v2696, 31
    %v2745 = vand.u32 %v2697, 31
    %v2746 = vand.u32 %v2698, 31
    %v2747 = vand.u32 %v2699, 31
    %v2748 = vand.u32 %v2700, 31
    %v2749 = vand.u32 %v2701, 31
    %v2750 = vand.u32 %v2702, 31
    %v2751 = vand.u32 %v2703, 31
    %v2752 = vand.u32 %v2704, 31
    %v2753 = vand.u32 %v2705, 31
    %vm2754 = vcmp.lt.s32.totalorder %v2722, 28
    %vm2755 = vcmp.lt.s32.totalorder %v2723, 28
    %vm2756 = vcmp.lt.s32.totalorder %v2724, 28
    %vm2757 = vcmp.lt.s32.totalorder %v2725, 28
    %vm2758 = vcmp.lt.s32.totalorder %v2726, 28
    %vm2759 = vcmp.lt.s32.totalorder %v2727, 28
    %vm2760 = vcmp.lt.s32.totalorder %v2728, 28
    %vm2761 = vcmp.lt.s32.totalorder %v2729, 28
    %vm2762 = vcmp.lt.s32.totalorder %v2730, 28
    %vm2763 = vcmp.lt.s32.totalorder %v2731, 28
    %vm2764 = vcmp.lt.s32.totalorder %v2732, 28
    %vm2765 = vcmp.lt.s32.totalorder %v2733, 28
    %vm2766 = vcmp.lt.s32.totalorder %v2734, 28
    %vm2767 = vcmp.lt.s32.totalorder %v2735, 28
    %vm2768 = vcmp.lt.s32.totalorder %v2736, 28
    %vm2769 = vcmp.lt.s32.totalorder %v2737, 28
    %vm2770 = vcmp.lt.s32.totalorder %v2738, 28
    %vm2771 = vcmp.lt.s32.totalorder %v2739, 28
    %vm2772 = vcmp.lt.s32.totalorder %v2740, 28
    %vm2773 = vcmp.lt.s32.totalorder %v2741, 28
    %vm2774 = vcmp.lt.s32.totalorder %v2742, 28
    %vm2775 = vcmp.lt.s32.totalorder %v2743, 28
    %vm2776 = vcmp.lt.s32.totalorder %v2744, 28
    %vm2777 = vcmp.lt.s32.totalorder %v2745, 28
    %vm2778 = vcmp.lt.s32.totalorder %v2746, 28
    %vm2779 = vcmp.lt.s32.totalorder %v2747, 28
    %vm2780 = vcmp.lt.s32.totalorder %v2748, 28
    %vm2781 = vcmp.lt.s32.totalorder %v2749, 28
    %vm2782 = vcmp.lt.s32.totalorder %v2750, 28
    %vm2783 = vcmp.lt.s32.totalorder %v2751, 28
    %vm2784 = vcmp.lt.s32.totalorder %v2752, 28
    %vm2785 = vcmp.lt.s32.totalorder %v2753, 28
    %vm2786 = vmand %vm2754, %vm2770
    %vm2787 = vmand %vm2755, %vm2771
    %vm2788 = vmand %vm2756, %vm2772
    %vm2789 = vmand %vm2757, %vm2773
    %vm2790 = vmand %vm2758, %vm2774
    %vm2791 = vmand %vm2759, %vm2775
    %vm2792 = vmand %vm2760, %vm2776
    %vm2793 = vmand %vm2761, %vm2777
    %vm2794 = vmand %vm2762, %vm2778
    %vm2795 = vmand %vm2763, %vm2779
    %vm2796 = vmand %vm2764, %vm2780
    %vm2797 = vmand %vm2765, %vm2781
    %vm2798 = vmand %vm2766, %vm2782
    %vm2799 = vmand %vm2767, %vm2783
    %vm2800 = vmand %vm2768, %vm2784
    %vm2801 = vmand %vm2769, %vm2785
    %v2802 = vsel %vm2786, 1.0, 0.0
    %v2803 = vsel %vm2787, 1.0, 0.0
    %v2804 = vsel %vm2788, 1.0, 0.0
    %v2805 = vsel %vm2789, 1.0, 0.0
    %v2806 = vsel %vm2790, 1.0, 0.0
    %v2807 = vsel %vm2791, 1.0, 0.0
    %v2808 = vsel %vm2792, 1.0, 0.0
    %v2809 = vsel %vm2793, 1.0, 0.0
    %v2810 = vsel %vm2794, 1.0, 0.0
    %v2811 = vsel %vm2795, 1.0, 0.0
    %v2812 = vsel %vm2796, 1.0, 0.0
    %v2813 = vsel %vm2797, 1.0, 0.0
    %v2814 = vsel %vm2798, 1.0, 0.0
    %v2815 = vsel %vm2799, 1.0, 0.0
    %v2816 = vsel %vm2800, 1.0, 0.0
    %v2817 = vsel %vm2801, 1.0, 0.0
    %v2818 = vmul.f32 %v2639, %v2802
    %v2819 = vmul.f32 %v2640, %v2803
    %v2820 = vmul.f32 %v2641, %v2804
    %v2821 = vmul.f32 %v2642, %v2805
    %v2822 = vmul.f32 %v2643, %v2806
    %v2823 = vmul.f32 %v2644, %v2807
    %v2824 = vmul.f32 %v2645, %v2808
    %v2825 = vmul.f32 %v2646, %v2809
    %v2826 = vmul.f32 %v2647, %v2810
    %v2827 = vmul.f32 %v2648, %v2811
    %v2828 = vmul.f32 %v2649, %v2812
    %v2829 = vmul.f32 %v2650, %v2813
    %v2830 = vmul.f32 %v2651, %v2814
    %v2831 = vmul.f32 %v2652, %v2815
    %v2832 = vmul.f32 %v2653, %v2816
    %v2833 = vmul.f32 %v2654, %v2817
    %v2834 = vsel %vm53, %v2818, 0.0
    %v2835 = vsel %vm53, %v2819, 0.0
    %v2836 = vadd.f32 %v2834, %v2835
    %v2837 = vsel %vm53, %v2820, 0.0
    %v2838 = vadd.f32 %v2836, %v2837
    %v2839 = vsel %vm53, %v2821, 0.0
    %v2840 = vadd.f32 %v2838, %v2839
    %v2841 = vsel %vm53, %v2822, 0.0
    %v2842 = vadd.f32 %v2840, %v2841
    %v2843 = vsel %vm53, %v2823, 0.0
    %v2844 = vadd.f32 %v2842, %v2843
    %v2845 = vsel %vm53, %v2824, 0.0
    %v2846 = vadd.f32 %v2844, %v2845
    %v2847 = vsel %vm53, %v2825, 0.0
    %v2848 = vadd.f32 %v2846, %v2847
    %v2849 = vsel %vm53, %v2826, 0.0
    %v2850 = vadd.f32 %v2848, %v2849
    %v2851 = vsel %vm53, %v2827, 0.0
    %v2852 = vadd.f32 %v2850, %v2851
    %v2853 = vsel %vm53, %v2828, 0.0
    %v2854 = vadd.f32 %v2852, %v2853
    %v2855 = vsel %vm53, %v2829, 0.0
    %v2856 = vadd.f32 %v2854, %v2855
    %v2857 = vsel %vm53, %v2830, 0.0
    %v2858 = vadd.f32 %v2856, %v2857
    %v2859 = vsel %vm53, %v2831, 0.0
    %v2860 = vadd.f32 %v2858, %v2859
    %v2861 = vsel %vm53, %v2832, 0.0
    %v2862 = vadd.f32 %v2860, %v2861
    %v2863 = vsel %vm53, %v2833, 0.0
    %v2864 = vadd.f32 %v2862, %v2863
    %v2865 = vrot.slane %v2864, 4
    %v2866 = vadd.f32 %v2864, %v2865
    %v2867 = vrot.slane %v2866, 2
    %v2868 = vadd.f32 %v2866, %v2867
    %v2869 = vrot.slane %v2868, 1
    %v2870 = vadd.f32 %v2868, %v2869
    %v2871 = vadd.f32 %v1478, %v2870
    %v2872 = vmul.f32 %v2639, %v2639
    %v2873 = vmul.f32 %v2640, %v2640
    %v2874 = vmul.f32 %v2641, %v2641
    %v2875 = vmul.f32 %v2642, %v2642
    %v2876 = vmul.f32 %v2643, %v2643
    %v2877 = vmul.f32 %v2644, %v2644
    %v2878 = vmul.f32 %v2645, %v2645
    %v2879 = vmul.f32 %v2646, %v2646
    %v2880 = vmul.f32 %v2647, %v2647
    %v2881 = vmul.f32 %v2648, %v2648
    %v2882 = vmul.f32 %v2649, %v2649
    %v2883 = vmul.f32 %v2650, %v2650
    %v2884 = vmul.f32 %v2651, %v2651
    %v2885 = vmul.f32 %v2652, %v2652
    %v2886 = vmul.f32 %v2653, %v2653
    %v2887 = vmul.f32 %v2654, %v2654
    %v2888 = vmul.f32 %v2872, %v2802
    %v2889 = vmul.f32 %v2873, %v2803
    %v2890 = vmul.f32 %v2874, %v2804
    %v2891 = vmul.f32 %v2875, %v2805
    %v2892 = vmul.f32 %v2876, %v2806
    %v2893 = vmul.f32 %v2877, %v2807
    %v2894 = vmul.f32 %v2878, %v2808
    %v2895 = vmul.f32 %v2879, %v2809
    %v2896 = vmul.f32 %v2880, %v2810
    %v2897 = vmul.f32 %v2881, %v2811
    %v2898 = vmul.f32 %v2882, %v2812
    %v2899 = vmul.f32 %v2883, %v2813
    %v2900 = vmul.f32 %v2884, %v2814
    %v2901 = vmul.f32 %v2885, %v2815
    %v2902 = vmul.f32 %v2886, %v2816
    %v2903 = vmul.f32 %v2887, %v2817
    %v2904 = vsel %vm53, %v2888, 0.0
    %v2905 = vsel %vm53, %v2889, 0.0
    %v2906 = vadd.f32 %v2904, %v2905
    %v2907 = vsel %vm53, %v2890, 0.0
    %v2908 = vadd.f32 %v2906, %v2907
    %v2909 = vsel %vm53, %v2891, 0.0
    %v2910 = vadd.f32 %v2908, %v2909
    %v2911 = vsel %vm53, %v2892, 0.0
    %v2912 = vadd.f32 %v2910, %v2911
    %v2913 = vsel %vm53, %v2893, 0.0
    %v2914 = vadd.f32 %v2912, %v2913
    %v2915 = vsel %vm53, %v2894, 0.0
    %v2916 = vadd.f32 %v2914, %v2915
    %v2917 = vsel %vm53, %v2895, 0.0
    %v2918 = vadd.f32 %v2916, %v2917
    %v2919 = vsel %vm53, %v2896, 0.0
    %v2920 = vadd.f32 %v2918, %v2919
    %v2921 = vsel %vm53, %v2897, 0.0
    %v2922 = vadd.f32 %v2920, %v2921
    %v2923 = vsel %vm53, %v2898, 0.0
    %v2924 = vadd.f32 %v2922, %v2923
    %v2925 = vsel %vm53, %v2899, 0.0
    %v2926 = vadd.f32 %v2924, %v2925
    %v2927 = vsel %vm53, %v2900, 0.0
    %v2928 = vadd.f32 %v2926, %v2927
    %v2929 = vsel %vm53, %v2901, 0.0
    %v2930 = vadd.f32 %v2928, %v2929
    %v2931 = vsel %vm53, %v2902, 0.0
    %v2932 = vadd.f32 %v2930, %v2931
    %v2933 = vsel %vm53, %v2903, 0.0
    %v2934 = vadd.f32 %v2932, %v2933
    %v2935 = vrot.slane %v2934, 4
    %v2936 = vadd.f32 %v2934, %v2935
    %v2937 = vrot.slane %v2936, 2
    %v2938 = vadd.f32 %v2936, %v2937
    %v2939 = vrot.slane %v2938, 1
    %v2940 = vadd.f32 %v2938, %v2939
    %v2941 = vadd.f32 %v1479, %v2940
  $region73: #{cnn_forward.1} parent=0 // loop_footer
    %s1477 = sadd.s32 1, %s1473
  $region74: #{cnn_forward.1} parent=0 // loop_footer_branch
    %1472 = sbr.rel target = $region70
  $region75: #{cnn_forward.1} parent=0 // loop_exit
    _
  %v2942 = vrcp.pop 1568.0
  %v2943 = vmul.f32 1568.0, %v2942
  %v2944 = vsub.f32 1.0, %v2943
  %v2945 = vmul.f32 %v2942, %v2944
  %v2946 = vadd.f32 %v2942, %v2945
  %vm2947 = vweird.f32 %v2942
  %v2948 = vsel %vm2947, %v2942, %v2946
  %v2949 = vmul.f32 %v1478, %v2948
  %v2950 = vmul.f32 %v1479, %v2948
  %v2951 = vmul.f32 %v2949, %v2949
  %v2952 = vsub.f32 %v2950, %v2951
  %v2953 = vmax.f32 %v2952, 0.0
  %v2954 = vadd.f32 %v2953, 1e-05
  %v2955 = vrsqrt.pop %v2954
  %v2956 = vmul.f32 %v2955, %v2954
  %v2957 = vmul.f32 %v2956, %v2955
  %v2958 = vmul.f32 0.5, %v2957
  %v2959 = vsub.f32 1.5, %v2958
  %v2960 = vmul.f32 %v2955, %v2959
  %vm2961 = vweird.f32 %v2954
  %vm2962 = vweird.f32 %v2955
  %vm2963 = vmor %vm2961, %vm2962
  %v2964 = vsel %vm2963, %v2955, %v2960
  %v2965 = vld [vmem:[#allocation3] ss:$2 sm:$0xff]
  %s2966 = scalar_lea.vmem [#allocation3], 16
  %v2967 = vld [vmem:[%s2966] ss:$2 sm:$0xff]
  %s2968 = scalar_lea.vmem [#allocation3], 1
  %v2969 = vld [vmem:[%s2968] ss:$2 sm:$0xff]
  %s2970 = scalar_lea.vmem [#allocation3], 17
  %v2971 = vld [vmem:[%s2970] ss:$2 sm:$0xff]
  %v2972 = vmax.f32 %v2965, %v2969
  %v2973 = vmax.f32 %v2967, %v2971
  %s2974 = scalar_lea.vmem [#allocation3], 32
  %v2975 = vld [vmem:[%s2974] ss:$2 sm:$0xff]
  %s2976 = scalar_lea.vmem [#allocation3], 48
  %v2977 = vld [vmem:[%s2976] ss:$2 sm:$0xff]
  %s2978 = scalar_lea.vmem [#allocation3], 33
  %v2979 = vld [vmem:[%s2978] ss:$2 sm:$0xff]
  %s2980 = scalar_lea.vmem [#allocation3], 49
  %v2981 = vld [vmem:[%s2980] ss:$2 sm:$0xff]
  %v2982 = vmax.f32 %v2975, %v2979
  %v2983 = vmax.f32 %v2977, %v2981
  %v2984 = vmax.f32 %v2972, %v2982
  %v2985 = vmax.f32 %v2973, %v2983
  %v2986 = vsub.f32 %v2984, %v2949
  %v2987 = vsub.f32 %v2985, %v2949
  %v2988 = vmul.f32 %v2986, %v2964
  %v2989 = vmul.f32 %v2987, %v2964
  %v2990 = vmax.f32 %v2988, 0.0
  %v2991 = vmax.f32 %v2989, 0.0
  %2992 = vst.msk [vmem:[#allocation4] sm:$0xff] %vm53, %v2990
  %2993 = vst.msk [vmem:[#allocation4 + $0x8] sm:$0xff] %vm53, %v2991
  %s2994 = scalar_lea.vmem [#allocation3], 64
  %v2995 = vld [vmem:[%s2994] ss:$2 sm:$0xff]
  %s2996 = scalar_lea.vmem [#allocation3], 80
  %v2997 = vld [vmem:[%s2996] ss:$2 sm:$0xff]
  %s2998 = scalar_lea.vmem [#allocation3], 65
  %v2999 = vld [vmem:[%s2998] ss:$2 sm:$0xff]
  %s3000 = scalar_lea.vmem [#allocation3], 81
  %v3001 = vld [vmem:[%s3000] ss:$2 sm:$0xff]
  %v3002 = vmax.f32 %v2995, %v2999
  %v3003 = vmax.f32 %v2997, %v3001
  %s3004 = scalar_lea.vmem [#allocation3], 96
  %v3005 = vld [vmem:[%s3004] ss:$2 sm:$0xff]
  %s3006 = scalar_lea.vmem [#allocation3], 112
  %v3007 = vld [vmem:[%s3006] ss:$2 sm:$0xff]
  %s3008 = scalar_lea.vmem [#allocation3], 97
  %v3009 = vld [vmem:[%s3008] ss:$2 sm:$0xff]
  %s3010 = scalar_lea.vmem [#allocation3], 113
  %v3011 = vld [vmem:[%s3010] ss:$2 sm:$0xff]
  %v3012 = vmax.f32 %v3005, %v3009
  %v3013 = vmax.f32 %v3007, %v3011
  %v3014 = vmax.f32 %v3002, %v3012
  %v3015 = vmax.f32 %v3003, %v3013
  %v3016 = vsub.f32 %v3014, %v2949
  %v3017 = vsub.f32 %v3015, %v2949
  %v3018 = vmul.f32 %v3016, %v2964
  %v3019 = vmul.f32 %v3017, %v2964
  %v3020 = vmax.f32 %v3018, 0.0
  %v3021 = vmax.f32 %v3019, 0.0
  %3022 = vst.msk [vmem:[#allocation4 + $0x10] sm:$0xff] %vm53, %v3020
  %3023 = vst.msk [vmem:[#allocation4 + $0x18] sm:$0xff] %vm53, %v3021
  %s3024 = scalar_lea.vmem [#allocation3], 128
  %v3025 = vld [vmem:[%s3024] ss:$2 sm:$0xff]
  %s3026 = scalar_lea.vmem [#allocation3], 144
  %v3027 = vld [vmem:[%s3026] ss:$2 sm:$0xff]
  %s3028 = scalar_lea.vmem [#allocation3], 129
  %v3029 = vld [vmem:[%s3028] ss:$2 sm:$0xff]
  %s3030 = scalar_lea.vmem [#allocation3], 145
  %v3031 = vld [vmem:[%s3030] ss:$2 sm:$0xff]
  %v3032 = vmax.f32 %v3025, %v3029
  %v3033 = vmax.f32 %v3027, %v3031
  %s3034 = scalar_lea.vmem [#allocation3], 160
  %v3035 = vld [vmem:[%s3034] ss:$2 sm:$0xff]
  %s3036 = scalar_lea.vmem [#allocation3], 176
  %v3037 = vld [vmem:[%s3036] ss:$2 sm:$0xff]
  %s3038 = scalar_lea.vmem [#allocation3], 161
  %v3039 = vld [vmem:[%s3038] ss:$2 sm:$0xff]
  %s3040 = scalar_lea.vmem [#allocation3], 177
  %v3041 = vld [vmem:[%s3040] ss:$2 sm:$0xff]
  %v3042 = vmax.f32 %v3035, %v3039
  %v3043 = vmax.f32 %v3037, %v3041
  %v3044 = vmax.f32 %v3032, %v3042
  %v3045 = vmax.f32 %v3033, %v3043
  %v3046 = vsub.f32 %v3044, %v2949
  %v3047 = vsub.f32 %v3045, %v2949
  %v3048 = vmul.f32 %v3046, %v2964
  %v3049 = vmul.f32 %v3047, %v2964
  %v3050 = vmax.f32 %v3048, 0.0
  %v3051 = vmax.f32 %v3049, 0.0
  %3052 = vst.msk [vmem:[#allocation4 + $0x20] sm:$0xff] %vm53, %v3050
  %3053 = vst.msk [vmem:[#allocation4 + $0x28] sm:$0xff] %vm53, %v3051
  %s3054 = scalar_lea.vmem [#allocation3], 192
  %v3055 = vld [vmem:[%s3054] ss:$2 sm:$0xff]
  %s3056 = scalar_lea.vmem [#allocation3], 208
  %v3057 = vld [vmem:[%s3056] ss:$2 sm:$0xff]
  %s3058 = scalar_lea.vmem [#allocation3], 193
  %v3059 = vld [vmem:[%s3058] ss:$2 sm:$0xff]
  %s3060 = scalar_lea.vmem [#allocation3], 209
  %v3061 = vld [vmem:[%s3060] ss:$2 sm:$0xff]
  %v3062 = vmax.f32 %v3055, %v3059
  %v3063 = vmax.f32 %v3057, %v3061
  %s3064 = scalar_lea.vmem [#allocation3], 224
  %v3065 = vld [vmem:[%s3064] ss:$2 sm:$0xff]
  %s3066 = scalar_lea.vmem [#allocation3], 240
  %v3067 = vld [vmem:[%s3066] ss:$2 sm:$0xff]
  %s3068 = scalar_lea.vmem [#allocation3], 225
  %v3069 = vld [vmem:[%s3068] ss:$2 sm:$0xff]
  %s3070 = scalar_lea.vmem [#allocation3], 241
  %v3071 = vld [vmem:[%s3070] ss:$2 sm:$0xff]
  %v3072 = vmax.f32 %v3065, %v3069
  %v3073 = vmax.f32 %v3067, %v3071
  %v3074 = vmax.f32 %v3062, %v3072
  %v3075 = vmax.f32 %v3063, %v3073
  %v3076 = vsub.f32 %v3074, %v2949
  %v3077 = vsub.f32 %v3075, %v2949
  %v3078 = vmul.f32 %v3076, %v2964
  %v3079 = vmul.f32 %v3077, %v2964
  %v3080 = vmax.f32 %v3078, 0.0
  %v3081 = vmax.f32 %v3079, 0.0
  %3082 = vst.msk [vmem:[#allocation4 + $0x30] sm:$0xff] %vm53, %v3080
  %3083 = vst.msk [vmem:[#allocation4 + $0x38] sm:$0xff] %vm53, %v3081
  %s3084 = scalar_lea.vmem [#allocation3], 256
  %v3085 = vld [vmem:[%s3084] ss:$2 sm:$0xff]
  %s3086 = scalar_lea.vmem [#allocation3], 272
  %v3087 = vld [vmem:[%s3086] ss:$2 sm:$0xff]
  %s3088 = scalar_lea.vmem [#allocation3], 257
  %v3089 = vld [vmem:[%s3088] ss:$2 sm:$0xff]
  %s3090 = scalar_lea.vmem [#allocation3], 273
  %v3091 = vld [vmem:[%s3090] ss:$2 sm:$0xff]
  %v3092 = vmax.f32 %v3085, %v3089
  %v3093 = vmax.f32 %v3087, %v3091
  %s3094 = scalar_lea.vmem [#allocation3], 288
  %v3095 = vld [vmem:[%s3094] ss:$2 sm:$0xff]
  %s3096 = scalar_lea.vmem [#allocation3], 304
  %v3097 = vld [vmem:[%s3096] ss:$2 sm:$0xff]
  %s3098 = scalar_lea.vmem [#allocation3], 289
  %v3099 = vld [vmem:[%s3098] ss:$2 sm:$0xff]
  %s3100 = scalar_lea.vmem [#allocation3], 305
  %v3101 = vld [vmem:[%s3100] ss:$2 sm:$0xff]
  %v3102 = vmax.f32 %v3095, %v3099
  %v3103 = vmax.f32 %v3097, %v3101
  %v3104 = vmax.f32 %v3092, %v3102
  %v3105 = vmax.f32 %v3093, %v3103
  %v3106 = vsub.f32 %v3104, %v2949
  %v3107 = vsub.f32 %v3105, %v2949
  %v3108 = vmul.f32 %v3106, %v2964
  %v3109 = vmul.f32 %v3107, %v2964
  %v3110 = vmax.f32 %v3108, 0.0
  %v3111 = vmax.f32 %v3109, 0.0
  %3112 = vst.msk [vmem:[#allocation4 + $0x40] sm:$0xff] %vm53, %v3110
  %3113 = vst.msk [vmem:[#allocation4 + $0x48] sm:$0xff] %vm53, %v3111
  %s3114 = scalar_lea.vmem [#allocation3], 320
  %v3115 = vld [vmem:[%s3114] ss:$2 sm:$0xff]
  %s3116 = scalar_lea.vmem [#allocation3], 336
  %v3117 = vld [vmem:[%s3116] ss:$2 sm:$0xff]
  %s3118 = scalar_lea.vmem [#allocation3], 321
  %v3119 = vld [vmem:[%s3118] ss:$2 sm:$0xff]
  %s3120 = scalar_lea.vmem [#allocation3], 337
  %v3121 = vld [vmem:[%s3120] ss:$2 sm:$0xff]
  %v3122 = vmax.f32 %v3115, %v3119
  %v3123 = vmax.f32 %v3117, %v3121
  %s3124 = scalar_lea.vmem [#allocation3], 352
  %v3125 = vld [vmem:[%s3124] ss:$2 sm:$0xff]
  %s3126 = scalar_lea.vmem [#allocation3], 368
  %v3127 = vld [vmem:[%s3126] ss:$2 sm:$0xff]
  %s3128 = scalar_lea.vmem [#allocation3], 353
  %v3129 = vld [vmem:[%s3128] ss:$2 sm:$0xff]
  %s3130 = scalar_lea.vmem [#allocation3], 369
  %v3131 = vld [vmem:[%s3130] ss:$2 sm:$0xff]
  %v3132 = vmax.f32 %v3125, %v3129
  %v3133 = vmax.f32 %v3127, %v3131
  %v3134 = vmax.f32 %v3122, %v3132
  %v3135 = vmax.f32 %v3123, %v3133
  %v3136 = vsub.f32 %v3134, %v2949
  %v3137 = vsub.f32 %v3135, %v2949
  %v3138 = vmul.f32 %v3136, %v2964
  %v3139 = vmul.f32 %v3137, %v2964
  %v3140 = vmax.f32 %v3138, 0.0
  %v3141 = vmax.f32 %v3139, 0.0
  %3142 = vst.msk [vmem:[#allocation4 + $0x50] sm:$0xff] %vm53, %v3140
  %3143 = vst.msk [vmem:[#allocation4 + $0x58] sm:$0xff] %vm53, %v3141
  %s3144 = scalar_lea.vmem [#allocation3], 384
  %v3145 = vld [vmem:[%s3144] ss:$2 sm:$0xff]
  %s3146 = scalar_lea.vmem [#allocation3], 400
  %v3147 = vld [vmem:[%s3146] ss:$2 sm:$0xff]
  %s3148 = scalar_lea.vmem [#allocation3], 385
  %v3149 = vld [vmem:[%s3148] ss:$2 sm:$0xff]
  %s3150 = scalar_lea.vmem [#allocation3], 401
  %v3151 = vld [vmem:[%s3150] ss:$2 sm:$0xff]
  %v3152 = vmax.f32 %v3145, %v3149
  %v3153 = vmax.f32 %v3147, %v3151
  %s3154 = scalar_lea.vmem [#allocation3], 416
  %v3155 = vld [vmem:[%s3154] ss:$2 sm:$0xff]
  %s3156 = scalar_lea.vmem [#allocation3], 432
  %v3157 = vld [vmem:[%s3156] ss:$2 sm:$0xff]
  %s3158 = scalar_lea.vmem [#allocation3], 417
  %v3159 = vld [vmem:[%s3158] ss:$2 sm:$0xff]
  %s3160 = scalar_lea.vmem [#allocation3], 433
  %v3161 = vld [vmem:[%s3160] ss:$2 sm:$0xff]
  %v3162 = vmax.f32 %v3155, %v3159
  %v3163 = vmax.f32 %v3157, %v3161
  %v3164 = vmax.f32 %v3152, %v3162
  %v3165 = vmax.f32 %v3153, %v3163
  %v3166 = vsub.f32 %v3164, %v2949
  %v3167 = vsub.f32 %v3165, %v2949
  %v3168 = vmul.f32 %v3166, %v2964
  %v3169 = vmul.f32 %v3167, %v2964
  %v3170 = vmax.f32 %v3168, 0.0
  %v3171 = vmax.f32 %v3169, 0.0
  %3172 = vst.msk [vmem:[#allocation4 + $0x60] sm:$0xff] %vm53, %v3170
  %3173 = vst.msk [vmem:[#allocation4 + $0x68] sm:$0xff] %vm53, %v3171
  %s3174 = scalar_lea.vmem [#allocation3], 448
  %v3175 = vld [vmem:[%s3174] ss:$2 sm:$0xff]
  %s3176 = scalar_lea.vmem [#allocation3], 464
  %v3177 = vld [vmem:[%s3176] ss:$2 sm:$0xff]
  %s3178 = scalar_lea.vmem [#allocation3], 449
  %v3179 = vld [vmem:[%s3178] ss:$2 sm:$0xff]
  %s3180 = scalar_lea.vmem [#allocation3], 465
  %v3181 = vld [vmem:[%s3180] ss:$2 sm:$0xff]
  %v3182 = vmax.f32 %v3175, %v3179
  %v3183 = vmax.f32 %v3177, %v3181
  %s3184 = scalar_lea.vmem [#allocation3], 480
  %v3185 = vld [vmem:[%s3184] ss:$2 sm:$0xff]
  %s3186 = scalar_lea.vmem [#allocation3], 496
  %v3187 = vld [vmem:[%s3186] ss:$2 sm:$0xff]
  %s3188 = scalar_lea.vmem [#allocation3], 481
  %v3189 = vld [vmem:[%s3188] ss:$2 sm:$0xff]
  %s3190 = scalar_lea.vmem [#allocation3], 497
  %v3191 = vld [vmem:[%s3190] ss:$2 sm:$0xff]
  %v3192 = vmax.f32 %v3185, %v3189
  %v3193 = vmax.f32 %v3187, %v3191
  %v3194 = vmax.f32 %v3182, %v3192
  %v3195 = vmax.f32 %v3183, %v3193
  %v3196 = vsub.f32 %v3194, %v2949
  %v3197 = vsub.f32 %v3195, %v2949
  %v3198 = vmul.f32 %v3196, %v2964
  %v3199 = vmul.f32 %v3197, %v2964
  %v3200 = vmax.f32 %v3198, 0.0
  %v3201 = vmax.f32 %v3199, 0.0
  %3202 = vst.msk [vmem:[#allocation4 + $0x70] sm:$0xff] %vm53, %v3200
  %3203 = vst.msk [vmem:[#allocation4 + $0x78] sm:$0xff] %vm53, %v3201
  %s3204 = scalar_lea.vmem [#allocation3], 512
  %v3205 = vld [vmem:[%s3204] ss:$2 sm:$0xff]
  %s3206 = scalar_lea.vmem [#allocation3], 528
  %v3207 = vld [vmem:[%s3206] ss:$2 sm:$0xff]
  %s3208 = scalar_lea.vmem [#allocation3], 513
  %v3209 = vld [vmem:[%s3208] ss:$2 sm:$0xff]
  %s3210 = scalar_lea.vmem [#allocation3], 529
  %v3211 = vld [vmem:[%s3210] ss:$2 sm:$0xff]
  %v3212 = vmax.f32 %v3205, %v3209
  %v3213 = vmax.f32 %v3207, %v3211
  %s3214 = scalar_lea.vmem [#allocation3], 544
  %v3215 = vld [vmem:[%s3214] ss:$2 sm:$0xff]
  %s3216 = scalar_lea.vmem [#allocation3], 560
  %v3217 = vld [vmem:[%s3216] ss:$2 sm:$0xff]
  %s3218 = scalar_lea.vmem [#allocation3], 545
  %v3219 = vld [vmem:[%s3218] ss:$2 sm:$0xff]
  %s3220 = scalar_lea.vmem [#allocation3], 561
  %v3221 = vld [vmem:[%s3220] ss:$2 sm:$0xff]
  %v3222 = vmax.f32 %v3215, %v3219
  %v3223 = vmax.f32 %v3217, %v3221
  %v3224 = vmax.f32 %v3212, %v3222
  %v3225 = vmax.f32 %v3213, %v3223
  %v3226 = vsub.f32 %v3224, %v2949
  %v3227 = vsub.f32 %v3225, %v2949
  %v3228 = vmul.f32 %v3226, %v2964
  %v3229 = vmul.f32 %v3227, %v2964
  %v3230 = vmax.f32 %v3228, 0.0
  %v3231 = vmax.f32 %v3229, 0.0
  %3232 = vst.msk [vmem:[#allocation4 + $0x80] sm:$0xff] %vm53, %v3230
  %3233 = vst.msk [vmem:[#allocation4 + $0x88] sm:$0xff] %vm53, %v3231
  %s3234 = scalar_lea.vmem [#allocation3], 576
  %v3235 = vld [vmem:[%s3234] ss:$2 sm:$0xff]
  %s3236 = scalar_lea.vmem [#allocation3], 592
  %v3237 = vld [vmem:[%s3236] ss:$2 sm:$0xff]
  %s3238 = scalar_lea.vmem [#allocation3], 577
  %v3239 = vld [vmem:[%s3238] ss:$2 sm:$0xff]
  %s3240 = scalar_lea.vmem [#allocation3], 593
  %v3241 = vld [vmem:[%s3240] ss:$2 sm:$0xff]
  %v3242 = vmax.f32 %v3235, %v3239
  %v3243 = vmax.f32 %v3237, %v3241
  %s3244 = scalar_lea.vmem [#allocation3], 608
  %v3245 = vld [vmem:[%s3244] ss:$2 sm:$0xff]
  %s3246 = scalar_lea.vmem [#allocation3], 624
  %v3247 = vld [vmem:[%s3246] ss:$2 sm:$0xff]
  %s3248 = scalar_lea.vmem [#allocation3], 609
  %v3249 = vld [vmem:[%s3248] ss:$2 sm:$0xff]
  %s3250 = scalar_lea.vmem [#allocation3], 625
  %v3251 = vld [vmem:[%s3250] ss:$2 sm:$0xff]
  %v3252 = vmax.f32 %v3245, %v3249
  %v3253 = vmax.f32 %v3247, %v3251
  %v3254 = vmax.f32 %v3242, %v3252
  %v3255 = vmax.f32 %v3243, %v3253
  %v3256 = vsub.f32 %v3254, %v2949
  %v3257 = vsub.f32 %v3255, %v2949
  %v3258 = vmul.f32 %v3256, %v2964
  %v3259 = vmul.f32 %v3257, %v2964
  %v3260 = vmax.f32 %v3258, 0.0
  %v3261 = vmax.f32 %v3259, 0.0
  %3262 = vst.msk [vmem:[#allocation4 + $0x90] sm:$0xff] %vm53, %v3260
  %3263 = vst.msk [vmem:[#allocation4 + $0x98] sm:$0xff] %vm53, %v3261
  %s3264 = scalar_lea.vmem [#allocation3], 640
  %v3265 = vld [vmem:[%s3264] ss:$2 sm:$0xff]
  %s3266 = scalar_lea.vmem [#allocation3], 656
  %v3267 = vld [vmem:[%s3266] ss:$2 sm:$0xff]
  %s3268 = scalar_lea.vmem [#allocation3], 641
  %v3269 = vld [vmem:[%s3268] ss:$2 sm:$0xff]
  %s3270 = scalar_lea.vmem [#allocation3], 657
  %v3271 = vld [vmem:[%s3270] ss:$2 sm:$0xff]
  %v3272 = vmax.f32 %v3265, %v3269
  %v3273 = vmax.f32 %v3267, %v3271
  %s3274 = scalar_lea.vmem [#allocation3], 672
  %v3275 = vld [vmem:[%s3274] ss:$2 sm:$0xff]
  %s3276 = scalar_lea.vmem [#allocation3], 688
  %v3277 = vld [vmem:[%s3276] ss:$2 sm:$0xff]
  %s3278 = scalar_lea.vmem [#allocation3], 673
  %v3279 = vld [vmem:[%s3278] ss:$2 sm:$0xff]
  %s3280 = scalar_lea.vmem [#allocation3], 689
  %v3281 = vld [vmem:[%s3280] ss:$2 sm:$0xff]
  %v3282 = vmax.f32 %v3275, %v3279
  %v3283 = vmax.f32 %v3277, %v3281
  %v3284 = vmax.f32 %v3272, %v3282
  %v3285 = vmax.f32 %v3273, %v3283
  %v3286 = vsub.f32 %v3284, %v2949
  %v3287 = vsub.f32 %v3285, %v2949
  %v3288 = vmul.f32 %v3286, %v2964
  %v3289 = vmul.f32 %v3287, %v2964
  %v3290 = vmax.f32 %v3288, 0.0
  %v3291 = vmax.f32 %v3289, 0.0
  %3292 = vst.msk [vmem:[#allocation4 + $0xa0] sm:$0xff] %vm53, %v3290
  %3293 = vst.msk [vmem:[#allocation4 + $0xa8] sm:$0xff] %vm53, %v3291
  %s3294 = scalar_lea.vmem [#allocation3], 704
  %v3295 = vld [vmem:[%s3294] ss:$2 sm:$0xff]
  %s3296 = scalar_lea.vmem [#allocation3], 720
  %v3297 = vld [vmem:[%s3296] ss:$2 sm:$0xff]
  %s3298 = scalar_lea.vmem [#allocation3], 705
  %v3299 = vld [vmem:[%s3298] ss:$2 sm:$0xff]
  %s3300 = scalar_lea.vmem [#allocation3], 721
  %v3301 = vld [vmem:[%s3300] ss:$2 sm:$0xff]
  %v3302 = vmax.f32 %v3295, %v3299
  %v3303 = vmax.f32 %v3297, %v3301
  %s3304 = scalar_lea.vmem [#allocation3], 736
  %v3305 = vld [vmem:[%s3304] ss:$2 sm:$0xff]
  %s3306 = scalar_lea.vmem [#allocation3], 752
  %v3307 = vld [vmem:[%s3306] ss:$2 sm:$0xff]
  %s3308 = scalar_lea.vmem [#allocation3], 737
  %v3309 = vld [vmem:[%s3308] ss:$2 sm:$0xff]
  %s3310 = scalar_lea.vmem [#allocation3], 753
  %v3311 = vld [vmem:[%s3310] ss:$2 sm:$0xff]
  %v3312 = vmax.f32 %v3305, %v3309
  %v3313 = vmax.f32 %v3307, %v3311
  %v3314 = vmax.f32 %v3302, %v3312
  %v3315 = vmax.f32 %v3303, %v3313
  %v3316 = vsub.f32 %v3314, %v2949
  %v3317 = vsub.f32 %v3315, %v2949
  %v3318 = vmul.f32 %v3316, %v2964
  %v3319 = vmul.f32 %v3317, %v2964
  %v3320 = vmax.f32 %v3318, 0.0
  %v3321 = vmax.f32 %v3319, 0.0
  %3322 = vst.msk [vmem:[#allocation4 + $0xb0] sm:$0xff] %vm53, %v3320
  %3323 = vst.msk [vmem:[#allocation4 + $0xb8] sm:$0xff] %vm53, %v3321
  %s3324 = scalar_lea.vmem [#allocation3], 768
  %v3325 = vld [vmem:[%s3324] ss:$2 sm:$0xff]
  %s3326 = scalar_lea.vmem [#allocation3], 784
  %v3327 = vld [vmem:[%s3326] ss:$2 sm:$0xff]
  %s3328 = scalar_lea.vmem [#allocation3], 769
  %v3329 = vld [vmem:[%s3328] ss:$2 sm:$0xff]
  %s3330 = scalar_lea.vmem [#allocation3], 785
  %v3331 = vld [vmem:[%s3330] ss:$2 sm:$0xff]
  %v3332 = vmax.f32 %v3325, %v3329
  %v3333 = vmax.f32 %v3327, %v3331
  %s3334 = scalar_lea.vmem [#allocation3], 800
  %v3335 = vld [vmem:[%s3334] ss:$2 sm:$0xff]
  %s3336 = scalar_lea.vmem [#allocation3], 816
  %v3337 = vld [vmem:[%s3336] ss:$2 sm:$0xff]
  %s3338 = scalar_lea.vmem [#allocation3], 801
  %v3339 = vld [vmem:[%s3338] ss:$2 sm:$0xff]
  %s3340 = scalar_lea.vmem [#allocation3], 817
  %v3341 = vld [vmem:[%s3340] ss:$2 sm:$0xff]
  %v3342 = vmax.f32 %v3335, %v3339
  %v3343 = vmax.f32 %v3337, %v3341
  %v3344 = vmax.f32 %v3332, %v3342
  %v3345 = vmax.f32 %v3333, %v3343
  %v3346 = vsub.f32 %v3344, %v2949
  %v3347 = vsub.f32 %v3345, %v2949
  %v3348 = vmul.f32 %v3346, %v2964
  %v3349 = vmul.f32 %v3347, %v2964
  %v3350 = vmax.f32 %v3348, 0.0
  %v3351 = vmax.f32 %v3349, 0.0
  %3352 = vst.msk [vmem:[#allocation4 + $0xc0] sm:$0xff] %vm53, %v3350
  %3353 = vst.msk [vmem:[#allocation4 + $0xc8] sm:$0xff] %vm53, %v3351
  %s3354 = scalar_lea.vmem [#allocation3], 832
  %v3355 = vld [vmem:[%s3354] ss:$2 sm:$0xff]
  %s3356 = scalar_lea.vmem [#allocation3], 848
  %v3357 = vld [vmem:[%s3356] ss:$2 sm:$0xff]
  %s3358 = scalar_lea.vmem [#allocation3], 833
  %v3359 = vld [vmem:[%s3358] ss:$2 sm:$0xff]
  %s3360 = scalar_lea.vmem [#allocation3], 849
  %v3361 = vld [vmem:[%s3360] ss:$2 sm:$0xff]
  %v3362 = vmax.f32 %v3355, %v3359
  %v3363 = vmax.f32 %v3357, %v3361
  %s3364 = scalar_lea.vmem [#allocation3], 864
  %v3365 = vld [vmem:[%s3364] ss:$2 sm:$0xff]
  %s3366 = scalar_lea.vmem [#allocation3], 880
  %v3367 = vld [vmem:[%s3366] ss:$2 sm:$0xff]
  %s3368 = scalar_lea.vmem [#allocation3], 865
  %v3369 = vld [vmem:[%s3368] ss:$2 sm:$0xff]
  %s3370 = scalar_lea.vmem [#allocation3], 881
  %v3371 = vld [vmem:[%s3370] ss:$2 sm:$0xff]
  %v3372 = vmax.f32 %v3365, %v3369
  %v3373 = vmax.f32 %v3367, %v3371
  %v3374 = vmax.f32 %v3362, %v3372
  %v3375 = vmax.f32 %v3363, %v3373
  %v3376 = vsub.f32 %v3374, %v2949
  %v3377 = vsub.f32 %v3375, %v2949
  %v3378 = vmul.f32 %v3376, %v2964
  %v3379 = vmul.f32 %v3377, %v2964
  %v3380 = vmax.f32 %v3378, 0.0
  %v3381 = vmax.f32 %v3379, 0.0
  %3382 = vst.msk [vmem:[#allocation4 + $0xd0] sm:$0xff] %vm53, %v3380
  %3383 = vst.msk [vmem:[#allocation4 + $0xd8] sm:$0xff] %vm53, %v3381
  %s3384 = scalar_lea.vmem [#allocation3], 896
  %v3385 = vld [vmem:[%s3384] ss:$2 sm:$0xff]
  %s3386 = scalar_lea.vmem [#allocation3], 912
  %v3387 = vld [vmem:[%s3386] ss:$2 sm:$0xff]
  %s3388 = scalar_lea.vmem [#allocation3], 897
  %v3389 = vld [vmem:[%s3388] ss:$2 sm:$0xff]
  %s3390 = scalar_lea.vmem [#allocation3], 913
  %v3391 = vld [vmem:[%s3390] ss:$2 sm:$0xff]
  %v3392 = vmax.f32 %v3385, %v3389
  %v3393 = vmax.f32 %v3387, %v3391
  %s3394 = scalar_lea.vmem [#allocation3], 928
  %v3395 = vld [vmem:[%s3394] ss:$2 sm:$0xff]
  %s3396 = scalar_lea.vmem [#allocation3], 944
  %v3397 = vld [vmem:[%s3396] ss:$2 sm:$0xff]
  %s3398 = scalar_lea.vmem [#allocation3], 929
  %v3399 = vld [vmem:[%s3398] ss:$2 sm:$0xff]
  %s3400 = scalar_lea.vmem [#allocation3], 945
  %v3401 = vld [vmem:[%s3400] ss:$2 sm:$0xff]
  %v3402 = vmax.f32 %v3395, %v3399
  %v3403 = vmax.f32 %v3397, %v3401
  %v3404 = vmax.f32 %v3392, %v3402
  %v3405 = vmax.f32 %v3393, %v3403
  %v3406 = vsub.f32 %v3404, %v2949
  %v3407 = vsub.f32 %v3405, %v2949
  %v3408 = vmul.f32 %v3406, %v2964
  %v3409 = vmul.f32 %v3407, %v2964
  %v3410 = vmax.f32 %v3408, 0.0
  %v3411 = vmax.f32 %v3409, 0.0
  %3412 = vst.msk [vmem:[#allocation4 + $0xe0] sm:$0xff] %vm53, %v3410
  %3413 = vst.msk [vmem:[#allocation4 + $0xe8] sm:$0xff] %vm53, %v3411
  %s3414 = scalar_lea.vmem [#allocation3], 960
  %v3415 = vld [vmem:[%s3414] ss:$2 sm:$0xff]
  %s3416 = scalar_lea.vmem [#allocation3], 976
  %v3417 = vld [vmem:[%s3416] ss:$2 sm:$0xff]
  %s3418 = scalar_lea.vmem [#allocation3], 961
  %v3419 = vld [vmem:[%s3418] ss:$2 sm:$0xff]
  %s3420 = scalar_lea.vmem [#allocation3], 977
  %v3421 = vld [vmem:[%s3420] ss:$2 sm:$0xff]
  %v3422 = vmax.f32 %v3415, %v3419
  %v3423 = vmax.f32 %v3417, %v3421
  %s3424 = scalar_lea.vmem [#allocation3], 992
  %v3425 = vld [vmem:[%s3424] ss:$2 sm:$0xff]
  %s3426 = scalar_lea.vmem [#allocation3], 1008
  %v3427 = vld [vmem:[%s3426] ss:$2 sm:$0xff]
  %s3428 = scalar_lea.vmem [#allocation3], 993
  %v3429 = vld [vmem:[%s3428] ss:$2 sm:$0xff]
  %s3430 = scalar_lea.vmem [#allocation3], 1009
  %v3431 = vld [vmem:[%s3430] ss:$2 sm:$0xff]
  %v3432 = vmax.f32 %v3425, %v3429
  %v3433 = vmax.f32 %v3427, %v3431
  %v3434 = vmax.f32 %v3422, %v3432
  %v3435 = vmax.f32 %v3423, %v3433
  %v3436 = vsub.f32 %v3434, %v2949
  %v3437 = vsub.f32 %v3435, %v2949
  %v3438 = vmul.f32 %v3436, %v2964
  %v3439 = vmul.f32 %v3437, %v2964
  %v3440 = vmax.f32 %v3438, 0.0
  %v3441 = vmax.f32 %v3439, 0.0
  %3442 = vst.msk [vmem:[#allocation4 + $0xf0] sm:$0xff] %vm53, %v3440
  %3443 = vst.msk [vmem:[#allocation4 + $0xf8] sm:$0xff] %vm53, %v3441
  %s3444 = scalar_lea.vmem [#allocation3], 1024
  %v3445 = vld [vmem:[%s3444] ss:$2 sm:$0xff]
  %s3446 = scalar_lea.vmem [#allocation3], 1040
  %v3447 = vld [vmem:[%s3446] ss:$2 sm:$0xff]
  %s3448 = scalar_lea.vmem [#allocation3], 1025
  %v3449 = vld [vmem:[%s3448] ss:$2 sm:$0xff]
  %s3450 = scalar_lea.vmem [#allocation3], 1041
  %v3451 = vld [vmem:[%s3450] ss:$2 sm:$0xff]
  %v3452 = vmax.f32 %v3445, %v3449
  %v3453 = vmax.f32 %v3447, %v3451
  %s3454 = scalar_lea.vmem [#allocation3], 1056
  %v3455 = vld [vmem:[%s3454] ss:$2 sm:$0xff]
  %s3456 = scalar_lea.vmem [#allocation3], 1072
  %v3457 = vld [vmem:[%s3456] ss:$2 sm:$0xff]
  %s3458 = scalar_lea.vmem [#allocation3], 1057
  %v3459 = vld [vmem:[%s3458] ss:$2 sm:$0xff]
  %s3460 = scalar_lea.vmem [#allocation3], 1073
  %v3461 = vld [vmem:[%s3460] ss:$2 sm:$0xff]
  %v3462 = vmax.f32 %v3455, %v3459
  %v3463 = vmax.f32 %v3457, %v3461
  %v3464 = vmax.f32 %v3452, %v3462
  %v3465 = vmax.f32 %v3453, %v3463
  %v3466 = vsub.f32 %v3464, %v2949
  %v3467 = vsub.f32 %v3465, %v2949
  %v3468 = vmul.f32 %v3466, %v2964
  %v3469 = vmul.f32 %v3467, %v2964
  %v3470 = vmax.f32 %v3468, 0.0
  %v3471 = vmax.f32 %v3469, 0.0
  %3472 = vst.msk [vmem:[#allocation4 + $0x100] sm:$0xff] %vm53, %v3470
  %3473 = vst.msk [vmem:[#allocation4 + $0x108] sm:$0xff] %vm53, %v3471
  %s3474 = scalar_lea.vmem [#allocation3], 1088
  %v3475 = vld [vmem:[%s3474] ss:$2 sm:$0xff]
  %s3476 = scalar_lea.vmem [#allocation3], 1104
  %v3477 = vld [vmem:[%s3476] ss:$2 sm:$0xff]
  %s3478 = scalar_lea.vmem [#allocation3], 1089
  %v3479 = vld [vmem:[%s3478] ss:$2 sm:$0xff]
  %s3480 = scalar_lea.vmem [#allocation3], 1105
  %v3481 = vld [vmem:[%s3480] ss:$2 sm:$0xff]
  %v3482 = vmax.f32 %v3475, %v3479
  %v3483 = vmax.f32 %v3477, %v3481
  %s3484 = scalar_lea.vmem [#allocation3], 1120
  %v3485 = vld [vmem:[%s3484] ss:$2 sm:$0xff]
  %s3486 = scalar_lea.vmem [#allocation3], 1136
  %v3487 = vld [vmem:[%s3486] ss:$2 sm:$0xff]
  %s3488 = scalar_lea.vmem [#allocation3], 1121
  %v3489 = vld [vmem:[%s3488] ss:$2 sm:$0xff]
  %s3490 = scalar_lea.vmem [#allocation3], 1137
  %v3491 = vld [vmem:[%s3490] ss:$2 sm:$0xff]
  %v3492 = vmax.f32 %v3485, %v3489
  %v3493 = vmax.f32 %v3487, %v3491
  %v3494 = vmax.f32 %v3482, %v3492
  %v3495 = vmax.f32 %v3483, %v3493
  %v3496 = vsub.f32 %v3494, %v2949
  %v3497 = vsub.f32 %v3495, %v2949
  %v3498 = vmul.f32 %v3496, %v2964
  %v3499 = vmul.f32 %v3497, %v2964
  %v3500 = vmax.f32 %v3498, 0.0
  %v3501 = vmax.f32 %v3499, 0.0
  %3502 = vst.msk [vmem:[#allocation4 + $0x110] sm:$0xff] %vm53, %v3500
  %3503 = vst.msk [vmem:[#allocation4 + $0x118] sm:$0xff] %vm53, %v3501
  %s3504 = scalar_lea.vmem [#allocation3], 1152
  %v3505 = vld [vmem:[%s3504] ss:$2 sm:$0xff]
  %s3506 = scalar_lea.vmem [#allocation3], 1168
  %v3507 = vld [vmem:[%s3506] ss:$2 sm:$0xff]
  %s3508 = scalar_lea.vmem [#allocation3], 1153
  %v3509 = vld [vmem:[%s3508] ss:$2 sm:$0xff]
  %s3510 = scalar_lea.vmem [#allocation3], 1169
  %v3511 = vld [vmem:[%s3510] ss:$2 sm:$0xff]
  %v3512 = vmax.f32 %v3505, %v3509
  %v3513 = vmax.f32 %v3507, %v3511
  %s3514 = scalar_lea.vmem [#allocation3], 1184
  %v3515 = vld [vmem:[%s3514] ss:$2 sm:$0xff]
  %s3516 = scalar_lea.vmem [#allocation3], 1200
  %v3517 = vld [vmem:[%s3516] ss:$2 sm:$0xff]
  %s3518 = scalar_lea.vmem [#allocation3], 1185
  %v3519 = vld [vmem:[%s3518] ss:$2 sm:$0xff]
  %s3520 = scalar_lea.vmem [#allocation3], 1201
  %v3521 = vld [vmem:[%s3520] ss:$2 sm:$0xff]
  %v3522 = vmax.f32 %v3515, %v3519
  %v3523 = vmax.f32 %v3517, %v3521
  %v3524 = vmax.f32 %v3512, %v3522
  %v3525 = vmax.f32 %v3513, %v3523
  %v3526 = vsub.f32 %v3524, %v2949
  %v3527 = vsub.f32 %v3525, %v2949
  %v3528 = vmul.f32 %v3526, %v2964
  %v3529 = vmul.f32 %v3527, %v2964
  %v3530 = vmax.f32 %v3528, 0.0
  %v3531 = vmax.f32 %v3529, 0.0
  %3532 = vst.msk [vmem:[#allocation4 + $0x120] sm:$0xff] %vm53, %v3530
  %3533 = vst.msk [vmem:[#allocation4 + $0x128] sm:$0xff] %vm53, %v3531
  %s3534 = scalar_lea.vmem [#allocation3], 1216
  %v3535 = vld [vmem:[%s3534] ss:$2 sm:$0xff]
  %s3536 = scalar_lea.vmem [#allocation3], 1232
  %v3537 = vld [vmem:[%s3536] ss:$2 sm:$0xff]
  %s3538 = scalar_lea.vmem [#allocation3], 1217
  %v3539 = vld [vmem:[%s3538] ss:$2 sm:$0xff]
  %s3540 = scalar_lea.vmem [#allocation3], 1233
  %v3541 = vld [vmem:[%s3540] ss:$2 sm:$0xff]
  %v3542 = vmax.f32 %v3535, %v3539
  %v3543 = vmax.f32 %v3537, %v3541
  %s3544 = scalar_lea.vmem [#allocation3], 1248
  %v3545 = vld [vmem:[%s3544] ss:$2 sm:$0xff]
  %s3546 = scalar_lea.vmem [#allocation3], 1264
  %v3547 = vld [vmem:[%s3546] ss:$2 sm:$0xff]
  %s3548 = scalar_lea.vmem [#allocation3], 1249
  %v3549 = vld [vmem:[%s3548] ss:$2 sm:$0xff]
  %s3550 = scalar_lea.vmem [#allocation3], 1265
  %v3551 = vld [vmem:[%s3550] ss:$2 sm:$0xff]
  %v3552 = vmax.f32 %v3545, %v3549
  %v3553 = vmax.f32 %v3547, %v3551
  %v3554 = vmax.f32 %v3542, %v3552
  %v3555 = vmax.f32 %v3543, %v3553
  %v3556 = vsub.f32 %v3554, %v2949
  %v3557 = vsub.f32 %v3555, %v2949
  %v3558 = vmul.f32 %v3556, %v2964
  %v3559 = vmul.f32 %v3557, %v2964
  %v3560 = vmax.f32 %v3558, 0.0
  %v3561 = vmax.f32 %v3559, 0.0
  %3562 = vst.msk [vmem:[#allocation4 + $0x130] sm:$0xff] %vm53, %v3560
  %3563 = vst.msk [vmem:[#allocation4 + $0x138] sm:$0xff] %vm53, %v3561
  %s3564 = scalar_lea.vmem [#allocation3], 1280
  %v3565 = vld [vmem:[%s3564] ss:$2 sm:$0xff]
  %s3566 = scalar_lea.vmem [#allocation3], 1296
  %v3567 = vld [vmem:[%s3566] ss:$2 sm:$0xff]
  %s3568 = scalar_lea.vmem [#allocation3], 1281
  %v3569 = vld [vmem:[%s3568] ss:$2 sm:$0xff]
  %s3570 = scalar_lea.vmem [#allocation3], 1297
  %v3571 = vld [vmem:[%s3570] ss:$2 sm:$0xff]
  %v3572 = vmax.f32 %v3565, %v3569
  %v3573 = vmax.f32 %v3567, %v3571
  %s3574 = scalar_lea.vmem [#allocation3], 1312
  %v3575 = vld [vmem:[%s3574] ss:$2 sm:$0xff]
  %s3576 = scalar_lea.vmem [#allocation3], 1328
  %v3577 = vld [vmem:[%s3576] ss:$2 sm:$0xff]
  %s3578 = scalar_lea.vmem [#allocation3], 1313
  %v3579 = vld [vmem:[%s3578] ss:$2 sm:$0xff]
  %s3580 = scalar_lea.vmem [#allocation3], 1329
  %v3581 = vld [vmem:[%s3580] ss:$2 sm:$0xff]
  %v3582 = vmax.f32 %v3575, %v3579
  %v3583 = vmax.f32 %v3577, %v3581
  %v3584 = vmax.f32 %v3572, %v3582
  %v3585 = vmax.f32 %v3573, %v3583
  %v3586 = vsub.f32 %v3584, %v2949
  %v3587 = vsub.f32 %v3585, %v2949
  %v3588 = vmul.f32 %v3586, %v2964
  %v3589 = vmul.f32 %v3587, %v2964
  %v3590 = vmax.f32 %v3588, 0.0
  %v3591 = vmax.f32 %v3589, 0.0
  %3592 = vst.msk [vmem:[#allocation4 + $0x140] sm:$0xff] %vm53, %v3590
  %3593 = vst.msk [vmem:[#allocation4 + $0x148] sm:$0xff] %vm53, %v3591
  %s3594 = scalar_lea.vmem [#allocation3], 1344
  %v3595 = vld [vmem:[%s3594] ss:$2 sm:$0xff]
  %s3596 = scalar_lea.vmem [#allocation3], 1360
  %v3597 = vld [vmem:[%s3596] ss:$2 sm:$0xff]
  %s3598 = scalar_lea.vmem [#allocation3], 1345
  %v3599 = vld [vmem:[%s3598] ss:$2 sm:$0xff]
  %s3600 = scalar_lea.vmem [#allocation3], 1361
  %v3601 = vld [vmem:[%s3600] ss:$2 sm:$0xff]
  %v3602 = vmax.f32 %v3595, %v3599
  %v3603 = vmax.f32 %v3597, %v3601
  %s3604 = scalar_lea.vmem [#allocation3], 1376
  %v3605 = vld [vmem:[%s3604] ss:$2 sm:$0xff]
  %s3606 = scalar_lea.vmem [#allocation3], 1392
  %v3607 = vld [vmem:[%s3606] ss:$2 sm:$0xff]
  %s3608 = scalar_lea.vmem [#allocation3], 1377
  %v3609 = vld [vmem:[%s3608] ss:$2 sm:$0xff]
  %s3610 = scalar_lea.vmem [#allocation3], 1393
  %v3611 = vld [vmem:[%s3610] ss:$2 sm:$0xff]
  %v3612 = vmax.f32 %v3605, %v3609
  %v3613 = vmax.f32 %v3607, %v3611
  %v3614 = vmax.f32 %v3602, %v3612
  %v3615 = vmax.f32 %v3603, %v3613
  %v3616 = vsub.f32 %v3614, %v2949
  %v3617 = vsub.f32 %v3615, %v2949
  %v3618 = vmul.f32 %v3616, %v2964
  %v3619 = vmul.f32 %v3617, %v2964
  %v3620 = vmax.f32 %v3618, 0.0
  %v3621 = vmax.f32 %v3619, 0.0
  %3622 = vst.msk [vmem:[#allocation4 + $0x150] sm:$0xff] %vm53, %v3620
  %3623 = vst.msk [vmem:[#allocation4 + $0x158] sm:$0xff] %vm53, %v3621
  %s3624 = scalar_lea.vmem [#allocation3], 1408
  %v3625 = vld [vmem:[%s3624] ss:$2 sm:$0xff]
  %s3626 = scalar_lea.vmem [#allocation3], 1424
  %v3627 = vld [vmem:[%s3626] ss:$2 sm:$0xff]
  %s3628 = scalar_lea.vmem [#allocation3], 1409
  %v3629 = vld [vmem:[%s3628] ss:$2 sm:$0xff]
  %s3630 = scalar_lea.vmem [#allocation3], 1425
  %v3631 = vld [vmem:[%s3630] ss:$2 sm:$0xff]
  %v3632 = vmax.f32 %v3625, %v3629
  %v3633 = vmax.f32 %v3627, %v3631
  %s3634 = scalar_lea.vmem [#allocation3], 1440
  %v3635 = vld [vmem:[%s3634] ss:$2 sm:$0xff]
  %s3636 = scalar_lea.vmem [#allocation3], 1456
  %v3637 = vld [vmem:[%s3636] ss:$2 sm:$0xff]
  %s3638 = scalar_lea.vmem [#allocation3], 1441
  %v3639 = vld [vmem:[%s3638] ss:$2 sm:$0xff]
  %s3640 = scalar_lea.vmem [#allocation3], 1457
  %v3641 = vld [vmem:[%s3640] ss:$2 sm:$0xff]
  %v3642 = vmax.f32 %v3635, %v3639
  %v3643 = vmax.f32 %v3637, %v3641
  %v3644 = vmax.f32 %v3632, %v3642
  %v3645 = vmax.f32 %v3633, %v3643
  %v3646 = vsub.f32 %v3644, %v2949
  %v3647 = vsub.f32 %v3645, %v2949
  %v3648 = vmul.f32 %v3646, %v2964
  %v3649 = vmul.f32 %v3647, %v2964
  %v3650 = vmax.f32 %v3648, 0.0
  %v3651 = vmax.f32 %v3649, 0.0
  %3652 = vst.msk [vmem:[#allocation4 + $0x160] sm:$0xff] %vm53, %v3650
  %3653 = vst.msk [vmem:[#allocation4 + $0x168] sm:$0xff] %vm53, %v3651
  %s3654 = scalar_lea.vmem [#allocation3], 1472
  %v3655 = vld [vmem:[%s3654] ss:$2 sm:$0xff]
  %s3656 = scalar_lea.vmem [#allocation3], 1488
  %v3657 = vld [vmem:[%s3656] ss:$2 sm:$0xff]
  %s3658 = scalar_lea.vmem [#allocation3], 1473
  %v3659 = vld [vmem:[%s3658] ss:$2 sm:$0xff]
  %s3660 = scalar_lea.vmem [#allocation3], 1489
  %v3661 = vld [vmem:[%s3660] ss:$2 sm:$0xff]
  %v3662 = vmax.f32 %v3655, %v3659
  %v3663 = vmax.f32 %v3657, %v3661
  %s3664 = scalar_lea.vmem [#allocation3], 1504
  %v3665 = vld [vmem:[%s3664] ss:$2 sm:$0xff]
  %s3666 = scalar_lea.vmem [#allocation3], 1520
  %v3667 = vld [vmem:[%s3666] ss:$2 sm:$0xff]
  %s3668 = scalar_lea.vmem [#allocation3], 1505
  %v3669 = vld [vmem:[%s3668] ss:$2 sm:$0xff]
  %s3670 = scalar_lea.vmem [#allocation3], 1521
  %v3671 = vld [vmem:[%s3670] ss:$2 sm:$0xff]
  %v3672 = vmax.f32 %v3665, %v3669
  %v3673 = vmax.f32 %v3667, %v3671
  %v3674 = vmax.f32 %v3662, %v3672
  %v3675 = vmax.f32 %v3663, %v3673
  %v3676 = vsub.f32 %v3674, %v2949
  %v3677 = vsub.f32 %v3675, %v2949
  %v3678 = vmul.f32 %v3676, %v2964
  %v3679 = vmul.f32 %v3677, %v2964
  %v3680 = vmax.f32 %v3678, 0.0
  %v3681 = vmax.f32 %v3679, 0.0
  %3682 = vst.msk [vmem:[#allocation4 + $0x170] sm:$0xff] %vm53, %v3680
  %3683 = vst.msk [vmem:[#allocation4 + $0x178] sm:$0xff] %vm53, %v3681
  %s3684 = scalar_lea.vmem [#allocation3], 1536
  %v3685 = vld [vmem:[%s3684] ss:$2 sm:$0xff]
  %s3686 = scalar_lea.vmem [#allocation3], 1552
  %v3687 = vld [vmem:[%s3686] ss:$2 sm:$0xff]
  %s3688 = scalar_lea.vmem [#allocation3], 1537
  %v3689 = vld [vmem:[%s3688] ss:$2 sm:$0xff]
  %s3690 = scalar_lea.vmem [#allocation3], 1553
  %v3691 = vld [vmem:[%s3690] ss:$2 sm:$0xff]
  %v3692 = vmax.f32 %v3685, %v3689
  %v3693 = vmax.f32 %v3687, %v3691
  %s3694 = scalar_lea.vmem [#allocation3], 1568
  %v3695 = vld [vmem:[%s3694] ss:$2 sm:$0xff]
  %s3696 = scalar_lea.vmem [#allocation3], 1584
  %v3697 = vld [vmem:[%s3696] ss:$2 sm:$0xff]
  %s3698 = scalar_lea.vmem [#allocation3], 1569
  %v3699 = vld [vmem:[%s3698] ss:$2 sm:$0xff]
  %s3700 = scalar_lea.vmem [#allocation3], 1585
  %v3701 = vld [vmem:[%s3700] ss:$2 sm:$0xff]
  %v3702 = vmax.f32 %v3695, %v3699
  %v3703 = vmax.f32 %v3697, %v3701
  %v3704 = vmax.f32 %v3692, %v3702
  %v3705 = vmax.f32 %v3693, %v3703
  %v3706 = vsub.f32 %v3704, %v2949
  %v3707 = vsub.f32 %v3705, %v2949
  %v3708 = vmul.f32 %v3706, %v2964
  %v3709 = vmul.f32 %v3707, %v2964
  %v3710 = vmax.f32 %v3708, 0.0
  %v3711 = vmax.f32 %v3709, 0.0
  %3712 = vst.msk [vmem:[#allocation4 + $0x180] sm:$0xff] %vm53, %v3710
  %3713 = vst.msk [vmem:[#allocation4 + $0x188] sm:$0xff] %vm53, %v3711
  %s3714 = scalar_lea.vmem [#allocation3], 1600
  %v3715 = vld [vmem:[%s3714] ss:$2 sm:$0xff]
  %s3716 = scalar_lea.vmem [#allocation3], 1616
  %v3717 = vld [vmem:[%s3716] ss:$2 sm:$0xff]
  %s3718 = scalar_lea.vmem [#allocation3], 1601
  %v3719 = vld [vmem:[%s3718] ss:$2 sm:$0xff]
  %s3720 = scalar_lea.vmem [#allocation3], 1617
  %v3721 = vld [vmem:[%s3720] ss:$2 sm:$0xff]
  %v3722 = vmax.f32 %v3715, %v3719
  %v3723 = vmax.f32 %v3717, %v3721
  %s3724 = scalar_lea.vmem [#allocation3], 1632
  %v3725 = vld [vmem:[%s3724] ss:$2 sm:$0xff]
  %s3726 = scalar_lea.vmem [#allocation3], 1648
  %v3727 = vld [vmem:[%s3726] ss:$2 sm:$0xff]
  %s3728 = scalar_lea.vmem [#allocation3], 1633
  %v3729 = vld [vmem:[%s3728] ss:$2 sm:$0xff]
  %s3730 = scalar_lea.vmem [#allocation3], 1649
  %v3731 = vld [vmem:[%s3730] ss:$2 sm:$0xff]
  %v3732 = vmax.f32 %v3725, %v3729
  %v3733 = vmax.f32 %v3727, %v3731
  %v3734 = vmax.f32 %v3722, %v3732
  %v3735 = vmax.f32 %v3723, %v3733
  %v3736 = vsub.f32 %v3734, %v2949
  %v3737 = vsub.f32 %v3735, %v2949
  %v3738 = vmul.f32 %v3736, %v2964
  %v3739 = vmul.f32 %v3737, %v2964
  %v3740 = vmax.f32 %v3738, 0.0
  %v3741 = vmax.f32 %v3739, 0.0
  %3742 = vst.msk [vmem:[#allocation4 + $0x190] sm:$0xff] %vm53, %v3740
  %3743 = vst.msk [vmem:[#allocation4 + $0x198] sm:$0xff] %vm53, %v3741
  %s3744 = scalar_lea.vmem [#allocation3], 1664
  %v3745 = vld [vmem:[%s3744] ss:$2 sm:$0xff]
  %s3746 = scalar_lea.vmem [#allocation3], 1680
  %v3747 = vld [vmem:[%s3746] ss:$2 sm:$0xff]
  %s3748 = scalar_lea.vmem [#allocation3], 1665
  %v3749 = vld [vmem:[%s3748] ss:$2 sm:$0xff]
  %s3750 = scalar_lea.vmem [#allocation3], 1681
  %v3751 = vld [vmem:[%s3750] ss:$2 sm:$0xff]
  %v3752 = vmax.f32 %v3745, %v3749
  %v3753 = vmax.f32 %v3747, %v3751
  %s3754 = scalar_lea.vmem [#allocation3], 1696
  %v3755 = vld [vmem:[%s3754] ss:$2 sm:$0xff]
  %s3756 = scalar_lea.vmem [#allocation3], 1712
  %v3757 = vld [vmem:[%s3756] ss:$2 sm:$0xff]
  %s3758 = scalar_lea.vmem [#allocation3], 1697
  %v3759 = vld [vmem:[%s3758] ss:$2 sm:$0xff]
  %s3760 = scalar_lea.vmem [#allocation3], 1713
  %v3761 = vld [vmem:[%s3760] ss:$2 sm:$0xff]
  %v3762 = vmax.f32 %v3755, %v3759
  %v3763 = vmax.f32 %v3757, %v3761
  %v3764 = vmax.f32 %v3752, %v3762
  %v3765 = vmax.f32 %v3753, %v3763
  %v3766 = vsub.f32 %v3764, %v2949
  %v3767 = vsub.f32 %v3765, %v2949
  %v3768 = vmul.f32 %v3766, %v2964
  %v3769 = vmul.f32 %v3767, %v2964
  %v3770 = vmax.f32 %v3768, 0.0
  %v3771 = vmax.f32 %v3769, 0.0
  %3772 = vst.msk [vmem:[#allocation4 + $0x1a0] sm:$0xff] %vm53, %v3770
  %3773 = vst.msk [vmem:[#allocation4 + $0x1a8] sm:$0xff] %vm53, %v3771
  %s3774 = scalar_lea.vmem [#allocation3], 1728
  %v3775 = vld [vmem:[%s3774] ss:$2 sm:$0xff]
  %s3776 = scalar_lea.vmem [#allocation3], 1744
  %v3777 = vld [vmem:[%s3776] ss:$2 sm:$0xff]
  %s3778 = scalar_lea.vmem [#allocation3], 1729
  %v3779 = vld [vmem:[%s3778] ss:$2 sm:$0xff]
  %s3780 = scalar_lea.vmem [#allocation3], 1745
  %v3781 = vld [vmem:[%s3780] ss:$2 sm:$0xff]
  %v3782 = vmax.f32 %v3775, %v3779
  %v3783 = vmax.f32 %v3777, %v3781
  %s3784 = scalar_lea.vmem [#allocation3], 1760
  %v3785 = vld [vmem:[%s3784] ss:$2 sm:$0xff]
  %s3786 = scalar_lea.vmem [#allocation3], 1776
  %v3787 = vld [vmem:[%s3786] ss:$2 sm:$0xff]
  %s3788 = scalar_lea.vmem [#allocation3], 1761
  %v3789 = vld [vmem:[%s3788] ss:$2 sm:$0xff]
  %s3790 = scalar_lea.vmem [#allocation3], 1777
  %v3791 = vld [vmem:[%s3790] ss:$2 sm:$0xff]
  %v3792 = vmax.f32 %v3785, %v3789
  %v3793 = vmax.f32 %v3787, %v3791
  %v3794 = vmax.f32 %v3782, %v3792
  %v3795 = vmax.f32 %v3783, %v3793
  %v3796 = vsub.f32 %v3794, %v2949
  %v3797 = vsub.f32 %v3795, %v2949
  %v3798 = vmul.f32 %v3796, %v2964
  %v3799 = vmul.f32 %v3797, %v2964
  %v3800 = vmax.f32 %v3798, 0.0
  %v3801 = vmax.f32 %v3799, 0.0
  %3802 = vst.msk [vmem:[#allocation4 + $0x1b0] sm:$0xff] %vm53, %v3800
  %3803 = vst.msk [vmem:[#allocation4 + $0x1b8] sm:$0xff] %vm53, %v3801
  %s3804 = scalar_lea.vmem [#allocation3], 1792
  %v3805 = vld [vmem:[%s3804] ss:$2 sm:$0xff]
  %s3806 = scalar_lea.vmem [#allocation3], 1808
  %v3807 = vld [vmem:[%s3806] ss:$2 sm:$0xff]
  %s3808 = scalar_lea.vmem [#allocation3], 1793
  %v3809 = vld [vmem:[%s3808] ss:$2 sm:$0xff]
  %s3810 = scalar_lea.vmem [#allocation3], 1809
  %v3811 = vld [vmem:[%s3810] ss:$2 sm:$0xff]
  %v3812 = vmax.f32 %v3805, %v3809
  %v3813 = vmax.f32 %v3807, %v3811
  %s3814 = scalar_lea.vmem [#allocation3], 1824
  %v3815 = vld [vmem:[%s3814] ss:$2 sm:$0xff]
  %s3816 = scalar_lea.vmem [#allocation3], 1840
  %v3817 = vld [vmem:[%s3816] ss:$2 sm:$0xff]
  %s3818 = scalar_lea.vmem [#allocation3], 1825
  %v3819 = vld [vmem:[%s3818] ss:$2 sm:$0xff]
  %s3820 = scalar_lea.vmem [#allocation3], 1841
  %v3821 = vld [vmem:[%s3820] ss:$2 sm:$0xff]
  %v3822 = vmax.f32 %v3815, %v3819
  %v3823 = vmax.f32 %v3817, %v3821
  %v3824 = vmax.f32 %v3812, %v3822
  %v3825 = vmax.f32 %v3813, %v3823
  %v3826 = vsub.f32 %v3824, %v2949
  %v3827 = vsub.f32 %v3825, %v2949
  %v3828 = vmul.f32 %v3826, %v2964
  %v3829 = vmul.f32 %v3827, %v2964
  %v3830 = vmax.f32 %v3828, 0.0
  %v3831 = vmax.f32 %v3829, 0.0
  %3832 = vst.msk [vmem:[#allocation4 + $0x1c0] sm:$0xff] %vm53, %v3830
  %3833 = vst.msk [vmem:[#allocation4 + $0x1c8] sm:$0xff] %vm53, %v3831
  %s3834 = scalar_lea.vmem [#allocation3], 1856
  %v3835 = vld [vmem:[%s3834] ss:$2 sm:$0xff]
  %s3836 = scalar_lea.vmem [#allocation3], 1872
  %v3837 = vld [vmem:[%s3836] ss:$2 sm:$0xff]
  %s3838 = scalar_lea.vmem [#allocation3], 1857
  %v3839 = vld [vmem:[%s3838] ss:$2 sm:$0xff]
  %s3840 = scalar_lea.vmem [#allocation3], 1873
  %v3841 = vld [vmem:[%s3840] ss:$2 sm:$0xff]
  %v3842 = vmax.f32 %v3835, %v3839
  %v3843 = vmax.f32 %v3837, %v3841
  %s3844 = scalar_lea.vmem [#allocation3], 1888
  %v3845 = vld [vmem:[%s3844] ss:$2 sm:$0xff]
  %s3846 = scalar_lea.vmem [#allocation3], 1904
  %v3847 = vld [vmem:[%s3846] ss:$2 sm:$0xff]
  %s3848 = scalar_lea.vmem [#allocation3], 1889
  %v3849 = vld [vmem:[%s3848] ss:$2 sm:$0xff]
  %s3850 = scalar_lea.vmem [#allocation3], 1905
  %v3851 = vld [vmem:[%s3850] ss:$2 sm:$0xff]
  %v3852 = vmax.f32 %v3845, %v3849
  %v3853 = vmax.f32 %v3847, %v3851
  %v3854 = vmax.f32 %v3842, %v3852
  %v3855 = vmax.f32 %v3843, %v3853
  %v3856 = vsub.f32 %v3854, %v2949
  %v3857 = vsub.f32 %v3855, %v2949
  %v3858 = vmul.f32 %v3856, %v2964
  %v3859 = vmul.f32 %v3857, %v2964
  %v3860 = vmax.f32 %v3858, 0.0
  %v3861 = vmax.f32 %v3859, 0.0
  %3862 = vst.msk [vmem:[#allocation4 + $0x1d0] sm:$0xff] %vm53, %v3860
  %3863 = vst.msk [vmem:[#allocation4 + $0x1d8] sm:$0xff] %vm53, %v3861
  %s3864 = scalar_lea.vmem [#allocation3], 1920
  %v3865 = vld [vmem:[%s3864] ss:$2 sm:$0xff]
  %s3866 = scalar_lea.vmem [#allocation3], 1936
  %v3867 = vld [vmem:[%s3866] ss:$2 sm:$0xff]
  %s3868 = scalar_lea.vmem [#allocation3], 1921
  %v3869 = vld [vmem:[%s3868] ss:$2 sm:$0xff]
  %s3870 = scalar_lea.vmem [#allocation3], 1937
  %v3871 = vld [vmem:[%s3870] ss:$2 sm:$0xff]
  %v3872 = vmax.f32 %v3865, %v3869
  %v3873 = vmax.f32 %v3867, %v3871
  %s3874 = scalar_lea.vmem [#allocation3], 1952
  %v3875 = vld [vmem:[%s3874] ss:$2 sm:$0xff]
  %s3876 = scalar_lea.vmem [#allocation3], 1968
  %v3877 = vld [vmem:[%s3876] ss:$2 sm:$0xff]
  %s3878 = scalar_lea.vmem [#allocation3], 1953
  %v3879 = vld [vmem:[%s3878] ss:$2 sm:$0xff]
  %s3880 = scalar_lea.vmem [#allocation3], 1969
  %v3881 = vld [vmem:[%s3880] ss:$2 sm:$0xff]
  %v3882 = vmax.f32 %v3875, %v3879
  %v3883 = vmax.f32 %v3877, %v3881
  %v3884 = vmax.f32 %v3872, %v3882
  %v3885 = vmax.f32 %v3873, %v3883
  %v3886 = vsub.f32 %v3884, %v2949
  %v3887 = vsub.f32 %v3885, %v2949
  %v3888 = vmul.f32 %v3886, %v2964
  %v3889 = vmul.f32 %v3887, %v2964
  %v3890 = vmax.f32 %v3888, 0.0
  %v3891 = vmax.f32 %v3889, 0.0
  %3892 = vst.msk [vmem:[#allocation4 + $0x1e0] sm:$0xff] %vm53, %v3890
  %3893 = vst.msk [vmem:[#allocation4 + $0x1e8] sm:$0xff] %vm53, %v3891
  %s3894 = scalar_lea.vmem [#allocation3], 1984
  %v3895 = vld [vmem:[%s3894] ss:$2 sm:$0xff]
  %s3896 = scalar_lea.vmem [#allocation3], 2000
  %v3897 = vld [vmem:[%s3896] ss:$2 sm:$0xff]
  %s3898 = scalar_lea.vmem [#allocation3], 1985
  %v3899 = vld [vmem:[%s3898] ss:$2 sm:$0xff]
  %s3900 = scalar_lea.vmem [#allocation3], 2001
  %v3901 = vld [vmem:[%s3900] ss:$2 sm:$0xff]
  %v3902 = vmax.f32 %v3895, %v3899
  %v3903 = vmax.f32 %v3897, %v3901
  %s3904 = scalar_lea.vmem [#allocation3], 2016
  %v3905 = vld [vmem:[%s3904] ss:$2 sm:$0xff]
  %s3906 = scalar_lea.vmem [#allocation3], 2032
  %v3907 = vld [vmem:[%s3906] ss:$2 sm:$0xff]
  %s3908 = scalar_lea.vmem [#allocation3], 2017
  %v3909 = vld [vmem:[%s3908] ss:$2 sm:$0xff]
  %s3910 = scalar_lea.vmem [#allocation3], 2033
  %v3911 = vld [vmem:[%s3910] ss:$2 sm:$0xff]
  %v3912 = vmax.f32 %v3905, %v3909
  %v3913 = vmax.f32 %v3907, %v3911
  %v3914 = vmax.f32 %v3902, %v3912
  %v3915 = vmax.f32 %v3903, %v3913
  %v3916 = vsub.f32 %v3914, %v2949
  %v3917 = vsub.f32 %v3915, %v2949
  %v3918 = vmul.f32 %v3916, %v2964
  %v3919 = vmul.f32 %v3917, %v2964
  %v3920 = vmax.f32 %v3918, 0.0
  %v3921 = vmax.f32 %v3919, 0.0
  %3922 = vst.msk [vmem:[#allocation4 + $0x1f0] sm:$0xff] %vm53, %v3920
  %3923 = vst.msk [vmem:[#allocation4 + $0x1f8] sm:$0xff] %vm53, %v3921
  loop: start=0, step=1, limit=4
  $region76: #{cnn_forward.1} parent=0 // loop_pre_header
    _
  $region77: #{cnn_forward.1} parent=0 // loop_header
    %s3925 = sphi 0, %s3929
    %p3926 = scmp.ge.s32.totalorder %s3925, 4
    %v3930 = vphi 0.0, %v5323
    %v3931 = vphi 0.0, %v5393
  $region78: #{cnn_forward.1} parent=0 // loop_header_branch
    %3928 = sbr.rel (%p3926) target = $region82
  $region79: #{cnn_forward.1} parent=0 // loop_body
    %s3932 = smul.u32 %s3925, 128
    %s3933 = scalar_lea.vmem [#allocation4], %s3932
    %v3934 = vld [vmem:[%s3933] sm:$0xff]
    %v3935 = vld [vmem:[%s3933 + $0x8] sm:$0xff]
    %v3936 = vld [vmem:[%s3933 + $0x10] sm:$0xff]
    %v3937 = vld [vmem:[%s3933 + $0x18] sm:$0xff]
    %v3938 = vld [vmem:[%s3933 + $0x20] sm:$0xff]
    %v3939 = vld [vmem:[%s3933 + $0x28] sm:$0xff]
    %v3940 = vld [vmem:[%s3933 + $0x30] sm:$0xff]
    %v3941 = vld [vmem:[%s3933 + $0x38] sm:$0xff]
    %v3942 = vld [vmem:[%s3933 + $0x40] sm:$0xff]
    %v3943 = vld [vmem:[%s3933 + $0x48] sm:$0xff]
    %v3944 = vld [vmem:[%s3933 + $0x50] sm:$0xff]
    %v3945 = vld [vmem:[%s3933 + $0x58] sm:$0xff]
    %v3946 = vld [vmem:[%s3933 + $0x60] sm:$0xff]
    %v3947 = vld [vmem:[%s3933 + $0x68] sm:$0xff]
    %v3948 = vld [vmem:[%s3933 + $0x70] sm:$0xff]
    %v3949 = vld [vmem:[%s3933 + $0x78] sm:$0xff]
    %v3950 = vpack.c.bf16 %v3935, %v3934
    %v3951 = vpack.c.bf16 %v3937, %v3936
    %v3952 = vpack.c.bf16 %v3939, %v3938
    %v3953 = vpack.c.bf16 %v3941, %v3940
    %v3954 = vpack.c.bf16 %v3943, %v3942
    %v3955 = vpack.c.bf16 %v3945, %v3944
    %v3956 = vpack.c.bf16 %v3947, %v3946
    %v3957 = vpack.c.bf16 %v3949, %v3948
    %v3958 = vld [vmem:[%s5] sm:$0xf]
    %v3959 = vld [vmem:[%s5 + $0x4] sm:$0xf]
    %v3960 = vld [vmem:[%s5 + $0x8] sm:$0xf]
    %v3961 = vld [vmem:[%s5 + $0xc] sm:$0xf]
    %s3962 = sadd.s32 %s3932, 1
    %s3963 = scalar_lea.vmem [#allocation4], %s3962
    %v3964 = vld [vmem:[%s3963] sm:$0xff]
    %v3965 = vld [vmem:[%s3963 + $0x8] sm:$0xff]
    %v3966 = vld [vmem:[%s3963 + $0x10] sm:$0xff]
    %v3967 = vld [vmem:[%s3963 + $0x18] sm:$0xff]
    %v3968 = vld [vmem:[%s3963 + $0x20] sm:$0xff]
    %v3969 = vld [vmem:[%s3963 + $0x28] sm:$0xff]
    %v3970 = vld [vmem:[%s3963 + $0x30] sm:$0xff]
    %v3971 = vld [vmem:[%s3963 + $0x38] sm:$0xff]
    %v3972 = vld [vmem:[%s3963 + $0x40] sm:$0xff]
    %v3973 = vld [vmem:[%s3963 + $0x48] sm:$0xff]
    %v3974 = vld [vmem:[%s3963 + $0x50] sm:$0xff]
    %v3975 = vld [vmem:[%s3963 + $0x58] sm:$0xff]
    %v3976 = vld [vmem:[%s3963 + $0x60] sm:$0xff]
    %v3977 = vld [vmem:[%s3963 + $0x68] sm:$0xff]
    %v3978 = vld [vmem:[%s3963 + $0x70] sm:$0xff]
    %v3979 = vld [vmem:[%s3963 + $0x78] sm:$0xff]
    %v3980 = vpack.c.bf16 %v3965, %v3964
    %v3981 = vpack.c.bf16 %v3967, %v3966
    %v3982 = vpack.c.bf16 %v3969, %v3968
    %v3983 = vpack.c.bf16 %v3971, %v3970
    %v3984 = vpack.c.bf16 %v3973, %v3972
    %v3985 = vpack.c.bf16 %v3975, %v3974
    %v3986 = vpack.c.bf16 %v3977, %v3976
    %v3987 = vpack.c.bf16 %v3979, %v3978
    %s3988 = scalar_lea.vmem %s5, 16
    %v3989 = vld [vmem:[%s3988] sm:$0xf]
    %v3990 = vld [vmem:[%s3988 + $0x4] sm:$0xf]
    %v3991 = vld [vmem:[%s3988 + $0x8] sm:$0xf]
    %v3992 = vld [vmem:[%s3988 + $0xc] sm:$0xf]
    %v3997 = vunpack.c.l.b16 %v3989
    %v3998 = vunpack.c.l.b16 %v3990
    %v3999 = vunpack.c.l.b16 %v3991
    %v4000 = vunpack.c.l.b16 %v3992
    %v4001 = vpack.c.b16 %v3998, %v3997
    %v4002 = vpack.c.b16 %v4000, %v3999
    %v4006 = vsel %vm53, %v3980, 0
    %v4009 = vsel %vm53, %v3981, 0
    %v4012 = vsel %vm53, %v3982, 0
    %v4015 = vsel %vm53, %v3983, 0
    %v4018 = vsel %vm53, %v3984, 0
    %v4021 = vsel %vm53, %v3985, 0
    %v4024 = vsel %vm53, %v3986, 0
    %v4027 = vsel %vm53, %v3987, 0
    %4029 = vmatpush.bf16.msra.mxu0 0
    %4030 = vmatpush.bf16.msra.mxu0 0
    %4031 = vmatpush.bf16.msra.mxu0 0
    %4032 = vmatpush.bf16.msra.mxu0 0
    %4033 = vmatpush.bf16.msra.mxu0 0
    %4034 = vmatpush.bf16.msra.mxu0 0
    %4035 = vmatpush.bf16.msra.mxu0 %v4002
    %4036 = vmatpush.bf16.msra.mxu0 %v4001
    %4037 = vmatmul.bf16.gmra.mxu0 %v4006
    %v4038 = vpop.f32.mrf.mxu0
    %v4039 = vadd.f32 0.0, %v4038
    %v4040 = vpop.f32.mrf.mxu0
    %v4041 = vadd.f32 0.0, %v4040
    %4042 = vmatmul.bf16.gmra.mxu0 %v4009
    %v4043 = vpop.f32.mrf.mxu0
    %v4044 = vadd.f32 0.0, %v4043
    %v4045 = vpop.f32.mrf.mxu0
    %v4046 = vadd.f32 0.0, %v4045
    %4047 = vmatmul.bf16.gmra.mxu0 %v4012
    %v4048 = vpop.f32.mrf.mxu0
    %v4049 = vadd.f32 0.0, %v4048
    %v4050 = vpop.f32.mrf.mxu0
    %v4051 = vadd.f32 0.0, %v4050
    %4052 = vmatmul.bf16.gmra.mxu0 %v4015
    %v4053 = vpop.f32.mrf.mxu0
    %v4054 = vadd.f32 0.0, %v4053
    %v4055 = vpop.f32.mrf.mxu0
    %v4056 = vadd.f32 0.0, %v4055
    %4057 = vmatmul.bf16.gmra.mxu0 %v4018
    %v4058 = vpop.f32.mrf.mxu0
    %v4059 = vadd.f32 0.0, %v4058
    %v4060 = vpop.f32.mrf.mxu0
    %v4061 = vadd.f32 0.0, %v4060
    %4062 = vmatmul.bf16.gmra.mxu0 %v4021
    %v4063 = vpop.f32.mrf.mxu0
    %v4064 = vadd.f32 0.0, %v4063
    %v4065 = vpop.f32.mrf.mxu0
    %v4066 = vadd.f32 0.0, %v4065
    %4067 = vmatmul.bf16.gmra.mxu0 %v4024
    %v4068 = vpop.f32.mrf.mxu0
    %v4069 = vadd.f32 0.0, %v4068
    %v4070 = vpop.f32.mrf.mxu0
    %v4071 = vadd.f32 0.0, %v4070
    %4072 = vmatmul.bf16.gmra.mxu0 %v4027
    %v4073 = vpop.f32.mrf.mxu0
    %v4074 = vadd.f32 0.0, %v4073
    %v4075 = vpop.f32.mrf.mxu0
    %v4076 = vadd.f32 0.0, %v4075
    %4077 = vdwg.mxu0
    %v4082 = vunpack.c.l.b16 %v3958
    %v4083 = vunpack.c.l.b16 %v3959
    %v4084 = vunpack.c.l.b16 %v3960
    %v4085 = vunpack.c.l.b16 %v3961
    %v4086 = vpack.c.b16 %v4083, %v4082
    %v4087 = vpack.c.b16 %v4085, %v4084
    %v4091 = vsel %vm53, %v3950, 0
    %v4094 = vsel %vm53, %v3951, 0
    %v4097 = vsel %vm53, %v3952, 0
    %v4100 = vsel %vm53, %v3953, 0
    %v4103 = vsel %vm53, %v3954, 0
    %v4106 = vsel %vm53, %v3955, 0
    %v4109 = vsel %vm53, %v3956, 0
    %v4112 = vsel %vm53, %v3957, 0
    %4114 = vmatpush.bf16.msra.mxu0 0
    %4115 = vmatpush.bf16.msra.mxu0 0
    %4116 = vmatpush.bf16.msra.mxu0 0
    %4117 = vmatpush.bf16.msra.mxu0 0
    %4118 = vmatpush.bf16.msra.mxu0 0
    %4119 = vmatpush.bf16.msra.mxu0 0
    %4120 = vmatpush.bf16.msra.mxu0 %v4087
    %4121 = vmatpush.bf16.msra.mxu0 %v4086
    %4122 = vmatmul.bf16.gmra.mxu0 %v4091
    %v4123 = vpop.f32.mrf.mxu0
    %v4124 = vadd.f32 %v4039, %v4123
    %v4125 = vpop.f32.mrf.mxu0
    %v4126 = vadd.f32 %v4041, %v4125
    %4127 = vmatmul.bf16.gmra.mxu0 %v4094
    %v4128 = vpop.f32.mrf.mxu0
    %v4129 = vadd.f32 %v4044, %v4128
    %v4130 = vpop.f32.mrf.mxu0
    %v4131 = vadd.f32 %v4046, %v4130
    %4132 = vmatmul.bf16.gmra.mxu0 %v4097
    %v4133 = vpop.f32.mrf.mxu0
    %v4134 = vadd.f32 %v4049, %v4133
    %v4135 = vpop.f32.mrf.mxu0
    %v4136 = vadd.f32 %v4051, %v4135
    %4137 = vmatmul.bf16.gmra.mxu0 %v4100
    %v4138 = vpop.f32.mrf.mxu0
    %v4139 = vadd.f32 %v4054, %v4138
    %v4140 = vpop.f32.mrf.mxu0
    %v4141 = vadd.f32 %v4056, %v4140
    %4142 = vmatmul.bf16.gmra.mxu0 %v4103
    %v4143 = vpop.f32.mrf.mxu0
    %v4144 = vadd.f32 %v4059, %v4143
    %v4145 = vpop.f32.mrf.mxu0
    %v4146 = vadd.f32 %v4061, %v4145
    %4147 = vmatmul.bf16.gmra.mxu0 %v4106
    %v4148 = vpop.f32.mrf.mxu0
    %v4149 = vadd.f32 %v4064, %v4148
    %v4150 = vpop.f32.mrf.mxu0
    %v4151 = vadd.f32 %v4066, %v4150
    %4152 = vmatmul.bf16.gmra.mxu0 %v4109
    %v4153 = vpop.f32.mrf.mxu0
    %v4154 = vadd.f32 %v4069, %v4153
    %v4155 = vpop.f32.mrf.mxu0
    %v4156 = vadd.f32 %v4071, %v4155
    %4157 = vmatmul.bf16.gmra.mxu0 %v4112
    %v4158 = vpop.f32.mrf.mxu0
    %v4159 = vadd.f32 %v4074, %v4158
    %v4160 = vpop.f32.mrf.mxu0
    %v4161 = vadd.f32 %v4076, %v4160
    %4162 = vdwg.mxu0
    %s4163 = sadd.s32 %s3932, 2
    %s4164 = scalar_lea.vmem [#allocation4], %s4163
    %v4165 = vld [vmem:[%s4164] sm:$0xff]
    %v4166 = vld [vmem:[%s4164 + $0x8] sm:$0xff]
    %v4167 = vld [vmem:[%s4164 + $0x10] sm:$0xff]
    %v4168 = vld [vmem:[%s4164 + $0x18] sm:$0xff]
    %v4169 = vld [vmem:[%s4164 + $0x20] sm:$0xff]
    %v4170 = vld [vmem:[%s4164 + $0x28] sm:$0xff]
    %v4171 = vld [vmem:[%s4164 + $0x30] sm:$0xff]
    %v4172 = vld [vmem:[%s4164 + $0x38] sm:$0xff]
    %v4173 = vld [vmem:[%s4164 + $0x40] sm:$0xff]
    %v4174 = vld [vmem:[%s4164 + $0x48] sm:$0xff]
    %v4175 = vld [vmem:[%s4164 + $0x50] sm:$0xff]
    %v4176 = vld [vmem:[%s4164 + $0x58] sm:$0xff]
    %v4177 = vld [vmem:[%s4164 + $0x60] sm:$0xff]
    %v4178 = vld [vmem:[%s4164 + $0x68] sm:$0xff]
    %v4179 = vld [vmem:[%s4164 + $0x70] sm:$0xff]
    %v4180 = vld [vmem:[%s4164 + $0x78] sm:$0xff]
    %v4181 = vpack.c.bf16 %v4166, %v4165
    %v4182 = vpack.c.bf16 %v4168, %v4167
    %v4183 = vpack.c.bf16 %v4170, %v4169
    %v4184 = vpack.c.bf16 %v4172, %v4171
    %v4185 = vpack.c.bf16 %v4174, %v4173
    %v4186 = vpack.c.bf16 %v4176, %v4175
    %v4187 = vpack.c.bf16 %v4178, %v4177
    %v4188 = vpack.c.bf16 %v4180, %v4179
    %s4189 = scalar_lea.vmem %s5, 32
    %v4190 = vld [vmem:[%s4189] sm:$0xf]
    %v4191 = vld [vmem:[%s4189 + $0x4] sm:$0xf]
    %v4192 = vld [vmem:[%s4189 + $0x8] sm:$0xf]
    %v4193 = vld [vmem:[%s4189 + $0xc] sm:$0xf]
    %v4198 = vunpack.c.l.b16 %v4190
    %v4199 = vunpack.c.l.b16 %v4191
    %v4200 = vunpack.c.l.b16 %v4192
    %v4201 = vunpack.c.l.b16 %v4193
    %v4202 = vpack.c.b16 %v4199, %v4198
    %v4203 = vpack.c.b16 %v4201, %v4200
    %v4207 = vsel %vm53, %v4181, 0
    %v4210 = vsel %vm53, %v4182, 0
    %v4213 = vsel %vm53, %v4183, 0
    %v4216 = vsel %vm53, %v4184, 0
    %v4219 = vsel %vm53, %v4185, 0
    %v4222 = vsel %vm53, %v4186, 0
    %v4225 = vsel %vm53, %v4187, 0
    %v4228 = vsel %vm53, %v4188, 0
    %4230 = vmatpush.bf16.msra.mxu0 0
    %4231 = vmatpush.bf16.msra.mxu0 0
    %4232 = vmatpush.bf16.msra.mxu0 0
    %4233 = vmatpush.bf16.msra.mxu0 0
    %4234 = vmatpush.bf16.msra.mxu0 0
    %4235 = vmatpush.bf16.msra.mxu0 0
    %4236 = vmatpush.bf16.msra.mxu0 %v4203
    %4237 = vmatpush.bf16.msra.mxu0 %v4202
    %4238 = vmatmul.bf16.gmra.mxu0 %v4207
    %v4239 = vpop.f32.mrf.mxu0
    %v4240 = vadd.f32 0.0, %v4239
    %v4241 = vpop.f32.mrf.mxu0
    %v4242 = vadd.f32 0.0, %v4241
    %4243 = vmatmul.bf16.gmra.mxu0 %v4210
    %v4244 = vpop.f32.mrf.mxu0
    %v4245 = vadd.f32 0.0, %v4244
    %v4246 = vpop.f32.mrf.mxu0
    %v4247 = vadd.f32 0.0, %v4246
    %4248 = vmatmul.bf16.gmra.mxu0 %v4213
    %v4249 = vpop.f32.mrf.mxu0
    %v4250 = vadd.f32 0.0, %v4249
    %v4251 = vpop.f32.mrf.mxu0
    %v4252 = vadd.f32 0.0, %v4251
    %4253 = vmatmul.bf16.gmra.mxu0 %v4216
    %v4254 = vpop.f32.mrf.mxu0
    %v4255 = vadd.f32 0.0, %v4254
    %v4256 = vpop.f32.mrf.mxu0
    %v4257 = vadd.f32 0.0, %v4256
    %4258 = vmatmul.bf16.gmra.mxu0 %v4219
    %v4259 = vpop.f32.mrf.mxu0
    %v4260 = vadd.f32 0.0, %v4259
    %v4261 = vpop.f32.mrf.mxu0
    %v4262 = vadd.f32 0.0, %v4261
    %4263 = vmatmul.bf16.gmra.mxu0 %v4222
    %v4264 = vpop.f32.mrf.mxu0
    %v4265 = vadd.f32 0.0, %v4264
    %v4266 = vpop.f32.mrf.mxu0
    %v4267 = vadd.f32 0.0, %v4266
    %4268 = vmatmul.bf16.gmra.mxu0 %v4225
    %v4269 = vpop.f32.mrf.mxu0
    %v4270 = vadd.f32 0.0, %v4269
    %v4271 = vpop.f32.mrf.mxu0
    %v4272 = vadd.f32 0.0, %v4271
    %4273 = vmatmul.bf16.gmra.mxu0 %v4228
    %v4274 = vpop.f32.mrf.mxu0
    %v4275 = vadd.f32 0.0, %v4274
    %v4276 = vpop.f32.mrf.mxu0
    %v4277 = vadd.f32 0.0, %v4276
    %4278 = vdwg.mxu0
    %v4279 = vadd.f32 %v4124, %v4240
    %v4280 = vadd.f32 %v4126, %v4242
    %v4281 = vadd.f32 %v4129, %v4245
    %v4282 = vadd.f32 %v4131, %v4247
    %v4283 = vadd.f32 %v4134, %v4250
    %v4284 = vadd.f32 %v4136, %v4252
    %v4285 = vadd.f32 %v4139, %v4255
    %v4286 = vadd.f32 %v4141, %v4257
    %v4287 = vadd.f32 %v4144, %v4260
    %v4288 = vadd.f32 %v4146, %v4262
    %v4289 = vadd.f32 %v4149, %v4265
    %v4290 = vadd.f32 %v4151, %v4267
    %v4291 = vadd.f32 %v4154, %v4270
    %v4292 = vadd.f32 %v4156, %v4272
    %v4293 = vadd.f32 %v4159, %v4275
    %v4294 = vadd.f32 %v4161, %v4277
    %s4295 = sadd.s32 %s3932, 16
    %s4296 = scalar_lea.vmem [#allocation4], %s4295
    %v4297 = vld [vmem:[%s4296] sm:$0xff]
    %v4298 = vld [vmem:[%s4296 + $0x8] sm:$0xff]
    %v4299 = vld [vmem:[%s4296 + $0x10] sm:$0xff]
    %v4300 = vld [vmem:[%s4296 + $0x18] sm:$0xff]
    %v4301 = vld [vmem:[%s4296 + $0x20] sm:$0xff]
    %v4302 = vld [vmem:[%s4296 + $0x28] sm:$0xff]
    %v4303 = vld [vmem:[%s4296 + $0x30] sm:$0xff]
    %v4304 = vld [vmem:[%s4296 + $0x38] sm:$0xff]
    %v4305 = vld [vmem:[%s4296 + $0x40] sm:$0xff]
    %v4306 = vld [vmem:[%s4296 + $0x48] sm:$0xff]
    %v4307 = vld [vmem:[%s4296 + $0x50] sm:$0xff]
    %v4308 = vld [vmem:[%s4296 + $0x58] sm:$0xff]
    %v4309 = vld [vmem:[%s4296 + $0x60] sm:$0xff]
    %v4310 = vld [vmem:[%s4296 + $0x68] sm:$0xff]
    %v4311 = vld [vmem:[%s4296 + $0x70] sm:$0xff]
    %v4312 = vld [vmem:[%s4296 + $0x78] sm:$0xff]
    %v4313 = vpack.c.bf16 %v4298, %v4297
    %v4314 = vpack.c.bf16 %v4300, %v4299
    %v4315 = vpack.c.bf16 %v4302, %v4301
    %v4316 = vpack.c.bf16 %v4304, %v4303
    %v4317 = vpack.c.bf16 %v4306, %v4305
    %v4318 = vpack.c.bf16 %v4308, %v4307
    %v4319 = vpack.c.bf16 %v4310, %v4309
    %v4320 = vpack.c.bf16 %v4312, %v4311
    %s4321 = scalar_lea.vmem %s5, 48
    %v4322 = vld [vmem:[%s4321] sm:$0xf]
    %v4323 = vld [vmem:[%s4321 + $0x4] sm:$0xf]
    %v4324 = vld [vmem:[%s4321 + $0x8] sm:$0xf]
    %v4325 = vld [vmem:[%s4321 + $0xc] sm:$0xf]
    %v4330 = vunpack.c.l.b16 %v4322
    %v4331 = vunpack.c.l.b16 %v4323
    %v4332 = vunpack.c.l.b16 %v4324
    %v4333 = vunpack.c.l.b16 %v4325
    %v4334 = vpack.c.b16 %v4331, %v4330
    %v4335 = vpack.c.b16 %v4333, %v4332
    %v4339 = vsel %vm53, %v4313, 0
    %v4342 = vsel %vm53, %v4314, 0
    %v4345 = vsel %vm53, %v4315, 0
    %v4348 = vsel %vm53, %v4316, 0
    %v4351 = vsel %vm53, %v4317, 0
    %v4354 = vsel %vm53, %v4318, 0
    %v4357 = vsel %vm53, %v4319, 0
    %v4360 = vsel %vm53, %v4320, 0
    %4362 = vmatpush.bf16.msra.mxu0 0
    %4363 = vmatpush.bf16.msra.mxu0 0
    %4364 = vmatpush.bf16.msra.mxu0 0
    %4365 = vmatpush.bf16.msra.mxu0 0
    %4366 = vmatpush.bf16.msra.mxu0 0
    %4367 = vmatpush.bf16.msra.mxu0 0
    %4368 = vmatpush.bf16.msra.mxu0 %v4335
    %4369 = vmatpush.bf16.msra.mxu0 %v4334
    %4370 = vmatmul.bf16.gmra.mxu0 %v4339
    %v4371 = vpop.f32.mrf.mxu0
    %v4372 = vadd.f32 0.0, %v4371
    %v4373 = vpop.f32.mrf.mxu0
    %v4374 = vadd.f32 0.0, %v4373
    %4375 = vmatmul.bf16.gmra.mxu0 %v4342
    %v4376 = vpop.f32.mrf.mxu0
    %v4377 = vadd.f32 0.0, %v4376
    %v4378 = vpop.f32.mrf.mxu0
    %v4379 = vadd.f32 0.0, %v4378
    %4380 = vmatmul.bf16.gmra.mxu0 %v4345
    %v4381 = vpop.f32.mrf.mxu0
    %v4382 = vadd.f32 0.0, %v4381
    %v4383 = vpop.f32.mrf.mxu0
    %v4384 = vadd.f32 0.0, %v4383
    %4385 = vmatmul.bf16.gmra.mxu0 %v4348
    %v4386 = vpop.f32.mrf.mxu0
    %v4387 = vadd.f32 0.0, %v4386
    %v4388 = vpop.f32.mrf.mxu0
    %v4389 = vadd.f32 0.0, %v4388
    %4390 = vmatmul.bf16.gmra.mxu0 %v4351
    %v4391 = vpop.f32.mrf.mxu0
    %v4392 = vadd.f32 0.0, %v4391
    %v4393 = vpop.f32.mrf.mxu0
    %v4394 = vadd.f32 0.0, %v4393
    %4395 = vmatmul.bf16.gmra.mxu0 %v4354
    %v4396 = vpop.f32.mrf.mxu0
    %v4397 = vadd.f32 0.0, %v4396
    %v4398 = vpop.f32.mrf.mxu0
    %v4399 = vadd.f32 0.0, %v4398
    %4400 = vmatmul.bf16.gmra.mxu0 %v4357
    %v4401 = vpop.f32.mrf.mxu0
    %v4402 = vadd.f32 0.0, %v4401
    %v4403 = vpop.f32.mrf.mxu0
    %v4404 = vadd.f32 0.0, %v4403
    %4405 = vmatmul.bf16.gmra.mxu0 %v4360
    %v4406 = vpop.f32.mrf.mxu0
    %v4407 = vadd.f32 0.0, %v4406
    %v4408 = vpop.f32.mrf.mxu0
    %v4409 = vadd.f32 0.0, %v4408
    %4410 = vdwg.mxu0
    %v4411 = vadd.f32 %v4279, %v4372
    %v4412 = vadd.f32 %v4280, %v4374
    %v4413 = vadd.f32 %v4281, %v4377
    %v4414 = vadd.f32 %v4282, %v4379
    %v4415 = vadd.f32 %v4283, %v4382
    %v4416 = vadd.f32 %v4284, %v4384
    %v4417 = vadd.f32 %v4285, %v4387
    %v4418 = vadd.f32 %v4286, %v4389
    %v4419 = vadd.f32 %v4287, %v4392
    %v4420 = vadd.f32 %v4288, %v4394
    %v4421 = vadd.f32 %v4289, %v4397
    %v4422 = vadd.f32 %v4290, %v4399
    %v4423 = vadd.f32 %v4291, %v4402
    %v4424 = vadd.f32 %v4292, %v4404
    %v4425 = vadd.f32 %v4293, %v4407
    %v4426 = vadd.f32 %v4294, %v4409
    %s4427 = sadd.s32 %s3932, 17
    %s4428 = scalar_lea.vmem [#allocation4], %s4427
    %v4429 = vld [vmem:[%s4428] sm:$0xff]
    %v4430 = vld [vmem:[%s4428 + $0x8] sm:$0xff]
    %v4431 = vld [vmem:[%s4428 + $0x10] sm:$0xff]
    %v4432 = vld [vmem:[%s4428 + $0x18] sm:$0xff]
    %v4433 = vld [vmem:[%s4428 + $0x20] sm:$0xff]
    %v4434 = vld [vmem:[%s4428 + $0x28] sm:$0xff]
    %v4435 = vld [vmem:[%s4428 + $0x30] sm:$0xff]
    %v4436 = vld [vmem:[%s4428 + $0x38] sm:$0xff]
    %v4437 = vld [vmem:[%s4428 + $0x40] sm:$0xff]
    %v4438 = vld [vmem:[%s4428 + $0x48] sm:$0xff]
    %v4439 = vld [vmem:[%s4428 + $0x50] sm:$0xff]
    %v4440 = vld [vmem:[%s4428 + $0x58] sm:$0xff]
    %v4441 = vld [vmem:[%s4428 + $0x60] sm:$0xff]
    %v4442 = vld [vmem:[%s4428 + $0x68] sm:$0xff]
    %v4443 = vld [vmem:[%s4428 + $0x70] sm:$0xff]
    %v4444 = vld [vmem:[%s4428 + $0x78] sm:$0xff]
    %v4445 = vpack.c.bf16 %v4430, %v4429
    %v4446 = vpack.c.bf16 %v4432, %v4431
    %v4447 = vpack.c.bf16 %v4434, %v4433
    %v4448 = vpack.c.bf16 %v4436, %v4435
    %v4449 = vpack.c.bf16 %v4438, %v4437
    %v4450 = vpack.c.bf16 %v4440, %v4439
    %v4451 = vpack.c.bf16 %v4442, %v4441
    %v4452 = vpack.c.bf16 %v4444, %v4443
    %s4453 = scalar_lea.vmem %s5, 64
    %v4454 = vld [vmem:[%s4453] sm:$0xf]
    %v4455 = vld [vmem:[%s4453 + $0x4] sm:$0xf]
    %v4456 = vld [vmem:[%s4453 + $0x8] sm:$0xf]
    %v4457 = vld [vmem:[%s4453 + $0xc] sm:$0xf]
    %v4462 = vunpack.c.l.b16 %v4454
    %v4463 = vunpack.c.l.b16 %v4455
    %v4464 = vunpack.c.l.b16 %v4456
    %v4465 = vunpack.c.l.b16 %v4457
    %v4466 = vpack.c.b16 %v4463, %v4462
    %v4467 = vpack.c.b16 %v4465, %v4464
    %v4471 = vsel %vm53, %v4445, 0
    %v4474 = vsel %vm53, %v4446, 0
    %v4477 = vsel %vm53, %v4447, 0
    %v4480 = vsel %vm53, %v4448, 0
    %v4483 = vsel %vm53, %v4449, 0
    %v4486 = vsel %vm53, %v4450, 0
    %v4489 = vsel %vm53, %v4451, 0
    %v4492 = vsel %vm53, %v4452, 0
    %4494 = vmatpush.bf16.msra.mxu0 0
    %4495 = vmatpush.bf16.msra.mxu0 0
    %4496 = vmatpush.bf16.msra.mxu0 0
    %4497 = vmatpush.bf16.msra.mxu0 0
    %4498 = vmatpush.bf16.msra.mxu0 0
    %4499 = vmatpush.bf16.msra.mxu0 0
    %4500 = vmatpush.bf16.msra.mxu0 %v4467
    %4501 = vmatpush.bf16.msra.mxu0 %v4466
    %4502 = vmatmul.bf16.gmra.mxu0 %v4471
    %v4503 = vpop.f32.mrf.mxu0
    %v4504 = vadd.f32 0.0, %v4503
    %v4505 = vpop.f32.mrf.mxu0
    %v4506 = vadd.f32 0.0, %v4505
    %4507 = vmatmul.bf16.gmra.mxu0 %v4474
    %v4508 = vpop.f32.mrf.mxu0
    %v4509 = vadd.f32 0.0, %v4508
    %v4510 = vpop.f32.mrf.mxu0
    %v4511 = vadd.f32 0.0, %v4510
    %4512 = vmatmul.bf16.gmra.mxu0 %v4477
    %v4513 = vpop.f32.mrf.mxu0
    %v4514 = vadd.f32 0.0, %v4513
    %v4515 = vpop.f32.mrf.mxu0
    %v4516 = vadd.f32 0.0, %v4515
    %4517 = vmatmul.bf16.gmra.mxu0 %v4480
    %v4518 = vpop.f32.mrf.mxu0
    %v4519 = vadd.f32 0.0, %v4518
    %v4520 = vpop.f32.mrf.mxu0
    %v4521 = vadd.f32 0.0, %v4520
    %4522 = vmatmul.bf16.gmra.mxu0 %v4483
    %v4523 = vpop.f32.mrf.mxu0
    %v4524 = vadd.f32 0.0, %v4523
    %v4525 = vpop.f32.mrf.mxu0
    %v4526 = vadd.f32 0.0, %v4525
    %4527 = vmatmul.bf16.gmra.mxu0 %v4486
    %v4528 = vpop.f32.mrf.mxu0
    %v4529 = vadd.f32 0.0, %v4528
    %v4530 = vpop.f32.mrf.mxu0
    %v4531 = vadd.f32 0.0, %v4530
    %4532 = vmatmul.bf16.gmra.mxu0 %v4489
    %v4533 = vpop.f32.mrf.mxu0
    %v4534 = vadd.f32 0.0, %v4533
    %v4535 = vpop.f32.mrf.mxu0
    %v4536 = vadd.f32 0.0, %v4535
    %4537 = vmatmul.bf16.gmra.mxu0 %v4492
    %v4538 = vpop.f32.mrf.mxu0
    %v4539 = vadd.f32 0.0, %v4538
    %v4540 = vpop.f32.mrf.mxu0
    %v4541 = vadd.f32 0.0, %v4540
    %4542 = vdwg.mxu0
    %v4543 = vadd.f32 %v4411, %v4504
    %v4544 = vadd.f32 %v4412, %v4506
    %v4545 = vadd.f32 %v4413, %v4509
    %v4546 = vadd.f32 %v4414, %v4511
    %v4547 = vadd.f32 %v4415, %v4514
    %v4548 = vadd.f32 %v4416, %v4516
    %v4549 = vadd.f32 %v4417, %v4519
    %v4550 = vadd.f32 %v4418, %v4521
    %v4551 = vadd.f32 %v4419, %v4524
    %v4552 = vadd.f32 %v4420, %v4526
    %v4553 = vadd.f32 %v4421, %v4529
    %v4554 = vadd.f32 %v4422, %v4531
    %v4555 = vadd.f32 %v4423, %v4534
    %v4556 = vadd.f32 %v4424, %v4536
    %v4557 = vadd.f32 %v4425, %v4539
    %v4558 = vadd.f32 %v4426, %v4541
    %s4559 = sadd.s32 %s3932, 18
    %s4560 = scalar_lea.vmem [#allocation4], %s4559
    %v4561 = vld [vmem:[%s4560] sm:$0xff]
    %v4562 = vld [vmem:[%s4560 + $0x8] sm:$0xff]
    %v4563 = vld [vmem:[%s4560 + $0x10] sm:$0xff]
    %v4564 = vld [vmem:[%s4560 + $0x18] sm:$0xff]
    %v4565 = vld [vmem:[%s4560 + $0x20] sm:$0xff]
    %v4566 = vld [vmem:[%s4560 + $0x28] sm:$0xff]
    %v4567 = vld [vmem:[%s4560 + $0x30] sm:$0xff]
    %v4568 = vld [vmem:[%s4560 + $0x38] sm:$0xff]
    %v4569 = vld [vmem:[%s4560 + $0x40] sm:$0xff]
    %v4570 = vld [vmem:[%s4560 + $0x48] sm:$0xff]
    %v4571 = vld [vmem:[%s4560 + $0x50] sm:$0xff]
    %v4572 = vld [vmem:[%s4560 + $0x58] sm:$0xff]
    %v4573 = vld [vmem:[%s4560 + $0x60] sm:$0xff]
    %v4574 = vld [vmem:[%s4560 + $0x68] sm:$0xff]
    %v4575 = vld [vmem:[%s4560 + $0x70] sm:$0xff]
    %v4576 = vld [vmem:[%s4560 + $0x78] sm:$0xff]
    %v4577 = vpack.c.bf16 %v4562, %v4561
    %v4578 = vpack.c.bf16 %v4564, %v4563
    %v4579 = vpack.c.bf16 %v4566, %v4565
    %v4580 = vpack.c.bf16 %v4568, %v4567
    %v4581 = vpack.c.bf16 %v4570, %v4569
    %v4582 = vpack.c.bf16 %v4572, %v4571
    %v4583 = vpack.c.bf16 %v4574, %v4573
    %v4584 = vpack.c.bf16 %v4576, %v4575
    %s4585 = scalar_lea.vmem %s5, 80
    %v4586 = vld [vmem:[%s4585] sm:$0xf]
    %v4587 = vld [vmem:[%s4585 + $0x4] sm:$0xf]
    %v4588 = vld [vmem:[%s4585 + $0x8] sm:$0xf]
    %v4589 = vld [vmem:[%s4585 + $0xc] sm:$0xf]
    %v4594 = vunpack.c.l.b16 %v4586
    %v4595 = vunpack.c.l.b16 %v4587
    %v4596 = vunpack.c.l.b16 %v4588
    %v4597 = vunpack.c.l.b16 %v4589
    %v4598 = vpack.c.b16 %v4595, %v4594
    %v4599 = vpack.c.b16 %v4597, %v4596
    %v4603 = vsel %vm53, %v4577, 0
    %v4606 = vsel %vm53, %v4578, 0
    %v4609 = vsel %vm53, %v4579, 0
    %v4612 = vsel %vm53, %v4580, 0
    %v4615 = vsel %vm53, %v4581, 0
    %v4618 = vsel %vm53, %v4582, 0
    %v4621 = vsel %vm53, %v4583, 0
    %v4624 = vsel %vm53, %v4584, 0
    %4626 = vmatpush.bf16.msra.mxu0 0
    %4627 = vmatpush.bf16.msra.mxu0 0
    %4628 = vmatpush.bf16.msra.mxu0 0
    %4629 = vmatpush.bf16.msra.mxu0 0
    %4630 = vmatpush.bf16.msra.mxu0 0
    %4631 = vmatpush.bf16.msra.mxu0 0
    %4632 = vmatpush.bf16.msra.mxu0 %v4599
    %4633 = vmatpush.bf16.msra.mxu0 %v4598
    %4634 = vmatmul.bf16.gmra.mxu0 %v4603
    %v4635 = vpop.f32.mrf.mxu0
    %v4636 = vadd.f32 0.0, %v4635
    %v4637 = vpop.f32.mrf.mxu0
    %v4638 = vadd.f32 0.0, %v4637
    %4639 = vmatmul.bf16.gmra.mxu0 %v4606
    %v4640 = vpop.f32.mrf.mxu0
    %v4641 = vadd.f32 0.0, %v4640
    %v4642 = vpop.f32.mrf.mxu0
    %v4643 = vadd.f32 0.0, %v4642
    %4644 = vmatmul.bf16.gmra.mxu0 %v4609
    %v4645 = vpop.f32.mrf.mxu0
    %v4646 = vadd.f32 0.0, %v4645
    %v4647 = vpop.f32.mrf.mxu0
    %v4648 = vadd.f32 0.0, %v4647
    %4649 = vmatmul.bf16.gmra.mxu0 %v4612
    %v4650 = vpop.f32.mrf.mxu0
    %v4651 = vadd.f32 0.0, %v4650
    %v4652 = vpop.f32.mrf.mxu0
    %v4653 = vadd.f32 0.0, %v4652
    %4654 = vmatmul.bf16.gmra.mxu0 %v4615
    %v4655 = vpop.f32.mrf.mxu0
    %v4656 = vadd.f32 0.0, %v4655
    %v4657 = vpop.f32.mrf.mxu0
    %v4658 = vadd.f32 0.0, %v4657
    %4659 = vmatmul.bf16.gmra.mxu0 %v4618
    %v4660 = vpop.f32.mrf.mxu0
    %v4661 = vadd.f32 0.0, %v4660
    %v4662 = vpop.f32.mrf.mxu0
    %v4663 = vadd.f32 0.0, %v4662
    %4664 = vmatmul.bf16.gmra.mxu0 %v4621
    %v4665 = vpop.f32.mrf.mxu0
    %v4666 = vadd.f32 0.0, %v4665
    %v4667 = vpop.f32.mrf.mxu0
    %v4668 = vadd.f32 0.0, %v4667
    %4669 = vmatmul.bf16.gmra.mxu0 %v4624
    %v4670 = vpop.f32.mrf.mxu0
    %v4671 = vadd.f32 0.0, %v4670
    %v4672 = vpop.f32.mrf.mxu0
    %v4673 = vadd.f32 0.0, %v4672
    %4674 = vdwg.mxu0
    %v4675 = vadd.f32 %v4543, %v4636
    %v4676 = vadd.f32 %v4544, %v4638
    %v4677 = vadd.f32 %v4545, %v4641
    %v4678 = vadd.f32 %v4546, %v4643
    %v4679 = vadd.f32 %v4547, %v4646
    %v4680 = vadd.f32 %v4548, %v4648
    %v4681 = vadd.f32 %v4549, %v4651
    %v4682 = vadd.f32 %v4550, %v4653
    %v4683 = vadd.f32 %v4551, %v4656
    %v4684 = vadd.f32 %v4552, %v4658
    %v4685 = vadd.f32 %v4553, %v4661
    %v4686 = vadd.f32 %v4554, %v4663
    %v4687 = vadd.f32 %v4555, %v4666
    %v4688 = vadd.f32 %v4556, %v4668
    %v4689 = vadd.f32 %v4557, %v4671
    %v4690 = vadd.f32 %v4558, %v4673
    %s4691 = sadd.s32 %s3932, 32
    %s4692 = scalar_lea.vmem [#allocation4], %s4691
    %v4693 = vld [vmem:[%s4692] sm:$0xff]
    %v4694 = vld [vmem:[%s4692 + $0x8] sm:$0xff]
    %v4695 = vld [vmem:[%s4692 + $0x10] sm:$0xff]
    %v4696 = vld [vmem:[%s4692 + $0x18] sm:$0xff]
    %v4697 = vld [vmem:[%s4692 + $0x20] sm:$0xff]
    %v4698 = vld [vmem:[%s4692 + $0x28] sm:$0xff]
    %v4699 = vld [vmem:[%s4692 + $0x30] sm:$0xff]
    %v4700 = vld [vmem:[%s4692 + $0x38] sm:$0xff]
    %v4701 = vld [vmem:[%s4692 + $0x40] sm:$0xff]
    %v4702 = vld [vmem:[%s4692 + $0x48] sm:$0xff]
    %v4703 = vld [vmem:[%s4692 + $0x50] sm:$0xff]
    %v4704 = vld [vmem:[%s4692 + $0x58] sm:$0xff]
    %v4705 = vld [vmem:[%s4692 + $0x60] sm:$0xff]
    %v4706 = vld [vmem:[%s4692 + $0x68] sm:$0xff]
    %v4707 = vld [vmem:[%s4692 + $0x70] sm:$0xff]
    %v4708 = vld [vmem:[%s4692 + $0x78] sm:$0xff]
    %v4709 = vpack.c.bf16 %v4694, %v4693
    %v4710 = vpack.c.bf16 %v4696, %v4695
    %v4711 = vpack.c.bf16 %v4698, %v4697
    %v4712 = vpack.c.bf16 %v4700, %v4699
    %v4713 = vpack.c.bf16 %v4702, %v4701
    %v4714 = vpack.c.bf16 %v4704, %v4703
    %v4715 = vpack.c.bf16 %v4706, %v4705
    %v4716 = vpack.c.bf16 %v4708, %v4707
    %s4717 = scalar_lea.vmem %s5, 96
    %v4718 = vld [vmem:[%s4717] sm:$0xf]
    %v4719 = vld [vmem:[%s4717 + $0x4] sm:$0xf]
    %v4720 = vld [vmem:[%s4717 + $0x8] sm:$0xf]
    %v4721 = vld [vmem:[%s4717 + $0xc] sm:$0xf]
    %v4726 = vunpack.c.l.b16 %v4718
    %v4727 = vunpack.c.l.b16 %v4719
    %v4728 = vunpack.c.l.b16 %v4720
    %v4729 = vunpack.c.l.b16 %v4721
    %v4730 = vpack.c.b16 %v4727, %v4726
    %v4731 = vpack.c.b16 %v4729, %v4728
    %v4735 = vsel %vm53, %v4709, 0
    %v4738 = vsel %vm53, %v4710, 0
    %v4741 = vsel %vm53, %v4711, 0
    %v4744 = vsel %vm53, %v4712, 0
    %v4747 = vsel %vm53, %v4713, 0
    %v4750 = vsel %vm53, %v4714, 0
    %v4753 = vsel %vm53, %v4715, 0
    %v4756 = vsel %vm53, %v4716, 0
    %4758 = vmatpush.bf16.msra.mxu0 0
    %4759 = vmatpush.bf16.msra.mxu0 0
    %4760 = vmatpush.bf16.msra.mxu0 0
    %4761 = vmatpush.bf16.msra.mxu0 0
    %4762 = vmatpush.bf16.msra.mxu0 0
    %4763 = vmatpush.bf16.msra.mxu0 0
    %4764 = vmatpush.bf16.msra.mxu0 %v4731
    %4765 = vmatpush.bf16.msra.mxu0 %v4730
    %4766 = vmatmul.bf16.gmra.mxu0 %v4735
    %v4767 = vpop.f32.mrf.mxu0
    %v4768 = vadd.f32 0.0, %v4767
    %v4769 = vpop.f32.mrf.mxu0
    %v4770 = vadd.f32 0.0, %v4769
    %4771 = vmatmul.bf16.gmra.mxu0 %v4738
    %v4772 = vpop.f32.mrf.mxu0
    %v4773 = vadd.f32 0.0, %v4772
    %v4774 = vpop.f32.mrf.mxu0
    %v4775 = vadd.f32 0.0, %v4774
    %4776 = vmatmul.bf16.gmra.mxu0 %v4741
    %v4777 = vpop.f32.mrf.mxu0
    %v4778 = vadd.f32 0.0, %v4777
    %v4779 = vpop.f32.mrf.mxu0
    %v4780 = vadd.f32 0.0, %v4779
    %4781 = vmatmul.bf16.gmra.mxu0 %v4744
    %v4782 = vpop.f32.mrf.mxu0
    %v4783 = vadd.f32 0.0, %v4782
    %v4784 = vpop.f32.mrf.mxu0
    %v4785 = vadd.f32 0.0, %v4784
    %4786 = vmatmul.bf16.gmra.mxu0 %v4747
    %v4787 = vpop.f32.mrf.mxu0
    %v4788 = vadd.f32 0.0, %v4787
    %v4789 = vpop.f32.mrf.mxu0
    %v4790 = vadd.f32 0.0, %v4789
    %4791 = vmatmul.bf16.gmra.mxu0 %v4750
    %v4792 = vpop.f32.mrf.mxu0
    %v4793 = vadd.f32 0.0, %v4792
    %v4794 = vpop.f32.mrf.mxu0
    %v4795 = vadd.f32 0.0, %v4794
    %4796 = vmatmul.bf16.gmra.mxu0 %v4753
    %v4797 = vpop.f32.mrf.mxu0
    %v4798 = vadd.f32 0.0, %v4797
    %v4799 = vpop.f32.mrf.mxu0
    %v4800 = vadd.f32 0.0, %v4799
    %4801 = vmatmul.bf16.gmra.mxu0 %v4756
    %v4802 = vpop.f32.mrf.mxu0
    %v4803 = vadd.f32 0.0, %v4802
    %v4804 = vpop.f32.mrf.mxu0
    %v4805 = vadd.f32 0.0, %v4804
    %4806 = vdwg.mxu0
    %v4807 = vadd.f32 %v4675, %v4768
    %v4808 = vadd.f32 %v4676, %v4770
    %v4809 = vadd.f32 %v4677, %v4773
    %v4810 = vadd.f32 %v4678, %v4775
    %v4811 = vadd.f32 %v4679, %v4778
    %v4812 = vadd.f32 %v4680, %v4780
    %v4813 = vadd.f32 %v4681, %v4783
    %v4814 = vadd.f32 %v4682, %v4785
    %v4815 = vadd.f32 %v4683, %v4788
    %v4816 = vadd.f32 %v4684, %v4790
    %v4817 = vadd.f32 %v4685, %v4793
    %v4818 = vadd.f32 %v4686, %v4795
    %v4819 = vadd.f32 %v4687, %v4798
    %v4820 = vadd.f32 %v4688, %v4800
    %v4821 = vadd.f32 %v4689, %v4803
    %v4822 = vadd.f32 %v4690, %v4805
    %s4823 = sadd.s32 %s3932, 33
    %s4824 = scalar_lea.vmem [#allocation4], %s4823
    %v4825 = vld [vmem:[%s4824] sm:$0xff]
    %v4826 = vld [vmem:[%s4824 + $0x8] sm:$0xff]
    %v4827 = vld [vmem:[%s4824 + $0x10] sm:$0xff]
    %v4828 = vld [vmem:[%s4824 + $0x18] sm:$0xff]
    %v4829 = vld [vmem:[%s4824 + $0x20] sm:$0xff]
    %v4830 = vld [vmem:[%s4824 + $0x28] sm:$0xff]
    %v4831 = vld [vmem:[%s4824 + $0x30] sm:$0xff]
    %v4832 = vld [vmem:[%s4824 + $0x38] sm:$0xff]
    %v4833 = vld [vmem:[%s4824 + $0x40] sm:$0xff]
    %v4834 = vld [vmem:[%s4824 + $0x48] sm:$0xff]
    %v4835 = vld [vmem:[%s4824 + $0x50] sm:$0xff]
    %v4836 = vld [vmem:[%s4824 + $0x58] sm:$0xff]
    %v4837 = vld [vmem:[%s4824 + $0x60] sm:$0xff]
    %v4838 = vld [vmem:[%s4824 + $0x68] sm:$0xff]
    %v4839 = vld [vmem:[%s4824 + $0x70] sm:$0xff]
    %v4840 = vld [vmem:[%s4824 + $0x78] sm:$0xff]
    %v4841 = vpack.c.bf16 %v4826, %v4825
    %v4842 = vpack.c.bf16 %v4828, %v4827
    %v4843 = vpack.c.bf16 %v4830, %v4829
    %v4844 = vpack.c.bf16 %v4832, %v4831
    %v4845 = vpack.c.bf16 %v4834, %v4833
    %v4846 = vpack.c.bf16 %v4836, %v4835
    %v4847 = vpack.c.bf16 %v4838, %v4837
    %v4848 = vpack.c.bf16 %v4840, %v4839
    %s4849 = scalar_lea.vmem %s5, 112
    %v4850 = vld [vmem:[%s4849] sm:$0xf]
    %v4851 = vld [vmem:[%s4849 + $0x4] sm:$0xf]
    %v4852 = vld [vmem:[%s4849 + $0x8] sm:$0xf]
    %v4853 = vld [vmem:[%s4849 + $0xc] sm:$0xf]
    %v4858 = vunpack.c.l.b16 %v4850
    %v4859 = vunpack.c.l.b16 %v4851
    %v4860 = vunpack.c.l.b16 %v4852
    %v4861 = vunpack.c.l.b16 %v4853
    %v4862 = vpack.c.b16 %v4859, %v4858
    %v4863 = vpack.c.b16 %v4861, %v4860
    %v4867 = vsel %vm53, %v4841, 0
    %v4870 = vsel %vm53, %v4842, 0
    %v4873 = vsel %vm53, %v4843, 0
    %v4876 = vsel %vm53, %v4844, 0
    %v4879 = vsel %vm53, %v4845, 0
    %v4882 = vsel %vm53, %v4846, 0
    %v4885 = vsel %vm53, %v4847, 0
    %v4888 = vsel %vm53, %v4848, 0
    %4890 = vmatpush.bf16.msra.mxu0 0
    %4891 = vmatpush.bf16.msra.mxu0 0
    %4892 = vmatpush.bf16.msra.mxu0 0
    %4893 = vmatpush.bf16.msra.mxu0 0
    %4894 = vmatpush.bf16.msra.mxu0 0
    %4895 = vmatpush.bf16.msra.mxu0 0
    %4896 = vmatpush.bf16.msra.mxu0 %v4863
    %4897 = vmatpush.bf16.msra.mxu0 %v4862
    %4898 = vmatmul.bf16.gmra.mxu0 %v4867
    %v4899 = vpop.f32.mrf.mxu0
    %v4900 = vadd.f32 0.0, %v4899
    %v4901 = vpop.f32.mrf.mxu0
    %v4902 = vadd.f32 0.0, %v4901
    %4903 = vmatmul.bf16.gmra.mxu0 %v4870
    %v4904 = vpop.f32.mrf.mxu0
    %v4905 = vadd.f32 0.0, %v4904
    %v4906 = vpop.f32.mrf.mxu0
    %v4907 = vadd.f32 0.0, %v4906
    %4908 = vmatmul.bf16.gmra.mxu0 %v4873
    %v4909 = vpop.f32.mrf.mxu0
    %v4910 = vadd.f32 0.0, %v4909
    %v4911 = vpop.f32.mrf.mxu0
    %v4912 = vadd.f32 0.0, %v4911
    %4913 = vmatmul.bf16.gmra.mxu0 %v4876
    %v4914 = vpop.f32.mrf.mxu0
    %v4915 = vadd.f32 0.0, %v4914
    %v4916 = vpop.f32.mrf.mxu0
    %v4917 = vadd.f32 0.0, %v4916
    %4918 = vmatmul.bf16.gmra.mxu0 %v4879
    %v4919 = vpop.f32.mrf.mxu0
    %v4920 = vadd.f32 0.0, %v4919
    %v4921 = vpop.f32.mrf.mxu0
    %v4922 = vadd.f32 0.0, %v4921
    %4923 = vmatmul.bf16.gmra.mxu0 %v4882
    %v4924 = vpop.f32.mrf.mxu0
    %v4925 = vadd.f32 0.0, %v4924
    %v4926 = vpop.f32.mrf.mxu0
    %v4927 = vadd.f32 0.0, %v4926
    %4928 = vmatmul.bf16.gmra.mxu0 %v4885
    %v4929 = vpop.f32.mrf.mxu0
    %v4930 = vadd.f32 0.0, %v4929
    %v4931 = vpop.f32.mrf.mxu0
    %v4932 = vadd.f32 0.0, %v4931
    %4933 = vmatmul.bf16.gmra.mxu0 %v4888
    %v4934 = vpop.f32.mrf.mxu0
    %v4935 = vadd.f32 0.0, %v4934
    %v4936 = vpop.f32.mrf.mxu0
    %v4937 = vadd.f32 0.0, %v4936
    %4938 = vdwg.mxu0
    %v4939 = vadd.f32 %v4807, %v4900
    %v4940 = vadd.f32 %v4808, %v4902
    %v4941 = vadd.f32 %v4809, %v4905
    %v4942 = vadd.f32 %v4810, %v4907
    %v4943 = vadd.f32 %v4811, %v4910
    %v4944 = vadd.f32 %v4812, %v4912
    %v4945 = vadd.f32 %v4813, %v4915
    %v4946 = vadd.f32 %v4814, %v4917
    %v4947 = vadd.f32 %v4815, %v4920
    %v4948 = vadd.f32 %v4816, %v4922
    %v4949 = vadd.f32 %v4817, %v4925
    %v4950 = vadd.f32 %v4818, %v4927
    %v4951 = vadd.f32 %v4819, %v4930
    %v4952 = vadd.f32 %v4820, %v4932
    %v4953 = vadd.f32 %v4821, %v4935
    %v4954 = vadd.f32 %v4822, %v4937
    %s4955 = sadd.s32 %s3932, 34
    %s4956 = scalar_lea.vmem [#allocation4], %s4955
    %v4957 = vld [vmem:[%s4956] sm:$0xff]
    %v4958 = vld [vmem:[%s4956 + $0x8] sm:$0xff]
    %v4959 = vld [vmem:[%s4956 + $0x10] sm:$0xff]
    %v4960 = vld [vmem:[%s4956 + $0x18] sm:$0xff]
    %v4961 = vld [vmem:[%s4956 + $0x20] sm:$0xff]
    %v4962 = vld [vmem:[%s4956 + $0x28] sm:$0xff]
    %v4963 = vld [vmem:[%s4956 + $0x30] sm:$0xff]
    %v4964 = vld [vmem:[%s4956 + $0x38] sm:$0xff]
    %v4965 = vld [vmem:[%s4956 + $0x40] sm:$0xff]
    %v4966 = vld [vmem:[%s4956 + $0x48] sm:$0xff]
    %v4967 = vld [vmem:[%s4956 + $0x50] sm:$0xff]
    %v4968 = vld [vmem:[%s4956 + $0x58] sm:$0xff]
    %v4969 = vld [vmem:[%s4956 + $0x60] sm:$0xff]
    %v4970 = vld [vmem:[%s4956 + $0x68] sm:$0xff]
    %v4971 = vld [vmem:[%s4956 + $0x70] sm:$0xff]
    %v4972 = vld [vmem:[%s4956 + $0x78] sm:$0xff]
    %v4973 = vpack.c.bf16 %v4958, %v4957
    %v4974 = vpack.c.bf16 %v4960, %v4959
    %v4975 = vpack.c.bf16 %v4962, %v4961
    %v4976 = vpack.c.bf16 %v4964, %v4963
    %v4977 = vpack.c.bf16 %v4966, %v4965
    %v4978 = vpack.c.bf16 %v4968, %v4967
    %v4979 = vpack.c.bf16 %v4970, %v4969
    %v4980 = vpack.c.bf16 %v4972, %v4971
    %s4981 = scalar_lea.vmem %s5, 128
    %v4982 = vld [vmem:[%s4981] sm:$0xf]
    %v4983 = vld [vmem:[%s4981 + $0x4] sm:$0xf]
    %v4984 = vld [vmem:[%s4981 + $0x8] sm:$0xf]
    %v4985 = vld [vmem:[%s4981 + $0xc] sm:$0xf]
    %v4990 = vunpack.c.l.b16 %v4982
    %v4991 = vunpack.c.l.b16 %v4983
    %v4992 = vunpack.c.l.b16 %v4984
    %v4993 = vunpack.c.l.b16 %v4985
    %v4994 = vpack.c.b16 %v4991, %v4990
    %v4995 = vpack.c.b16 %v4993, %v4992
    %v4999 = vsel %vm53, %v4973, 0
    %v5002 = vsel %vm53, %v4974, 0
    %v5005 = vsel %vm53, %v4975, 0
    %v5008 = vsel %vm53, %v4976, 0
    %v5011 = vsel %vm53, %v4977, 0
    %v5014 = vsel %vm53, %v4978, 0
    %v5017 = vsel %vm53, %v4979, 0
    %v5020 = vsel %vm53, %v4980, 0
    %5022 = vmatpush.bf16.msra.mxu0 0
    %5023 = vmatpush.bf16.msra.mxu0 0
    %5024 = vmatpush.bf16.msra.mxu0 0
    %5025 = vmatpush.bf16.msra.mxu0 0
    %5026 = vmatpush.bf16.msra.mxu0 0
    %5027 = vmatpush.bf16.msra.mxu0 0
    %5028 = vmatpush.bf16.msra.mxu0 %v4995
    %5029 = vmatpush.bf16.msra.mxu0 %v4994
    %5030 = vmatmul.bf16.gmra.mxu0 %v4999
    %v5031 = vpop.f32.mrf.mxu0
    %v5032 = vadd.f32 0.0, %v5031
    %v5033 = vpop.f32.mrf.mxu0
    %v5034 = vadd.f32 0.0, %v5033
    %5035 = vmatmul.bf16.gmra.mxu0 %v5002
    %v5036 = vpop.f32.mrf.mxu0
    %v5037 = vadd.f32 0.0, %v5036
    %v5038 = vpop.f32.mrf.mxu0
    %v5039 = vadd.f32 0.0, %v5038
    %5040 = vmatmul.bf16.gmra.mxu0 %v5005
    %v5041 = vpop.f32.mrf.mxu0
    %v5042 = vadd.f32 0.0, %v5041
    %v5043 = vpop.f32.mrf.mxu0
    %v5044 = vadd.f32 0.0, %v5043
    %5045 = vmatmul.bf16.gmra.mxu0 %v5008
    %v5046 = vpop.f32.mrf.mxu0
    %v5047 = vadd.f32 0.0, %v5046
    %v5048 = vpop.f32.mrf.mxu0
    %v5049 = vadd.f32 0.0, %v5048
    %5050 = vmatmul.bf16.gmra.mxu0 %v5011
    %v5051 = vpop.f32.mrf.mxu0
    %v5052 = vadd.f32 0.0, %v5051
    %v5053 = vpop.f32.mrf.mxu0
    %v5054 = vadd.f32 0.0, %v5053
    %5055 = vmatmul.bf16.gmra.mxu0 %v5014
    %v5056 = vpop.f32.mrf.mxu0
    %v5057 = vadd.f32 0.0, %v5056
    %v5058 = vpop.f32.mrf.mxu0
    %v5059 = vadd.f32 0.0, %v5058
    %5060 = vmatmul.bf16.gmra.mxu0 %v5017
    %v5061 = vpop.f32.mrf.mxu0
    %v5062 = vadd.f32 0.0, %v5061
    %v5063 = vpop.f32.mrf.mxu0
    %v5064 = vadd.f32 0.0, %v5063
    %5065 = vmatmul.bf16.gmra.mxu0 %v5020
    %v5066 = vpop.f32.mrf.mxu0
    %v5067 = vadd.f32 0.0, %v5066
    %v5068 = vpop.f32.mrf.mxu0
    %v5069 = vadd.f32 0.0, %v5068
    %5070 = vdwg.mxu0
    %v5071 = vadd.f32 %v4939, %v5032
    %v5072 = vadd.f32 %v4940, %v5034
    %v5073 = vadd.f32 %v4941, %v5037
    %v5074 = vadd.f32 %v4942, %v5039
    %v5075 = vadd.f32 %v4943, %v5042
    %v5076 = vadd.f32 %v4944, %v5044
    %v5077 = vadd.f32 %v4945, %v5047
    %v5078 = vadd.f32 %v4946, %v5049
    %v5079 = vadd.f32 %v4947, %v5052
    %v5080 = vadd.f32 %v4948, %v5054
    %v5081 = vadd.f32 %v4949, %v5057
    %v5082 = vadd.f32 %v4950, %v5059
    %v5083 = vadd.f32 %v4951, %v5062
    %v5084 = vadd.f32 %v4952, %v5064
    %v5085 = vadd.f32 %v4953, %v5067
    %v5086 = vadd.f32 %v4954, %v5069
    %v5087 = vld [vmem:[%s6] sm:$0x1]
    %v5089 = vperm.slane %v5087, 0
    %v5091 = vadd.f32 %v5071, %v5089
    %v5092 = vadd.f32 %v5072, %v5089
    %v5093 = vadd.f32 %v5073, %v5089
    %v5094 = vadd.f32 %v5074, %v5089
    %v5095 = vadd.f32 %v5075, %v5089
    %v5096 = vadd.f32 %v5076, %v5089
    %v5097 = vadd.f32 %v5077, %v5089
    %v5098 = vadd.f32 %v5078, %v5089
    %v5099 = vadd.f32 %v5079, %v5089
    %v5100 = vadd.f32 %v5080, %v5089
    %v5101 = vadd.f32 %v5081, %v5089
    %v5102 = vadd.f32 %v5082, %v5089
    %v5103 = vadd.f32 %v5083, %v5089
    %v5104 = vadd.f32 %v5084, %v5089
    %v5105 = vadd.f32 %v5085, %v5089
    %v5106 = vadd.f32 %v5086, %v5089
    %s5107 = scalar_lea.vmem [#allocation5], %s3932
    %5108 = vst.msk [vmem:[%s5107] sm:$0xff] %vm68, %v5091
    %5109 = vst.msk [vmem:[%s5107 + $0x8] sm:$0xff] %vm68, %v5092
    %5110 = vst.msk [vmem:[%s5107 + $0x10] sm:$0xff] %vm68, %v5093
    %5111 = vst.msk [vmem:[%s5107 + $0x18] sm:$0xff] %vm68, %v5094
    %5112 = vst.msk [vmem:[%s5107 + $0x20] sm:$0xff] %vm68, %v5095
    %5113 = vst.msk [vmem:[%s5107 + $0x28] sm:$0xff] %vm68, %v5096
    %5114 = vst.msk [vmem:[%s5107 + $0x30] sm:$0xff] %vm68, %v5097
    %5115 = vst.msk [vmem:[%s5107 + $0x38] sm:$0xff] %vm68, %v5098
    %5116 = vst.msk [vmem:[%s5107 + $0x40] sm:$0xff] %vm68, %v5099
    %5117 = vst.msk [vmem:[%s5107 + $0x48] sm:$0xff] %vm68, %v5100
    %5118 = vst.msk [vmem:[%s5107 + $0x50] sm:$0xff] %vm68, %v5101
    %5119 = vst.msk [vmem:[%s5107 + $0x58] sm:$0xff] %vm68, %v5102
    %5120 = vst.msk [vmem:[%s5107 + $0x60] sm:$0xff] %vm68, %v5103
    %5121 = vst.msk [vmem:[%s5107 + $0x68] sm:$0xff] %vm68, %v5104
    %5122 = vst.msk [vmem:[%s5107 + $0x70] sm:$0xff] %vm68, %v5105
    %5123 = vst.msk [vmem:[%s5107 + $0x78] sm:$0xff] %vm68, %v5106
    %v5124 = vlaneseq
    %v5125 = vshrl.u32 %v5124, 7
    %v5126 = vadd.s32 %v5125, 8
    %v5127 = vadd.s32 %v5125, 16
    %v5128 = vadd.s32 %v5125, 24
    %v5129 = vadd.s32 %v5125, 32
    %v5130 = vadd.s32 %v5125, 40
    %v5131 = vadd.s32 %v5125, 48
    %v5132 = vadd.s32 %v5125, 56
    %v5133 = vadd.s32 %v5125, 64
    %v5134 = vadd.s32 %v5125, 72
    %v5135 = vadd.s32 %v5125, 80
    %v5136 = vadd.s32 %v5125, 88
    %v5137 = vadd.s32 %v5125, 96
    %v5138 = vadd.s32 %v5125, 104
    %v5139 = vadd.s32 %v5125, 112
    %v5140 = vadd.s32 %v5125, 120
    %v5141 = vstv %s3932
    %v5142 = vadd.s32 %v5141, %v5125
    %v5143 = vadd.s32 %v5141, %v5126
    %v5144 = vadd.s32 %v5141, %v5127
    %v5145 = vadd.s32 %v5141, %v5128
    %v5146 = vadd.s32 %v5141, %v5129
    %v5147 = vadd.s32 %v5141, %v5130
    %v5148 = vadd.s32 %v5141, %v5131
    %v5149 = vadd.s32 %v5141, %v5132
    %v5150 = vadd.s32 %v5141, %v5133
    %v5151 = vadd.s32 %v5141, %v5134
    %v5152 = vadd.s32 %v5141, %v5135
    %v5153 = vadd.s32 %v5141, %v5136
    %v5154 = vadd.s32 %v5141, %v5137
    %v5155 = vadd.s32 %v5141, %v5138
    %v5156 = vadd.s32 %v5141, %v5139
    %v5157 = vadd.s32 %v5141, %v5140
    %v5158 = vshra.s32 %v5142, 4
    %v5159 = vshra.s32 %v5143, 4
    %v5160 = vshra.s32 %v5144, 4
    %v5161 = vshra.s32 %v5145, 4
    %v5162 = vshra.s32 %v5146, 4
    %v5163 = vshra.s32 %v5147, 4
    %v5164 = vshra.s32 %v5148, 4
    %v5165 = vshra.s32 %v5149, 4
    %v5166 = vshra.s32 %v5150, 4
    %v5167 = vshra.s32 %v5151, 4
    %v5168 = vshra.s32 %v5152, 4
    %v5169 = vshra.s32 %v5153, 4
    %v5170 = vshra.s32 %v5154, 4
    %v5171 = vshra.s32 %v5155, 4
    %v5172 = vshra.s32 %v5156, 4
    %v5173 = vshra.s32 %v5157, 4
    %v5174 = vand.u32 %v5158, 15
    %v5175 = vand.u32 %v5159, 15
    %v5176 = vand.u32 %v5160, 15
    %v5177 = vand.u32 %v5161, 15
    %v5178 = vand.u32 %v5162, 15
    %v5179 = vand.u32 %v5163, 15
    %v5180 = vand.u32 %v5164, 15
    %v5181 = vand.u32 %v5165, 15
    %v5182 = vand.u32 %v5166, 15
    %v5183 = vand.u32 %v5167, 15
    %v5184 = vand.u32 %v5168, 15
    %v5185 = vand.u32 %v5169, 15
    %v5186 = vand.u32 %v5170, 15
    %v5187 = vand.u32 %v5171, 15
    %v5188 = vand.u32 %v5172, 15
    %v5189 = vand.u32 %v5173, 15
    %v5190 = vand.u32 %v5142, 15
    %v5191 = vand.u32 %v5143, 15
    %v5192 = vand.u32 %v5144, 15
    %v5193 = vand.u32 %v5145, 15
    %v5194 = vand.u32 %v5146, 15
    %v5195 = vand.u32 %v5147, 15
    %v5196 = vand.u32 %v5148, 15
    %v5197 = vand.u32 %v5149, 15
    %v5198 = vand.u32 %v5150, 15
    %v5199 = vand.u32 %v5151, 15
    %v5200 = vand.u32 %v5152, 15
    %v5201 = vand.u32 %v5153, 15
    %v5202 = vand.u32 %v5154, 15
    %v5203 = vand.u32 %v5155, 15
    %v5204 = vand.u32 %v5156, 15
    %v5205 = vand.u32 %v5157, 15
    %vm5206 = vcmp.lt.s32.totalorder %v5174, 12
    %vm5207 = vcmp.lt.s32.totalorder %v5175, 12
    %vm5208 = vcmp.lt.s32.totalorder %v5176, 12
    %vm5209 = vcmp.lt.s32.totalorder %v5177, 12
    %vm5210 = vcmp.lt.s32.totalorder %v5178, 12
    %vm5211 = vcmp.lt.s32.totalorder %v5179, 12
    %vm5212 = vcmp.lt.s32.totalorder %v5180, 12
    %vm5213 = vcmp.lt.s32.totalorder %v5181, 12
    %vm5214 = vcmp.lt.s32.totalorder %v5182, 12
    %vm5215 = vcmp.lt.s32.totalorder %v5183, 12
    %vm5216 = vcmp.lt.s32.totalorder %v5184, 12
    %vm5217 = vcmp.lt.s32.totalorder %v5185, 12
    %vm5218 = vcmp.lt.s32.totalorder %v5186, 12
    %vm5219 = vcmp.lt.s32.totalorder %v5187, 12
    %vm5220 = vcmp.lt.s32.totalorder %v5188, 12
    %vm5221 = vcmp.lt.s32.totalorder %v5189, 12
    %vm5222 = vcmp.lt.s32.totalorder %v5190, 12
    %vm5223 = vcmp.lt.s32.totalorder %v5191, 12
    %vm5224 = vcmp.lt.s32.totalorder %v5192, 12
    %vm5225 = vcmp.lt.s32.totalorder %v5193, 12
    %vm5226 = vcmp.lt.s32.totalorder %v5194, 12
    %vm5227 = vcmp.lt.s32.totalorder %v5195, 12
    %vm5228 = vcmp.lt.s32.totalorder %v5196, 12
    %vm5229 = vcmp.lt.s32.totalorder %v5197, 12
    %vm5230 = vcmp.lt.s32.totalorder %v5198, 12
    %vm5231 = vcmp.lt.s32.totalorder %v5199, 12
    %vm5232 = vcmp.lt.s32.totalorder %v5200, 12
    %vm5233 = vcmp.lt.s32.totalorder %v5201, 12
    %vm5234 = vcmp.lt.s32.totalorder %v5202, 12
    %vm5235 = vcmp.lt.s32.totalorder %v5203, 12
    %vm5236 = vcmp.lt.s32.totalorder %v5204, 12
    %vm5237 = vcmp.lt.s32.totalorder %v5205, 12
    %vm5238 = vmand %vm5206, %vm5222
    %vm5239 = vmand %vm5207, %vm5223
    %vm5240 = vmand %vm5208, %vm5224
    %vm5241 = vmand %vm5209, %vm5225
    %vm5242 = vmand %vm5210, %vm5226
    %vm5243 = vmand %vm5211, %vm5227
    %vm5244 = vmand %vm5212, %vm5228
    %vm5245 = vmand %vm5213, %vm5229
    %vm5246 = vmand %vm5214, %vm5230
    %vm5247 = vmand %vm5215, %vm5231
    %vm5248 = vmand %vm5216, %vm5232
    %vm5249 = vmand %vm5217, %vm5233
    %vm5250 = vmand %vm5218, %vm5234
    %vm5251 = vmand %vm5219, %vm5235
    %vm5252 = vmand %vm5220, %vm5236
    %vm5253 = vmand %vm5221, %vm5237
    %v5254 = vsel %vm5238, 1.0, 0.0
    %v5255 = vsel %vm5239, 1.0, 0.0
    %v5256 = vsel %vm5240, 1.0, 0.0
    %v5257 = vsel %vm5241, 1.0, 0.0
    %v5258 = vsel %vm5242, 1.0, 0.0
    %v5259 = vsel %vm5243, 1.0, 0.0
    %v5260 = vsel %vm5244, 1.0, 0.0
    %v5261 = vsel %vm5245, 1.0, 0.0
    %v5262 = vsel %vm5246, 1.0, 0.0
    %v5263 = vsel %vm5247, 1.0, 0.0
    %v5264 = vsel %vm5248, 1.0, 0.0
    %v5265 = vsel %vm5249, 1.0, 0.0
    %v5266 = vsel %vm5250, 1.0, 0.0
    %v5267 = vsel %vm5251, 1.0, 0.0
    %v5268 = vsel %vm5252, 1.0, 0.0
    %v5269 = vsel %vm5253, 1.0, 0.0
    %v5270 = vmul.f32 %v5091, %v5254
    %v5271 = vmul.f32 %v5092, %v5255
    %v5272 = vmul.f32 %v5093, %v5256
    %v5273 = vmul.f32 %v5094, %v5257
    %v5274 = vmul.f32 %v5095, %v5258
    %v5275 = vmul.f32 %v5096, %v5259
    %v5276 = vmul.f32 %v5097, %v5260
    %v5277 = vmul.f32 %v5098, %v5261
    %v5278 = vmul.f32 %v5099, %v5262
    %v5279 = vmul.f32 %v5100, %v5263
    %v5280 = vmul.f32 %v5101, %v5264
    %v5281 = vmul.f32 %v5102, %v5265
    %v5282 = vmul.f32 %v5103, %v5266
    %v5283 = vmul.f32 %v5104, %v5267
    %v5284 = vmul.f32 %v5105, %v5268
    %v5285 = vmul.f32 %v5106, %v5269
    %v5286 = vsel %vm68, %v5270, 0.0
    %v5287 = vsel %vm68, %v5271, 0.0
    %v5288 = vadd.f32 %v5286, %v5287
    %v5289 = vsel %vm68, %v5272, 0.0
    %v5290 = vadd.f32 %v5288, %v5289
    %v5291 = vsel %vm68, %v5273, 0.0
    %v5292 = vadd.f32 %v5290, %v5291
    %v5293 = vsel %vm68, %v5274, 0.0
    %v5294 = vadd.f32 %v5292, %v5293
    %v5295 = vsel %vm68, %v5275, 0.0
    %v5296 = vadd.f32 %v5294, %v5295
    %v5297 = vsel %vm68, %v5276, 0.0
    %v5298 = vadd.f32 %v5296, %v5297
    %v5299 = vsel %vm68, %v5277, 0.0
    %v5300 = vadd.f32 %v5298, %v5299
    %v5301 = vsel %vm68, %v5278, 0.0
    %v5302 = vadd.f32 %v5300, %v5301
    %v5303 = vsel %vm68, %v5279, 0.0
    %v5304 = vadd.f32 %v5302, %v5303
    %v5305 = vsel %vm68, %v5280, 0.0
    %v5306 = vadd.f32 %v5304, %v5305
    %v5307 = vsel %vm68, %v5281, 0.0
    %v5308 = vadd.f32 %v5306, %v5307
    %v5309 = vsel %vm68, %v5282, 0.0
    %v5310 = vadd.f32 %v5308, %v5309
    %v5311 = vsel %vm68, %v5283, 0.0
    %v5312 = vadd.f32 %v5310, %v5311
    %v5313 = vsel %vm68, %v5284, 0.0
    %v5314 = vadd.f32 %v5312, %v5313
    %v5315 = vsel %vm68, %v5285, 0.0
    %v5316 = vadd.f32 %v5314, %v5315
    %v5317 = vrot.slane %v5316, 4
    %v5318 = vadd.f32 %v5316, %v5317
    %v5319 = vrot.slane %v5318, 2
    %v5320 = vadd.f32 %v5318, %v5319
    %v5321 = vrot.slane %v5320, 1
    %v5322 = vadd.f32 %v5320, %v5321
    %v5323 = vadd.f32 %v3930, %v5322
    %v5324 = vmul.f32 %v5091, %v5091
    %v5325 = vmul.f32 %v5092, %v5092
    %v5326 = vmul.f32 %v5093, %v5093
    %v5327 = vmul.f32 %v5094, %v5094
    %v5328 = vmul.f32 %v5095, %v5095
    %v5329 = vmul.f32 %v5096, %v5096
    %v5330 = vmul.f32 %v5097, %v5097
    %v5331 = vmul.f32 %v5098, %v5098
    %v5332 = vmul.f32 %v5099, %v5099
    %v5333 = vmul.f32 %v5100, %v5100
    %v5334 = vmul.f32 %v5101, %v5101
    %v5335 = vmul.f32 %v5102, %v5102
    %v5336 = vmul.f32 %v5103, %v5103
    %v5337 = vmul.f32 %v5104, %v5104
    %v5338 = vmul.f32 %v5105, %v5105
    %v5339 = vmul.f32 %v5106, %v5106
    %v5340 = vmul.f32 %v5324, %v5254
    %v5341 = vmul.f32 %v5325, %v5255
    %v5342 = vmul.f32 %v5326, %v5256
    %v5343 = vmul.f32 %v5327, %v5257
    %v5344 = vmul.f32 %v5328, %v5258
    %v5345 = vmul.f32 %v5329, %v5259
    %v5346 = vmul.f32 %v5330, %v5260
    %v5347 = vmul.f32 %v5331, %v5261
    %v5348 = vmul.f32 %v5332, %v5262
    %v5349 = vmul.f32 %v5333, %v5263
    %v5350 = vmul.f32 %v5334, %v5264
    %v5351 = vmul.f32 %v5335, %v5265
    %v5352 = vmul.f32 %v5336, %v5266
    %v5353 = vmul.f32 %v5337, %v5267
    %v5354 = vmul.f32 %v5338, %v5268
    %v5355 = vmul.f32 %v5339, %v5269
    %v5356 = vsel %vm68, %v5340, 0.0
    %v5357 = vsel %vm68, %v5341, 0.0
    %v5358 = vadd.f32 %v5356, %v5357
    %v5359 = vsel %vm68, %v5342, 0.0
    %v5360 = vadd.f32 %v5358, %v5359
    %v5361 = vsel %vm68, %v5343, 0.0
    %v5362 = vadd.f32 %v5360, %v5361
    %v5363 = vsel %vm68, %v5344, 0.0
    %v5364 = vadd.f32 %v5362, %v5363
    %v5365 = vsel %vm68, %v5345, 0.0
    %v5366 = vadd.f32 %v5364, %v5365
    %v5367 = vsel %vm68, %v5346, 0.0
    %v5368 = vadd.f32 %v5366, %v5367
    %v5369 = vsel %vm68, %v5347, 0.0
    %v5370 = vadd.f32 %v5368, %v5369
    %v5371 = vsel %vm68, %v5348, 0.0
    %v5372 = vadd.f32 %v5370, %v5371
    %v5373 = vsel %vm68, %v5349, 0.0
    %v5374 = vadd.f32 %v5372, %v5373
    %v5375 = vsel %vm68, %v5350, 0.0
    %v5376 = vadd.f32 %v5374, %v5375
    %v5377 = vsel %vm68, %v5351, 0.0
    %v5378 = vadd.f32 %v5376, %v5377
    %v5379 = vsel %vm68, %v5352, 0.0
    %v5380 = vadd.f32 %v5378, %v5379
    %v5381 = vsel %vm68, %v5353, 0.0
    %v5382 = vadd.f32 %v5380, %v5381
    %v5383 = vsel %vm68, %v5354, 0.0
    %v5384 = vadd.f32 %v5382, %v5383
    %v5385 = vsel %vm68, %v5355, 0.0
    %v5386 = vadd.f32 %v5384, %v5385
    %v5387 = vrot.slane %v5386, 4
    %v5388 = vadd.f32 %v5386, %v5387
    %v5389 = vrot.slane %v5388, 2
    %v5390 = vadd.f32 %v5388, %v5389
    %v5391 = vrot.slane %v5390, 1
    %v5392 = vadd.f32 %v5390, %v5391
    %v5393 = vadd.f32 %v3931, %v5392
  $region80: #{cnn_forward.1} parent=0 // loop_footer
    %s3929 = sadd.s32 1, %s3925
  $region81: #{cnn_forward.1} parent=0 // loop_footer_branch
    %3924 = sbr.rel target = $region77
  $region82: #{cnn_forward.1} parent=0 // loop_exit
    _
  %v5394 = vrcp.pop 288.0
  %v5395 = vmul.f32 288.0, %v5394
  %v5396 = vsub.f32 1.0, %v5395
  %v5397 = vmul.f32 %v5394, %v5396
  %v5398 = vadd.f32 %v5394, %v5397
  %vm5399 = vweird.f32 %v5394
  %v5400 = vsel %vm5399, %v5394, %v5398
  %v5401 = vmul.f32 %v3930, %v5400
  %v5402 = vmul.f32 %v3931, %v5400
  %v5403 = vmul.f32 %v5401, %v5401
  %v5404 = vsub.f32 %v5402, %v5403
  %v5405 = vmax.f32 %v5404, 0.0
  %v5406 = vadd.f32 %v5405, 1e-05
  %v5407 = vrsqrt.pop %v5406
  %v5408 = vmul.f32 %v5407, %v5406
  %v5409 = vmul.f32 %v5408, %v5407
  %v5410 = vmul.f32 0.5, %v5409
  %v5411 = vsub.f32 1.5, %v5410
  %v5412 = vmul.f32 %v5407, %v5411
  %vm5413 = vweird.f32 %v5406
  %vm5414 = vweird.f32 %v5407
  %vm5415 = vmor %vm5413, %vm5414
  %v5416 = vsel %vm5415, %v5407, %v5412
  loop: start=0, step=1, limit=4
  $region83: #{cnn_forward.1} parent=0 // loop_pre_header
    _
  $region84: #{cnn_forward.1} parent=0 // loop_header
    %s5418 = sphi 0, %s5422
    %p5419 = scmp.ge.s32.totalorder %s5418, 4
  $region85: #{cnn_forward.1} parent=0 // loop_header_branch
    %5421 = sbr.rel (%p5419) target = $region89
  $region86: #{cnn_forward.1} parent=0 // loop_body
    %s5423 = smul.u32 %s5418, 128
    %s5424 = scalar_lea.vmem [#allocation5], %s5423
    %v5425 = vld [vmem:[%s5424] sm:$0xff]
    %v5426 = vld [vmem:[%s5424 + $0x8] sm:$0xff]
    %v5427 = vld [vmem:[%s5424 + $0x10] sm:$0xff]
    %v5428 = vld [vmem:[%s5424 + $0x18] sm:$0xff]
    %v5429 = vld [vmem:[%s5424 + $0x20] sm:$0xff]
    %v5430 = vld [vmem:[%s5424 + $0x28] sm:$0xff]
    %v5431 = vld [vmem:[%s5424 + $0x30] sm:$0xff]
    %v5432 = vld [vmem:[%s5424 + $0x38] sm:$0xff]
    %v5433 = vld [vmem:[%s5424 + $0x40] sm:$0xff]
    %v5434 = vld [vmem:[%s5424 + $0x48] sm:$0xff]
    %v5435 = vld [vmem:[%s5424 + $0x50] sm:$0xff]
    %v5436 = vld [vmem:[%s5424 + $0x58] sm:$0xff]
    %v5437 = vld [vmem:[%s5424 + $0x60] sm:$0xff]
    %v5438 = vld [vmem:[%s5424 + $0x68] sm:$0xff]
    %v5439 = vld [vmem:[%s5424 + $0x70] sm:$0xff]
    %v5440 = vld [vmem:[%s5424 + $0x78] sm:$0xff]
    %v5441 = vsub.f32 %v5425, %v5401
    %v5442 = vsub.f32 %v5426, %v5401
    %v5443 = vsub.f32 %v5427, %v5401
    %v5444 = vsub.f32 %v5428, %v5401
    %v5445 = vsub.f32 %v5429, %v5401
    %v5446 = vsub.f32 %v5430, %v5401
    %v5447 = vsub.f32 %v5431, %v5401
    %v5448 = vsub.f32 %v5432, %v5401
    %v5449 = vsub.f32 %v5433, %v5401
    %v5450 = vsub.f32 %v5434, %v5401
    %v5451 = vsub.f32 %v5435, %v5401
    %v5452 = vsub.f32 %v5436, %v5401
    %v5453 = vsub.f32 %v5437, %v5401
    %v5454 = vsub.f32 %v5438, %v5401
    %v5455 = vsub.f32 %v5439, %v5401
    %v5456 = vsub.f32 %v5440, %v5401
    %v5457 = vmul.f32 %v5441, %v5416
    %v5458 = vmul.f32 %v5442, %v5416
    %v5459 = vmul.f32 %v5443, %v5416
    %v5460 = vmul.f32 %v5444, %v5416
    %v5461 = vmul.f32 %v5445, %v5416
    %v5462 = vmul.f32 %v5446, %v5416
    %v5463 = vmul.f32 %v5447, %v5416
    %v5464 = vmul.f32 %v5448, %v5416
    %v5465 = vmul.f32 %v5449, %v5416
    %v5466 = vmul.f32 %v5450, %v5416
    %v5467 = vmul.f32 %v5451, %v5416
    %v5468 = vmul.f32 %v5452, %v5416
    %v5469 = vmul.f32 %v5453, %v5416
    %v5470 = vmul.f32 %v5454, %v5416
    %v5471 = vmul.f32 %v5455, %v5416
    %v5472 = vmul.f32 %v5456, %v5416
    %v5473 = vmax.f32 %v5457, 0.0
    %v5474 = vmax.f32 %v5458, 0.0
    %v5475 = vmax.f32 %v5459, 0.0
    %v5476 = vmax.f32 %v5460, 0.0
    %v5477 = vmax.f32 %v5461, 0.0
    %v5478 = vmax.f32 %v5462, 0.0
    %v5479 = vmax.f32 %v5463, 0.0
    %v5480 = vmax.f32 %v5464, 0.0
    %v5481 = vmax.f32 %v5465, 0.0
    %v5482 = vmax.f32 %v5466, 0.0
    %v5483 = vmax.f32 %v5467, 0.0
    %v5484 = vmax.f32 %v5468, 0.0
    %v5485 = vmax.f32 %v5469, 0.0
    %v5486 = vmax.f32 %v5470, 0.0
    %v5487 = vmax.f32 %v5471, 0.0
    %v5488 = vmax.f32 %v5472, 0.0
    %5489 = vst.msk [vmem:[%s5424] sm:$0xff] %vm68, %v5473
    %5490 = vst.msk [vmem:[%s5424 + $0x8] sm:$0xff] %vm68, %v5474
    %5491 = vst.msk [vmem:[%s5424 + $0x10] sm:$0xff] %vm68, %v5475
    %5492 = vst.msk [vmem:[%s5424 + $0x18] sm:$0xff] %vm68, %v5476
    %5493 = vst.msk [vmem:[%s5424 + $0x20] sm:$0xff] %vm68, %v5477
    %5494 = vst.msk [vmem:[%s5424 + $0x28] sm:$0xff] %vm68, %v5478
    %5495 = vst.msk [vmem:[%s5424 + $0x30] sm:$0xff] %vm68, %v5479
    %5496 = vst.msk [vmem:[%s5424 + $0x38] sm:$0xff] %vm68, %v5480
    %5497 = vst.msk [vmem:[%s5424 + $0x40] sm:$0xff] %vm68, %v5481
    %5498 = vst.msk [vmem:[%s5424 + $0x48] sm:$0xff] %vm68, %v5482
    %5499 = vst.msk [vmem:[%s5424 + $0x50] sm:$0xff] %vm68, %v5483
    %5500 = vst.msk [vmem:[%s5424 + $0x58] sm:$0xff] %vm68, %v5484
    %5501 = vst.msk [vmem:[%s5424 + $0x60] sm:$0xff] %vm68, %v5485
    %5502 = vst.msk [vmem:[%s5424 + $0x68] sm:$0xff] %vm68, %v5486
    %5503 = vst.msk [vmem:[%s5424 + $0x70] sm:$0xff] %vm68, %v5487
    %5504 = vst.msk [vmem:[%s5424 + $0x78] sm:$0xff] %vm68, %v5488
  $region87: #{cnn_forward.1} parent=0 // loop_footer
    %s5422 = sadd.s32 1, %s5418
  $region88: #{cnn_forward.1} parent=0 // loop_footer_branch
    %5417 = sbr.rel target = $region84
  $region89: #{cnn_forward.1} parent=0 // loop_exit
    _
  loop: start=0, step=1, limit=4
  $region90: #{cnn_forward.1} parent=0 // loop_pre_header
    _
  $region91: #{cnn_forward.1} parent=0 // loop_header
    %s5506 = sphi 0, %s5510
    %p5507 = scmp.ge.s32.totalorder %s5506, 4
  $region92: #{cnn_forward.1} parent=0 // loop_header_branch
    %5509 = sbr.rel (%p5507) target = $region96
  $region93: #{cnn_forward.1} parent=0 // loop_body
    %s5511 = smul.u32 %s5506, 128
    %s5512 = scalar_lea.vmem [#allocation5], %s5511
    %v5513 = vld [vmem:[%s5512] sm:$0xff]
    %v5514 = vld [vmem:[%s5512 + $0x8] sm:$0xff]
    %v5515 = vld [vmem:[%s5512 + $0x10] sm:$0xff]
    %v5516 = vld [vmem:[%s5512 + $0x18] sm:$0xff]
    %v5517 = vld [vmem:[%s5512 + $0x20] sm:$0xff]
    %v5518 = vld [vmem:[%s5512 + $0x28] sm:$0xff]
    %v5519 = vld [vmem:[%s5512 + $0x30] sm:$0xff]
    %v5520 = vld [vmem:[%s5512 + $0x38] sm:$0xff]
    %v5521 = vld [vmem:[%s5512 + $0x40] sm:$0xff]
    %v5522 = vld [vmem:[%s5512 + $0x48] sm:$0xff]
    %v5523 = vld [vmem:[%s5512 + $0x50] sm:$0xff]
    %v5524 = vld [vmem:[%s5512 + $0x58] sm:$0xff]
    %v5525 = vld [vmem:[%s5512 + $0x60] sm:$0xff]
    %v5526 = vld [vmem:[%s5512 + $0x68] sm:$0xff]
    %v5527 = vld [vmem:[%s5512 + $0x70] sm:$0xff]
    %v5528 = vld [vmem:[%s5512 + $0x78] sm:$0xff]
    %v5529 = vpack.c.bf16 %v5514, %v5513
    %v5530 = vpack.c.bf16 %v5516, %v5515
    %v5531 = vpack.c.bf16 %v5518, %v5517
    %v5532 = vpack.c.bf16 %v5520, %v5519
    %v5533 = vpack.c.bf16 %v5522, %v5521
    %v5534 = vpack.c.bf16 %v5524, %v5523
    %v5535 = vpack.c.bf16 %v5526, %v5525
    %v5536 = vpack.c.bf16 %v5528, %v5527
    %v5537 = vld [vmem:[%s7] sm:$0xf]
    %v5538 = vld [vmem:[%s7 + $0x4] sm:$0xf]
    %v5539 = vld [vmem:[%s7 + $0x8] sm:$0xf]
    %v5540 = vld [vmem:[%s7 + $0xc] sm:$0xf]
    %v5541 = vld [vmem:[%s7 + $0x10] sm:$0xf]
    %v5542 = vld [vmem:[%s7 + $0x14] sm:$0xf]
    %v5543 = vld [vmem:[%s7 + $0x18] sm:$0xf]
    %v5544 = vld [vmem:[%s7 + $0x1c] sm:$0xf]
    %s5545 = sadd.s32 %s5511, 1
    %s5546 = scalar_lea.vmem [#allocation5], %s5545
    %v5547 = vld [vmem:[%s5546] sm:$0xff]
    %v5548 = vld [vmem:[%s5546 + $0x8] sm:$0xff]
    %v5549 = vld [vmem:[%s5546 + $0x10] sm:$0xff]
    %v5550 = vld [vmem:[%s5546 + $0x18] sm:$0xff]
    %v5551 = vld [vmem:[%s5546 + $0x20] sm:$0xff]
    %v5552 = vld [vmem:[%s5546 + $0x28] sm:$0xff]
    %v5553 = vld [vmem:[%s5546 + $0x30] sm:$0xff]
    %v5554 = vld [vmem:[%s5546 + $0x38] sm:$0xff]
    %v5555 = vld [vmem:[%s5546 + $0x40] sm:$0xff]
    %v5556 = vld [vmem:[%s5546 + $0x48] sm:$0xff]
    %v5557 = vld [vmem:[%s5546 + $0x50] sm:$0xff]
    %v5558 = vld [vmem:[%s5546 + $0x58] sm:$0xff]
    %v5559 = vld [vmem:[%s5546 + $0x60] sm:$0xff]
    %v5560 = vld [vmem:[%s5546 + $0x68] sm:$0xff]
    %v5561 = vld [vmem:[%s5546 + $0x70] sm:$0xff]
    %v5562 = vld [vmem:[%s5546 + $0x78] sm:$0xff]
    %v5563 = vpack.c.bf16 %v5548, %v5547
    %v5564 = vpack.c.bf16 %v5550, %v5549
    %v5565 = vpack.c.bf16 %v5552, %v5551
    %v5566 = vpack.c.bf16 %v5554, %v5553
    %v5567 = vpack.c.bf16 %v5556, %v5555
    %v5568 = vpack.c.bf16 %v5558, %v5557
    %v5569 = vpack.c.bf16 %v5560, %v5559
    %v5570 = vpack.c.bf16 %v5562, %v5561
    %s5571 = scalar_lea.vmem %s7, 32
    %v5572 = vld [vmem:[%s5571] sm:$0xf]
    %v5573 = vld [vmem:[%s5571 + $0x4] sm:$0xf]
    %v5574 = vld [vmem:[%s5571 + $0x8] sm:$0xf]
    %v5575 = vld [vmem:[%s5571 + $0xc] sm:$0xf]
    %v5576 = vld [vmem:[%s5571 + $0x10] sm:$0xf]
    %v5577 = vld [vmem:[%s5571 + $0x14] sm:$0xf]
    %v5578 = vld [vmem:[%s5571 + $0x18] sm:$0xf]
    %v5579 = vld [vmem:[%s5571 + $0x1c] sm:$0xf]
    %v5588 = vunpack.c.l.b16 %v5572
    %v5589 = vunpack.c.l.b16 %v5573
    %v5590 = vunpack.c.l.b16 %v5574
    %v5591 = vunpack.c.l.b16 %v5575
    %v5592 = vunpack.c.l.b16 %v5576
    %v5593 = vunpack.c.l.b16 %v5577
    %v5594 = vunpack.c.l.b16 %v5578
    %v5595 = vunpack.c.l.b16 %v5579
    %v5596 = vpack.c.b16 %v5589, %v5588
    %v5597 = vpack.c.b16 %v5591, %v5590
    %v5598 = vpack.c.b16 %v5593, %v5592
    %v5599 = vpack.c.b16 %v5595, %v5594
    %v5605 = vsel %vm68, %v5563, 0
    %v5608 = vsel %vm68, %v5564, 0
    %v5611 = vsel %vm68, %v5565, 0
    %v5614 = vsel %vm68, %v5566, 0
    %v5617 = vsel %vm68, %v5567, 0
    %v5620 = vsel %vm68, %v5568, 0
    %v5623 = vsel %vm68, %v5569, 0
    %v5626 = vsel %vm68, %v5570, 0
    %5628 = vmatpush.bf16.msra.mxu0 0
    %5629 = vmatpush.bf16.msra.mxu0 0
    %5630 = vmatpush.bf16.msra.mxu0 0
    %5631 = vmatpush.bf16.msra.mxu0 0
    %5632 = vmatpush.bf16.msra.mxu0 %v5599
    %5633 = vmatpush.bf16.msra.mxu0 %v5598
    %5634 = vmatpush.bf16.msra.mxu0 %v5597
    %5635 = vmatpush.bf16.msra.mxu0 %v5596
    %5636 = vmatmul.bf16.gmra.mxu0 %v5605
    %v5637 = vpop.f32.mrf.mxu0
    %v5638 = vadd.f32 0.0, %v5637
    %v5639 = vpop.f32.mrf.mxu0
    %v5640 = vadd.f32 0.0, %v5639
    %5641 = vmatmul.bf16.gmra.mxu0 %v5608
    %v5642 = vpop.f32.mrf.mxu0
    %v5643 = vadd.f32 0.0, %v5642
    %v5644 = vpop.f32.mrf.mxu0
    %v5645 = vadd.f32 0.0, %v5644
    %5646 = vmatmul.bf16.gmra.mxu0 %v5611
    %v5647 = vpop.f32.mrf.mxu0
    %v5648 = vadd.f32 0.0, %v5647
    %v5649 = vpop.f32.mrf.mxu0
    %v5650 = vadd.f32 0.0, %v5649
    %5651 = vmatmul.bf16.gmra.mxu0 %v5614
    %v5652 = vpop.f32.mrf.mxu0
    %v5653 = vadd.f32 0.0, %v5652
    %v5654 = vpop.f32.mrf.mxu0
    %v5655 = vadd.f32 0.0, %v5654
    %5656 = vmatmul.bf16.gmra.mxu0 %v5617
    %v5657 = vpop.f32.mrf.mxu0
    %v5658 = vadd.f32 0.0, %v5657
    %v5659 = vpop.f32.mrf.mxu0
    %v5660 = vadd.f32 0.0, %v5659
    %5661 = vmatmul.bf16.gmra.mxu0 %v5620
    %v5662 = vpop.f32.mrf.mxu0
    %v5663 = vadd.f32 0.0, %v5662
    %v5664 = vpop.f32.mrf.mxu0
    %v5665 = vadd.f32 0.0, %v5664
    %5666 = vmatmul.bf16.gmra.mxu0 %v5623
    %v5667 = vpop.f32.mrf.mxu0
    %v5668 = vadd.f32 0.0, %v5667
    %v5669 = vpop.f32.mrf.mxu0
    %v5670 = vadd.f32 0.0, %v5669
    %5671 = vmatmul.bf16.gmra.mxu0 %v5626
    %v5672 = vpop.f32.mrf.mxu0
    %v5673 = vadd.f32 0.0, %v5672
    %v5674 = vpop.f32.mrf.mxu0
    %v5675 = vadd.f32 0.0, %v5674
    %5676 = vdwg.mxu0
    %v5685 = vunpack.c.l.b16 %v5537
    %v5686 = vunpack.c.l.b16 %v5538
    %v5687 = vunpack.c.l.b16 %v5539
    %v5688 = vunpack.c.l.b16 %v5540
    %v5689 = vunpack.c.l.b16 %v5541
    %v5690 = vunpack.c.l.b16 %v5542
    %v5691 = vunpack.c.l.b16 %v5543
    %v5692 = vunpack.c.l.b16 %v5544
    %v5693 = vpack.c.b16 %v5686, %v5685
    %v5694 = vpack.c.b16 %v5688, %v5687
    %v5695 = vpack.c.b16 %v5690, %v5689
    %v5696 = vpack.c.b16 %v5692, %v5691
    %v5702 = vsel %vm68, %v5529, 0
    %v5705 = vsel %vm68, %v5530, 0
    %v5708 = vsel %vm68, %v5531, 0
    %v5711 = vsel %vm68, %v5532, 0
    %v5714 = vsel %vm68, %v5533, 0
    %v5717 = vsel %vm68, %v5534, 0
    %v5720 = vsel %vm68, %v5535, 0
    %v5723 = vsel %vm68, %v5536, 0
    %5725 = vmatpush.bf16.msra.mxu0 0
    %5726 = vmatpush.bf16.msra.mxu0 0
    %5727 = vmatpush.bf16.msra.mxu0 0
    %5728 = vmatpush.bf16.msra.mxu0 0
    %5729 = vmatpush.bf16.msra.mxu0 %v5696
    %5730 = vmatpush.bf16.msra.mxu0 %v5695
    %5731 = vmatpush.bf16.msra.mxu0 %v5694
    %5732 = vmatpush.bf16.msra.mxu0 %v5693
    %5733 = vmatmul.bf16.gmra.mxu0 %v5702
    %v5734 = vpop.f32.mrf.mxu0
    %v5735 = vadd.f32 %v5638, %v5734
    %v5736 = vpop.f32.mrf.mxu0
    %v5737 = vadd.f32 %v5640, %v5736
    %5738 = vmatmul.bf16.gmra.mxu0 %v5705
    %v5739 = vpop.f32.mrf.mxu0
    %v5740 = vadd.f32 %v5643, %v5739
    %v5741 = vpop.f32.mrf.mxu0
    %v5742 = vadd.f32 %v5645, %v5741
    %5743 = vmatmul.bf16.gmra.mxu0 %v5708
    %v5744 = vpop.f32.mrf.mxu0
    %v5745 = vadd.f32 %v5648, %v5744
    %v5746 = vpop.f32.mrf.mxu0
    %v5747 = vadd.f32 %v5650, %v5746
    %5748 = vmatmul.bf16.gmra.mxu0 %v5711
    %v5749 = vpop.f32.mrf.mxu0
    %v5750 = vadd.f32 %v5653, %v5749
    %v5751 = vpop.f32.mrf.mxu0
    %v5752 = vadd.f32 %v5655, %v5751
    %5753 = vmatmul.bf16.gmra.mxu0 %v5714
    %v5754 = vpop.f32.mrf.mxu0
    %v5755 = vadd.f32 %v5658, %v5754
    %v5756 = vpop.f32.mrf.mxu0
    %v5757 = vadd.f32 %v5660, %v5756
    %5758 = vmatmul.bf16.gmra.mxu0 %v5717
    %v5759 = vpop.f32.mrf.mxu0
    %v5760 = vadd.f32 %v5663, %v5759
    %v5761 = vpop.f32.mrf.mxu0
    %v5762 = vadd.f32 %v5665, %v5761
    %5763 = vmatmul.bf16.gmra.mxu0 %v5720
    %v5764 = vpop.f32.mrf.mxu0
    %v5765 = vadd.f32 %v5668, %v5764
    %v5766 = vpop.f32.mrf.mxu0
    %v5767 = vadd.f32 %v5670, %v5766
    %5768 = vmatmul.bf16.gmra.mxu0 %v5723
    %v5769 = vpop.f32.mrf.mxu0
    %v5770 = vadd.f32 %v5673, %v5769
    %v5771 = vpop.f32.mrf.mxu0
    %v5772 = vadd.f32 %v5675, %v5771
    %5773 = vdwg.mxu0
    %s5774 = sadd.s32 %s5511, 2
    %s5775 = scalar_lea.vmem [#allocation5], %s5774
    %v5776 = vld [vmem:[%s5775] sm:$0xff]
    %v5777 = vld [vmem:[%s5775 + $0x8] sm:$0xff]
    %v5778 = vld [vmem:[%s5775 + $0x10] sm:$0xff]
    %v5779 = vld [vmem:[%s5775 + $0x18] sm:$0xff]
    %v5780 = vld [vmem:[%s5775 + $0x20] sm:$0xff]
    %v5781 = vld [vmem:[%s5775 + $0x28] sm:$0xff]
    %v5782 = vld [vmem:[%s5775 + $0x30] sm:$0xff]
    %v5783 = vld [vmem:[%s5775 + $0x38] sm:$0xff]
    %v5784 = vld [vmem:[%s5775 + $0x40] sm:$0xff]
    %v5785 = vld [vmem:[%s5775 + $0x48] sm:$0xff]
    %v5786 = vld [vmem:[%s5775 + $0x50] sm:$0xff]
    %v5787 = vld [vmem:[%s5775 + $0x58] sm:$0xff]
    %v5788 = vld [vmem:[%s5775 + $0x60] sm:$0xff]
    %v5789 = vld [vmem:[%s5775 + $0x68] sm:$0xff]
    %v5790 = vld [vmem:[%s5775 + $0x70] sm:$0xff]
    %v5791 = vld [vmem:[%s5775 + $0x78] sm:$0xff]
    %v5792 = vpack.c.bf16 %v5777, %v5776
    %v5793 = vpack.c.bf16 %v5779, %v5778
    %v5794 = vpack.c.bf16 %v5781, %v5780
    %v5795 = vpack.c.bf16 %v5783, %v5782
    %v5796 = vpack.c.bf16 %v5785, %v5784
    %v5797 = vpack.c.bf16 %v5787, %v5786
    %v5798 = vpack.c.bf16 %v5789, %v5788
    %v5799 = vpack.c.bf16 %v5791, %v5790
    %s5800 = scalar_lea.vmem %s7, 64
    %v5801 = vld [vmem:[%s5800] sm:$0xf]
    %v5802 = vld [vmem:[%s5800 + $0x4] sm:$0xf]
    %v5803 = vld [vmem:[%s5800 + $0x8] sm:$0xf]
    %v5804 = vld [vmem:[%s5800 + $0xc] sm:$0xf]
    %v5805 = vld [vmem:[%s5800 + $0x10] sm:$0xf]
    %v5806 = vld [vmem:[%s5800 + $0x14] sm:$0xf]
    %v5807 = vld [vmem:[%s5800 + $0x18] sm:$0xf]
    %v5808 = vld [vmem:[%s5800 + $0x1c] sm:$0xf]
    %v5817 = vunpack.c.l.b16 %v5801
    %v5818 = vunpack.c.l.b16 %v5802
    %v5819 = vunpack.c.l.b16 %v5803
    %v5820 = vunpack.c.l.b16 %v5804
    %v5821 = vunpack.c.l.b16 %v5805
    %v5822 = vunpack.c.l.b16 %v5806
    %v5823 = vunpack.c.l.b16 %v5807
    %v5824 = vunpack.c.l.b16 %v5808
    %v5825 = vpack.c.b16 %v5818, %v5817
    %v5826 = vpack.c.b16 %v5820, %v5819
    %v5827 = vpack.c.b16 %v5822, %v5821
    %v5828 = vpack.c.b16 %v5824, %v5823
    %v5834 = vsel %vm68, %v5792, 0
    %v5837 = vsel %vm68, %v5793, 0
    %v5840 = vsel %vm68, %v5794, 0
    %v5843 = vsel %vm68, %v5795, 0
    %v5846 = vsel %vm68, %v5796, 0
    %v5849 = vsel %vm68, %v5797, 0
    %v5852 = vsel %vm68, %v5798, 0
    %v5855 = vsel %vm68, %v5799, 0
    %5857 = vmatpush.bf16.msra.mxu0 0
    %5858 = vmatpush.bf16.msra.mxu0 0
    %5859 = vmatpush.bf16.msra.mxu0 0
    %5860 = vmatpush.bf16.msra.mxu0 0
    %5861 = vmatpush.bf16.msra.mxu0 %v5828
    %5862 = vmatpush.bf16.msra.mxu0 %v5827
    %5863 = vmatpush.bf16.msra.mxu0 %v5826
    %5864 = vmatpush.bf16.msra.mxu0 %v5825
    %5865 = vmatmul.bf16.gmra.mxu0 %v5834
    %v5866 = vpop.f32.mrf.mxu0
    %v5867 = vadd.f32 0.0, %v5866
    %v5868 = vpop.f32.mrf.mxu0
    %v5869 = vadd.f32 0.0, %v5868
    %5870 = vmatmul.bf16.gmra.mxu0 %v5837
    %v5871 = vpop.f32.mrf.mxu0
    %v5872 = vadd.f32 0.0, %v5871
    %v5873 = vpop.f32.mrf.mxu0
    %v5874 = vadd.f32 0.0, %v5873
    %5875 = vmatmul.bf16.gmra.mxu0 %v5840
    %v5876 = vpop.f32.mrf.mxu0
    %v5877 = vadd.f32 0.0, %v5876
    %v5878 = vpop.f32.mrf.mxu0
    %v5879 = vadd.f32 0.0, %v5878
    %5880 = vmatmul.bf16.gmra.mxu0 %v5843
    %v5881 = vpop.f32.mrf.mxu0
    %v5882 = vadd.f32 0.0, %v5881
    %v5883 = vpop.f32.mrf.mxu0
    %v5884 = vadd.f32 0.0, %v5883
    %5885 = vmatmul.bf16.gmra.mxu0 %v5846
    %v5886 = vpop.f32.mrf.mxu0
    %v5887 = vadd.f32 0.0, %v5886
    %v5888 = vpop.f32.mrf.mxu0
    %v5889 = vadd.f32 0.0, %v5888
    %5890 = vmatmul.bf16.gmra.mxu0 %v5849
    %v5891 = vpop.f32.mrf.mxu0
    %v5892 = vadd.f32 0.0, %v5891
    %v5893 = vpop.f32.mrf.mxu0
    %v5894 = vadd.f32 0.0, %v5893
    %5895 = vmatmul.bf16.gmra.mxu0 %v5852
    %v5896 = vpop.f32.mrf.mxu0
    %v5897 = vadd.f32 0.0, %v5896
    %v5898 = vpop.f32.mrf.mxu0
    %v5899 = vadd.f32 0.0, %v5898
    %5900 = vmatmul.bf16.gmra.mxu0 %v5855
    %v5901 = vpop.f32.mrf.mxu0
    %v5902 = vadd.f32 0.0, %v5901
    %v5903 = vpop.f32.mrf.mxu0
    %v5904 = vadd.f32 0.0, %v5903
    %5905 = vdwg.mxu0
    %v5906 = vadd.f32 %v5735, %v5867
    %v5907 = vadd.f32 %v5737, %v5869
    %v5908 = vadd.f32 %v5740, %v5872
    %v5909 = vadd.f32 %v5742, %v5874
    %v5910 = vadd.f32 %v5745, %v5877
    %v5911 = vadd.f32 %v5747, %v5879
    %v5912 = vadd.f32 %v5750, %v5882
    %v5913 = vadd.f32 %v5752, %v5884
    %v5914 = vadd.f32 %v5755, %v5887
    %v5915 = vadd.f32 %v5757, %v5889
    %v5916 = vadd.f32 %v5760, %v5892
    %v5917 = vadd.f32 %v5762, %v5894
    %v5918 = vadd.f32 %v5765, %v5897
    %v5919 = vadd.f32 %v5767, %v5899
    %v5920 = vadd.f32 %v5770, %v5902
    %v5921 = vadd.f32 %v5772, %v5904
    %s5922 = sadd.s32 %s5511, 16
    %s5923 = scalar_lea.vmem [#allocation5], %s5922
    %v5924 = vld [vmem:[%s5923] sm:$0xff]
    %v5925 = vld [vmem:[%s5923 + $0x8] sm:$0xff]
    %v5926 = vld [vmem:[%s5923 + $0x10] sm:$0xff]
    %v5927 = vld [vmem:[%s5923 + $0x18] sm:$0xff]
    %v5928 = vld [vmem:[%s5923 + $0x20] sm:$0xff]
    %v5929 = vld [vmem:[%s5923 + $0x28] sm:$0xff]
    %v5930 = vld [vmem:[%s5923 + $0x30] sm:$0xff]
    %v5931 = vld [vmem:[%s5923 + $0x38] sm:$0xff]
    %v5932 = vld [vmem:[%s5923 + $0x40] sm:$0xff]
    %v5933 = vld [vmem:[%s5923 + $0x48] sm:$0xff]
    %v5934 = vld [vmem:[%s5923 + $0x50] sm:$0xff]
    %v5935 = vld [vmem:[%s5923 + $0x58] sm:$0xff]
    %v5936 = vld [vmem:[%s5923 + $0x60] sm:$0xff]
    %v5937 = vld [vmem:[%s5923 + $0x68] sm:$0xff]
    %v5938 = vld [vmem:[%s5923 + $0x70] sm:$0xff]
    %v5939 = vld [vmem:[%s5923 + $0x78] sm:$0xff]
    %v5940 = vpack.c.bf16 %v5925, %v5924
    %v5941 = vpack.c.bf16 %v5927, %v5926
    %v5942 = vpack.c.bf16 %v5929, %v5928
    %v5943 = vpack.c.bf16 %v5931, %v5930
    %v5944 = vpack.c.bf16 %v5933, %v5932
    %v5945 = vpack.c.bf16 %v5935, %v5934
    %v5946 = vpack.c.bf16 %v5937, %v5936
    %v5947 = vpack.c.bf16 %v5939, %v5938
    %s5948 = scalar_lea.vmem %s7, 96
    %v5949 = vld [vmem:[%s5948] sm:$0xf]
    %v5950 = vld [vmem:[%s5948 + $0x4] sm:$0xf]
    %v5951 = vld [vmem:[%s5948 + $0x8] sm:$0xf]
    %v5952 = vld [vmem:[%s5948 + $0xc] sm:$0xf]
    %v5953 = vld [vmem:[%s5948 + $0x10] sm:$0xf]
    %v5954 = vld [vmem:[%s5948 + $0x14] sm:$0xf]
    %v5955 = vld [vmem:[%s5948 + $0x18] sm:$0xf]
    %v5956 = vld [vmem:[%s5948 + $0x1c] sm:$0xf]
    %v5965 = vunpack.c.l.b16 %v5949
    %v5966 = vunpack.c.l.b16 %v5950
    %v5967 = vunpack.c.l.b16 %v5951
    %v5968 = vunpack.c.l.b16 %v5952
    %v5969 = vunpack.c.l.b16 %v5953
    %v5970 = vunpack.c.l.b16 %v5954
    %v5971 = vunpack.c.l.b16 %v5955
    %v5972 = vunpack.c.l.b16 %v5956
    %v5973 = vpack.c.b16 %v5966, %v5965
    %v5974 = vpack.c.b16 %v5968, %v5967
    %v5975 = vpack.c.b16 %v5970, %v5969
    %v5976 = vpack.c.b16 %v5972, %v5971
    %v5982 = vsel %vm68, %v5940, 0
    %v5985 = vsel %vm68, %v5941, 0
    %v5988 = vsel %vm68, %v5942, 0
    %v5991 = vsel %vm68, %v5943, 0
    %v5994 = vsel %vm68, %v5944, 0
    %v5997 = vsel %vm68, %v5945, 0
    %v6000 = vsel %vm68, %v5946, 0
    %v6003 = vsel %vm68, %v5947, 0
    %6005 = vmatpush.bf16.msra.mxu0 0
    %6006 = vmatpush.bf16.msra.mxu0 0
    %6007 = vmatpush.bf16.msra.mxu0 0
    %6008 = vmatpush.bf16.msra.mxu0 0
    %6009 = vmatpush.bf16.msra.mxu0 %v5976
    %6010 = vmatpush.bf16.msra.mxu0 %v5975
    %6011 = vmatpush.bf16.msra.mxu0 %v5974
    %6012 = vmatpush.bf16.msra.mxu0 %v5973
    %6013 = vmatmul.bf16.gmra.mxu0 %v5982
    %v6014 = vpop.f32.mrf.mxu0
    %v6015 = vadd.f32 0.0, %v6014
    %v6016 = vpop.f32.mrf.mxu0
    %v6017 = vadd.f32 0.0, %v6016
    %6018 = vmatmul.bf16.gmra.mxu0 %v5985
    %v6019 = vpop.f32.mrf.mxu0
    %v6020 = vadd.f32 0.0, %v6019
    %v6021 = vpop.f32.mrf.mxu0
    %v6022 = vadd.f32 0.0, %v6021
    %6023 = vmatmul.bf16.gmra.mxu0 %v5988
    %v6024 = vpop.f32.mrf.mxu0
    %v6025 = vadd.f32 0.0, %v6024
    %v6026 = vpop.f32.mrf.mxu0
    %v6027 = vadd.f32 0.0, %v6026
    %6028 = vmatmul.bf16.gmra.mxu0 %v5991
    %v6029 = vpop.f32.mrf.mxu0
    %v6030 = vadd.f32 0.0, %v6029
    %v6031 = vpop.f32.mrf.mxu0
    %v6032 = vadd.f32 0.0, %v6031
    %6033 = vmatmul.bf16.gmra.mxu0 %v5994
    %v6034 = vpop.f32.mrf.mxu0
    %v6035 = vadd.f32 0.0, %v6034
    %v6036 = vpop.f32.mrf.mxu0
    %v6037 = vadd.f32 0.0, %v6036
    %6038 = vmatmul.bf16.gmra.mxu0 %v5997
    %v6039 = vpop.f32.mrf.mxu0
    %v6040 = vadd.f32 0.0, %v6039
    %v6041 = vpop.f32.mrf.mxu0
    %v6042 = vadd.f32 0.0, %v6041
    %6043 = vmatmul.bf16.gmra.mxu0 %v6000
    %v6044 = vpop.f32.mrf.mxu0
    %v6045 = vadd.f32 0.0, %v6044
    %v6046 = vpop.f32.mrf.mxu0
    %v6047 = vadd.f32 0.0, %v6046
    %6048 = vmatmul.bf16.gmra.mxu0 %v6003
    %v6049 = vpop.f32.mrf.mxu0
    %v6050 = vadd.f32 0.0, %v6049
    %v6051 = vpop.f32.mrf.mxu0
    %v6052 = vadd.f32 0.0, %v6051
    %6053 = vdwg.mxu0
    %v6054 = vadd.f32 %v5906, %v6015
    %v6055 = vadd.f32 %v5907, %v6017
    %v6056 = vadd.f32 %v5908, %v6020
    %v6057 = vadd.f32 %v5909, %v6022
    %v6058 = vadd.f32 %v5910, %v6025
    %v6059 = vadd.f32 %v5911, %v6027
    %v6060 = vadd.f32 %v5912, %v6030
    %v6061 = vadd.f32 %v5913, %v6032
    %v6062 = vadd.f32 %v5914, %v6035
    %v6063 = vadd.f32 %v5915, %v6037
    %v6064 = vadd.f32 %v5916, %v6040
    %v6065 = vadd.f32 %v5917, %v6042
    %v6066 = vadd.f32 %v5918, %v6045
    %v6067 = vadd.f32 %v5919, %v6047
    %v6068 = vadd.f32 %v5920, %v6050
    %v6069 = vadd.f32 %v5921, %v6052
    %s6070 = sadd.s32 %s5511, 17
    %s6071 = scalar_lea.vmem [#allocation5], %s6070
    %v6072 = vld [vmem:[%s6071] sm:$0xff]
    %v6073 = vld [vmem:[%s6071 + $0x8] sm:$0xff]
    %v6074 = vld [vmem:[%s6071 + $0x10] sm:$0xff]
    %v6075 = vld [vmem:[%s6071 + $0x18] sm:$0xff]
    %v6076 = vld [vmem:[%s6071 + $0x20] sm:$0xff]
    %v6077 = vld [vmem:[%s6071 + $0x28] sm:$0xff]
    %v6078 = vld [vmem:[%s6071 + $0x30] sm:$0xff]
    %v6079 = vld [vmem:[%s6071 + $0x38] sm:$0xff]
    %v6080 = vld [vmem:[%s6071 + $0x40] sm:$0xff]
    %v6081 = vld [vmem:[%s6071 + $0x48] sm:$0xff]
    %v6082 = vld [vmem:[%s6071 + $0x50] sm:$0xff]
    %v6083 = vld [vmem:[%s6071 + $0x58] sm:$0xff]
    %v6084 = vld [vmem:[%s6071 + $0x60] sm:$0xff]
    %v6085 = vld [vmem:[%s6071 + $0x68] sm:$0xff]
    %v6086 = vld [vmem:[%s6071 + $0x70] sm:$0xff]
    %v6087 = vld [vmem:[%s6071 + $0x78] sm:$0xff]
    %v6088 = vpack.c.bf16 %v6073, %v6072
    %v6089 = vpack.c.bf16 %v6075, %v6074
    %v6090 = vpack.c.bf16 %v6077, %v6076
    %v6091 = vpack.c.bf16 %v6079, %v6078
    %v6092 = vpack.c.bf16 %v6081, %v6080
    %v6093 = vpack.c.bf16 %v6083, %v6082
    %v6094 = vpack.c.bf16 %v6085, %v6084
    %v6095 = vpack.c.bf16 %v6087, %v6086
    %s6096 = scalar_lea.vmem %s7, 128
    %v6097 = vld [vmem:[%s6096] sm:$0xf]
    %v6098 = vld [vmem:[%s6096 + $0x4] sm:$0xf]
    %v6099 = vld [vmem:[%s6096 + $0x8] sm:$0xf]
    %v6100 = vld [vmem:[%s6096 + $0xc] sm:$0xf]
    %v6101 = vld [vmem:[%s6096 + $0x10] sm:$0xf]
    %v6102 = vld [vmem:[%s6096 + $0x14] sm:$0xf]
    %v6103 = vld [vmem:[%s6096 + $0x18] sm:$0xf]
    %v6104 = vld [vmem:[%s6096 + $0x1c] sm:$0xf]
    %v6113 = vunpack.c.l.b16 %v6097
    %v6114 = vunpack.c.l.b16 %v6098
    %v6115 = vunpack.c.l.b16 %v6099
    %v6116 = vunpack.c.l.b16 %v6100
    %v6117 = vunpack.c.l.b16 %v6101
    %v6118 = vunpack.c.l.b16 %v6102
    %v6119 = vunpack.c.l.b16 %v6103
    %v6120 = vunpack.c.l.b16 %v6104
    %v6121 = vpack.c.b16 %v6114, %v6113
    %v6122 = vpack.c.b16 %v6116, %v6115
    %v6123 = vpack.c.b16 %v6118, %v6117
    %v6124 = vpack.c.b16 %v6120, %v6119
    %v6130 = vsel %vm68, %v6088, 0
    %v6133 = vsel %vm68, %v6089, 0
    %v6136 = vsel %vm68, %v6090, 0
    %v6139 = vsel %vm68, %v6091, 0
    %v6142 = vsel %vm68, %v6092, 0
    %v6145 = vsel %vm68, %v6093, 0
    %v6148 = vsel %vm68, %v6094, 0
    %v6151 = vsel %vm68, %v6095, 0
    %6153 = vmatpush.bf16.msra.mxu0 0
    %6154 = vmatpush.bf16.msra.mxu0 0
    %6155 = vmatpush.bf16.msra.mxu0 0
    %6156 = vmatpush.bf16.msra.mxu0 0
    %6157 = vmatpush.bf16.msra.mxu0 %v6124
    %6158 = vmatpush.bf16.msra.mxu0 %v6123
    %6159 = vmatpush.bf16.msra.mxu0 %v6122
    %6160 = vmatpush.bf16.msra.mxu0 %v6121
    %6161 = vmatmul.bf16.gmra.mxu0 %v6130
    %v6162 = vpop.f32.mrf.mxu0
    %v6163 = vadd.f32 0.0, %v6162
    %v6164 = vpop.f32.mrf.mxu0
    %v6165 = vadd.f32 0.0, %v6164
    %6166 = vmatmul.bf16.gmra.mxu0 %v6133
    %v6167 = vpop.f32.mrf.mxu0
    %v6168 = vadd.f32 0.0, %v6167
    %v6169 = vpop.f32.mrf.mxu0
    %v6170 = vadd.f32 0.0, %v6169
    %6171 = vmatmul.bf16.gmra.mxu0 %v6136
    %v6172 = vpop.f32.mrf.mxu0
    %v6173 = vadd.f32 0.0, %v6172
    %v6174 = vpop.f32.mrf.mxu0
    %v6175 = vadd.f32 0.0, %v6174
    %6176 = vmatmul.bf16.gmra.mxu0 %v6139
    %v6177 = vpop.f32.mrf.mxu0
    %v6178 = vadd.f32 0.0, %v6177
    %v6179 = vpop.f32.mrf.mxu0
    %v6180 = vadd.f32 0.0, %v6179
    %6181 = vmatmul.bf16.gmra.mxu0 %v6142
    %v6182 = vpop.f32.mrf.mxu0
    %v6183 = vadd.f32 0.0, %v6182
    %v6184 = vpop.f32.mrf.mxu0
    %v6185 = vadd.f32 0.0, %v6184
    %6186 = vmatmul.bf16.gmra.mxu0 %v6145
    %v6187 = vpop.f32.mrf.mxu0
    %v6188 = vadd.f32 0.0, %v6187
    %v6189 = vpop.f32.mrf.mxu0
    %v6190 = vadd.f32 0.0, %v6189
    %6191 = vmatmul.bf16.gmra.mxu0 %v6148
    %v6192 = vpop.f32.mrf.mxu0
    %v6193 = vadd.f32 0.0, %v6192
    %v6194 = vpop.f32.mrf.mxu0
    %v6195 = vadd.f32 0.0, %v6194
    %6196 = vmatmul.bf16.gmra.mxu0 %v6151
    %v6197 = vpop.f32.mrf.mxu0
    %v6198 = vadd.f32 0.0, %v6197
    %v6199 = vpop.f32.mrf.mxu0
    %v6200 = vadd.f32 0.0, %v6199
    %6201 = vdwg.mxu0
    %v6202 = vadd.f32 %v6054, %v6163
    %v6203 = vadd.f32 %v6055, %v6165
    %v6204 = vadd.f32 %v6056, %v6168
    %v6205 = vadd.f32 %v6057, %v6170
    %v6206 = vadd.f32 %v6058, %v6173
    %v6207 = vadd.f32 %v6059, %v6175
    %v6208 = vadd.f32 %v6060, %v6178
    %v6209 = vadd.f32 %v6061, %v6180
    %v6210 = vadd.f32 %v6062, %v6183
    %v6211 = vadd.f32 %v6063, %v6185
    %v6212 = vadd.f32 %v6064, %v6188
    %v6213 = vadd.f32 %v6065, %v6190
    %v6214 = vadd.f32 %v6066, %v6193
    %v6215 = vadd.f32 %v6067, %v6195
    %v6216 = vadd.f32 %v6068, %v6198
    %v6217 = vadd.f32 %v6069, %v6200
    %s6218 = sadd.s32 %s5511, 18
    %s6219 = scalar_lea.vmem [#allocation5], %s6218
    %v6220 = vld [vmem:[%s6219] sm:$0xff]
    %v6221 = vld [vmem:[%s6219 + $0x8] sm:$0xff]
    %v6222 = vld [vmem:[%s6219 + $0x10] sm:$0xff]
    %v6223 = vld [vmem:[%s6219 + $0x18] sm:$0xff]
    %v6224 = vld [vmem:[%s6219 + $0x20] sm:$0xff]
    %v6225 = vld [vmem:[%s6219 + $0x28] sm:$0xff]
    %v6226 = vld [vmem:[%s6219 + $0x30] sm:$0xff]
    %v6227 = vld [vmem:[%s6219 + $0x38] sm:$0xff]
    %v6228 = vld [vmem:[%s6219 + $0x40] sm:$0xff]
    %v6229 = vld [vmem:[%s6219 + $0x48] sm:$0xff]
    %v6230 = vld [vmem:[%s6219 + $0x50] sm:$0xff]
    %v6231 = vld [vmem:[%s6219 + $0x58] sm:$0xff]
    %v6232 = vld [vmem:[%s6219 + $0x60] sm:$0xff]
    %v6233 = vld [vmem:[%s6219 + $0x68] sm:$0xff]
    %v6234 = vld [vmem:[%s6219 + $0x70] sm:$0xff]
    %v6235 = vld [vmem:[%s6219 + $0x78] sm:$0xff]
    %v6236 = vpack.c.bf16 %v6221, %v6220
    %v6237 = vpack.c.bf16 %v6223, %v6222
    %v6238 = vpack.c.bf16 %v6225, %v6224
    %v6239 = vpack.c.bf16 %v6227, %v6226
    %v6240 = vpack.c.bf16 %v6229, %v6228
    %v6241 = vpack.c.bf16 %v6231, %v6230
    %v6242 = vpack.c.bf16 %v6233, %v6232
    %v6243 = vpack.c.bf16 %v6235, %v6234
    %s6244 = scalar_lea.vmem %s7, 160
    %v6245 = vld [vmem:[%s6244] sm:$0xf]
    %v6246 = vld [vmem:[%s6244 + $0x4] sm:$0xf]
    %v6247 = vld [vmem:[%s6244 + $0x8] sm:$0xf]
    %v6248 = vld [vmem:[%s6244 + $0xc] sm:$0xf]
    %v6249 = vld [vmem:[%s6244 + $0x10] sm:$0xf]
    %v6250 = vld [vmem:[%s6244 + $0x14] sm:$0xf]
    %v6251 = vld [vmem:[%s6244 + $0x18] sm:$0xf]
    %v6252 = vld [vmem:[%s6244 + $0x1c] sm:$0xf]
    %v6261 = vunpack.c.l.b16 %v6245
    %v6262 = vunpack.c.l.b16 %v6246
    %v6263 = vunpack.c.l.b16 %v6247
    %v6264 = vunpack.c.l.b16 %v6248
    %v6265 = vunpack.c.l.b16 %v6249
    %v6266 = vunpack.c.l.b16 %v6250
    %v6267 = vunpack.c.l.b16 %v6251
    %v6268 = vunpack.c.l.b16 %v6252
    %v6269 = vpack.c.b16 %v6262, %v6261
    %v6270 = vpack.c.b16 %v6264, %v6263
    %v6271 = vpack.c.b16 %v6266, %v6265
    %v6272 = vpack.c.b16 %v6268, %v6267
    %v6278 = vsel %vm68, %v6236, 0
    %v6281 = vsel %vm68, %v6237, 0
    %v6284 = vsel %vm68, %v6238, 0
    %v6287 = vsel %vm68, %v6239, 0
    %v6290 = vsel %vm68, %v6240, 0
    %v6293 = vsel %vm68, %v6241, 0
    %v6296 = vsel %vm68, %v6242, 0
    %v6299 = vsel %vm68, %v6243, 0
    %6301 = vmatpush.bf16.msra.mxu0 0
    %6302 = vmatpush.bf16.msra.mxu0 0
    %6303 = vmatpush.bf16.msra.mxu0 0
    %6304 = vmatpush.bf16.msra.mxu0 0
    %6305 = vmatpush.bf16.msra.mxu0 %v6272
    %6306 = vmatpush.bf16.msra.mxu0 %v6271
    %6307 = vmatpush.bf16.msra.mxu0 %v6270
    %6308 = vmatpush.bf16.msra.mxu0 %v6269
    %6309 = vmatmul.bf16.gmra.mxu0 %v6278
    %v6310 = vpop.f32.mrf.mxu0
    %v6311 = vadd.f32 0.0, %v6310
    %v6312 = vpop.f32.mrf.mxu0
    %v6313 = vadd.f32 0.0, %v6312
    %6314 = vmatmul.bf16.gmra.mxu0 %v6281
    %v6315 = vpop.f32.mrf.mxu0
    %v6316 = vadd.f32 0.0, %v6315
    %v6317 = vpop.f32.mrf.mxu0
    %v6318 = vadd.f32 0.0, %v6317
    %6319 = vmatmul.bf16.gmra.mxu0 %v6284
    %v6320 = vpop.f32.mrf.mxu0
    %v6321 = vadd.f32 0.0, %v6320
    %v6322 = vpop.f32.mrf.mxu0
    %v6323 = vadd.f32 0.0, %v6322
    %6324 = vmatmul.bf16.gmra.mxu0 %v6287
    %v6325 = vpop.f32.mrf.mxu0
    %v6326 = vadd.f32 0.0, %v6325
    %v6327 = vpop.f32.mrf.mxu0
    %v6328 = vadd.f32 0.0, %v6327
    %6329 = vmatmul.bf16.gmra.mxu0 %v6290
    %v6330 = vpop.f32.mrf.mxu0
    %v6331 = vadd.f32 0.0, %v6330
    %v6332 = vpop.f32.mrf.mxu0
    %v6333 = vadd.f32 0.0, %v6332
    %6334 = vmatmul.bf16.gmra.mxu0 %v6293
    %v6335 = vpop.f32.mrf.mxu0
    %v6336 = vadd.f32 0.0, %v6335
    %v6337 = vpop.f32.mrf.mxu0
    %v6338 = vadd.f32 0.0, %v6337
    %6339 = vmatmul.bf16.gmra.mxu0 %v6296
    %v6340 = vpop.f32.mrf.mxu0
    %v6341 = vadd.f32 0.0, %v6340
    %v6342 = vpop.f32.mrf.mxu0
    %v6343 = vadd.f32 0.0, %v6342
    %6344 = vmatmul.bf16.gmra.mxu0 %v6299
    %v6345 = vpop.f32.mrf.mxu0
    %v6346 = vadd.f32 0.0, %v6345
    %v6347 = vpop.f32.mrf.mxu0
    %v6348 = vadd.f32 0.0, %v6347
    %6349 = vdwg.mxu0
    %v6350 = vadd.f32 %v6202, %v6311
    %v6351 = vadd.f32 %v6203, %v6313
    %v6352 = vadd.f32 %v6204, %v6316
    %v6353 = vadd.f32 %v6205, %v6318
    %v6354 = vadd.f32 %v6206, %v6321
    %v6355 = vadd.f32 %v6207, %v6323
    %v6356 = vadd.f32 %v6208, %v6326
    %v6357 = vadd.f32 %v6209, %v6328
    %v6358 = vadd.f32 %v6210, %v6331
    %v6359 = vadd.f32 %v6211, %v6333
    %v6360 = vadd.f32 %v6212, %v6336
    %v6361 = vadd.f32 %v6213, %v6338
    %v6362 = vadd.f32 %v6214, %v6341
    %v6363 = vadd.f32 %v6215, %v6343
    %v6364 = vadd.f32 %v6216, %v6346
    %v6365 = vadd.f32 %v6217, %v6348
    %s6366 = sadd.s32 %s5511, 32
    %s6367 = scalar_lea.vmem [#allocation5], %s6366
    %v6368 = vld [vmem:[%s6367] sm:$0xff]
    %v6369 = vld [vmem:[%s6367 + $0x8] sm:$0xff]
    %v6370 = vld [vmem:[%s6367 + $0x10] sm:$0xff]
    %v6371 = vld [vmem:[%s6367 + $0x18] sm:$0xff]
    %v6372 = vld [vmem:[%s6367 + $0x20] sm:$0xff]
    %v6373 = vld [vmem:[%s6367 + $0x28] sm:$0xff]
    %v6374 = vld [vmem:[%s6367 + $0x30] sm:$0xff]
    %v6375 = vld [vmem:[%s6367 + $0x38] sm:$0xff]
    %v6376 = vld [vmem:[%s6367 + $0x40] sm:$0xff]
    %v6377 = vld [vmem:[%s6367 + $0x48] sm:$0xff]
    %v6378 = vld [vmem:[%s6367 + $0x50] sm:$0xff]
    %v6379 = vld [vmem:[%s6367 + $0x58] sm:$0xff]
    %v6380 = vld [vmem:[%s6367 + $0x60] sm:$0xff]
    %v6381 = vld [vmem:[%s6367 + $0x68] sm:$0xff]
    %v6382 = vld [vmem:[%s6367 + $0x70] sm:$0xff]
    %v6383 = vld [vmem:[%s6367 + $0x78] sm:$0xff]
    %v6384 = vpack.c.bf16 %v6369, %v6368
    %v6385 = vpack.c.bf16 %v6371, %v6370
    %v6386 = vpack.c.bf16 %v6373, %v6372
    %v6387 = vpack.c.bf16 %v6375, %v6374
    %v6388 = vpack.c.bf16 %v6377, %v6376
    %v6389 = vpack.c.bf16 %v6379, %v6378
    %v6390 = vpack.c.bf16 %v6381, %v6380
    %v6391 = vpack.c.bf16 %v6383, %v6382
    %s6392 = scalar_lea.vmem %s7, 192
    %v6393 = vld [vmem:[%s6392] sm:$0xf]
    %v6394 = vld [vmem:[%s6392 + $0x4] sm:$0xf]
    %v6395 = vld [vmem:[%s6392 + $0x8] sm:$0xf]
    %v6396 = vld [vmem:[%s6392 + $0xc] sm:$0xf]
    %v6397 = vld [vmem:[%s6392 + $0x10] sm:$0xf]
    %v6398 = vld [vmem:[%s6392 + $0x14] sm:$0xf]
    %v6399 = vld [vmem:[%s6392 + $0x18] sm:$0xf]
    %v6400 = vld [vmem:[%s6392 + $0x1c] sm:$0xf]
    %v6409 = vunpack.c.l.b16 %v6393
    %v6410 = vunpack.c.l.b16 %v6394
    %v6411 = vunpack.c.l.b16 %v6395
    %v6412 = vunpack.c.l.b16 %v6396
    %v6413 = vunpack.c.l.b16 %v6397
    %v6414 = vunpack.c.l.b16 %v6398
    %v6415 = vunpack.c.l.b16 %v6399
    %v6416 = vunpack.c.l.b16 %v6400
    %v6417 = vpack.c.b16 %v6410, %v6409
    %v6418 = vpack.c.b16 %v6412, %v6411
    %v6419 = vpack.c.b16 %v6414, %v6413
    %v6420 = vpack.c.b16 %v6416, %v6415
    %v6426 = vsel %vm68, %v6384, 0
    %v6429 = vsel %vm68, %v6385, 0
    %v6432 = vsel %vm68, %v6386, 0
    %v6435 = vsel %vm68, %v6387, 0
    %v6438 = vsel %vm68, %v6388, 0
    %v6441 = vsel %vm68, %v6389, 0
    %v6444 = vsel %vm68, %v6390, 0
    %v6447 = vsel %vm68, %v6391, 0
    %6449 = vmatpush.bf16.msra.mxu0 0
    %6450 = vmatpush.bf16.msra.mxu0 0
    %6451 = vmatpush.bf16.msra.mxu0 0
    %6452 = vmatpush.bf16.msra.mxu0 0
    %6453 = vmatpush.bf16.msra.mxu0 %v6420
    %6454 = vmatpush.bf16.msra.mxu0 %v6419
    %6455 = vmatpush.bf16.msra.mxu0 %v6418
    %6456 = vmatpush.bf16.msra.mxu0 %v6417
    %6457 = vmatmul.bf16.gmra.mxu0 %v6426
    %v6458 = vpop.f32.mrf.mxu0
    %v6459 = vadd.f32 0.0, %v6458
    %v6460 = vpop.f32.mrf.mxu0
    %v6461 = vadd.f32 0.0, %v6460
    %6462 = vmatmul.bf16.gmra.mxu0 %v6429
    %v6463 = vpop.f32.mrf.mxu0
    %v6464 = vadd.f32 0.0, %v6463
    %v6465 = vpop.f32.mrf.mxu0
    %v6466 = vadd.f32 0.0, %v6465
    %6467 = vmatmul.bf16.gmra.mxu0 %v6432
    %v6468 = vpop.f32.mrf.mxu0
    %v6469 = vadd.f32 0.0, %v6468
    %v6470 = vpop.f32.mrf.mxu0
    %v6471 = vadd.f32 0.0, %v6470
    %6472 = vmatmul.bf16.gmra.mxu0 %v6435
    %v6473 = vpop.f32.mrf.mxu0
    %v6474 = vadd.f32 0.0, %v6473
    %v6475 = vpop.f32.mrf.mxu0
    %v6476 = vadd.f32 0.0, %v6475
    %6477 = vmatmul.bf16.gmra.mxu0 %v6438
    %v6478 = vpop.f32.mrf.mxu0
    %v6479 = vadd.f32 0.0, %v6478
    %v6480 = vpop.f32.mrf.mxu0
    %v6481 = vadd.f32 0.0, %v6480
    %6482 = vmatmul.bf16.gmra.mxu0 %v6441
    %v6483 = vpop.f32.mrf.mxu0
    %v6484 = vadd.f32 0.0, %v6483
    %v6485 = vpop.f32.mrf.mxu0
    %v6486 = vadd.f32 0.0, %v6485
    %6487 = vmatmul.bf16.gmra.mxu0 %v6444
    %v6488 = vpop.f32.mrf.mxu0
    %v6489 = vadd.f32 0.0, %v6488
    %v6490 = vpop.f32.mrf.mxu0
    %v6491 = vadd.f32 0.0, %v6490
    %6492 = vmatmul.bf16.gmra.mxu0 %v6447
    %v6493 = vpop.f32.mrf.mxu0
    %v6494 = vadd.f32 0.0, %v6493
    %v6495 = vpop.f32.mrf.mxu0
    %v6496 = vadd.f32 0.0, %v6495
    %6497 = vdwg.mxu0
    %v6498 = vadd.f32 %v6350, %v6459
    %v6499 = vadd.f32 %v6351, %v6461
    %v6500 = vadd.f32 %v6352, %v6464
    %v6501 = vadd.f32 %v6353, %v6466
    %v6502 = vadd.f32 %v6354, %v6469
    %v6503 = vadd.f32 %v6355, %v6471
    %v6504 = vadd.f32 %v6356, %v6474
    %v6505 = vadd.f32 %v6357, %v6476
    %v6506 = vadd.f32 %v6358, %v6479
    %v6507 = vadd.f32 %v6359, %v6481
    %v6508 = vadd.f32 %v6360, %v6484
    %v6509 = vadd.f32 %v6361, %v6486
    %v6510 = vadd.f32 %v6362, %v6489
    %v6511 = vadd.f32 %v6363, %v6491
    %v6512 = vadd.f32 %v6364, %v6494
    %v6513 = vadd.f32 %v6365, %v6496
    %s6514 = sadd.s32 %s5511, 33
    %s6515 = scalar_lea.vmem [#allocation5], %s6514
    %v6516 = vld [vmem:[%s6515] sm:$0xff]
    %v6517 = vld [vmem:[%s6515 + $0x8] sm:$0xff]
    %v6518 = vld [vmem:[%s6515 + $0x10] sm:$0xff]
    %v6519 = vld [vmem:[%s6515 + $0x18] sm:$0xff]
    %v6520 = vld [vmem:[%s6515 + $0x20] sm:$0xff]
    %v6521 = vld [vmem:[%s6515 + $0x28] sm:$0xff]
    %v6522 = vld [vmem:[%s6515 + $0x30] sm:$0xff]
    %v6523 = vld [vmem:[%s6515 + $0x38] sm:$0xff]
    %v6524 = vld [vmem:[%s6515 + $0x40] sm:$0xff]
    %v6525 = vld [vmem:[%s6515 + $0x48] sm:$0xff]
    %v6526 = vld [vmem:[%s6515 + $0x50] sm:$0xff]
    %v6527 = vld [vmem:[%s6515 + $0x58] sm:$0xff]
    %v6528 = vld [vmem:[%s6515 + $0x60] sm:$0xff]
    %v6529 = vld [vmem:[%s6515 + $0x68] sm:$0xff]
    %v6530 = vld [vmem:[%s6515 + $0x70] sm:$0xff]
    %v6531 = vld [vmem:[%s6515 + $0x78] sm:$0xff]
    %v6532 = vpack.c.bf16 %v6517, %v6516
    %v6533 = vpack.c.bf16 %v6519, %v6518
    %v6534 = vpack.c.bf16 %v6521, %v6520
    %v6535 = vpack.c.bf16 %v6523, %v6522
    %v6536 = vpack.c.bf16 %v6525, %v6524
    %v6537 = vpack.c.bf16 %v6527, %v6526
    %v6538 = vpack.c.bf16 %v6529, %v6528
    %v6539 = vpack.c.bf16 %v6531, %v6530
    %s6540 = scalar_lea.vmem %s7, 224
    %v6541 = vld [vmem:[%s6540] sm:$0xf]
    %v6542 = vld [vmem:[%s6540 + $0x4] sm:$0xf]
    %v6543 = vld [vmem:[%s6540 + $0x8] sm:$0xf]
    %v6544 = vld [vmem:[%s6540 + $0xc] sm:$0xf]
    %v6545 = vld [vmem:[%s6540 + $0x10] sm:$0xf]
    %v6546 = vld [vmem:[%s6540 + $0x14] sm:$0xf]
    %v6547 = vld [vmem:[%s6540 + $0x18] sm:$0xf]
    %v6548 = vld [vmem:[%s6540 + $0x1c] sm:$0xf]
    %v6557 = vunpack.c.l.b16 %v6541
    %v6558 = vunpack.c.l.b16 %v6542
    %v6559 = vunpack.c.l.b16 %v6543
    %v6560 = vunpack.c.l.b16 %v6544
    %v6561 = vunpack.c.l.b16 %v6545
    %v6562 = vunpack.c.l.b16 %v6546
    %v6563 = vunpack.c.l.b16 %v6547
    %v6564 = vunpack.c.l.b16 %v6548
    %v6565 = vpack.c.b16 %v6558, %v6557
    %v6566 = vpack.c.b16 %v6560, %v6559
    %v6567 = vpack.c.b16 %v6562, %v6561
    %v6568 = vpack.c.b16 %v6564, %v6563
    %v6574 = vsel %vm68, %v6532, 0
    %v6577 = vsel %vm68, %v6533, 0
    %v6580 = vsel %vm68, %v6534, 0
    %v6583 = vsel %vm68, %v6535, 0
    %v6586 = vsel %vm68, %v6536, 0
    %v6589 = vsel %vm68, %v6537, 0
    %v6592 = vsel %vm68, %v6538, 0
    %v6595 = vsel %vm68, %v6539, 0
    %6597 = vmatpush.bf16.msra.mxu0 0
    %6598 = vmatpush.bf16.msra.mxu0 0
    %6599 = vmatpush.bf16.msra.mxu0 0
    %6600 = vmatpush.bf16.msra.mxu0 0
    %6601 = vmatpush.bf16.msra.mxu0 %v6568
    %6602 = vmatpush.bf16.msra.mxu0 %v6567
    %6603 = vmatpush.bf16.msra.mxu0 %v6566
    %6604 = vmatpush.bf16.msra.mxu0 %v6565
    %6605 = vmatmul.bf16.gmra.mxu0 %v6574
    %v6606 = vpop.f32.mrf.mxu0
    %v6607 = vadd.f32 0.0, %v6606
    %v6608 = vpop.f32.mrf.mxu0
    %v6609 = vadd.f32 0.0, %v6608
    %6610 = vmatmul.bf16.gmra.mxu0 %v6577
    %v6611 = vpop.f32.mrf.mxu0
    %v6612 = vadd.f32 0.0, %v6611
    %v6613 = vpop.f32.mrf.mxu0
    %v6614 = vadd.f32 0.0, %v6613
    %6615 = vmatmul.bf16.gmra.mxu0 %v6580
    %v6616 = vpop.f32.mrf.mxu0
    %v6617 = vadd.f32 0.0, %v6616
    %v6618 = vpop.f32.mrf.mxu0
    %v6619 = vadd.f32 0.0, %v6618
    %6620 = vmatmul.bf16.gmra.mxu0 %v6583
    %v6621 = vpop.f32.mrf.mxu0
    %v6622 = vadd.f32 0.0, %v6621
    %v6623 = vpop.f32.mrf.mxu0
    %v6624 = vadd.f32 0.0, %v6623
    %6625 = vmatmul.bf16.gmra.mxu0 %v6586
    %v6626 = vpop.f32.mrf.mxu0
    %v6627 = vadd.f32 0.0, %v6626
    %v6628 = vpop.f32.mrf.mxu0
    %v6629 = vadd.f32 0.0, %v6628
    %6630 = vmatmul.bf16.gmra.mxu0 %v6589
    %v6631 = vpop.f32.mrf.mxu0
    %v6632 = vadd.f32 0.0, %v6631
    %v6633 = vpop.f32.mrf.mxu0
    %v6634 = vadd.f32 0.0, %v6633
    %6635 = vmatmul.bf16.gmra.mxu0 %v6592
    %v6636 = vpop.f32.mrf.mxu0
    %v6637 = vadd.f32 0.0, %v6636
    %v6638 = vpop.f32.mrf.mxu0
    %v6639 = vadd.f32 0.0, %v6638
    %6640 = vmatmul.bf16.gmra.mxu0 %v6595
    %v6641 = vpop.f32.mrf.mxu0
    %v6642 = vadd.f32 0.0, %v6641
    %v6643 = vpop.f32.mrf.mxu0
    %v6644 = vadd.f32 0.0, %v6643
    %6645 = vdwg.mxu0
    %v6646 = vadd.f32 %v6498, %v6607
    %v6647 = vadd.f32 %v6499, %v6609
    %v6648 = vadd.f32 %v6500, %v6612
    %v6649 = vadd.f32 %v6501, %v6614
    %v6650 = vadd.f32 %v6502, %v6617
    %v6651 = vadd.f32 %v6503, %v6619
    %v6652 = vadd.f32 %v6504, %v6622
    %v6653 = vadd.f32 %v6505, %v6624
    %v6654 = vadd.f32 %v6506, %v6627
    %v6655 = vadd.f32 %v6507, %v6629
    %v6656 = vadd.f32 %v6508, %v6632
    %v6657 = vadd.f32 %v6509, %v6634
    %v6658 = vadd.f32 %v6510, %v6637
    %v6659 = vadd.f32 %v6511, %v6639
    %v6660 = vadd.f32 %v6512, %v6642
    %v6661 = vadd.f32 %v6513, %v6644
    %s6662 = sadd.s32 %s5511, 34
    %s6663 = scalar_lea.vmem [#allocation5], %s6662
    %v6664 = vld [vmem:[%s6663] sm:$0xff]
    %v6665 = vld [vmem:[%s6663 + $0x8] sm:$0xff]
    %v6666 = vld [vmem:[%s6663 + $0x10] sm:$0xff]
    %v6667 = vld [vmem:[%s6663 + $0x18] sm:$0xff]
    %v6668 = vld [vmem:[%s6663 + $0x20] sm:$0xff]
    %v6669 = vld [vmem:[%s6663 + $0x28] sm:$0xff]
    %v6670 = vld [vmem:[%s6663 + $0x30] sm:$0xff]
    %v6671 = vld [vmem:[%s6663 + $0x38] sm:$0xff]
    %v6672 = vld [vmem:[%s6663 + $0x40] sm:$0xff]
    %v6673 = vld [vmem:[%s6663 + $0x48] sm:$0xff]
    %v6674 = vld [vmem:[%s6663 + $0x50] sm:$0xff]
    %v6675 = vld [vmem:[%s6663 + $0x58] sm:$0xff]
    %v6676 = vld [vmem:[%s6663 + $0x60] sm:$0xff]
    %v6677 = vld [vmem:[%s6663 + $0x68] sm:$0xff]
    %v6678 = vld [vmem:[%s6663 + $0x70] sm:$0xff]
    %v6679 = vld [vmem:[%s6663 + $0x78] sm:$0xff]
    %v6680 = vpack.c.bf16 %v6665, %v6664
    %v6681 = vpack.c.bf16 %v6667, %v6666
    %v6682 = vpack.c.bf16 %v6669, %v6668
    %v6683 = vpack.c.bf16 %v6671, %v6670
    %v6684 = vpack.c.bf16 %v6673, %v6672
    %v6685 = vpack.c.bf16 %v6675, %v6674
    %v6686 = vpack.c.bf16 %v6677, %v6676
    %v6687 = vpack.c.bf16 %v6679, %v6678
    %s6688 = scalar_lea.vmem %s7, 256
    %v6689 = vld [vmem:[%s6688] sm:$0xf]
    %v6690 = vld [vmem:[%s6688 + $0x4] sm:$0xf]
    %v6691 = vld [vmem:[%s6688 + $0x8] sm:$0xf]
    %v6692 = vld [vmem:[%s6688 + $0xc] sm:$0xf]
    %v6693 = vld [vmem:[%s6688 + $0x10] sm:$0xf]
    %v6694 = vld [vmem:[%s6688 + $0x14] sm:$0xf]
    %v6695 = vld [vmem:[%s6688 + $0x18] sm:$0xf]
    %v6696 = vld [vmem:[%s6688 + $0x1c] sm:$0xf]
    %v6705 = vunpack.c.l.b16 %v6689
    %v6706 = vunpack.c.l.b16 %v6690
    %v6707 = vunpack.c.l.b16 %v6691
    %v6708 = vunpack.c.l.b16 %v6692
    %v6709 = vunpack.c.l.b16 %v6693
    %v6710 = vunpack.c.l.b16 %v6694
    %v6711 = vunpack.c.l.b16 %v6695
    %v6712 = vunpack.c.l.b16 %v6696
    %v6713 = vpack.c.b16 %v6706, %v6705
    %v6714 = vpack.c.b16 %v6708, %v6707
    %v6715 = vpack.c.b16 %v6710, %v6709
    %v6716 = vpack.c.b16 %v6712, %v6711
    %v6722 = vsel %vm68, %v6680, 0
    %v6725 = vsel %vm68, %v6681, 0
    %v6728 = vsel %vm68, %v6682, 0
    %v6731 = vsel %vm68, %v6683, 0
    %v6734 = vsel %vm68, %v6684, 0
    %v6737 = vsel %vm68, %v6685, 0
    %v6740 = vsel %vm68, %v6686, 0
    %v6743 = vsel %vm68, %v6687, 0
    %6745 = vmatpush.bf16.msra.mxu0 0
    %6746 = vmatpush.bf16.msra.mxu0 0
    %6747 = vmatpush.bf16.msra.mxu0 0
    %6748 = vmatpush.bf16.msra.mxu0 0
    %6749 = vmatpush.bf16.msra.mxu0 %v6716
    %6750 = vmatpush.bf16.msra.mxu0 %v6715
    %6751 = vmatpush.bf16.msra.mxu0 %v6714
    %6752 = vmatpush.bf16.msra.mxu0 %v6713
    %6753 = vmatmul.bf16.gmra.mxu0 %v6722
    %v6754 = vpop.f32.mrf.mxu0
    %v6755 = vadd.f32 0.0, %v6754
    %v6756 = vpop.f32.mrf.mxu0
    %v6757 = vadd.f32 0.0, %v6756
    %6758 = vmatmul.bf16.gmra.mxu0 %v6725
    %v6759 = vpop.f32.mrf.mxu0
    %v6760 = vadd.f32 0.0, %v6759
    %v6761 = vpop.f32.mrf.mxu0
    %v6762 = vadd.f32 0.0, %v6761
    %6763 = vmatmul.bf16.gmra.mxu0 %v6728
    %v6764 = vpop.f32.mrf.mxu0
    %v6765 = vadd.f32 0.0, %v6764
    %v6766 = vpop.f32.mrf.mxu0
    %v6767 = vadd.f32 0.0, %v6766
    %6768 = vmatmul.bf16.gmra.mxu0 %v6731
    %v6769 = vpop.f32.mrf.mxu0
    %v6770 = vadd.f32 0.0, %v6769
    %v6771 = vpop.f32.mrf.mxu0
    %v6772 = vadd.f32 0.0, %v6771
    %6773 = vmatmul.bf16.gmra.mxu0 %v6734
    %v6774 = vpop.f32.mrf.mxu0
    %v6775 = vadd.f32 0.0, %v6774
    %v6776 = vpop.f32.mrf.mxu0
    %v6777 = vadd.f32 0.0, %v6776
    %6778 = vmatmul.bf16.gmra.mxu0 %v6737
    %v6779 = vpop.f32.mrf.mxu0
    %v6780 = vadd.f32 0.0, %v6779
    %v6781 = vpop.f32.mrf.mxu0
    %v6782 = vadd.f32 0.0, %v6781
    %6783 = vmatmul.bf16.gmra.mxu0 %v6740
    %v6784 = vpop.f32.mrf.mxu0
    %v6785 = vadd.f32 0.0, %v6784
    %v6786 = vpop.f32.mrf.mxu0
    %v6787 = vadd.f32 0.0, %v6786
    %6788 = vmatmul.bf16.gmra.mxu0 %v6743
    %v6789 = vpop.f32.mrf.mxu0
    %v6790 = vadd.f32 0.0, %v6789
    %v6791 = vpop.f32.mrf.mxu0
    %v6792 = vadd.f32 0.0, %v6791
    %6793 = vdwg.mxu0
    %v6794 = vadd.f32 %v6646, %v6755
    %v6795 = vadd.f32 %v6647, %v6757
    %v6796 = vadd.f32 %v6648, %v6760
    %v6797 = vadd.f32 %v6649, %v6762
    %v6798 = vadd.f32 %v6650, %v6765
    %v6799 = vadd.f32 %v6651, %v6767
    %v6800 = vadd.f32 %v6652, %v6770
    %v6801 = vadd.f32 %v6653, %v6772
    %v6802 = vadd.f32 %v6654, %v6775
    %v6803 = vadd.f32 %v6655, %v6777
    %v6804 = vadd.f32 %v6656, %v6780
    %v6805 = vadd.f32 %v6657, %v6782
    %v6806 = vadd.f32 %v6658, %v6785
    %v6807 = vadd.f32 %v6659, %v6787
    %v6808 = vadd.f32 %v6660, %v6790
    %v6809 = vadd.f32 %v6661, %v6792
    %v6810 = vld [vmem:[%s8] sm:$0x1]
    %v6812 = vperm.slane %v6810, 0
    %v6814 = vadd.f32 %v6794, %v6812
    %v6815 = vadd.f32 %v6795, %v6812
    %v6816 = vadd.f32 %v6796, %v6812
    %v6817 = vadd.f32 %v6797, %v6812
    %v6818 = vadd.f32 %v6798, %v6812
    %v6819 = vadd.f32 %v6799, %v6812
    %v6820 = vadd.f32 %v6800, %v6812
    %v6821 = vadd.f32 %v6801, %v6812
    %v6822 = vadd.f32 %v6802, %v6812
    %v6823 = vadd.f32 %v6803, %v6812
    %v6824 = vadd.f32 %v6804, %v6812
    %v6825 = vadd.f32 %v6805, %v6812
    %v6826 = vadd.f32 %v6806, %v6812
    %v6827 = vadd.f32 %v6807, %v6812
    %v6828 = vadd.f32 %v6808, %v6812
    %v6829 = vadd.f32 %v6809, %v6812
    %s6830 = scalar_lea.vmem [#allocation6], %s5511
    %6831 = vst.msk [vmem:[%s6830] sm:$0xff] %vm68, %v6814
    %6832 = vst.msk [vmem:[%s6830 + $0x8] sm:$0xff] %vm68, %v6815
    %6833 = vst.msk [vmem:[%s6830 + $0x10] sm:$0xff] %vm68, %v6816
    %6834 = vst.msk [vmem:[%s6830 + $0x18] sm:$0xff] %vm68, %v6817
    %6835 = vst.msk [vmem:[%s6830 + $0x20] sm:$0xff] %vm68, %v6818
    %6836 = vst.msk [vmem:[%s6830 + $0x28] sm:$0xff] %vm68, %v6819
    %6837 = vst.msk [vmem:[%s6830 + $0x30] sm:$0xff] %vm68, %v6820
    %6838 = vst.msk [vmem:[%s6830 + $0x38] sm:$0xff] %vm68, %v6821
    %6839 = vst.msk [vmem:[%s6830 + $0x40] sm:$0xff] %vm68, %v6822
    %6840 = vst.msk [vmem:[%s6830 + $0x48] sm:$0xff] %vm68, %v6823
    %6841 = vst.msk [vmem:[%s6830 + $0x50] sm:$0xff] %vm68, %v6824
    %6842 = vst.msk [vmem:[%s6830 + $0x58] sm:$0xff] %vm68, %v6825
    %6843 = vst.msk [vmem:[%s6830 + $0x60] sm:$0xff] %vm68, %v6826
    %6844 = vst.msk [vmem:[%s6830 + $0x68] sm:$0xff] %vm68, %v6827
    %6845 = vst.msk [vmem:[%s6830 + $0x70] sm:$0xff] %vm68, %v6828
    %6846 = vst.msk [vmem:[%s6830 + $0x78] sm:$0xff] %vm68, %v6829
  $region94: #{cnn_forward.1} parent=0 // loop_footer
    %s5510 = sadd.s32 1, %s5506
  $region95: #{cnn_forward.1} parent=0 // loop_footer_branch
    %5505 = sbr.rel target = $region91
  $region96: #{cnn_forward.1} parent=0 // loop_exit
    _
  %v6847 = vld [vmem:[#allocation6] ss:$2 sm:$0xff]
  %s6848 = scalar_lea.vmem [#allocation6], 1
  %v6849 = vld [vmem:[%s6848] ss:$2 sm:$0xff]
  %v6850 = vmax.f32 %v6847, %v6849
  %s6851 = scalar_lea.vmem [#allocation6], 16
  %v6852 = vld [vmem:[%s6851] ss:$2 sm:$0xff]
  %s6853 = scalar_lea.vmem [#allocation6], 17
  %v6854 = vld [vmem:[%s6853] ss:$2 sm:$0xff]
  %v6855 = vmax.f32 %v6852, %v6854
  %v6856 = vmax.f32 %v6850, %v6855
  %v6857 = vmax.f32 %v6856, 0.0
  %6858 = vst.msk [vmem:[#allocation7] sm:$0xff] %vm68, %v6857
  %s6859 = scalar_lea.vmem [#allocation6], 32
  %v6860 = vld [vmem:[%s6859] ss:$2 sm:$0xff]
  %s6861 = scalar_lea.vmem [#allocation6], 33
  %v6862 = vld [vmem:[%s6861] ss:$2 sm:$0xff]
  %v6863 = vmax.f32 %v6860, %v6862
  %s6864 = scalar_lea.vmem [#allocation6], 48
  %v6865 = vld [vmem:[%s6864] ss:$2 sm:$0xff]
  %s6866 = scalar_lea.vmem [#allocation6], 49
  %v6867 = vld [vmem:[%s6866] ss:$2 sm:$0xff]
  %v6868 = vmax.f32 %v6865, %v6867
  %v6869 = vmax.f32 %v6863, %v6868
  %v6870 = vmax.f32 %v6869, 0.0
  %6871 = vst.msk [vmem:[#allocation7 + $0x8] sm:$0xff] %vm68, %v6870
  %s6872 = scalar_lea.vmem [#allocation6], 64
  %v6873 = vld [vmem:[%s6872] ss:$2 sm:$0xff]
  %s6874 = scalar_lea.vmem [#allocation6], 65
  %v6875 = vld [vmem:[%s6874] ss:$2 sm:$0xff]
  %v6876 = vmax.f32 %v6873, %v6875
  %s6877 = scalar_lea.vmem [#allocation6], 80
  %v6878 = vld [vmem:[%s6877] ss:$2 sm:$0xff]
  %s6879 = scalar_lea.vmem [#allocation6], 81
  %v6880 = vld [vmem:[%s6879] ss:$2 sm:$0xff]
  %v6881 = vmax.f32 %v6878, %v6880
  %v6882 = vmax.f32 %v6876, %v6881
  %v6883 = vmax.f32 %v6882, 0.0
  %6884 = vst.msk [vmem:[#allocation7 + $0x10] sm:$0xff] %vm68, %v6883
  %s6885 = scalar_lea.vmem [#allocation6], 96
  %v6886 = vld [vmem:[%s6885] ss:$2 sm:$0xff]
  %s6887 = scalar_lea.vmem [#allocation6], 97
  %v6888 = vld [vmem:[%s6887] ss:$2 sm:$0xff]
  %v6889 = vmax.f32 %v6886, %v6888
  %s6890 = scalar_lea.vmem [#allocation6], 112
  %v6891 = vld [vmem:[%s6890] ss:$2 sm:$0xff]
  %s6892 = scalar_lea.vmem [#allocation6], 113
  %v6893 = vld [vmem:[%s6892] ss:$2 sm:$0xff]
  %v6894 = vmax.f32 %v6891, %v6893
  %v6895 = vmax.f32 %v6889, %v6894
  %v6896 = vmax.f32 %v6895, 0.0
  %6897 = vst.msk [vmem:[#allocation7 + $0x18] sm:$0xff] %vm68, %v6896
  %s6898 = scalar_lea.vmem [#allocation6], 128
  %v6899 = vld [vmem:[%s6898] ss:$2 sm:$0xff]
  %s6900 = scalar_lea.vmem [#allocation6], 129
  %v6901 = vld [vmem:[%s6900] ss:$2 sm:$0xff]
  %v6902 = vmax.f32 %v6899, %v6901
  %s6903 = scalar_lea.vmem [#allocation6], 144
  %v6904 = vld [vmem:[%s6903] ss:$2 sm:$0xff]
  %s6905 = scalar_lea.vmem [#allocation6], 145
  %v6906 = vld [vmem:[%s6905] ss:$2 sm:$0xff]
  %v6907 = vmax.f32 %v6904, %v6906
  %v6908 = vmax.f32 %v6902, %v6907
  %v6909 = vmax.f32 %v6908, 0.0
  %6910 = vst.msk [vmem:[#allocation7 + $0x20] sm:$0xff] %vm68, %v6909
  %s6911 = scalar_lea.vmem [#allocation6], 160
  %v6912 = vld [vmem:[%s6911] ss:$2 sm:$0xff]
  %s6913 = scalar_lea.vmem [#allocation6], 161
  %v6914 = vld [vmem:[%s6913] ss:$2 sm:$0xff]
  %v6915 = vmax.f32 %v6912, %v6914
  %s6916 = scalar_lea.vmem [#allocation6], 176
  %v6917 = vld [vmem:[%s6916] ss:$2 sm:$0xff]
  %s6918 = scalar_lea.vmem [#allocation6], 177
  %v6919 = vld [vmem:[%s6918] ss:$2 sm:$0xff]
  %v6920 = vmax.f32 %v6917, %v6919
  %v6921 = vmax.f32 %v6915, %v6920
  %v6922 = vmax.f32 %v6921, 0.0
  %6923 = vst.msk [vmem:[#allocation7 + $0x28] sm:$0xff] %vm68, %v6922
  %s6924 = scalar_lea.vmem [#allocation6], 192
  %v6925 = vld [vmem:[%s6924] ss:$2 sm:$0xff]
  %s6926 = scalar_lea.vmem [#allocation6], 193
  %v6927 = vld [vmem:[%s6926] ss:$2 sm:$0xff]
  %v6928 = vmax.f32 %v6925, %v6927
  %s6929 = scalar_lea.vmem [#allocation6], 208
  %v6930 = vld [vmem:[%s6929] ss:$2 sm:$0xff]
  %s6931 = scalar_lea.vmem [#allocation6], 209
  %v6932 = vld [vmem:[%s6931] ss:$2 sm:$0xff]
  %v6933 = vmax.f32 %v6930, %v6932
  %v6934 = vmax.f32 %v6928, %v6933
  %v6935 = vmax.f32 %v6934, 0.0
  %6936 = vst.msk [vmem:[#allocation7 + $0x30] sm:$0xff] %vm68, %v6935
  %s6937 = scalar_lea.vmem [#allocation6], 224
  %v6938 = vld [vmem:[%s6937] ss:$2 sm:$0xff]
  %s6939 = scalar_lea.vmem [#allocation6], 225
  %v6940 = vld [vmem:[%s6939] ss:$2 sm:$0xff]
  %v6941 = vmax.f32 %v6938, %v6940
  %s6942 = scalar_lea.vmem [#allocation6], 240
  %v6943 = vld [vmem:[%s6942] ss:$2 sm:$0xff]
  %s6944 = scalar_lea.vmem [#allocation6], 241
  %v6945 = vld [vmem:[%s6944] ss:$2 sm:$0xff]
  %v6946 = vmax.f32 %v6943, %v6945
  %v6947 = vmax.f32 %v6941, %v6946
  %v6948 = vmax.f32 %v6947, 0.0
  %6949 = vst.msk [vmem:[#allocation7 + $0x38] sm:$0xff] %vm68, %v6948
  %s6950 = scalar_lea.vmem [#allocation6], 256
  %v6951 = vld [vmem:[%s6950] ss:$2 sm:$0xff]
  %s6952 = scalar_lea.vmem [#allocation6], 257
  %v6953 = vld [vmem:[%s6952] ss:$2 sm:$0xff]
  %v6954 = vmax.f32 %v6951, %v6953
  %s6955 = scalar_lea.vmem [#allocation6], 272
  %v6956 = vld [vmem:[%s6955] ss:$2 sm:$0xff]
  %s6957 = scalar_lea.vmem [#allocation6], 273
  %v6958 = vld [vmem:[%s6957] ss:$2 sm:$0xff]
  %v6959 = vmax.f32 %v6956, %v6958
  %v6960 = vmax.f32 %v6954, %v6959
  %v6961 = vmax.f32 %v6960, 0.0
  %6962 = vst.msk [vmem:[#allocation7 + $0x40] sm:$0xff] %vm68, %v6961
  %s6963 = scalar_lea.vmem [#allocation6], 288
  %v6964 = vld [vmem:[%s6963] ss:$2 sm:$0xff]
  %s6965 = scalar_lea.vmem [#allocation6], 289
  %v6966 = vld [vmem:[%s6965] ss:$2 sm:$0xff]
  %v6967 = vmax.f32 %v6964, %v6966
  %s6968 = scalar_lea.vmem [#allocation6], 304
  %v6969 = vld [vmem:[%s6968] ss:$2 sm:$0xff]
  %s6970 = scalar_lea.vmem [#allocation6], 305
  %v6971 = vld [vmem:[%s6970] ss:$2 sm:$0xff]
  %v6972 = vmax.f32 %v6969, %v6971
  %v6973 = vmax.f32 %v6967, %v6972
  %v6974 = vmax.f32 %v6973, 0.0
  %6975 = vst.msk [vmem:[#allocation7 + $0x48] sm:$0xff] %vm68, %v6974
  %s6976 = scalar_lea.vmem [#allocation6], 320
  %v6977 = vld [vmem:[%s6976] ss:$2 sm:$0xff]
  %s6978 = scalar_lea.vmem [#allocation6], 321
  %v6979 = vld [vmem:[%s6978] ss:$2 sm:$0xff]
  %v6980 = vmax.f32 %v6977, %v6979
  %s6981 = scalar_lea.vmem [#allocation6], 336
  %v6982 = vld [vmem:[%s6981] ss:$2 sm:$0xff]
  %s6983 = scalar_lea.vmem [#allocation6], 337
  %v6984 = vld [vmem:[%s6983] ss:$2 sm:$0xff]
  %v6985 = vmax.f32 %v6982, %v6984
  %v6986 = vmax.f32 %v6980, %v6985
  %v6987 = vmax.f32 %v6986, 0.0
  %6988 = vst.msk [vmem:[#allocation7 + $0x50] sm:$0xff] %vm68, %v6987
  %s6989 = scalar_lea.vmem [#allocation6], 352
  %v6990 = vld [vmem:[%s6989] ss:$2 sm:$0xff]
  %s6991 = scalar_lea.vmem [#allocation6], 353
  %v6992 = vld [vmem:[%s6991] ss:$2 sm:$0xff]
  %v6993 = vmax.f32 %v6990, %v6992
  %s6994 = scalar_lea.vmem [#allocation6], 368
  %v6995 = vld [vmem:[%s6994] ss:$2 sm:$0xff]
  %s6996 = scalar_lea.vmem [#allocation6], 369
  %v6997 = vld [vmem:[%s6996] ss:$2 sm:$0xff]
  %v6998 = vmax.f32 %v6995, %v6997
  %v6999 = vmax.f32 %v6993, %v6998
  %v7000 = vmax.f32 %v6999, 0.0
  %7001 = vst.msk [vmem:[#allocation7 + $0x58] sm:$0xff] %vm68, %v7000
  %s7002 = scalar_lea.vmem [#allocation6], 384
  %v7003 = vld [vmem:[%s7002] ss:$2 sm:$0xff]
  %s7004 = scalar_lea.vmem [#allocation6], 385
  %v7005 = vld [vmem:[%s7004] ss:$2 sm:$0xff]
  %v7006 = vmax.f32 %v7003, %v7005
  %s7007 = scalar_lea.vmem [#allocation6], 400
  %v7008 = vld [vmem:[%s7007] ss:$2 sm:$0xff]
  %s7009 = scalar_lea.vmem [#allocation6], 401
  %v7010 = vld [vmem:[%s7009] ss:$2 sm:$0xff]
  %v7011 = vmax.f32 %v7008, %v7010
  %v7012 = vmax.f32 %v7006, %v7011
  %v7013 = vmax.f32 %v7012, 0.0
  %7014 = vst.msk [vmem:[#allocation7 + $0x60] sm:$0xff] %vm68, %v7013
  %s7015 = scalar_lea.vmem [#allocation6], 416
  %v7016 = vld [vmem:[%s7015] ss:$2 sm:$0xff]
  %s7017 = scalar_lea.vmem [#allocation6], 417
  %v7018 = vld [vmem:[%s7017] ss:$2 sm:$0xff]
  %v7019 = vmax.f32 %v7016, %v7018
  %s7020 = scalar_lea.vmem [#allocation6], 432
  %v7021 = vld [vmem:[%s7020] ss:$2 sm:$0xff]
  %s7022 = scalar_lea.vmem [#allocation6], 433
  %v7023 = vld [vmem:[%s7022] ss:$2 sm:$0xff]
  %v7024 = vmax.f32 %v7021, %v7023
  %v7025 = vmax.f32 %v7019, %v7024
  %v7026 = vmax.f32 %v7025, 0.0
  %7027 = vst.msk [vmem:[#allocation7 + $0x68] sm:$0xff] %vm68, %v7026
  %s7028 = scalar_lea.vmem [#allocation6], 448
  %v7029 = vld [vmem:[%s7028] ss:$2 sm:$0xff]
  %s7030 = scalar_lea.vmem [#allocation6], 449
  %v7031 = vld [vmem:[%s7030] ss:$2 sm:$0xff]
  %v7032 = vmax.f32 %v7029, %v7031
  %s7033 = scalar_lea.vmem [#allocation6], 464
  %v7034 = vld [vmem:[%s7033] ss:$2 sm:$0xff]
  %s7035 = scalar_lea.vmem [#allocation6], 465
  %v7036 = vld [vmem:[%s7035] ss:$2 sm:$0xff]
  %v7037 = vmax.f32 %v7034, %v7036
  %v7038 = vmax.f32 %v7032, %v7037
  %v7039 = vmax.f32 %v7038, 0.0
  %7040 = vst.msk [vmem:[#allocation7 + $0x70] sm:$0xff] %vm68, %v7039
  %s7041 = scalar_lea.vmem [#allocation6], 480
  %v7042 = vld [vmem:[%s7041] ss:$2 sm:$0xff]
  %s7043 = scalar_lea.vmem [#allocation6], 481
  %v7044 = vld [vmem:[%s7043] ss:$2 sm:$0xff]
  %v7045 = vmax.f32 %v7042, %v7044
  %s7046 = scalar_lea.vmem [#allocation6], 496
  %v7047 = vld [vmem:[%s7046] ss:$2 sm:$0xff]
  %s7048 = scalar_lea.vmem [#allocation6], 497
  %v7049 = vld [vmem:[%s7048] ss:$2 sm:$0xff]
  %v7050 = vmax.f32 %v7047, %v7049
  %v7051 = vmax.f32 %v7045, %v7050
  %v7052 = vmax.f32 %v7051, 0.0
  %7053 = vst.msk [vmem:[#allocation7 + $0x78] sm:$0xff] %vm68, %v7052
  loop: start=0, step=1, limit=2
  $region97: #{cnn_forward.1} parent=0 // loop_pre_header
    _
  $region98: #{cnn_forward.1} parent=0 // loop_header
    %s7055 = sphi 0, %s7059
    %p7056 = scmp.ge.s32.totalorder %s7055, 2
  $region99: #{cnn_forward.1} parent=0 // loop_header_branch
    %7058 = sbr.rel (%p7056) target = $region103
  $region100: #{cnn_forward.1} parent=0 // loop_body
    %s7060 = smul.u32 %s7055, 64
    %s7061 = scalar_lea.vmem [#allocation7], %s7060
    %v7062 = vld [vmem:[%s7061] sm:$0xff]
    %v7063 = vld [vmem:[%s7061 + $0x8] sm:$0xff]
    %v7064 = vld [vmem:[%s7061 + $0x10] sm:$0xff]
    %v7065 = vld [vmem:[%s7061 + $0x18] sm:$0xff]
    %v7066 = vld [vmem:[%s7061 + $0x20] sm:$0xff]
    %v7067 = vld [vmem:[%s7061 + $0x28] sm:$0xff]
    %v7068 = vld [vmem:[%s7061 + $0x30] sm:$0xff]
    %v7069 = vld [vmem:[%s7061 + $0x38] sm:$0xff]
    %v7070 = vpack.c.bf16 %v7063, %v7062
    %v7071 = vpack.c.bf16 %v7065, %v7064
    %v7072 = vpack.c.bf16 %v7067, %v7066
    %v7073 = vpack.c.bf16 %v7069, %v7068
    %v7074 = vld [vmem:[%s9] sm:$0xf]
    %v7075 = vld [vmem:[%s9 + $0x4] sm:$0xf]
    %v7076 = vld [vmem:[%s9 + $0x8] sm:$0xf]
    %v7077 = vld [vmem:[%s9 + $0xc] sm:$0xf]
    %v7078 = vld [vmem:[%s9 + $0x10] sm:$0xf]
    %v7079 = vld [vmem:[%s9 + $0x14] sm:$0xf]
    %v7080 = vld [vmem:[%s9 + $0x18] sm:$0xf]
    %v7081 = vld [vmem:[%s9 + $0x1c] sm:$0xf]
    %s7082 = sadd.s32 %s7060, 1
    %s7083 = scalar_lea.vmem [#allocation7], %s7082
    %v7084 = vld [vmem:[%s7083] sm:$0xff]
    %v7085 = vld [vmem:[%s7083 + $0x8] sm:$0xff]
    %v7086 = vld [vmem:[%s7083 + $0x10] sm:$0xff]
    %v7087 = vld [vmem:[%s7083 + $0x18] sm:$0xff]
    %v7088 = vld [vmem:[%s7083 + $0x20] sm:$0xff]
    %v7089 = vld [vmem:[%s7083 + $0x28] sm:$0xff]
    %v7090 = vld [vmem:[%s7083 + $0x30] sm:$0xff]
    %v7091 = vld [vmem:[%s7083 + $0x38] sm:$0xff]
    %v7092 = vpack.c.bf16 %v7085, %v7084
    %v7093 = vpack.c.bf16 %v7087, %v7086
    %v7094 = vpack.c.bf16 %v7089, %v7088
    %v7095 = vpack.c.bf16 %v7091, %v7090
    %s7096 = scalar_lea.vmem %s9, 32
    %v7097 = vld [vmem:[%s7096] sm:$0xf]
    %v7098 = vld [vmem:[%s7096 + $0x4] sm:$0xf]
    %v7099 = vld [vmem:[%s7096 + $0x8] sm:$0xf]
    %v7100 = vld [vmem:[%s7096 + $0xc] sm:$0xf]
    %v7101 = vld [vmem:[%s7096 + $0x10] sm:$0xf]
    %v7102 = vld [vmem:[%s7096 + $0x14] sm:$0xf]
    %v7103 = vld [vmem:[%s7096 + $0x18] sm:$0xf]
    %v7104 = vld [vmem:[%s7096 + $0x1c] sm:$0xf]
    %v7113 = vunpack.c.l.b16 %v7097
    %v7114 = vunpack.c.l.b16 %v7098
    %v7115 = vunpack.c.l.b16 %v7099
    %v7116 = vunpack.c.l.b16 %v7100
    %v7117 = vunpack.c.l.b16 %v7101
    %v7118 = vunpack.c.l.b16 %v7102
    %v7119 = vunpack.c.l.b16 %v7103
    %v7120 = vunpack.c.l.b16 %v7104
    %v7121 = vpack.c.b16 %v7114, %v7113
    %v7122 = vpack.c.b16 %v7116, %v7115
    %v7123 = vpack.c.b16 %v7118, %v7117
    %v7124 = vpack.c.b16 %v7120, %v7119
    %v7130 = vsel %vm68, %v7092, 0
    %v7133 = vsel %vm68, %v7093, 0
    %v7136 = vsel %vm68, %v7094, 0
    %v7139 = vsel %vm68, %v7095, 0
    %7141 = vmatpush.bf16.msra.mxu0 0
    %7142 = vmatpush.bf16.msra.mxu0 0
    %7143 = vmatpush.bf16.msra.mxu0 0
    %7144 = vmatpush.bf16.msra.mxu0 0
    %7145 = vmatpush.bf16.msra.mxu0 %v7124
    %7146 = vmatpush.bf16.msra.mxu0 %v7123
    %7147 = vmatpush.bf16.msra.mxu0 %v7122
    %7148 = vmatpush.bf16.msra.mxu0 %v7121
    %7149 = vmatmul.bf16.gmra.mxu0 %v7130
    %v7150 = vpop.f32.mrf.mxu0
    %v7151 = vadd.f32 0.0, %v7150
    %v7152 = vpop.f32.mrf.mxu0
    %v7153 = vadd.f32 0.0, %v7152
    %7154 = vmatmul.bf16.gmra.mxu0 %v7133
    %v7155 = vpop.f32.mrf.mxu0
    %v7156 = vadd.f32 0.0, %v7155
    %v7157 = vpop.f32.mrf.mxu0
    %v7158 = vadd.f32 0.0, %v7157
    %7159 = vmatmul.bf16.gmra.mxu0 %v7136
    %v7160 = vpop.f32.mrf.mxu0
    %v7161 = vadd.f32 0.0, %v7160
    %v7162 = vpop.f32.mrf.mxu0
    %v7163 = vadd.f32 0.0, %v7162
    %7164 = vmatmul.bf16.gmra.mxu0 %v7139
    %v7165 = vpop.f32.mrf.mxu0
    %v7166 = vadd.f32 0.0, %v7165
    %v7167 = vpop.f32.mrf.mxu0
    %v7168 = vadd.f32 0.0, %v7167
    %7169 = vdwg.mxu0
    %v7178 = vunpack.c.l.b16 %v7074
    %v7179 = vunpack.c.l.b16 %v7075
    %v7180 = vunpack.c.l.b16 %v7076
    %v7181 = vunpack.c.l.b16 %v7077
    %v7182 = vunpack.c.l.b16 %v7078
    %v7183 = vunpack.c.l.b16 %v7079
    %v7184 = vunpack.c.l.b16 %v7080
    %v7185 = vunpack.c.l.b16 %v7081
    %v7186 = vpack.c.b16 %v7179, %v7178
    %v7187 = vpack.c.b16 %v7181, %v7180
    %v7188 = vpack.c.b16 %v7183, %v7182
    %v7189 = vpack.c.b16 %v7185, %v7184
    %v7195 = vsel %vm68, %v7070, 0
    %v7198 = vsel %vm68, %v7071, 0
    %v7201 = vsel %vm68, %v7072, 0
    %v7204 = vsel %vm68, %v7073, 0
    %7206 = vmatpush.bf16.msra.mxu0 0
    %7207 = vmatpush.bf16.msra.mxu0 0
    %7208 = vmatpush.bf16.msra.mxu0 0
    %7209 = vmatpush.bf16.msra.mxu0 0
    %7210 = vmatpush.bf16.msra.mxu0 %v7189
    %7211 = vmatpush.bf16.msra.mxu0 %v7188
    %7212 = vmatpush.bf16.msra.mxu0 %v7187
    %7213 = vmatpush.bf16.msra.mxu0 %v7186
    %7214 = vmatmul.bf16.gmra.mxu0 %v7195
    %v7215 = vpop.f32.mrf.mxu0
    %v7216 = vadd.f32 %v7151, %v7215
    %v7217 = vpop.f32.mrf.mxu0
    %v7218 = vadd.f32 %v7153, %v7217
    %7219 = vmatmul.bf16.gmra.mxu0 %v7198
    %v7220 = vpop.f32.mrf.mxu0
    %v7221 = vadd.f32 %v7156, %v7220
    %v7222 = vpop.f32.mrf.mxu0
    %v7223 = vadd.f32 %v7158, %v7222
    %7224 = vmatmul.bf16.gmra.mxu0 %v7201
    %v7225 = vpop.f32.mrf.mxu0
    %v7226 = vadd.f32 %v7161, %v7225
    %v7227 = vpop.f32.mrf.mxu0
    %v7228 = vadd.f32 %v7163, %v7227
    %7229 = vmatmul.bf16.gmra.mxu0 %v7204
    %v7230 = vpop.f32.mrf.mxu0
    %v7231 = vadd.f32 %v7166, %v7230
    %v7232 = vpop.f32.mrf.mxu0
    %v7233 = vadd.f32 %v7168, %v7232
    %7234 = vdwg.mxu0
    %s7235 = sadd.s32 %s7060, 8
    %s7236 = scalar_lea.vmem [#allocation7], %s7235
    %v7237 = vld [vmem:[%s7236] sm:$0xff]
    %v7238 = vld [vmem:[%s7236 + $0x8] sm:$0xff]
    %v7239 = vld [vmem:[%s7236 + $0x10] sm:$0xff]
    %v7240 = vld [vmem:[%s7236 + $0x18] sm:$0xff]
    %v7241 = vld [vmem:[%s7236 + $0x20] sm:$0xff]
    %v7242 = vld [vmem:[%s7236 + $0x28] sm:$0xff]
    %v7243 = vld [vmem:[%s7236 + $0x30] sm:$0xff]
    %v7244 = vld [vmem:[%s7236 + $0x38] sm:$0xff]
    %v7245 = vpack.c.bf16 %v7238, %v7237
    %v7246 = vpack.c.bf16 %v7240, %v7239
    %v7247 = vpack.c.bf16 %v7242, %v7241
    %v7248 = vpack.c.bf16 %v7244, %v7243
    %s7249 = scalar_lea.vmem %s9, 64
    %v7250 = vld [vmem:[%s7249] sm:$0xf]
    %v7251 = vld [vmem:[%s7249 + $0x4] sm:$0xf]
    %v7252 = vld [vmem:[%s7249 + $0x8] sm:$0xf]
    %v7253 = vld [vmem:[%s7249 + $0xc] sm:$0xf]
    %v7254 = vld [vmem:[%s7249 + $0x10] sm:$0xf]
    %v7255 = vld [vmem:[%s7249 + $0x14] sm:$0xf]
    %v7256 = vld [vmem:[%s7249 + $0x18] sm:$0xf]
    %v7257 = vld [vmem:[%s7249 + $0x1c] sm:$0xf]
    %v7266 = vunpack.c.l.b16 %v7250
    %v7267 = vunpack.c.l.b16 %v7251
    %v7268 = vunpack.c.l.b16 %v7252
    %v7269 = vunpack.c.l.b16 %v7253
    %v7270 = vunpack.c.l.b16 %v7254
    %v7271 = vunpack.c.l.b16 %v7255
    %v7272 = vunpack.c.l.b16 %v7256
    %v7273 = vunpack.c.l.b16 %v7257
    %v7274 = vpack.c.b16 %v7267, %v7266
    %v7275 = vpack.c.b16 %v7269, %v7268
    %v7276 = vpack.c.b16 %v7271, %v7270
    %v7277 = vpack.c.b16 %v7273, %v7272
    %v7283 = vsel %vm68, %v7245, 0
    %v7286 = vsel %vm68, %v7246, 0
    %v7289 = vsel %vm68, %v7247, 0
    %v7292 = vsel %vm68, %v7248, 0
    %7294 = vmatpush.bf16.msra.mxu0 0
    %7295 = vmatpush.bf16.msra.mxu0 0
    %7296 = vmatpush.bf16.msra.mxu0 0
    %7297 = vmatpush.bf16.msra.mxu0 0
    %7298 = vmatpush.bf16.msra.mxu0 %v7277
    %7299 = vmatpush.bf16.msra.mxu0 %v7276
    %7300 = vmatpush.bf16.msra.mxu0 %v7275
    %7301 = vmatpush.bf16.msra.mxu0 %v7274
    %7302 = vmatmul.bf16.gmra.mxu0 %v7283
    %v7303 = vpop.f32.mrf.mxu0
    %v7304 = vadd.f32 0.0, %v7303
    %v7305 = vpop.f32.mrf.mxu0
    %v7306 = vadd.f32 0.0, %v7305
    %7307 = vmatmul.bf16.gmra.mxu0 %v7286
    %v7308 = vpop.f32.mrf.mxu0
    %v7309 = vadd.f32 0.0, %v7308
    %v7310 = vpop.f32.mrf.mxu0
    %v7311 = vadd.f32 0.0, %v7310
    %7312 = vmatmul.bf16.gmra.mxu0 %v7289
    %v7313 = vpop.f32.mrf.mxu0
    %v7314 = vadd.f32 0.0, %v7313
    %v7315 = vpop.f32.mrf.mxu0
    %v7316 = vadd.f32 0.0, %v7315
    %7317 = vmatmul.bf16.gmra.mxu0 %v7292
    %v7318 = vpop.f32.mrf.mxu0
    %v7319 = vadd.f32 0.0, %v7318
    %v7320 = vpop.f32.mrf.mxu0
    %v7321 = vadd.f32 0.0, %v7320
    %7322 = vdwg.mxu0
    %v7323 = vadd.f32 %v7216, %v7304
    %v7324 = vadd.f32 %v7218, %v7306
    %v7325 = vadd.f32 %v7221, %v7309
    %v7326 = vadd.f32 %v7223, %v7311
    %v7327 = vadd.f32 %v7226, %v7314
    %v7328 = vadd.f32 %v7228, %v7316
    %v7329 = vadd.f32 %v7231, %v7319
    %v7330 = vadd.f32 %v7233, %v7321
    %s7331 = sadd.s32 %s7060, 9
    %s7332 = scalar_lea.vmem [#allocation7], %s7331
    %v7333 = vld [vmem:[%s7332] sm:$0xff]
    %v7334 = vld [vmem:[%s7332 + $0x8] sm:$0xff]
    %v7335 = vld [vmem:[%s7332 + $0x10] sm:$0xff]
    %v7336 = vld [vmem:[%s7332 + $0x18] sm:$0xff]
    %v7337 = vld [vmem:[%s7332 + $0x20] sm:$0xff]
    %v7338 = vld [vmem:[%s7332 + $0x28] sm:$0xff]
    %v7339 = vld [vmem:[%s7332 + $0x30] sm:$0xff]
    %v7340 = vld [vmem:[%s7332 + $0x38] sm:$0xff]
    %v7341 = vpack.c.bf16 %v7334, %v7333
    %v7342 = vpack.c.bf16 %v7336, %v7335
    %v7343 = vpack.c.bf16 %v7338, %v7337
    %v7344 = vpack.c.bf16 %v7340, %v7339
    %s7345 = scalar_lea.vmem %s9, 96
    %v7346 = vld [vmem:[%s7345] sm:$0xf]
    %v7347 = vld [vmem:[%s7345 + $0x4] sm:$0xf]
    %v7348 = vld [vmem:[%s7345 + $0x8] sm:$0xf]
    %v7349 = vld [vmem:[%s7345 + $0xc] sm:$0xf]
    %v7350 = vld [vmem:[%s7345 + $0x10] sm:$0xf]
    %v7351 = vld [vmem:[%s7345 + $0x14] sm:$0xf]
    %v7352 = vld [vmem:[%s7345 + $0x18] sm:$0xf]
    %v7353 = vld [vmem:[%s7345 + $0x1c] sm:$0xf]
    %v7362 = vunpack.c.l.b16 %v7346
    %v7363 = vunpack.c.l.b16 %v7347
    %v7364 = vunpack.c.l.b16 %v7348
    %v7365 = vunpack.c.l.b16 %v7349
    %v7366 = vunpack.c.l.b16 %v7350
    %v7367 = vunpack.c.l.b16 %v7351
    %v7368 = vunpack.c.l.b16 %v7352
    %v7369 = vunpack.c.l.b16 %v7353
    %v7370 = vpack.c.b16 %v7363, %v7362
    %v7371 = vpack.c.b16 %v7365, %v7364
    %v7372 = vpack.c.b16 %v7367, %v7366
    %v7373 = vpack.c.b16 %v7369, %v7368
    %v7379 = vsel %vm68, %v7341, 0
    %v7382 = vsel %vm68, %v7342, 0
    %v7385 = vsel %vm68, %v7343, 0
    %v7388 = vsel %vm68, %v7344, 0
    %7390 = vmatpush.bf16.msra.mxu0 0
    %7391 = vmatpush.bf16.msra.mxu0 0
    %7392 = vmatpush.bf16.msra.mxu0 0
    %7393 = vmatpush.bf16.msra.mxu0 0
    %7394 = vmatpush.bf16.msra.mxu0 %v7373
    %7395 = vmatpush.bf16.msra.mxu0 %v7372
    %7396 = vmatpush.bf16.msra.mxu0 %v7371
    %7397 = vmatpush.bf16.msra.mxu0 %v7370
    %7398 = vmatmul.bf16.gmra.mxu0 %v7379
    %v7399 = vpop.f32.mrf.mxu0
    %v7400 = vadd.f32 0.0, %v7399
    %v7401 = vpop.f32.mrf.mxu0
    %v7402 = vadd.f32 0.0, %v7401
    %7403 = vmatmul.bf16.gmra.mxu0 %v7382
    %v7404 = vpop.f32.mrf.mxu0
    %v7405 = vadd.f32 0.0, %v7404
    %v7406 = vpop.f32.mrf.mxu0
    %v7407 = vadd.f32 0.0, %v7406
    %7408 = vmatmul.bf16.gmra.mxu0 %v7385
    %v7409 = vpop.f32.mrf.mxu0
    %v7410 = vadd.f32 0.0, %v7409
    %v7411 = vpop.f32.mrf.mxu0
    %v7412 = vadd.f32 0.0, %v7411
    %7413 = vmatmul.bf16.gmra.mxu0 %v7388
    %v7414 = vpop.f32.mrf.mxu0
    %v7415 = vadd.f32 0.0, %v7414
    %v7416 = vpop.f32.mrf.mxu0
    %v7417 = vadd.f32 0.0, %v7416
    %7418 = vdwg.mxu0
    %v7419 = vadd.f32 %v7323, %v7400
    %v7420 = vadd.f32 %v7324, %v7402
    %v7421 = vadd.f32 %v7325, %v7405
    %v7422 = vadd.f32 %v7326, %v7407
    %v7423 = vadd.f32 %v7327, %v7410
    %v7424 = vadd.f32 %v7328, %v7412
    %v7425 = vadd.f32 %v7329, %v7415
    %v7426 = vadd.f32 %v7330, %v7417
    %v7427 = vld [vmem:[%s10] sm:$0x1]
    %v7429 = vperm.slane %v7427, 0
    %v7431 = vadd.f32 %v7419, %v7429
    %v7432 = vadd.f32 %v7420, %v7429
    %v7433 = vadd.f32 %v7421, %v7429
    %v7434 = vadd.f32 %v7422, %v7429
    %v7435 = vadd.f32 %v7423, %v7429
    %v7436 = vadd.f32 %v7424, %v7429
    %v7437 = vadd.f32 %v7425, %v7429
    %v7438 = vadd.f32 %v7426, %v7429
    %v7439 = vmax.f32 %v7431, 0.0
    %v7440 = vmax.f32 %v7432, 0.0
    %v7441 = vmax.f32 %v7433, 0.0
    %v7442 = vmax.f32 %v7434, 0.0
    %v7443 = vmax.f32 %v7435, 0.0
    %v7444 = vmax.f32 %v7436, 0.0
    %v7445 = vmax.f32 %v7437, 0.0
    %v7446 = vmax.f32 %v7438, 0.0
    %s7447 = scalar_lea.vmem [#allocation8], %s7060
    %7448 = vst.msk [vmem:[%s7447] sm:$0xff] %vm68, %v7439
    %7449 = vst.msk [vmem:[%s7447 + $0x8] sm:$0xff] %vm68, %v7440
    %7450 = vst.msk [vmem:[%s7447 + $0x10] sm:$0xff] %vm68, %v7441
    %7451 = vst.msk [vmem:[%s7447 + $0x18] sm:$0xff] %vm68, %v7442
    %7452 = vst.msk [vmem:[%s7447 + $0x20] sm:$0xff] %vm68, %v7443
    %7453 = vst.msk [vmem:[%s7447 + $0x28] sm:$0xff] %vm68, %v7444
    %7454 = vst.msk [vmem:[%s7447 + $0x30] sm:$0xff] %vm68, %v7445
    %7455 = vst.msk [vmem:[%s7447 + $0x38] sm:$0xff] %vm68, %v7446
  $region101: #{cnn_forward.1} parent=0 // loop_footer
    %s7059 = sadd.s32 1, %s7055
  $region102: #{cnn_forward.1} parent=0 // loop_footer_branch
    %7054 = sbr.rel target = $region98
  $region103: #{cnn_forward.1} parent=0 // loop_exit
    _
  %v7456 = vld [vmem:[#allocation8] ss:$64 sm:$0x1]
  %v7457 = vld [vmem:[#allocation8] ss:$64 sm:$0x2]
  %v7458 = vor.u32 %v7456, %v7457
  %v7459 = vpack.c.bf16 %v7458, %v7458
  %v7460 = vld [vmem:[%s11] sm:$0xff]
  %v7461 = vld [vmem:[%s11 + $0x8] sm:$0xff]
  %v7462 = vld [vmem:[%s11 + $0x10] sm:$0xff]
  %v7463 = vld [vmem:[%s11 + $0x18] sm:$0xff]
  %v7464 = vld [vmem:[%s11 + $0x20] sm:$0xff]
  %v7465 = vld [vmem:[%s11 + $0x28] sm:$0xff]
  %v7466 = vld [vmem:[%s11 + $0x30] sm:$0xff]
  %v7467 = vld [vmem:[%s11 + $0x38] sm:$0xff]
  %s7468 = scalar_lea.vmem [#allocation8], 1
  %v7469 = vld [vmem:[%s7468] ss:$64 sm:$0x1]
  %v7470 = vld [vmem:[%s7468] ss:$64 sm:$0x2]
  %v7471 = vor.u32 %v7469, %v7470
  %v7472 = vpack.c.bf16 %v7471, %v7471
  %s7473 = scalar_lea.vmem %s11, 64
  %v7474 = vld [vmem:[%s7473] sm:$0xff]
  %v7475 = vld [vmem:[%s7473 + $0x8] sm:$0xff]
  %v7476 = vld [vmem:[%s7473 + $0x10] sm:$0xff]
  %v7477 = vld [vmem:[%s7473 + $0x18] sm:$0xff]
  %v7478 = vld [vmem:[%s7473 + $0x20] sm:$0xff]
  %v7479 = vld [vmem:[%s7473 + $0x28] sm:$0xff]
  %v7480 = vld [vmem:[%s7473 + $0x30] sm:$0xff]
  %v7481 = vld [vmem:[%s7473 + $0x38] sm:$0xff]
  %v7490 = vunpack.c.l.b16 %v7474
  %v7491 = vunpack.c.h.b16 %v7474
  %v7492 = vunpack.c.l.b16 %v7475
  %v7493 = vunpack.c.h.b16 %v7475
  %v7494 = vunpack.c.l.b16 %v7476
  %v7495 = vunpack.c.h.b16 %v7476
  %v7496 = vunpack.c.l.b16 %v7477
  %v7497 = vunpack.c.h.b16 %v7477
  %v7498 = vunpack.c.l.b16 %v7478
  %v7499 = vunpack.c.h.b16 %v7478
  %v7500 = vunpack.c.l.b16 %v7479
  %v7501 = vunpack.c.h.b16 %v7479
  %v7502 = vunpack.c.l.b16 %v7480
  %v7503 = vunpack.c.h.b16 %v7480
  %v7504 = vunpack.c.l.b16 %v7481
  %v7505 = vunpack.c.h.b16 %v7481
  %v7506 = vpack.c.b16 %v7492, %v7490
  %v7507 = vpack.c.b16 %v7493, %v7491
  %v7508 = vpack.c.b16 %v7496, %v7494
  %v7509 = vpack.c.b16 %v7497, %v7495
  %v7510 = vpack.c.b16 %v7500, %v7498
  %v7511 = vpack.c.b16 %v7501, %v7499
  %v7512 = vpack.c.b16 %v7504, %v7502
  %v7513 = vpack.c.b16 %v7505, %v7503
  %v7523 = vsel %vm68, %v7472, 0
  %7525 = vmatpush.bf16.msra.mxu0 0
  %7526 = vmatpush.bf16.msra.mxu0 0
  %7527 = vmatpush.bf16.msra.mxu0 0
  %7528 = vmatpush.bf16.msra.mxu0 0
  %7529 = vmatpush.bf16.msra.mxu0 %v7512
  %7530 = vmatpush.bf16.msra.mxu0 %v7510
  %7531 = vmatpush.bf16.msra.mxu0 %v7508
  %7532 = vmatpush.bf16.msra.mxu0 %v7506
  %7533 = vmatmul.bf16.gmra.mxu0 %v7523
  %v7534 = vpop.f32.mrf.mxu0
  %v7535 = vadd.f32 0.0, %v7534
  %v7536 = vpop.f32.mrf.mxu0
  %7537 = vdwg.mxu0
  %7538 = vmatpush.bf16.msra.mxu0 0
  %7539 = vmatpush.bf16.msra.mxu0 0
  %7540 = vmatpush.bf16.msra.mxu0 0
  %7541 = vmatpush.bf16.msra.mxu0 0
  %7542 = vmatpush.bf16.msra.mxu0 %v7513
  %7543 = vmatpush.bf16.msra.mxu0 %v7511
  %7544 = vmatpush.bf16.msra.mxu0 %v7509
  %7545 = vmatpush.bf16.msra.mxu0 %v7507
  %7546 = vmatmul.bf16.gmra.mxu0 %v7523
  %v7547 = vpop.f32.mrf.mxu0
  %v7548 = vadd.f32 0.0, %v7547
  %v7549 = vpop.f32.mrf.mxu0
  %7550 = vdwg.mxu0
  %v7559 = vunpack.c.l.b16 %v7460
  %v7560 = vunpack.c.h.b16 %v7460
  %v7561 = vunpack.c.l.b16 %v7461
  %v7562 = vunpack.c.h.b16 %v7461
  %v7563 = vunpack.c.l.b16 %v7462
  %v7564 = vunpack.c.h.b16 %v7462
  %v7565 = vunpack.c.l.b16 %v7463
  %v7566 = vunpack.c.h.b16 %v7463
  %v7567 = vunpack.c.l.b16 %v7464
  %v7568 = vunpack.c.h.b16 %v7464
  %v7569 = vunpack.c.l.b16 %v7465
  %v7570 = vunpack.c.h.b16 %v7465
  %v7571 = vunpack.c.l.b16 %v7466
  %v7572 = vunpack.c.h.b16 %v7466
  %v7573 = vunpack.c.l.b16 %v7467
  %v7574 = vunpack.c.h.b16 %v7467
  %v7575 = vpack.c.b16 %v7561, %v7559
  %v7576 = vpack.c.b16 %v7562, %v7560
  %v7577 = vpack.c.b16 %v7565, %v7563
  %v7578 = vpack.c.b16 %v7566, %v7564
  %v7579 = vpack.c.b16 %v7569, %v7567
  %v7580 = vpack.c.b16 %v7570, %v7568
  %v7581 = vpack.c.b16 %v7573, %v7571
  %v7582 = vpack.c.b16 %v7574, %v7572
  %v7592 = vsel %vm68, %v7459, 0
  %7594 = vmatpush.bf16.msra.mxu0 0
  %7595 = vmatpush.bf16.msra.mxu0 0
  %7596 = vmatpush.bf16.msra.mxu0 0
  %7597 = vmatpush.bf16.msra.mxu0 0
  %7598 = vmatpush.bf16.msra.mxu0 %v7581
  %7599 = vmatpush.bf16.msra.mxu0 %v7579
  %7600 = vmatpush.bf16.msra.mxu0 %v7577
  %7601 = vmatpush.bf16.msra.mxu0 %v7575
  %7602 = vmatmul.bf16.gmra.mxu0 %v7592
  %v7603 = vpop.f32.mrf.mxu0
  %v7604 = vadd.f32 %v7535, %v7603
  %v7605 = vpop.f32.mrf.mxu0
  %7606 = vdwg.mxu0
  %7607 = vmatpush.bf16.msra.mxu0 0
  %7608 = vmatpush.bf16.msra.mxu0 0
  %7609 = vmatpush.bf16.msra.mxu0 0
  %7610 = vmatpush.bf16.msra.mxu0 0
  %7611 = vmatpush.bf16.msra.mxu0 %v7582
  %7612 = vmatpush.bf16.msra.mxu0 %v7580
  %7613 = vmatpush.bf16.msra.mxu0 %v7578
  %7614 = vmatpush.bf16.msra.mxu0 %v7576
  %7615 = vmatmul.bf16.gmra.mxu0 %v7592
  %v7616 = vpop.f32.mrf.mxu0
  %v7617 = vadd.f32 %v7548, %v7616
  %v7618 = vpop.f32.mrf.mxu0
  %7619 = vdwg.mxu0
  %s7620 = scalar_lea.vmem [#allocation8], 2
  %v7621 = vld [vmem:[%s7620] ss:$64 sm:$0x1]
  %v7622 = vld [vmem:[%s7620] ss:$64 sm:$0x2]
  %v7623 = vor.u32 %v7621, %v7622
  %v7624 = vpack.c.bf16 %v7623, %v7623
  %s7625 = scalar_lea.vmem %s11, 128
  %v7626 = vld [vmem:[%s7625] sm:$0xff]
  %v7627 = vld [vmem:[%s7625 + $0x8] sm:$0xff]
  %v7628 = vld [vmem:[%s7625 + $0x10] sm:$0xff]
  %v7629 = vld [vmem:[%s7625 + $0x18] sm:$0xff]
  %v7630 = vld [vmem:[%s7625 + $0x20] sm:$0xff]
  %v7631 = vld [vmem:[%s7625 + $0x28] sm:$0xff]
  %v7632 = vld [vmem:[%s7625 + $0x30] sm:$0xff]
  %v7633 = vld [vmem:[%s7625 + $0x38] sm:$0xff]
  %v7642 = vunpack.c.l.b16 %v7626
  %v7643 = vunpack.c.h.b16 %v7626
  %v7644 = vunpack.c.l.b16 %v7627
  %v7645 = vunpack.c.h.b16 %v7627
  %v7646 = vunpack.c.l.b16 %v7628
  %v7647 = vunpack.c.h.b16 %v7628
  %v7648 = vunpack.c.l.b16 %v7629
  %v7649 = vunpack.c.h.b16 %v7629
  %v7650 = vunpack.c.l.b16 %v7630
  %v7651 = vunpack.c.h.b16 %v7630
  %v7652 = vunpack.c.l.b16 %v7631
  %v7653 = vunpack.c.h.b16 %v7631
  %v7654 = vunpack.c.l.b16 %v7632
  %v7655 = vunpack.c.h.b16 %v7632
  %v7656 = vunpack.c.l.b16 %v7633
  %v7657 = vunpack.c.h.b16 %v7633
  %v7658 = vpack.c.b16 %v7644, %v7642
  %v7659 = vpack.c.b16 %v7645, %v7643
  %v7660 = vpack.c.b16 %v7648, %v7646
  %v7661 = vpack.c.b16 %v7649, %v7647
  %v7662 = vpack.c.b16 %v7652, %v7650
  %v7663 = vpack.c.b16 %v7653, %v7651
  %v7664 = vpack.c.b16 %v7656, %v7654
  %v7665 = vpack.c.b16 %v7657, %v7655
  %v7675 = vsel %vm68, %v7624, 0
  %7677 = vmatpush.bf16.msra.mxu0 0
  %7678 = vmatpush.bf16.msra.mxu0 0
  %7679 = vmatpush.bf16.msra.mxu0 0
  %7680 = vmatpush.bf16.msra.mxu0 0
  %7681 = vmatpush.bf16.msra.mxu0 %v7664
  %7682 = vmatpush.bf16.msra.mxu0 %v7662
  %7683 = vmatpush.bf16.msra.mxu0 %v7660
  %7684 = vmatpush.bf16.msra.mxu0 %v7658
  %7685 = vmatmul.bf16.gmra.mxu0 %v7675
  %v7686 = vpop.f32.mrf.mxu0
  %v7687 = vadd.f32 0.0, %v7686
  %v7688 = vpop.f32.mrf.mxu0
  %7689 = vdwg.mxu0
  %7690 = vmatpush.bf16.msra.mxu0 0
  %7691 = vmatpush.bf16.msra.mxu0 0
  %7692 = vmatpush.bf16.msra.mxu0 0
  %7693 = vmatpush.bf16.msra.mxu0 0
  %7694 = vmatpush.bf16.msra.mxu0 %v7665
  %7695 = vmatpush.bf16.msra.mxu0 %v7663
  %7696 = vmatpush.bf16.msra.mxu0 %v7661
  %7697 = vmatpush.bf16.msra.mxu0 %v7659
  %7698 = vmatmul.bf16.gmra.mxu0 %v7675
  %v7699 = vpop.f32.mrf.mxu0
  %v7700 = vadd.f32 0.0, %v7699
  %v7701 = vpop.f32.mrf.mxu0
  %7702 = vdwg.mxu0
  %v7703 = vadd.f32 %v7604, %v7687
  %v7704 = vadd.f32 %v7617, %v7700
  %s7705 = scalar_lea.vmem [#allocation8], 3
  %v7706 = vld [vmem:[%s7705] ss:$64 sm:$0x1]
  %v7707 = vld [vmem:[%s7705] ss:$64 sm:$0x2]
  %v7708 = vor.u32 %v7706, %v7707
  %v7709 = vpack.c.bf16 %v7708, %v7708
  %s7710 = scalar_lea.vmem %s11, 192
  %v7711 = vld [vmem:[%s7710] sm:$0xff]
  %v7712 = vld [vmem:[%s7710 + $0x8] sm:$0xff]
  %v7713 = vld [vmem:[%s7710 + $0x10] sm:$0xff]
  %v7714 = vld [vmem:[%s7710 + $0x18] sm:$0xff]
  %v7715 = vld [vmem:[%s7710 + $0x20] sm:$0xff]
  %v7716 = vld [vmem:[%s7710 + $0x28] sm:$0xff]
  %v7717 = vld [vmem:[%s7710 + $0x30] sm:$0xff]
  %v7718 = vld [vmem:[%s7710 + $0x38] sm:$0xff]
  %v7727 = vunpack.c.l.b16 %v7711
  %v7728 = vunpack.c.h.b16 %v7711
  %v7729 = vunpack.c.l.b16 %v7712
  %v7730 = vunpack.c.h.b16 %v7712
  %v7731 = vunpack.c.l.b16 %v7713
  %v7732 = vunpack.c.h.b16 %v7713
  %v7733 = vunpack.c.l.b16 %v7714
  %v7734 = vunpack.c.h.b16 %v7714
  %v7735 = vunpack.c.l.b16 %v7715
  %v7736 = vunpack.c.h.b16 %v7715
  %v7737 = vunpack.c.l.b16 %v7716
  %v7738 = vunpack.c.h.b16 %v7716
  %v7739 = vunpack.c.l.b16 %v7717
  %v7740 = vunpack.c.h.b16 %v7717
  %v7741 = vunpack.c.l.b16 %v7718
  %v7742 = vunpack.c.h.b16 %v7718
  %v7743 = vpack.c.b16 %v7729, %v7727
  %v7744 = vpack.c.b16 %v7730, %v7728
  %v7745 = vpack.c.b16 %v7733, %v7731
  %v7746 = vpack.c.b16 %v7734, %v7732
  %v7747 = vpack.c.b16 %v7737, %v7735
  %v7748 = vpack.c.b16 %v7738, %v7736
  %v7749 = vpack.c.b16 %v7741, %v7739
  %v7750 = vpack.c.b16 %v7742, %v7740
  %v7760 = vsel %vm68, %v7709, 0
  %7762 = vmatpush.bf16.msra.mxu0 0
  %7763 = vmatpush.bf16.msra.mxu0 0
  %7764 = vmatpush.bf16.msra.mxu0 0
  %7765 = vmatpush.bf16.msra.mxu0 0
  %7766 = vmatpush.bf16.msra.mxu0 %v7749
  %7767 = vmatpush.bf16.msra.mxu0 %v7747
  %7768 = vmatpush.bf16.msra.mxu0 %v7745
  %7769 = vmatpush.bf16.msra.mxu0 %v7743
  %7770 = vmatmul.bf16.gmra.mxu0 %v7760
  %v7771 = vpop.f32.mrf.mxu0
  %v7772 = vadd.f32 0.0, %v7771
  %v7773 = vpop.f32.mrf.mxu0
  %7774 = vdwg.mxu0
  %7775 = vmatpush.bf16.msra.mxu0 0
  %7776 = vmatpush.bf16.msra.mxu0 0
  %7777 = vmatpush.bf16.msra.mxu0 0
  %7778 = vmatpush.bf16.msra.mxu0 0
  %7779 = vmatpush.bf16.msra.mxu0 %v7750
  %7780 = vmatpush.bf16.msra.mxu0 %v7748
  %7781 = vmatpush.bf16.msra.mxu0 %v7746
  %7782 = vmatpush.bf16.msra.mxu0 %v7744
  %7783 = vmatmul.bf16.gmra.mxu0 %v7760
  %v7784 = vpop.f32.mrf.mxu0
  %v7785 = vadd.f32 0.0, %v7784
  %v7786 = vpop.f32.mrf.mxu0
  %7787 = vdwg.mxu0
  %v7788 = vadd.f32 %v7703, %v7772
  %v7789 = vadd.f32 %v7704, %v7785
  %s7790 = scalar_lea.vmem [#allocation8], 8
  %v7791 = vld [vmem:[%s7790] ss:$64 sm:$0x1]
  %v7792 = vld [vmem:[%s7790] ss:$64 sm:$0x2]
  %v7793 = vor.u32 %v7791, %v7792
  %v7794 = vpack.c.bf16 %v7793, %v7793
  %s7795 = scalar_lea.vmem %s11, 256
  %v7796 = vld [vmem:[%s7795] sm:$0xff]
  %v7797 = vld [vmem:[%s7795 + $0x8] sm:$0xff]
  %v7798 = vld [vmem:[%s7795 + $0x10] sm:$0xff]
  %v7799 = vld [vmem:[%s7795 + $0x18] sm:$0xff]
  %v7800 = vld [vmem:[%s7795 + $0x20] sm:$0xff]
  %v7801 = vld [vmem:[%s7795 + $0x28] sm:$0xff]
  %v7802 = vld [vmem:[%s7795 + $0x30] sm:$0xff]
  %v7803 = vld [vmem:[%s7795 + $0x38] sm:$0xff]
  %v7812 = vunpack.c.l.b16 %v7796
  %v7813 = vunpack.c.h.b16 %v7796
  %v7814 = vunpack.c.l.b16 %v7797
  %v7815 = vunpack.c.h.b16 %v7797
  %v7816 = vunpack.c.l.b16 %v7798
  %v7817 = vunpack.c.h.b16 %v7798
  %v7818 = vunpack.c.l.b16 %v7799
  %v7819 = vunpack.c.h.b16 %v7799
  %v7820 = vunpack.c.l.b16 %v7800
  %v7821 = vunpack.c.h.b16 %v7800
  %v7822 = vunpack.c.l.b16 %v7801
  %v7823 = vunpack.c.h.b16 %v7801
  %v7824 = vunpack.c.l.b16 %v7802
  %v7825 = vunpack.c.h.b16 %v7802
  %v7826 = vunpack.c.l.b16 %v7803
  %v7827 = vunpack.c.h.b16 %v7803
  %v7828 = vpack.c.b16 %v7814, %v7812
  %v7829 = vpack.c.b16 %v7815, %v7813
  %v7830 = vpack.c.b16 %v7818, %v7816
  %v7831 = vpack.c.b16 %v7819, %v7817
  %v7832 = vpack.c.b16 %v7822, %v7820
  %v7833 = vpack.c.b16 %v7823, %v7821
  %v7834 = vpack.c.b16 %v7826, %v7824
  %v7835 = vpack.c.b16 %v7827, %v7825
  %v7845 = vsel %vm68, %v7794, 0
  %7847 = vmatpush.bf16.msra.mxu0 0
  %7848 = vmatpush.bf16.msra.mxu0 0
  %7849 = vmatpush.bf16.msra.mxu0 0
  %7850 = vmatpush.bf16.msra.mxu0 0
  %7851 = vmatpush.bf16.msra.mxu0 %v7834
  %7852 = vmatpush.bf16.msra.mxu0 %v7832
  %7853 = vmatpush.bf16.msra.mxu0 %v7830
  %7854 = vmatpush.bf16.msra.mxu0 %v7828
  %7855 = vmatmul.bf16.gmra.mxu0 %v7845
  %v7856 = vpop.f32.mrf.mxu0
  %v7857 = vadd.f32 0.0, %v7856
  %v7858 = vpop.f32.mrf.mxu0
  %7859 = vdwg.mxu0
  %7860 = vmatpush.bf16.msra.mxu0 0
  %7861 = vmatpush.bf16.msra.mxu0 0
  %7862 = vmatpush.bf16.msra.mxu0 0
  %7863 = vmatpush.bf16.msra.mxu0 0
  %7864 = vmatpush.bf16.msra.mxu0 %v7835
  %7865 = vmatpush.bf16.msra.mxu0 %v7833
  %7866 = vmatpush.bf16.msra.mxu0 %v7831
  %7867 = vmatpush.bf16.msra.mxu0 %v7829
  %7868 = vmatmul.bf16.gmra.mxu0 %v7845
  %v7869 = vpop.f32.mrf.mxu0
  %v7870 = vadd.f32 0.0, %v7869
  %v7871 = vpop.f32.mrf.mxu0
  %7872 = vdwg.mxu0
  %v7873 = vadd.f32 %v7788, %v7857
  %v7874 = vadd.f32 %v7789, %v7870
  %s7875 = scalar_lea.vmem [#allocation8], 9
  %v7876 = vld [vmem:[%s7875] ss:$64 sm:$0x1]
  %v7877 = vld [vmem:[%s7875] ss:$64 sm:$0x2]
  %v7878 = vor.u32 %v7876, %v7877
  %v7879 = vpack.c.bf16 %v7878, %v7878
  %s7880 = scalar_lea.vmem %s11, 320
  %v7881 = vld [vmem:[%s7880] sm:$0xff]
  %v7882 = vld [vmem:[%s7880 + $0x8] sm:$0xff]
  %v7883 = vld [vmem:[%s7880 + $0x10] sm:$0xff]
  %v7884 = vld [vmem:[%s7880 + $0x18] sm:$0xff]
  %v7885 = vld [vmem:[%s7880 + $0x20] sm:$0xff]
  %v7886 = vld [vmem:[%s7880 + $0x28] sm:$0xff]
  %v7887 = vld [vmem:[%s7880 + $0x30] sm:$0xff]
  %v7888 = vld [vmem:[%s7880 + $0x38] sm:$0xff]
  %v7897 = vunpack.c.l.b16 %v7881
  %v7898 = vunpack.c.h.b16 %v7881
  %v7899 = vunpack.c.l.b16 %v7882
  %v7900 = vunpack.c.h.b16 %v7882
  %v7901 = vunpack.c.l.b16 %v7883
  %v7902 = vunpack.c.h.b16 %v7883
  %v7903 = vunpack.c.l.b16 %v7884
  %v7904 = vunpack.c.h.b16 %v7884
  %v7905 = vunpack.c.l.b16 %v7885
  %v7906 = vunpack.c.h.b16 %v7885
  %v7907 = vunpack.c.l.b16 %v7886
  %v7908 = vunpack.c.h.b16 %v7886
  %v7909 = vunpack.c.l.b16 %v7887
  %v7910 = vunpack.c.h.b16 %v7887
  %v7911 = vunpack.c.l.b16 %v7888
  %v7912 = vunpack.c.h.b16 %v7888
  %v7913 = vpack.c.b16 %v7899, %v7897
  %v7914 = vpack.c.b16 %v7900, %v7898
  %v7915 = vpack.c.b16 %v7903, %v7901
  %v7916 = vpack.c.b16 %v7904, %v7902
  %v7917 = vpack.c.b16 %v7907, %v7905
  %v7918 = vpack.c.b16 %v7908, %v7906
  %v7919 = vpack.c.b16 %v7911, %v7909
  %v7920 = vpack.c.b16 %v7912, %v7910
  %v7930 = vsel %vm68, %v7879, 0
  %7932 = vmatpush.bf16.msra.mxu0 0
  %7933 = vmatpush.bf16.msra.mxu0 0
  %7934 = vmatpush.bf16.msra.mxu0 0
  %7935 = vmatpush.bf16.msra.mxu0 0
  %7936 = vmatpush.bf16.msra.mxu0 %v7919
  %7937 = vmatpush.bf16.msra.mxu0 %v7917
  %7938 = vmatpush.bf16.msra.mxu0 %v7915
  %7939 = vmatpush.bf16.msra.mxu0 %v7913
  %7940 = vmatmul.bf16.gmra.mxu0 %v7930
  %v7941 = vpop.f32.mrf.mxu0
  %v7942 = vadd.f32 0.0, %v7941
  %v7943 = vpop.f32.mrf.mxu0
  %7944 = vdwg.mxu0
  %7945 = vmatpush.bf16.msra.mxu0 0
  %7946 = vmatpush.bf16.msra.mxu0 0
  %7947 = vmatpush.bf16.msra.mxu0 0
  %7948 = vmatpush.bf16.msra.mxu0 0
  %7949 = vmatpush.bf16.msra.mxu0 %v7920
  %7950 = vmatpush.bf16.msra.mxu0 %v7918
  %7951 = vmatpush.bf16.msra.mxu0 %v7916
  %7952 = vmatpush.bf16.msra.mxu0 %v7914
  %7953 = vmatmul.bf16.gmra.mxu0 %v7930
  %v7954 = vpop.f32.mrf.mxu0
  %v7955 = vadd.f32 0.0, %v7954
  %v7956 = vpop.f32.mrf.mxu0
  %7957 = vdwg.mxu0
  %v7958 = vadd.f32 %v7873, %v7942
  %v7959 = vadd.f32 %v7874, %v7955
  %s7960 = scalar_lea.vmem [#allocation8], 10
  %v7961 = vld [vmem:[%s7960] ss:$64 sm:$0x1]
  %v7962 = vld [vmem:[%s7960] ss:$64 sm:$0x2]
  %v7963 = vor.u32 %v7961, %v7962
  %v7964 = vpack.c.bf16 %v7963, %v7963
  %s7965 = scalar_lea.vmem %s11, 384
  %v7966 = vld [vmem:[%s7965] sm:$0xff]
  %v7967 = vld [vmem:[%s7965 + $0x8] sm:$0xff]
  %v7968 = vld [vmem:[%s7965 + $0x10] sm:$0xff]
  %v7969 = vld [vmem:[%s7965 + $0x18] sm:$0xff]
  %v7970 = vld [vmem:[%s7965 + $0x20] sm:$0xff]
  %v7971 = vld [vmem:[%s7965 + $0x28] sm:$0xff]
  %v7972 = vld [vmem:[%s7965 + $0x30] sm:$0xff]
  %v7973 = vld [vmem:[%s7965 + $0x38] sm:$0xff]
  %v7982 = vunpack.c.l.b16 %v7966
  %v7983 = vunpack.c.h.b16 %v7966
  %v7984 = vunpack.c.l.b16 %v7967
  %v7985 = vunpack.c.h.b16 %v7967
  %v7986 = vunpack.c.l.b16 %v7968
  %v7987 = vunpack.c.h.b16 %v7968
  %v7988 = vunpack.c.l.b16 %v7969
  %v7989 = vunpack.c.h.b16 %v7969
  %v7990 = vunpack.c.l.b16 %v7970
  %v7991 = vunpack.c.h.b16 %v7970
  %v7992 = vunpack.c.l.b16 %v7971
  %v7993 = vunpack.c.h.b16 %v7971
  %v7994 = vunpack.c.l.b16 %v7972
  %v7995 = vunpack.c.h.b16 %v7972
  %v7996 = vunpack.c.l.b16 %v7973
  %v7997 = vunpack.c.h.b16 %v7973
  %v7998 = vpack.c.b16 %v7984, %v7982
  %v7999 = vpack.c.b16 %v7985, %v7983
  %v8000 = vpack.c.b16 %v7988, %v7986
  %v8001 = vpack.c.b16 %v7989, %v7987
  %v8002 = vpack.c.b16 %v7992, %v7990
  %v8003 = vpack.c.b16 %v7993, %v7991
  %v8004 = vpack.c.b16 %v7996, %v7994
  %v8005 = vpack.c.b16 %v7997, %v7995
  %v8015 = vsel %vm68, %v7964, 0
  %8017 = vmatpush.bf16.msra.mxu0 0
  %8018 = vmatpush.bf16.msra.mxu0 0
  %8019 = vmatpush.bf16.msra.mxu0 0
  %8020 = vmatpush.bf16.msra.mxu0 0
  %8021 = vmatpush.bf16.msra.mxu0 %v8004
  %8022 = vmatpush.bf16.msra.mxu0 %v8002
  %8023 = vmatpush.bf16.msra.mxu0 %v8000
  %8024 = vmatpush.bf16.msra.mxu0 %v7998
  %8025 = vmatmul.bf16.gmra.mxu0 %v8015
  %v8026 = vpop.f32.mrf.mxu0
  %v8027 = vadd.f32 0.0, %v8026
  %v8028 = vpop.f32.mrf.mxu0
  %8029 = vdwg.mxu0
  %8030 = vmatpush.bf16.msra.mxu0 0
  %8031 = vmatpush.bf16.msra.mxu0 0
  %8032 = vmatpush.bf16.msra.mxu0 0
  %8033 = vmatpush.bf16.msra.mxu0 0
  %8034 = vmatpush.bf16.msra.mxu0 %v8005
  %8035 = vmatpush.bf16.msra.mxu0 %v8003
  %8036 = vmatpush.bf16.msra.mxu0 %v8001
  %8037 = vmatpush.bf16.msra.mxu0 %v7999
  %8038 = vmatmul.bf16.gmra.mxu0 %v8015
  %v8039 = vpop.f32.mrf.mxu0
  %v8040 = vadd.f32 0.0, %v8039
  %v8041 = vpop.f32.mrf.mxu0
  %8042 = vdwg.mxu0
  %v8043 = vadd.f32 %v7958, %v8027
  %v8044 = vadd.f32 %v7959, %v8040
  %s8045 = scalar_lea.vmem [#allocation8], 11
  %v8046 = vld [vmem:[%s8045] ss:$64 sm:$0x1]
  %v8047 = vld [vmem:[%s8045] ss:$64 sm:$0x2]
  %v8048 = vor.u32 %v8046, %v8047
  %v8049 = vpack.c.bf16 %v8048, %v8048
  %s8050 = scalar_lea.vmem %s11, 448
  %v8051 = vld [vmem:[%s8050] sm:$0xff]
  %v8052 = vld [vmem:[%s8050 + $0x8] sm:$0xff]
  %v8053 = vld [vmem:[%s8050 + $0x10] sm:$0xff]
  %v8054 = vld [vmem:[%s8050 + $0x18] sm:$0xff]
  %v8055 = vld [vmem:[%s8050 + $0x20] sm:$0xff]
  %v8056 = vld [vmem:[%s8050 + $0x28] sm:$0xff]
  %v8057 = vld [vmem:[%s8050 + $0x30] sm:$0xff]
  %v8058 = vld [vmem:[%s8050 + $0x38] sm:$0xff]
  %v8067 = vunpack.c.l.b16 %v8051
  %v8068 = vunpack.c.h.b16 %v8051
  %v8069 = vunpack.c.l.b16 %v8052
  %v8070 = vunpack.c.h.b16 %v8052
  %v8071 = vunpack.c.l.b16 %v8053
  %v8072 = vunpack.c.h.b16 %v8053
  %v8073 = vunpack.c.l.b16 %v8054
  %v8074 = vunpack.c.h.b16 %v8054
  %v8075 = vunpack.c.l.b16 %v8055
  %v8076 = vunpack.c.h.b16 %v8055
  %v8077 = vunpack.c.l.b16 %v8056
  %v8078 = vunpack.c.h.b16 %v8056
  %v8079 = vunpack.c.l.b16 %v8057
  %v8080 = vunpack.c.h.b16 %v8057
  %v8081 = vunpack.c.l.b16 %v8058
  %v8082 = vunpack.c.h.b16 %v8058
  %v8083 = vpack.c.b16 %v8069, %v8067
  %v8084 = vpack.c.b16 %v8070, %v8068
  %v8085 = vpack.c.b16 %v8073, %v8071
  %v8086 = vpack.c.b16 %v8074, %v8072
  %v8087 = vpack.c.b16 %v8077, %v8075
  %v8088 = vpack.c.b16 %v8078, %v8076
  %v8089 = vpack.c.b16 %v8081, %v8079
  %v8090 = vpack.c.b16 %v8082, %v8080
  %v8100 = vsel %vm68, %v8049, 0
  %8102 = vmatpush.bf16.msra.mxu0 0
  %8103 = vmatpush.bf16.msra.mxu0 0
  %8104 = vmatpush.bf16.msra.mxu0 0
  %8105 = vmatpush.bf16.msra.mxu0 0
  %8106 = vmatpush.bf16.msra.mxu0 %v8089
  %8107 = vmatpush.bf16.msra.mxu0 %v8087
  %8108 = vmatpush.bf16.msra.mxu0 %v8085
  %8109 = vmatpush.bf16.msra.mxu0 %v8083
  %8110 = vmatmul.bf16.gmra.mxu0 %v8100
  %v8111 = vpop.f32.mrf.mxu0
  %v8112 = vadd.f32 0.0, %v8111
  %v8113 = vpop.f32.mrf.mxu0
  %8114 = vdwg.mxu0
  %8115 = vmatpush.bf16.msra.mxu0 0
  %8116 = vmatpush.bf16.msra.mxu0 0
  %8117 = vmatpush.bf16.msra.mxu0 0
  %8118 = vmatpush.bf16.msra.mxu0 0
  %8119 = vmatpush.bf16.msra.mxu0 %v8090
  %8120 = vmatpush.bf16.msra.mxu0 %v8088
  %8121 = vmatpush.bf16.msra.mxu0 %v8086
  %8122 = vmatpush.bf16.msra.mxu0 %v8084
  %8123 = vmatmul.bf16.gmra.mxu0 %v8100
  %v8124 = vpop.f32.mrf.mxu0
  %v8125 = vadd.f32 0.0, %v8124
  %v8126 = vpop.f32.mrf.mxu0
  %8127 = vdwg.mxu0
  %v8128 = vadd.f32 %v8043, %v8112
  %v8129 = vadd.f32 %v8044, %v8125
  %s8130 = scalar_lea.vmem [#allocation8], 16
  %v8131 = vld [vmem:[%s8130] ss:$64 sm:$0x1]
  %v8132 = vld [vmem:[%s8130] ss:$64 sm:$0x2]
  %v8133 = vor.u32 %v8131, %v8132
  %v8134 = vpack.c.bf16 %v8133, %v8133
  %s8135 = scalar_lea.vmem %s11, 512
  %v8136 = vld [vmem:[%s8135] sm:$0xff]
  %v8137 = vld [vmem:[%s8135 + $0x8] sm:$0xff]
  %v8138 = vld [vmem:[%s8135 + $0x10] sm:$0xff]
  %v8139 = vld [vmem:[%s8135 + $0x18] sm:$0xff]
  %v8140 = vld [vmem:[%s8135 + $0x20] sm:$0xff]
  %v8141 = vld [vmem:[%s8135 + $0x28] sm:$0xff]
  %v8142 = vld [vmem:[%s8135 + $0x30] sm:$0xff]
  %v8143 = vld [vmem:[%s8135 + $0x38] sm:$0xff]
  %v8152 = vunpack.c.l.b16 %v8136
  %v8153 = vunpack.c.h.b16 %v8136
  %v8154 = vunpack.c.l.b16 %v8137
  %v8155 = vunpack.c.h.b16 %v8137
  %v8156 = vunpack.c.l.b16 %v8138
  %v8157 = vunpack.c.h.b16 %v8138
  %v8158 = vunpack.c.l.b16 %v8139
  %v8159 = vunpack.c.h.b16 %v8139
  %v8160 = vunpack.c.l.b16 %v8140
  %v8161 = vunpack.c.h.b16 %v8140
  %v8162 = vunpack.c.l.b16 %v8141
  %v8163 = vunpack.c.h.b16 %v8141
  %v8164 = vunpack.c.l.b16 %v8142
  %v8165 = vunpack.c.h.b16 %v8142
  %v8166 = vunpack.c.l.b16 %v8143
  %v8167 = vunpack.c.h.b16 %v8143
  %v8168 = vpack.c.b16 %v8154, %v8152
  %v8169 = vpack.c.b16 %v8155, %v8153
  %v8170 = vpack.c.b16 %v8158, %v8156
  %v8171 = vpack.c.b16 %v8159, %v8157
  %v8172 = vpack.c.b16 %v8162, %v8160
  %v8173 = vpack.c.b16 %v8163, %v8161
  %v8174 = vpack.c.b16 %v8166, %v8164
  %v8175 = vpack.c.b16 %v8167, %v8165
  %v8185 = vsel %vm68, %v8134, 0
  %8187 = vmatpush.bf16.msra.mxu0 0
  %8188 = vmatpush.bf16.msra.mxu0 0
  %8189 = vmatpush.bf16.msra.mxu0 0
  %8190 = vmatpush.bf16.msra.mxu0 0
  %8191 = vmatpush.bf16.msra.mxu0 %v8174
  %8192 = vmatpush.bf16.msra.mxu0 %v8172
  %8193 = vmatpush.bf16.msra.mxu0 %v8170
  %8194 = vmatpush.bf16.msra.mxu0 %v8168
  %8195 = vmatmul.bf16.gmra.mxu0 %v8185
  %v8196 = vpop.f32.mrf.mxu0
  %v8197 = vadd.f32 0.0, %v8196
  %v8198 = vpop.f32.mrf.mxu0
  %8199 = vdwg.mxu0
  %8200 = vmatpush.bf16.msra.mxu0 0
  %8201 = vmatpush.bf16.msra.mxu0 0
  %8202 = vmatpush.bf16.msra.mxu0 0
  %8203 = vmatpush.bf16.msra.mxu0 0
  %8204 = vmatpush.bf16.msra.mxu0 %v8175
  %8205 = vmatpush.bf16.msra.mxu0 %v8173
  %8206 = vmatpush.bf16.msra.mxu0 %v8171
  %8207 = vmatpush.bf16.msra.mxu0 %v8169
  %8208 = vmatmul.bf16.gmra.mxu0 %v8185
  %v8209 = vpop.f32.mrf.mxu0
  %v8210 = vadd.f32 0.0, %v8209
  %v8211 = vpop.f32.mrf.mxu0
  %8212 = vdwg.mxu0
  %v8213 = vadd.f32 %v8128, %v8197
  %v8214 = vadd.f32 %v8129, %v8210
  %s8215 = scalar_lea.vmem [#allocation8], 17
  %v8216 = vld [vmem:[%s8215] ss:$64 sm:$0x1]
  %v8217 = vld [vmem:[%s8215] ss:$64 sm:$0x2]
  %v8218 = vor.u32 %v8216, %v8217
  %v8219 = vpack.c.bf16 %v8218, %v8218
  %s8220 = scalar_lea.vmem %s11, 576
  %v8221 = vld [vmem:[%s8220] sm:$0xff]
  %v8222 = vld [vmem:[%s8220 + $0x8] sm:$0xff]
  %v8223 = vld [vmem:[%s8220 + $0x10] sm:$0xff]
  %v8224 = vld [vmem:[%s8220 + $0x18] sm:$0xff]
  %v8225 = vld [vmem:[%s8220 + $0x20] sm:$0xff]
  %v8226 = vld [vmem:[%s8220 + $0x28] sm:$0xff]
  %v8227 = vld [vmem:[%s8220 + $0x30] sm:$0xff]
  %v8228 = vld [vmem:[%s8220 + $0x38] sm:$0xff]
  %v8237 = vunpack.c.l.b16 %v8221
  %v8238 = vunpack.c.h.b16 %v8221
  %v8239 = vunpack.c.l.b16 %v8222
  %v8240 = vunpack.c.h.b16 %v8222
  %v8241 = vunpack.c.l.b16 %v8223
  %v8242 = vunpack.c.h.b16 %v8223
  %v8243 = vunpack.c.l.b16 %v8224
  %v8244 = vunpack.c.h.b16 %v8224
  %v8245 = vunpack.c.l.b16 %v8225
  %v8246 = vunpack.c.h.b16 %v8225
  %v8247 = vunpack.c.l.b16 %v8226
  %v8248 = vunpack.c.h.b16 %v8226
  %v8249 = vunpack.c.l.b16 %v8227
  %v8250 = vunpack.c.h.b16 %v8227
  %v8251 = vunpack.c.l.b16 %v8228
  %v8252 = vunpack.c.h.b16 %v8228
  %v8253 = vpack.c.b16 %v8239, %v8237
  %v8254 = vpack.c.b16 %v8240, %v8238
  %v8255 = vpack.c.b16 %v8243, %v8241
  %v8256 = vpack.c.b16 %v8244, %v8242
  %v8257 = vpack.c.b16 %v8247, %v8245
  %v8258 = vpack.c.b16 %v8248, %v8246
  %v8259 = vpack.c.b16 %v8251, %v8249
  %v8260 = vpack.c.b16 %v8252, %v8250
  %v8270 = vsel %vm68, %v8219, 0
  %8272 = vmatpush.bf16.msra.mxu0 0
  %8273 = vmatpush.bf16.msra.mxu0 0
  %8274 = vmatpush.bf16.msra.mxu0 0
  %8275 = vmatpush.bf16.msra.mxu0 0
  %8276 = vmatpush.bf16.msra.mxu0 %v8259
  %8277 = vmatpush.bf16.msra.mxu0 %v8257
  %8278 = vmatpush.bf16.msra.mxu0 %v8255
  %8279 = vmatpush.bf16.msra.mxu0 %v8253
  %8280 = vmatmul.bf16.gmra.mxu0 %v8270
  %v8281 = vpop.f32.mrf.mxu0
  %v8282 = vadd.f32 0.0, %v8281
  %v8283 = vpop.f32.mrf.mxu0
  %8284 = vdwg.mxu0
  %8285 = vmatpush.bf16.msra.mxu0 0
  %8286 = vmatpush.bf16.msra.mxu0 0
  %8287 = vmatpush.bf16.msra.mxu0 0
  %8288 = vmatpush.bf16.msra.mxu0 0
  %8289 = vmatpush.bf16.msra.mxu0 %v8260
  %8290 = vmatpush.bf16.msra.mxu0 %v8258
  %8291 = vmatpush.bf16.msra.mxu0 %v8256
  %8292 = vmatpush.bf16.msra.mxu0 %v8254
  %8293 = vmatmul.bf16.gmra.mxu0 %v8270
  %v8294 = vpop.f32.mrf.mxu0
  %v8295 = vadd.f32 0.0, %v8294
  %v8296 = vpop.f32.mrf.mxu0
  %8297 = vdwg.mxu0
  %v8298 = vadd.f32 %v8213, %v8282
  %v8299 = vadd.f32 %v8214, %v8295
  %s8300 = scalar_lea.vmem [#allocation8], 18
  %v8301 = vld [vmem:[%s8300] ss:$64 sm:$0x1]
  %v8302 = vld [vmem:[%s8300] ss:$64 sm:$0x2]
  %v8303 = vor.u32 %v8301, %v8302
  %v8304 = vpack.c.bf16 %v8303, %v8303
  %s8305 = scalar_lea.vmem %s11, 640
  %v8306 = vld [vmem:[%s8305] sm:$0xff]
  %v8307 = vld [vmem:[%s8305 + $0x8] sm:$0xff]
  %v8308 = vld [vmem:[%s8305 + $0x10] sm:$0xff]
  %v8309 = vld [vmem:[%s8305 + $0x18] sm:$0xff]
  %v8310 = vld [vmem:[%s8305 + $0x20] sm:$0xff]
  %v8311 = vld [vmem:[%s8305 + $0x28] sm:$0xff]
  %v8312 = vld [vmem:[%s8305 + $0x30] sm:$0xff]
  %v8313 = vld [vmem:[%s8305 + $0x38] sm:$0xff]
  %v8322 = vunpack.c.l.b16 %v8306
  %v8323 = vunpack.c.h.b16 %v8306
  %v8324 = vunpack.c.l.b16 %v8307
  %v8325 = vunpack.c.h.b16 %v8307
  %v8326 = vunpack.c.l.b16 %v8308
  %v8327 = vunpack.c.h.b16 %v8308
  %v8328 = vunpack.c.l.b16 %v8309
  %v8329 = vunpack.c.h.b16 %v8309
  %v8330 = vunpack.c.l.b16 %v8310
  %v8331 = vunpack.c.h.b16 %v8310
  %v8332 = vunpack.c.l.b16 %v8311
  %v8333 = vunpack.c.h.b16 %v8311
  %v8334 = vunpack.c.l.b16 %v8312
  %v8335 = vunpack.c.h.b16 %v8312
  %v8336 = vunpack.c.l.b16 %v8313
  %v8337 = vunpack.c.h.b16 %v8313
  %v8338 = vpack.c.b16 %v8324, %v8322
  %v8339 = vpack.c.b16 %v8325, %v8323
  %v8340 = vpack.c.b16 %v8328, %v8326
  %v8341 = vpack.c.b16 %v8329, %v8327
  %v8342 = vpack.c.b16 %v8332, %v8330
  %v8343 = vpack.c.b16 %v8333, %v8331
  %v8344 = vpack.c.b16 %v8336, %v8334
  %v8345 = vpack.c.b16 %v8337, %v8335
  %v8355 = vsel %vm68, %v8304, 0
  %8357 = vmatpush.bf16.msra.mxu0 0
  %8358 = vmatpush.bf16.msra.mxu0 0
  %8359 = vmatpush.bf16.msra.mxu0 0
  %8360 = vmatpush.bf16.msra.mxu0 0
  %8361 = vmatpush.bf16.msra.mxu0 %v8344
  %8362 = vmatpush.bf16.msra.mxu0 %v8342
  %8363 = vmatpush.bf16.msra.mxu0 %v8340
  %8364 = vmatpush.bf16.msra.mxu0 %v8338
  %8365 = vmatmul.bf16.gmra.mxu0 %v8355
  %v8366 = vpop.f32.mrf.mxu0
  %v8367 = vadd.f32 0.0, %v8366
  %v8368 = vpop.f32.mrf.mxu0
  %8369 = vdwg.mxu0
  %8370 = vmatpush.bf16.msra.mxu0 0
  %8371 = vmatpush.bf16.msra.mxu0 0
  %8372 = vmatpush.bf16.msra.mxu0 0
  %8373 = vmatpush.bf16.msra.mxu0 0
  %8374 = vmatpush.bf16.msra.mxu0 %v8345
  %8375 = vmatpush.bf16.msra.mxu0 %v8343
  %8376 = vmatpush.bf16.msra.mxu0 %v8341
  %8377 = vmatpush.bf16.msra.mxu0 %v8339
  %8378 = vmatmul.bf16.gmra.mxu0 %v8355
  %v8379 = vpop.f32.mrf.mxu0
  %v8380 = vadd.f32 0.0, %v8379
  %v8381 = vpop.f32.mrf.mxu0
  %8382 = vdwg.mxu0
  %v8383 = vadd.f32 %v8298, %v8367
  %v8384 = vadd.f32 %v8299, %v8380
  %s8385 = scalar_lea.vmem [#allocation8], 19
  %v8386 = vld [vmem:[%s8385] ss:$64 sm:$0x1]
  %v8387 = vld [vmem:[%s8385] ss:$64 sm:$0x2]
  %v8388 = vor.u32 %v8386, %v8387
  %v8389 = vpack.c.bf16 %v8388, %v8388
  %s8390 = scalar_lea.vmem %s11, 704
  %v8391 = vld [vmem:[%s8390] sm:$0xff]
  %v8392 = vld [vmem:[%s8390 + $0x8] sm:$0xff]
  %v8393 = vld [vmem:[%s8390 + $0x10] sm:$0xff]
  %v8394 = vld [vmem:[%s8390 + $0x18] sm:$0xff]
  %v8395 = vld [vmem:[%s8390 + $0x20] sm:$0xff]
  %v8396 = vld [vmem:[%s8390 + $0x28] sm:$0xff]
  %v8397 = vld [vmem:[%s8390 + $0x30] sm:$0xff]
  %v8398 = vld [vmem:[%s8390 + $0x38] sm:$0xff]
  %v8407 = vunpack.c.l.b16 %v8391
  %v8408 = vunpack.c.h.b16 %v8391
  %v8409 = vunpack.c.l.b16 %v8392
  %v8410 = vunpack.c.h.b16 %v8392
  %v8411 = vunpack.c.l.b16 %v8393
  %v8412 = vunpack.c.h.b16 %v8393
  %v8413 = vunpack.c.l.b16 %v8394
  %v8414 = vunpack.c.h.b16 %v8394
  %v8415 = vunpack.c.l.b16 %v8395
  %v8416 = vunpack.c.h.b16 %v8395
  %v8417 = vunpack.c.l.b16 %v8396
  %v8418 = vunpack.c.h.b16 %v8396
  %v8419 = vunpack.c.l.b16 %v8397
  %v8420 = vunpack.c.h.b16 %v8397
  %v8421 = vunpack.c.l.b16 %v8398
  %v8422 = vunpack.c.h.b16 %v8398
  %v8423 = vpack.c.b16 %v8409, %v8407
  %v8424 = vpack.c.b16 %v8410, %v8408
  %v8425 = vpack.c.b16 %v8413, %v8411
  %v8426 = vpack.c.b16 %v8414, %v8412
  %v8427 = vpack.c.b16 %v8417, %v8415
  %v8428 = vpack.c.b16 %v8418, %v8416
  %v8429 = vpack.c.b16 %v8421, %v8419
  %v8430 = vpack.c.b16 %v8422, %v8420
  %v8440 = vsel %vm68, %v8389, 0
  %8442 = vmatpush.bf16.msra.mxu0 0
  %8443 = vmatpush.bf16.msra.mxu0 0
  %8444 = vmatpush.bf16.msra.mxu0 0
  %8445 = vmatpush.bf16.msra.mxu0 0
  %8446 = vmatpush.bf16.msra.mxu0 %v8429
  %8447 = vmatpush.bf16.msra.mxu0 %v8427
  %8448 = vmatpush.bf16.msra.mxu0 %v8425
  %8449 = vmatpush.bf16.msra.mxu0 %v8423
  %8450 = vmatmul.bf16.gmra.mxu0 %v8440
  %v8451 = vpop.f32.mrf.mxu0
  %v8452 = vadd.f32 0.0, %v8451
  %v8453 = vpop.f32.mrf.mxu0
  %8454 = vdwg.mxu0
  %8455 = vmatpush.bf16.msra.mxu0 0
  %8456 = vmatpush.bf16.msra.mxu0 0
  %8457 = vmatpush.bf16.msra.mxu0 0
  %8458 = vmatpush.bf16.msra.mxu0 0
  %8459 = vmatpush.bf16.msra.mxu0 %v8430
  %8460 = vmatpush.bf16.msra.mxu0 %v8428
  %8461 = vmatpush.bf16.msra.mxu0 %v8426
  %8462 = vmatpush.bf16.msra.mxu0 %v8424
  %8463 = vmatmul.bf16.gmra.mxu0 %v8440
  %v8464 = vpop.f32.mrf.mxu0
  %v8465 = vadd.f32 0.0, %v8464
  %v8466 = vpop.f32.mrf.mxu0
  %8467 = vdwg.mxu0
  %v8468 = vadd.f32 %v8383, %v8452
  %v8469 = vadd.f32 %v8384, %v8465
  %s8470 = scalar_lea.vmem [#allocation8], 24
  %v8471 = vld [vmem:[%s8470] ss:$64 sm:$0x1]
  %v8472 = vld [vmem:[%s8470] ss:$64 sm:$0x2]
  %v8473 = vor.u32 %v8471, %v8472
  %v8474 = vpack.c.bf16 %v8473, %v8473
  %s8475 = scalar_lea.vmem %s11, 768
  %v8476 = vld [vmem:[%s8475] sm:$0xff]
  %v8477 = vld [vmem:[%s8475 + $0x8] sm:$0xff]
  %v8478 = vld [vmem:[%s8475 + $0x10] sm:$0xff]
  %v8479 = vld [vmem:[%s8475 + $0x18] sm:$0xff]
  %v8480 = vld [vmem:[%s8475 + $0x20] sm:$0xff]
  %v8481 = vld [vmem:[%s8475 + $0x28] sm:$0xff]
  %v8482 = vld [vmem:[%s8475 + $0x30] sm:$0xff]
  %v8483 = vld [vmem:[%s8475 + $0x38] sm:$0xff]
  %v8492 = vunpack.c.l.b16 %v8476
  %v8493 = vunpack.c.h.b16 %v8476
  %v8494 = vunpack.c.l.b16 %v8477
  %v8495 = vunpack.c.h.b16 %v8477
  %v8496 = vunpack.c.l.b16 %v8478
  %v8497 = vunpack.c.h.b16 %v8478
  %v8498 = vunpack.c.l.b16 %v8479
  %v8499 = vunpack.c.h.b16 %v8479
  %v8500 = vunpack.c.l.b16 %v8480
  %v8501 = vunpack.c.h.b16 %v8480
  %v8502 = vunpack.c.l.b16 %v8481
  %v8503 = vunpack.c.h.b16 %v8481
  %v8504 = vunpack.c.l.b16 %v8482
  %v8505 = vunpack.c.h.b16 %v8482
  %v8506 = vunpack.c.l.b16 %v8483
  %v8507 = vunpack.c.h.b16 %v8483
  %v8508 = vpack.c.b16 %v8494, %v8492
  %v8509 = vpack.c.b16 %v8495, %v8493
  %v8510 = vpack.c.b16 %v8498, %v8496
  %v8511 = vpack.c.b16 %v8499, %v8497
  %v8512 = vpack.c.b16 %v8502, %v8500
  %v8513 = vpack.c.b16 %v8503, %v8501
  %v8514 = vpack.c.b16 %v8506, %v8504
  %v8515 = vpack.c.b16 %v8507, %v8505
  %v8525 = vsel %vm68, %v8474, 0
  %8527 = vmatpush.bf16.msra.mxu0 0
  %8528 = vmatpush.bf16.msra.mxu0 0
  %8529 = vmatpush.bf16.msra.mxu0 0
  %8530 = vmatpush.bf16.msra.mxu0 0
  %8531 = vmatpush.bf16.msra.mxu0 %v8514
  %8532 = vmatpush.bf16.msra.mxu0 %v8512
  %8533 = vmatpush.bf16.msra.mxu0 %v8510
  %8534 = vmatpush.bf16.msra.mxu0 %v8508
  %8535 = vmatmul.bf16.gmra.mxu0 %v8525
  %v8536 = vpop.f32.mrf.mxu0
  %v8537 = vadd.f32 0.0, %v8536
  %v8538 = vpop.f32.mrf.mxu0
  %8539 = vdwg.mxu0
  %8540 = vmatpush.bf16.msra.mxu0 0
  %8541 = vmatpush.bf16.msra.mxu0 0
  %8542 = vmatpush.bf16.msra.mxu0 0
  %8543 = vmatpush.bf16.msra.mxu0 0
  %8544 = vmatpush.bf16.msra.mxu0 %v8515
  %8545 = vmatpush.bf16.msra.mxu0 %v8513
  %8546 = vmatpush.bf16.msra.mxu0 %v8511
  %8547 = vmatpush.bf16.msra.mxu0 %v8509
  %8548 = vmatmul.bf16.gmra.mxu0 %v8525
  %v8549 = vpop.f32.mrf.mxu0
  %v8550 = vadd.f32 0.0, %v8549
  %v8551 = vpop.f32.mrf.mxu0
  %8552 = vdwg.mxu0
  %v8553 = vadd.f32 %v8468, %v8537
  %v8554 = vadd.f32 %v8469, %v8550
  %s8555 = scalar_lea.vmem [#allocation8], 25
  %v8556 = vld [vmem:[%s8555] ss:$64 sm:$0x1]
  %v8557 = vld [vmem:[%s8555] ss:$64 sm:$0x2]
  %v8558 = vor.u32 %v8556, %v8557
  %v8559 = vpack.c.bf16 %v8558, %v8558
  %s8560 = scalar_lea.vmem %s11, 832
  %v8561 = vld [vmem:[%s8560] sm:$0xff]
  %v8562 = vld [vmem:[%s8560 + $0x8] sm:$0xff]
  %v8563 = vld [vmem:[%s8560 + $0x10] sm:$0xff]
  %v8564 = vld [vmem:[%s8560 + $0x18] sm:$0xff]
  %v8565 = vld [vmem:[%s8560 + $0x20] sm:$0xff]
  %v8566 = vld [vmem:[%s8560 + $0x28] sm:$0xff]
  %v8567 = vld [vmem:[%s8560 + $0x30] sm:$0xff]
  %v8568 = vld [vmem:[%s8560 + $0x38] sm:$0xff]
  %v8577 = vunpack.c.l.b16 %v8561
  %v8578 = vunpack.c.h.b16 %v8561
  %v8579 = vunpack.c.l.b16 %v8562
  %v8580 = vunpack.c.h.b16 %v8562
  %v8581 = vunpack.c.l.b16 %v8563
  %v8582 = vunpack.c.h.b16 %v8563
  %v8583 = vunpack.c.l.b16 %v8564
  %v8584 = vunpack.c.h.b16 %v8564
  %v8585 = vunpack.c.l.b16 %v8565
  %v8586 = vunpack.c.h.b16 %v8565
  %v8587 = vunpack.c.l.b16 %v8566
  %v8588 = vunpack.c.h.b16 %v8566
  %v8589 = vunpack.c.l.b16 %v8567
  %v8590 = vunpack.c.h.b16 %v8567
  %v8591 = vunpack.c.l.b16 %v8568
  %v8592 = vunpack.c.h.b16 %v8568
  %v8593 = vpack.c.b16 %v8579, %v8577
  %v8594 = vpack.c.b16 %v8580, %v8578
  %v8595 = vpack.c.b16 %v8583, %v8581
  %v8596 = vpack.c.b16 %v8584, %v8582
  %v8597 = vpack.c.b16 %v8587, %v8585
  %v8598 = vpack.c.b16 %v8588, %v8586
  %v8599 = vpack.c.b16 %v8591, %v8589
  %v8600 = vpack.c.b16 %v8592, %v8590
  %v8610 = vsel %vm68, %v8559, 0
  %8612 = vmatpush.bf16.msra.mxu0 0
  %8613 = vmatpush.bf16.msra.mxu0 0
  %8614 = vmatpush.bf16.msra.mxu0 0
  %8615 = vmatpush.bf16.msra.mxu0 0
  %8616 = vmatpush.bf16.msra.mxu0 %v8599
  %8617 = vmatpush.bf16.msra.mxu0 %v8597
  %8618 = vmatpush.bf16.msra.mxu0 %v8595
  %8619 = vmatpush.bf16.msra.mxu0 %v8593
  %8620 = vmatmul.bf16.gmra.mxu0 %v8610
  %v8621 = vpop.f32.mrf.mxu0
  %v8622 = vadd.f32 0.0, %v8621
  %v8623 = vpop.f32.mrf.mxu0
  %8624 = vdwg.mxu0
  %8625 = vmatpush.bf16.msra.mxu0 0
  %8626 = vmatpush.bf16.msra.mxu0 0
  %8627 = vmatpush.bf16.msra.mxu0 0
  %8628 = vmatpush.bf16.msra.mxu0 0
  %8629 = vmatpush.bf16.msra.mxu0 %v8600
  %8630 = vmatpush.bf16.msra.mxu0 %v8598
  %8631 = vmatpush.bf16.msra.mxu0 %v8596
  %8632 = vmatpush.bf16.msra.mxu0 %v8594
  %8633 = vmatmul.bf16.gmra.mxu0 %v8610
  %v8634 = vpop.f32.mrf.mxu0
  %v8635 = vadd.f32 0.0, %v8634
  %v8636 = vpop.f32.mrf.mxu0
  %8637 = vdwg.mxu0
  %v8638 = vadd.f32 %v8553, %v8622
  %v8639 = vadd.f32 %v8554, %v8635
  %s8640 = scalar_lea.vmem [#allocation8], 26
  %v8641 = vld [vmem:[%s8640] ss:$64 sm:$0x1]
  %v8642 = vld [vmem:[%s8640] ss:$64 sm:$0x2]
  %v8643 = vor.u32 %v8641, %v8642
  %v8644 = vpack.c.bf16 %v8643, %v8643
  %s8645 = scalar_lea.vmem %s11, 896
  %v8646 = vld [vmem:[%s8645] sm:$0xff]
  %v8647 = vld [vmem:[%s8645 + $0x8] sm:$0xff]
  %v8648 = vld [vmem:[%s8645 + $0x10] sm:$0xff]
  %v8649 = vld [vmem:[%s8645 + $0x18] sm:$0xff]
  %v8650 = vld [vmem:[%s8645 + $0x20] sm:$0xff]
  %v8651 = vld [vmem:[%s8645 + $0x28] sm:$0xff]
  %v8652 = vld [vmem:[%s8645 + $0x30] sm:$0xff]
  %v8653 = vld [vmem:[%s8645 + $0x38] sm:$0xff]
  %v8662 = vunpack.c.l.b16 %v8646
  %v8663 = vunpack.c.h.b16 %v8646
  %v8664 = vunpack.c.l.b16 %v8647
  %v8665 = vunpack.c.h.b16 %v8647
  %v8666 = vunpack.c.l.b16 %v8648
  %v8667 = vunpack.c.h.b16 %v8648
  %v8668 = vunpack.c.l.b16 %v8649
  %v8669 = vunpack.c.h.b16 %v8649
  %v8670 = vunpack.c.l.b16 %v8650
  %v8671 = vunpack.c.h.b16 %v8650
  %v8672 = vunpack.c.l.b16 %v8651
  %v8673 = vunpack.c.h.b16 %v8651
  %v8674 = vunpack.c.l.b16 %v8652
  %v8675 = vunpack.c.h.b16 %v8652
  %v8676 = vunpack.c.l.b16 %v8653
  %v8677 = vunpack.c.h.b16 %v8653
  %v8678 = vpack.c.b16 %v8664, %v8662
  %v8679 = vpack.c.b16 %v8665, %v8663
  %v8680 = vpack.c.b16 %v8668, %v8666
  %v8681 = vpack.c.b16 %v8669, %v8667
  %v8682 = vpack.c.b16 %v8672, %v8670
  %v8683 = vpack.c.b16 %v8673, %v8671
  %v8684 = vpack.c.b16 %v8676, %v8674
  %v8685 = vpack.c.b16 %v8677, %v8675
  %v8695 = vsel %vm68, %v8644, 0
  %8697 = vmatpush.bf16.msra.mxu0 0
  %8698 = vmatpush.bf16.msra.mxu0 0
  %8699 = vmatpush.bf16.msra.mxu0 0
  %8700 = vmatpush.bf16.msra.mxu0 0
  %8701 = vmatpush.bf16.msra.mxu0 %v8684
  %8702 = vmatpush.bf16.msra.mxu0 %v8682
  %8703 = vmatpush.bf16.msra.mxu0 %v8680
  %8704 = vmatpush.bf16.msra.mxu0 %v8678
  %8705 = vmatmul.bf16.gmra.mxu0 %v8695
  %v8706 = vpop.f32.mrf.mxu0
  %v8707 = vadd.f32 0.0, %v8706
  %v8708 = vpop.f32.mrf.mxu0
  %8709 = vdwg.mxu0
  %8710 = vmatpush.bf16.msra.mxu0 0
  %8711 = vmatpush.bf16.msra.mxu0 0
  %8712 = vmatpush.bf16.msra.mxu0 0
  %8713 = vmatpush.bf16.msra.mxu0 0
  %8714 = vmatpush.bf16.msra.mxu0 %v8685
  %8715 = vmatpush.bf16.msra.mxu0 %v8683
  %8716 = vmatpush.bf16.msra.mxu0 %v8681
  %8717 = vmatpush.bf16.msra.mxu0 %v8679
  %8718 = vmatmul.bf16.gmra.mxu0 %v8695
  %v8719 = vpop.f32.mrf.mxu0
  %v8720 = vadd.f32 0.0, %v8719
  %v8721 = vpop.f32.mrf.mxu0
  %8722 = vdwg.mxu0
  %v8723 = vadd.f32 %v8638, %v8707
  %v8724 = vadd.f32 %v8639, %v8720
  %s8725 = scalar_lea.vmem [#allocation8], 27
  %v8726 = vld [vmem:[%s8725] ss:$64 sm:$0x1]
  %v8727 = vld [vmem:[%s8725] ss:$64 sm:$0x2]
  %v8728 = vor.u32 %v8726, %v8727
  %v8729 = vpack.c.bf16 %v8728, %v8728
  %s8730 = scalar_lea.vmem %s11, 960
  %v8731 = vld [vmem:[%s8730] sm:$0xff]
  %v8732 = vld [vmem:[%s8730 + $0x8] sm:$0xff]
  %v8733 = vld [vmem:[%s8730 + $0x10] sm:$0xff]
  %v8734 = vld [vmem:[%s8730 + $0x18] sm:$0xff]
  %v8735 = vld [vmem:[%s8730 + $0x20] sm:$0xff]
  %v8736 = vld [vmem:[%s8730 + $0x28] sm:$0xff]
  %v8737 = vld [vmem:[%s8730 + $0x30] sm:$0xff]
  %v8738 = vld [vmem:[%s8730 + $0x38] sm:$0xff]
  %v8747 = vunpack.c.l.b16 %v8731
  %v8748 = vunpack.c.h.b16 %v8731
  %v8749 = vunpack.c.l.b16 %v8732
  %v8750 = vunpack.c.h.b16 %v8732
  %v8751 = vunpack.c.l.b16 %v8733
  %v8752 = vunpack.c.h.b16 %v8733
  %v8753 = vunpack.c.l.b16 %v8734
  %v8754 = vunpack.c.h.b16 %v8734
  %v8755 = vunpack.c.l.b16 %v8735
  %v8756 = vunpack.c.h.b16 %v8735
  %v8757 = vunpack.c.l.b16 %v8736
  %v8758 = vunpack.c.h.b16 %v8736
  %v8759 = vunpack.c.l.b16 %v8737
  %v8760 = vunpack.c.h.b16 %v8737
  %v8761 = vunpack.c.l.b16 %v8738
  %v8762 = vunpack.c.h.b16 %v8738
  %v8763 = vpack.c.b16 %v8749, %v8747
  %v8764 = vpack.c.b16 %v8750, %v8748
  %v8765 = vpack.c.b16 %v8753, %v8751
  %v8766 = vpack.c.b16 %v8754, %v8752
  %v8767 = vpack.c.b16 %v8757, %v8755
  %v8768 = vpack.c.b16 %v8758, %v8756
  %v8769 = vpack.c.b16 %v8761, %v8759
  %v8770 = vpack.c.b16 %v8762, %v8760
  %v8780 = vsel %vm68, %v8729, 0
  %8782 = vmatpush.bf16.msra.mxu0 0
  %8783 = vmatpush.bf16.msra.mxu0 0
  %8784 = vmatpush.bf16.msra.mxu0 0
  %8785 = vmatpush.bf16.msra.mxu0 0
  %8786 = vmatpush.bf16.msra.mxu0 %v8769
  %8787 = vmatpush.bf16.msra.mxu0 %v8767
  %8788 = vmatpush.bf16.msra.mxu0 %v8765
  %8789 = vmatpush.bf16.msra.mxu0 %v8763
  %8790 = vmatmul.bf16.gmra.mxu0 %v8780
  %v8791 = vpop.f32.mrf.mxu0
  %v8792 = vadd.f32 0.0, %v8791
  %v8793 = vpop.f32.mrf.mxu0
  %8794 = vdwg.mxu0
  %8795 = vmatpush.bf16.msra.mxu0 0
  %8796 = vmatpush.bf16.msra.mxu0 0
  %8797 = vmatpush.bf16.msra.mxu0 0
  %8798 = vmatpush.bf16.msra.mxu0 0
  %8799 = vmatpush.bf16.msra.mxu0 %v8770
  %8800 = vmatpush.bf16.msra.mxu0 %v8768
  %8801 = vmatpush.bf16.msra.mxu0 %v8766
  %8802 = vmatpush.bf16.msra.mxu0 %v8764
  %8803 = vmatmul.bf16.gmra.mxu0 %v8780
  %v8804 = vpop.f32.mrf.mxu0
  %v8805 = vadd.f32 0.0, %v8804
  %v8806 = vpop.f32.mrf.mxu0
  %8807 = vdwg.mxu0
  %v8808 = vadd.f32 %v8723, %v8792
  %v8809 = vadd.f32 %v8724, %v8805
  %v8810 = vld [vmem:[%s12] sm:$0x3]
  %v8812 = vperm.slane %v8810, 0
  %v8813 = vperm.slane %v8810, 1
  %v8816 = vadd.f32 %v8808, %v8812
  %v8817 = vadd.f32 %v8809, %v8813
  %v8818 = vmax.f32 %v8816, 0.0
  %v8819 = vmax.f32 %v8817, 0.0
  %v8820 = vld [vmem:[%s13] sm:$0x3]
  %v8822 = vperm.slane %v8820, 0
  %v8823 = vperm.slane %v8820, 1
  %v8826 = vmul.f32 %v8818, %v8822
  %v8827 = vmul.f32 %v8819, %v8823
  %vm8828 = vcmask 1041408
  %v8829 = vsel %vm8828, %v8826, 0.0
  %v8830 = vsel %vm8828, %v8827, 0.0
  %v8831 = vadd.f32 %v8829, %v8830
  %8832 = vadd.xlane.f32.xlu0 %v8831
  %v8833 = vpop.xlane.xlu0 %8832
  %v8834 = vld [vmem:[#allocation9] sm:$0x1]
  %v8836 = vperm.slane %v8834, 0
  %v8838 = vadd.f32 %v8833, %v8836
  %v8839 = vsub.f32 0.0, %v8838
  %v8840 = vmul.f32 %v8839, 1.442695
  %v8841 = vpow.pop %v8840
  %v8842 = vadd.f32 %v8841, 1.0
  %v8843 = vrcp.pop %v8842
  %v8844 = vmul.f32 %v8842, %v8843
  %v8845 = vsub.f32 1.0, %v8844
  %v8846 = vmul.f32 %v8843, %v8845
  %v8847 = vadd.f32 %v8843, %v8846
  %vm8848 = vweird.f32 %v8842
  %vm8849 = vweird.f32 %v8843
  %vm8850 = vmor %vm8848, %vm8849
  %v8851 = vsel %vm8850, %v8843, %v8847
  %v8852 = vand.u32 2147483647, %v8842
  %vm8853 = vcmp.eq.f32.partialorder %v8852, 8.507059e+37
  %v8854 = vand.u32 %v8842, 2147483648
  %v8855 = vor.u32 1.1754944e-38, %v8854
  %v8856 = vsel %vm8853, %v8855, %v8851
  %v8857 = vmul.f32 1.0, %v8856
  %vm8858 = vcmask 1024
  %8859 = vst.msk [vmem:[%s15] sm:$0x3] %vm8858, %v8857
  // Predicated region
  $region104: #{cnn_forward.1} parent=0 // pred_check
    _
  $region105: #{cnn_forward.1} parent=0 // pred_check_branch
    %8861 = sbr.rel (0) target = $region107
  $region106: #{cnn_forward.1} parent=0 // pred_region
    _
  $region107: #{cnn_forward.1} parent=0 // pred_fallthru
    _
  // Predicated region
  $region108: #{cnn_forward.1} parent=0 // pred_check
    _
  $region109: #{cnn_forward.1} parent=0 // pred_check_branch
    %8863 = sbr.rel (0) target = $region111
  $region110: #{cnn_forward.1} parent=0 // pred_region
    _
  $region111: #{cnn_forward.1} parent=0 // pred_fallthru
    _

</llo_original>
